<compile_context>
chip_gen: v5e
topology: v5e:2x2
jax: 0.10.0
libtpu: 0.0.40
codegen_flags: <defaults>
</compile_context>

<pallas_src>
import functools

import jax
import jax.numpy as jnp
from jax.experimental import pallas as pl
from jax.experimental.pallas import tpu as pltpu

BN_EPS = 1e-5
_NEG_BIG = -1e9          # fill for unused (padded) head-logit lanes
_W_PER_BLOCK = 6         # (w_im2col, bias, se_w1, se_b1, se_w2, se_b2)
_TARGET_ROWS = 1024      # target MXU M dimension (TB * L) per grid step


def _round_up(v, m):
    return -(-v // m) * m


# ----------------------------------------------------------------------------
# Fused Pallas kernel: 4 MultiScaleBlocks + head conv + log_softmax
# ----------------------------------------------------------------------------
def _fused_kernel(*args, nd_list, seq_len, off0, offr):
    n_blocks = len(nd_list)
    x_ref = args[0]
    w_refs = args[1:1 + _W_PER_BLOCK * n_blocks]
    head_w_ref = args[1 + _W_PER_BLOCK * n_blocks]
    head_b_ref = args[2 + _W_PER_BLOCK * n_blocks]
    out_ref = args[3 + _W_PER_BLOCK * n_blocks]
    xpad0_ref = args[4 + _W_PER_BLOCK * n_blocks]   # (TB, L+2*off0, 384) bf16
    padr_ref = args[5 + _W_PER_BLOCK * n_blocks]    # (TB, L+2*offr, 128) bf16
    col_ref = args[6 + _W_PER_BLOCK * n_blocks]     # (TB, L, Kmax)      bf16

    TB = x_ref.shape[0]
    L = seq_len

    def run_block(src_ref, off, nd, w_ref, b_ref, s1w, s1b, s2w, s2b):
        """src_ref: padded (TB, Lp, Cin) bf16 ref -> (TB, L, Cout) f32."""
        cin = src_ref.shape[-1]
        cout = w_ref.shape[-1]
        ktaps = 2 * nd + 1
        K = ktaps * cin

        # im2col: tap t reads rows [off + t - nd, off + t - nd + L) of the
        # padded buffer (static, in-bounds starts).  One copy per tap, then a
        # single wide-K matmul instead of 7-9 K=128 matmuls + accumulate adds.
        for t in range(ktaps):
            a = off + t - nd
            col_ref[:, :, t * cin:(t + 1) * cin] = src_ref[:, a:a + L, :]

        slab = col_ref[:, :, :K].reshape(TB * L, K)              # bf16
        acc = jnp.dot(slab, w_ref[...], preferred_element_type=jnp.float32)
        acc = acc + b_ref[...]                  # single folded bias (1, Cout)
        y3 = jnp.maximum(acc, 0.0).reshape(TB, L, cout)          # ReLU, f32

        # SeModule: per-sample mean over L -> Linear/ReLU/Linear/Sigmoid gate
        m = jnp.mean(y3, axis=1)                                 # (TB, Cout)
        h = jnp.maximum(
            jnp.dot(m, s1w[...], preferred_element_type=jnp.float32)
            + s1b[...], 0.0)
        s = jax.nn.sigmoid(
            jnp.dot(h, s2w[...], preferred_element_type=jnp.float32)
            + s2b[...])                                          # (TB, Cout)
        # TODO(synk): Dropout(0.6) and train-mode BatchNorm (batch statistics)
        # are not implemented; eval-mode forward semantics only.
        return y3 * s[:, None, :]

    # ---- zero only the halo rows of the pad buffers.  Done every step (it is
    # tiny in bf16) so the kernel stays correct when the parallel grid axis is
    # sharded across TensorCores (scratch is per-core). --------------------
    c0 = xpad0_ref.shape[-1]
    cm = padr_ref.shape[-1]
    xpad0_ref[:, :off0, :] = jnp.zeros((TB, off0, c0), xpad0_ref.dtype)
    xpad0_ref[:, off0 + L:, :] = jnp.zeros(
        (TB, xpad0_ref.shape[1] - off0 - L, c0), xpad0_ref.dtype)
    padr_ref[:, :offr, :] = jnp.zeros((TB, offr, cm), padr_ref.dtype)
    padr_ref[:, offr + L:, :] = jnp.zeros(
        (TB, padr_ref.shape[1] - offr - L, cm), padr_ref.dtype)

    # ---- block 0: channel-padded bf16 embedding -> pad buffer (no cast) ----
    xpad0_ref[:, off0:off0 + L, :] = x_ref[...]
    y3 = run_block(xpad0_ref, off0, nd_list[0], *w_refs[:_W_PER_BLOCK])

    # ---- blocks 1..n-1: one resident 128-ch bf16 pad buffer (no HBM trips) -
    for bi in range(1, n_blocks):
        padr_ref[:, offr:offr + L, :] = y3.astype(padr_ref.dtype)
        lo = _W_PER_BLOCK * bi
        y3 = run_block(padr_ref, offr, nd_list[bi],
                       *w_refs[lo:lo + _W_PER_BLOCK])

    # ---- head: Conv1d(128, T, 1) + log_softmax (lane-padded to 128) --------
    cout = y3.shape[-1]
    logits = jnp.dot(y3.reshape(TB * L, cout).astype(head_w_ref.dtype),
                     head_w_ref[...], preferred_element_type=jnp.float32)
    logits = logits + head_b_ref[...]           # padded lanes get -1e9 -> p=0
    mx = jnp.max(logits, axis=-1, keepdims=True)
    z = logits - mx
    lse = jnp.log(jnp.sum(jnp.exp(z), axis=-1, keepdims=True))
    out_ref[...] = (z - lse).reshape(TB, L, -1).astype(out_ref.dtype)


# ----------------------------------------------------------------------------
# pallas_call wrapper (whole model in one call)
# ----------------------------------------------------------------------------
def convo_model_apply(x, lens, masks, params):
    """ConvoModel.forward.  x: (B, L, 300) -> log-probs (B, L, tagset_size)."""
    del lens, masks          # the PyTorch forward ignores them as well
    B, L, E = x.shape
    blocks = params["blocks"]
    nd_list = tuple(nd for _, nd in blocks)
    flat_w = [w for blk, _ in blocks for w in blk]
    head_w, head_b = params["head_w"], params["head_b"]
    T = params["tagset"]
    Tp = head_w.shape[-1]
    c0p = params["emb_pad"]                      # lane-dense embedding dim
    c_mid = blocks[0][0][0].shape[-1]            # block output channels (128)

    # Batch tile: fill the MXU M dimension (~_TARGET_ROWS rows per step), but
    # keep >= 2 grid steps whenever possible so both v7x TensorCores get work.
    TB = max(1, min(B, _round_up(_TARGET_ROWS, L) // L))
    if -(-B // TB) < 2 and B > 1:
        TB = -(-B // 2)
    Bp = _round_up(B, TB)

    xb = x.astype(jnp.bfloat16)                  # halve input DMA bytes
    pad_b, pad_c = Bp - B, c0p - E
    if pad_b or pad_c:
        xb = jnp.pad(xb, ((0, pad_b), (0, 0), (0, pad_c)))

    # Sublane-aligned halo widths inside the pad buffers.
    off0 = _round_up(nd_list[0], 8)
    offr = _round_up(max(nd_list[1:]), 8) if len(nd_list) > 1 else 8
    k_max = max(w.shape[0] for w in flat_w[::_W_PER_BLOCK])   # im2col K sizes

    # All weights are grid-invariant (same block index every step -> fetched
    # into VMEM once by the pipeline and kept resident).
    # TODO(synk): pipeline_mode=pl.Buffered(1) on these constant-weight specs
    # would shave ~1.5 MiB of double-buffer VMEM; skipped, budget is not tight.
    def _const_spec(w):
        n = w.ndim
        return pl.BlockSpec(w.shape, lambda b, n=n: (0,) * n)

    in_specs = ([pl.BlockSpec((TB, L, c0p), lambda b: (b, 0, 0))]
                + [_const_spec(w) for w in flat_w]
                + [_const_spec(head_w), _const_spec(head_b)])

    kernel = functools.partial(_fused_kernel, nd_list=nd_list, seq_len=L,
                               off0=off0, offr=offr)
    out = pl.pallas_call(
        kernel,
        out_shape=jax.ShapeDtypeStruct((Bp, L, Tp), jnp.float32),
        grid=(Bp // TB,),
        in_specs=in_specs,
        out_specs=pl.BlockSpec((TB, L, Tp), lambda b: (b, 0, 0)),
        scratch_shapes=[
            pltpu.VMEM((TB, L + 2 * off0, c0p), jnp.bfloat16),   # block-0 pad
            pltpu.VMEM((TB, L + 2 * offr, c_mid), jnp.bfloat16),  # blocks 1..n
            pltpu.VMEM((TB, L, k_max), jnp.bfloat16),             # im2col slab
        ],
        compiler_params=pltpu.CompilerParams(
            dimension_semantics=("parallel",),
            vmem_limit_bytes=48 * 1024 * 1024),   # safe on v5e/v6e/v7x
    )(xb, *flat_w, head_w, head_b)
    return out[:B, :, :T]


# ----------------------------------------------------------------------------
# Deterministic parameter construction (PyTorch layouts -> folded kernel form)
# ----------------------------------------------------------------------------
def _init_bn_convo(key, cin, cout, k):
    k1, k2, k3, k4, k5, k6 = jax.random.split(key, 6)
    conv_w = 0.05 * jax.random.normal(k1, (cout, cin, k), jnp.float32)
    conv_b = 0.05 * jax.random.normal(k2, (cout,), jnp.float32)
    bn_w = 1.0 + 0.1 * jax.random.normal(k3, (cout,), jnp.float32)
    bn_b = 0.1 * jax.random.normal(k4, (cout,), jnp.float32)
    bn_rm = 0.1 * jax.random.normal(k5, (cout,), jnp.float32)
    bn_rv = jax.random.uniform(k6, (cout,), jnp.float32, 0.5, 1.5)
    return conv_w, conv_b, bn_w, bn_b, bn_rm, bn_rv


def _fold_bn(conv_w, conv_b, bn_w, bn_b, bn_rm, bn_rv):
    scale = bn_w / jnp.sqrt(bn_rv + BN_EPS)               # (cout,)
    return conv_w * scale[:, None, None], (conv_b - bn_rm) * scale + bn_b


def init_msblock(key, cin, cout, num_dil, se_r=16, cin_pad=None):
    cin_pad = cin if cin_pad is None else cin_pad
    keys = jax.random.split(key, num_dil + 9)
    convs3 = [_init_bn_convo(keys[i], cin, cout, 3) for i in range(num_dil)]
    conv1 = _init_bn_convo(keys[num_dil], cin, cout, 1)
    dil_w = jax.random.normal(keys[num_dil + 1], (num_dil + 1,), jnp.float32)
    key_strength = jax.random.normal(keys[num_dil + 2], (), jnp.float32)
    gamma = jax.random.normal(keys[num_dil + 3], (), jnp.float32)
    se_w1 = 0.1 * jax.random.normal(keys[num_dil + 4],
                                    (cout // se_r, cout), jnp.float32)
    se_b1 = 0.1 * jax.random.normal(keys[num_dil + 5],
                                    (cout // se_r,), jnp.float32)
    se_w2 = 0.1 * jax.random.normal(keys[num_dil + 6],
                                    (cout, cout // se_r), jnp.float32)
    se_b2 = 0.1 * jax.random.normal(keys[num_dil + 7], (cout,), jnp.float32)

    # MultiScaleBlock branch-mixing scalars (computed once here, folded below).
    beta = jnp.log(jnp.exp(key_strength) + 1.0)           # softplus
    wts = jax.nn.softmax(dil_w * beta)
    g = jnp.log(jnp.exp(gamma) + 1.0) + 1.0               # modified softplus
    wts = wts ** g
    wts = wts / jnp.sum(wts)

    # Fold ALL conv taps (every k=3 branch, the k=1 branch, BatchNorm, branch
    # weights) into one im2col weight ((2*nd+1)*cin_pad, cout): slab t
    # multiplies x[l + (t - nd)].  cin rows 300..383 stay zero (lane padding).
    nd = num_dil
    slabs = [jnp.zeros((cin_pad, cout), jnp.float32) for _ in range(2 * nd + 1)]
    bias = jnp.zeros((cout,), jnp.float32)
    for i, raw in enumerate(convs3):                      # dilation d = i + 1
        fw, fb = _fold_bn(*raw)                           # (cout, cin, 3)
        fw = jnp.transpose(fw, (2, 1, 0)) * wts[i]        # (3, cin, cout)
        d = i + 1
        slabs[nd - d] = slabs[nd - d].at[:cin].add(fw[0])   # reads x[l - d]
        slabs[nd] = slabs[nd].at[:cin].add(fw[1])           # centre tap
        slabs[nd + d] = slabs[nd + d].at[:cin].add(fw[2])   # reads x[l + d]
        bias = bias + fb * wts[i]
    fw1, fb1 = _fold_bn(*conv1)
    slabs[nd] = slabs[nd].at[:cin].add(
        jnp.transpose(fw1[:, :, 0]) * wts[num_dil])
    bias = bias + fb1 * wts[num_dil]

    blk = (jnp.concatenate(slabs, axis=0).astype(jnp.bfloat16),  # (K, cout)
           bias[None, :],                                        # (1, cout) f32
           jnp.transpose(se_w1), se_b1[None, :],                 # SE MLP in f32
           jnp.transpose(se_w2), se_b2[None, :])
    return blk, num_dil


def init_convo_model(key, tagset_size, emb_dim=300, emb_pad=384):
    keys = jax.random.split(key, 6)
    blocks = [
        init_msblock(keys[0], emb_dim, 128, 3, se_r=16, cin_pad=emb_pad),
        init_msblock(keys[1], 128, 128, 4, se_r=16),
        init_msblock(keys[2], 128, 128, 4, se_r=16),
        init_msblock(keys[3], 128, 128, 4, se_r=16),
    ]
    # final Conv1d(128, tagset, 1): PyTorch weight (T, 128, 1), bias (T,)
    hw = 0.1 * jax.random.normal(keys[4], (tagset_size, 128, 1), jnp.float32)
    hb = 0.1 * jax.random.normal(keys[5], (tagset_size,), jnp.float32)
    tp = _round_up(max(tagset_size, 128), 128)            # lane-dense head out
    head_w = jnp.zeros((128, tp), jnp.float32).at[:, :tagset_size].set(
        jnp.transpose(hw[:, :, 0]))
    head_b = jnp.full((1, tp), _NEG_BIG, jnp.float32).at[0, :tagset_size].set(hb)
    return {"blocks": blocks,
            "head_w": head_w.astype(jnp.bfloat16),
            "head_b": head_b,
            "tagset": tagset_size,
            "emb_pad": emb_pad}


# ----------------------------------------------------------------------------
if __name__ == "__main__":
    B, L, EMB, TAGS = 2, 16, 300, 8

    key = jax.random.PRNGKey(0)
    kx, kp = jax.random.split(key)
    x = jax.random.normal(kx, (B, L, EMB), jnp.float32)   # (batch, seq, 300)
    lens = jnp.full((B,), L, jnp.int32)
    masks = jnp.ones((B, L), jnp.float32)

    params = init_convo_model(kp, TAGS)

    fwd = jax.jit(lambda x_, l_, m_: convo_model_apply(x_, l_, m_, params))
    out = jax.block_until_ready(fwd(x, lens, masks))

    assert out.shape == (B, L, TAGS), out.shape
    assert bool(jnp.all(jnp.isfinite(out)))
    # log_softmax sanity: probabilities per position sum to 1
    assert bool(jnp.allclose(jnp.sum(jnp.exp(out), axis=-1), 1.0, atol=1e-3))
    print("KERNEL_OK")
</pallas_src>

<mosaic_0001>
module attributes {stable_mosaic.version = 11 : i64} {
  func.func @_fused_kernel(%arg0: i32, %arg1: memref<1x16x384xbf16, #tpu.memory_space<vmem>>, %arg2: memref<2688x128xbf16, #tpu.memory_space<vmem>>, %arg3: memref<1x128xf32, #tpu.memory_space<vmem>>, %arg4: memref<128x8xf32, #tpu.memory_space<vmem>>, %arg5: memref<1x8xf32, #tpu.memory_space<vmem>>, %arg6: memref<8x128xf32, #tpu.memory_space<vmem>>, %arg7: memref<1x128xf32, #tpu.memory_space<vmem>>, %arg8: memref<1152x128xbf16, #tpu.memory_space<vmem>>, %arg9: memref<1x128xf32, #tpu.memory_space<vmem>>, %arg10: memref<128x8xf32, #tpu.memory_space<vmem>>, %arg11: memref<1x8xf32, #tpu.memory_space<vmem>>, %arg12: memref<8x128xf32, #tpu.memory_space<vmem>>, %arg13: memref<1x128xf32, #tpu.memory_space<vmem>>, %arg14: memref<1152x128xbf16, #tpu.memory_space<vmem>>, %arg15: memref<1x128xf32, #tpu.memory_space<vmem>>, %arg16: memref<128x8xf32, #tpu.memory_space<vmem>>, %arg17: memref<1x8xf32, #tpu.memory_space<vmem>>, %arg18: memref<8x128xf32, #tpu.memory_space<vmem>>, %arg19: memref<1x128xf32, #tpu.memory_space<vmem>>, %arg20: memref<1152x128xbf16, #tpu.memory_space<vmem>>, %arg21: memref<1x128xf32, #tpu.memory_space<vmem>>, %arg22: memref<128x8xf32, #tpu.memory_space<vmem>>, %arg23: memref<1x8xf32, #tpu.memory_space<vmem>>, %arg24: memref<8x128xf32, #tpu.memory_space<vmem>>, %arg25: memref<1x128xf32, #tpu.memory_space<vmem>>, %arg26: memref<128x128xbf16, #tpu.memory_space<vmem>>, %arg27: memref<1x128xf32, #tpu.memory_space<vmem>>, %arg28: memref<1x16x128xf32, #tpu.memory_space<vmem>>, %arg29: memref<1x32x384xbf16, #tpu.memory_space<vmem>>, %arg30: memref<1x32x128xbf16, #tpu.memory_space<vmem>>, %arg31: memref<1x16x2688xbf16, #tpu.memory_space<vmem>>) attributes {dimension_semantics = [#tpu.dimension_semantics<parallel>], iteration_bounds = array<i64: 2>, scalar_prefetch = 0 : i64, scratch_operands = 3 : i64, tpu.core_type = #tpu.core_type<tc>, window_params = [{transform_indices = @transform_0, window_bounds = array<i64: 1, 16, 384>}, {pipeline_mode = #tpu.pipeline_mode<synchronous>, transform_indices = @transform_1, window_bounds = array<i64: 2688, 128>}, {pipeline_mode = #tpu.pipeline_mode<synchronous>, transform_indices = @transform_2, window_bounds = array<i64: 1, 128>}, {pipeline_mode = #tpu.pipeline_mode<synchronous>, transform_indices = @transform_3, window_bounds = array<i64: 128, 8>}, {pipeline_mode = #tpu.pipeline_mode<synchronous>, transform_indices = @transform_4, window_bounds = array<i64: 1, 8>}, {pipeline_mode = #tpu.pipeline_mode<synchronous>, transform_indices = @transform_5, window_bounds = array<i64: 8, 128>}, {pipeline_mode = #tpu.pipeline_mode<synchronous>, transform_indices = @transform_6, window_bounds = array<i64: 1, 128>}, {pipeline_mode = #tpu.pipeline_mode<synchronous>, transform_indices = @transform_7, window_bounds = array<i64: 1152, 128>}, {pipeline_mode = #tpu.pipeline_mode<synchronous>, transform_indices = @transform_8, window_bounds = array<i64: 1, 128>}, {pipeline_mode = #tpu.pipeline_mode<synchronous>, transform_indices = @transform_9, window_bounds = array<i64: 128, 8>}, {pipeline_mode = #tpu.pipeline_mode<synchronous>, transform_indices = @transform_10, window_bounds = array<i64: 1, 8>}, {pipeline_mode = #tpu.pipeline_mode<synchronous>, transform_indices = @transform_11, window_bounds = array<i64: 8, 128>}, {pipeline_mode = #tpu.pipeline_mode<synchronous>, transform_indices = @transform_12, window_bounds = array<i64: 1, 128>}, {pipeline_mode = #tpu.pipeline_mode<synchronous>, transform_indices = @transform_13, window_bounds = array<i64: 1152, 128>}, {pipeline_mode = #tpu.pipeline_mode<synchronous>, transform_indices = @transform_14, window_bounds = array<i64: 1, 128>}, {pipeline_mode = #tpu.pipeline_mode<synchronous>, transform_indices = @transform_15, window_bounds = array<i64: 128, 8>}, {pipeline_mode = #tpu.pipeline_mode<synchronous>, transform_indices = @transform_16, window_bounds = array<i64: 1, 8>}, {pipeline_mode = #tpu.pipeline_mode<synchronous>, transform_indices = @transform_17, window_bounds = array<i64: 8, 128>}, {pipeline_mode = #tpu.pipeline_mode<synchronous>, transform_indices = @transform_18, window_bounds = array<i64: 1, 128>}, {pipeline_mode = #tpu.pipeline_mode<synchronous>, transform_indices = @transform_19, window_bounds = array<i64: 1152, 128>}, {pipeline_mode = #tpu.pipeline_mode<synchronous>, transform_indices = @transform_20, window_bounds = array<i64: 1, 128>}, {pipeline_mode = #tpu.pipeline_mode<synchronous>, transform_indices = @transform_21, window_bounds = array<i64: 128, 8>}, {pipeline_mode = #tpu.pipeline_mode<synchronous>, transform_indices = @transform_22, window_bounds = array<i64: 1, 8>}, {pipeline_mode = #tpu.pipeline_mode<synchronous>, transform_indices = @transform_23, window_bounds = array<i64: 8, 128>}, {pipeline_mode = #tpu.pipeline_mode<synchronous>, transform_indices = @transform_24, window_bounds = array<i64: 1, 128>}, {pipeline_mode = #tpu.pipeline_mode<synchronous>, transform_indices = @transform_25, window_bounds = array<i64: 128, 128>}, {pipeline_mode = #tpu.pipeline_mode<synchronous>, transform_indices = @transform_26, window_bounds = array<i64: 1, 128>}, {transform_indices = @transform_27, window_bounds = array<i64: 1, 16, 128>}]} {
    %cst = arith.constant 0.000000e+00 : bf16
    %0 = vector.broadcast %cst : bf16 to vector<1x8x384xbf16>
    %c0 = arith.constant 0 : index
    %c0_0 = arith.constant 0 : index
    %c0_1 = arith.constant 0 : index
    %1 = vector.load %arg29[%c0, %c0_0, %c0_1] : memref<1x32x384xbf16, #tpu.memory_space<vmem>>, vector<1x8x384xbf16>
    tpu.vector_store %arg29[%c0, %c0_0, %c0_1], %0 {strides = array<i32>} : memref<1x32x384xbf16, #tpu.memory_space<vmem>>, vector<1x8x384xbf16>,
    %cst_2 = arith.constant 0.000000e+00 : bf16
    %2 = vector.broadcast %cst_2 : bf16 to vector<1x8x384xbf16>
    %c0_3 = arith.constant 0 : index
    %c24 = arith.constant 24 : index
    %c0_4 = arith.constant 0 : index
    %3 = vector.load %arg29[%c0_3, %c24, %c0_4] : memref<1x32x384xbf16, #tpu.memory_space<vmem>>, vector<1x8x384xbf16>
    tpu.vector_store %arg29[%c0_3, %c24, %c0_4], %2 {strides = array<i32>} : memref<1x32x384xbf16, #tpu.memory_space<vmem>>, vector<1x8x384xbf16>,
    %cst_5 = arith.constant 0.000000e+00 : bf16
    %4 = vector.broadcast %cst_5 : bf16 to vector<1x8x128xbf16>
    %c0_6 = arith.constant 0 : index
    %c0_7 = arith.constant 0 : index
    %c0_8 = arith.constant 0 : index
    %5 = vector.load %arg30[%c0_6, %c0_7, %c0_8] : memref<1x32x128xbf16, #tpu.memory_space<vmem>>, vector<1x8x128xbf16>
    tpu.vector_store %arg30[%c0_6, %c0_7, %c0_8], %4 {strides = array<i32>} : memref<1x32x128xbf16, #tpu.memory_space<vmem>>, vector<1x8x128xbf16>,
    %cst_9 = arith.constant 0.000000e+00 : bf16
    %6 = vector.broadcast %cst_9 : bf16 to vector<1x8x128xbf16>
    %c0_10 = arith.constant 0 : index
    %c24_11 = arith.constant 24 : index
    %c0_12 = arith.constant 0 : index
    %7 = vector.load %arg30[%c0_10, %c24_11, %c0_12] : memref<1x32x128xbf16, #tpu.memory_space<vmem>>, vector<1x8x128xbf16>
    tpu.vector_store %arg30[%c0_10, %c24_11, %c0_12], %6 {strides = array<i32>} : memref<1x32x128xbf16, #tpu.memory_space<vmem>>, vector<1x8x128xbf16>,
    %c0_13 = arith.constant 0 : index
    %c0_14 = arith.constant 0 : index
    %c0_15 = arith.constant 0 : index
    %8 = vector.load %arg1[%c0_13, %c0_14, %c0_15] : memref<1x16x384xbf16, #tpu.memory_space<vmem>>, vector<1x16x384xbf16>
    %c0_16 = arith.constant 0 : index
    %c8 = arith.constant 8 : index
    %c0_17 = arith.constant 0 : index
    %9 = vector.load %arg29[%c0_16, %c8, %c0_17] : memref<1x32x384xbf16, #tpu.memory_space<vmem>>, vector<1x16x384xbf16>
    tpu.vector_store %arg29[%c0_16, %c8, %c0_17], %8 {strides = array<i32>} : memref<1x32x384xbf16, #tpu.memory_space<vmem>>, vector<1x16x384xbf16>,
    %c0_18 = arith.constant 0 : index
    %c5 = arith.constant 5 : index
    %c0_19 = arith.constant 0 : index
    %10 = vector.load %arg29[%c0_18, %c5, %c0_19] : memref<1x32x384xbf16, #tpu.memory_space<vmem>>, vector<1x16x384xbf16>
    %c0_20 = arith.constant 0 : index
    %c0_21 = arith.constant 0 : index
    %c0_22 = arith.constant 0 : index
    %11 = vector.load %arg31[%c0_20, %c0_21, %c0_22] : memref<1x16x2688xbf16, #tpu.memory_space<vmem>>, vector<1x16x384xbf16>
    tpu.vector_store %arg31[%c0_20, %c0_21, %c0_22], %10 {strides = array<i32>} : memref<1x16x2688xbf16, #tpu.memory_space<vmem>>, vector<1x16x384xbf16>,
    %c0_23 = arith.constant 0 : index
    %c6 = arith.constant 6 : index
    %c0_24 = arith.constant 0 : index
    %12 = vector.load %arg29[%c0_23, %c6, %c0_24] : memref<1x32x384xbf16, #tpu.memory_space<vmem>>, vector<1x16x384xbf16>
    %c0_25 = arith.constant 0 : index
    %c0_26 = arith.constant 0 : index
    %c384 = arith.constant 384 : index
    %13 = vector.load %arg31[%c0_25, %c0_26, %c384] : memref<1x16x2688xbf16, #tpu.memory_space<vmem>>, vector<1x16x384xbf16>
    tpu.vector_store %arg31[%c0_25, %c0_26, %c384], %12 {strides = array<i32>} : memref<1x16x2688xbf16, #tpu.memory_space<vmem>>, vector<1x16x384xbf16>,
    %c0_27 = arith.constant 0 : index
    %c7 = arith.constant 7 : index
    %c0_28 = arith.constant 0 : index
    %14 = vector.load %arg29[%c0_27, %c7, %c0_28] : memref<1x32x384xbf16, #tpu.memory_space<vmem>>, vector<1x16x384xbf16>
    %c0_29 = arith.constant 0 : index
    %c0_30 = arith.constant 0 : index
    %c768 = arith.constant 768 : index
    %15 = vector.load %arg31[%c0_29, %c0_30, %c768] : memref<1x16x2688xbf16, #tpu.memory_space<vmem>>, vector<1x16x384xbf16>
    tpu.vector_store %arg31[%c0_29, %c0_30, %c768], %14 {strides = array<i32>} : memref<1x16x2688xbf16, #tpu.memory_space<vmem>>, vector<1x16x384xbf16>,
    %c0_31 = arith.constant 0 : index
    %c8_32 = arith.constant 8 : index
    %c0_33 = arith.constant 0 : index
    %16 = vector.load %arg29[%c0_31, %c8_32, %c0_33] : memref<1x32x384xbf16, #tpu.memory_space<vmem>>, vector<1x16x384xbf16>
    %c0_34 = arith.constant 0 : index
    %c0_35 = arith.constant 0 : index
    %c1152 = arith.constant 1152 : index
    %17 = vector.load %arg31[%c0_34, %c0_35, %c1152] : memref<1x16x2688xbf16, #tpu.memory_space<vmem>>, vector<1x16x384xbf16>
    tpu.vector_store %arg31[%c0_34, %c0_35, %c1152], %16 {strides = array<i32>} : memref<1x16x2688xbf16, #tpu.memory_space<vmem>>, vector<1x16x384xbf16>,
    %c0_36 = arith.constant 0 : index
    %c9 = arith.constant 9 : index
    %c0_37 = arith.constant 0 : index
    %18 = vector.load %arg29[%c0_36, %c9, %c0_37] : memref<1x32x384xbf16, #tpu.memory_space<vmem>>, vector<1x16x384xbf16>
    %c0_38 = arith.constant 0 : index
    %c0_39 = arith.constant 0 : index
    %c1536 = arith.constant 1536 : index
    %19 = vector.load %arg31[%c0_38, %c0_39, %c1536] : memref<1x16x2688xbf16, #tpu.memory_space<vmem>>, vector<1x16x384xbf16>
    tpu.vector_store %arg31[%c0_38, %c0_39, %c1536], %18 {strides = array<i32>} : memref<1x16x2688xbf16, #tpu.memory_space<vmem>>, vector<1x16x384xbf16>,
    %c0_40 = arith.constant 0 : index
    %c10 = arith.constant 10 : index
    %c0_41 = arith.constant 0 : index
    %20 = vector.load %arg29[%c0_40, %c10, %c0_41] : memref<1x32x384xbf16, #tpu.memory_space<vmem>>, vector<1x16x384xbf16>
    %c0_42 = arith.constant 0 : index
    %c0_43 = arith.constant 0 : index
    %c1920 = arith.constant 1920 : index
    %21 = vector.load %arg31[%c0_42, %c0_43, %c1920] : memref<1x16x2688xbf16, #tpu.memory_space<vmem>>, vector<1x16x384xbf16>
    tpu.vector_store %arg31[%c0_42, %c0_43, %c1920], %20 {strides = array<i32>} : memref<1x16x2688xbf16, #tpu.memory_space<vmem>>, vector<1x16x384xbf16>,
    %c0_44 = arith.constant 0 : index
    %c11 = arith.constant 11 : index
    %c0_45 = arith.constant 0 : index
    %22 = vector.load %arg29[%c0_44, %c11, %c0_45] : memref<1x32x384xbf16, #tpu.memory_space<vmem>>, vector<1x16x384xbf16>
    %c0_46 = arith.constant 0 : index
    %c0_47 = arith.constant 0 : index
    %c2304 = arith.constant 2304 : index
    %23 = vector.load %arg31[%c0_46, %c0_47, %c2304] : memref<1x16x2688xbf16, #tpu.memory_space<vmem>>, vector<1x16x384xbf16>
    tpu.vector_store %arg31[%c0_46, %c0_47, %c2304], %22 {strides = array<i32>} : memref<1x16x2688xbf16, #tpu.memory_space<vmem>>, vector<1x16x384xbf16>,
    %c0_48 = arith.constant 0 : index
    %c0_49 = arith.constant 0 : index
    %c0_50 = arith.constant 0 : index
    %24 = vector.load %arg31[%c0_48, %c0_49, %c0_50] : memref<1x16x2688xbf16, #tpu.memory_space<vmem>>, vector<1x16x2688xbf16>
    %25 = vector.shape_cast %24 : vector<1x16x2688xbf16> to vector<16x2688xbf16>
    %c0_51 = arith.constant 0 : index
    %c0_52 = arith.constant 0 : index
    %26 = vector.load %arg2[%c0_51, %c0_52] : memref<2688x128xbf16, #tpu.memory_space<vmem>>, vector<2688x128xbf16>
    %cst_53 = arith.constant dense<0.000000e+00> : vector<16x128xf32>
    %27 = tpu.matmul %25, %26, %cst_53 {dimension_numbers = #tpu.dot_dimension_numbers<[1], [0], [0], [1], [0, 0, 1, 1], [], []>} : vector<16x2688xbf16>, vector<2688x128xbf16>, vector<16x128xf32> -> vector<16x128xf32>
    %c0_54 = arith.constant 0 : index
    %c0_55 = arith.constant 0 : index
    %28 = vector.load %arg3[%c0_54, %c0_55] : memref<1x128xf32, #tpu.memory_space<vmem>>, vector<1x128xf32>
    %29 = vector.broadcast %28 : vector<1x128xf32> to vector<16x128xf32>
    %30 = arith.addf %27, %29 : vector<16x128xf32>
    %cst_56 = arith.constant 0.000000e+00 : f32
    %31 = vector.broadcast %cst_56 : f32 to vector<16x128xf32>
    %32 = arith.maximumf %30, %31 : vector<16x128xf32>
    %33 = vector.shape_cast %32 : vector<16x128xf32> to vector<1x16x128xf32>
    %cst_57 = arith.constant dense<0.000000e+00> : vector<1x128xf32>
    %34 = vector.multi_reduction <add>, %33, %cst_57 [1] : vector<1x16x128xf32> to vector<1x128xf32>
    %cst_58 = arith.constant 1.600000e+01 : f32
    %35 = vector.broadcast %cst_58 : f32 to vector<1x128xf32>
    %36 = arith.divf %34, %35 : vector<1x128xf32>
    %c0_59 = arith.constant 0 : index
    %c0_60 = arith.constant 0 : index
    %37 = vector.load %arg4[%c0_59, %c0_60] : memref<128x8xf32, #tpu.memory_space<vmem>>, vector<128x8xf32>
    %cst_61 = arith.constant dense<0.000000e+00> : vector<1x8xf32>
    %38 = tpu.matmul %36, %37, %cst_61 {dimension_numbers = #tpu.dot_dimension_numbers<[1], [0], [0], [1], [0, 0, 1, 1], [], []>} : vector<1x128xf32>, vector<128x8xf32>, vector<1x8xf32> -> vector<1x8xf32>
    %c0_62 = arith.constant 0 : index
    %c0_63 = arith.constant 0 : index
    %39 = vector.load %arg5[%c0_62, %c0_63] : memref<1x8xf32, #tpu.memory_space<vmem>>, vector<1x8xf32>
    %40 = arith.addf %38, %39 : vector<1x8xf32>
    %cst_64 = arith.constant 0.000000e+00 : f32
    %41 = vector.broadcast %cst_64 : f32 to vector<1x8xf32>
    %42 = arith.maximumf %40, %41 : vector<1x8xf32>
    %c0_65 = arith.constant 0 : index
    %c0_66 = arith.constant 0 : index
    %43 = vector.load %arg6[%c0_65, %c0_66] : memref<8x128xf32, #tpu.memory_space<vmem>>, vector<8x128xf32>
    %cst_67 = arith.constant dense<0.000000e+00> : vector<1x128xf32>
    %44 = tpu.matmul %42, %43, %cst_67 {dimension_numbers = #tpu.dot_dimension_numbers<[1], [0], [0], [1], [0, 0, 1, 1], [], []>} : vector<1x8xf32>, vector<8x128xf32>, vector<1x128xf32> -> vector<1x128xf32>
    %c0_68 = arith.constant 0 : index
    %c0_69 = arith.constant 0 : index
    %45 = vector.load %arg7[%c0_68, %c0_69] : memref<1x128xf32, #tpu.memory_space<vmem>>, vector<1x128xf32>
    %46 = arith.addf %44, %45 : vector<1x128xf32>
    %47 = arith.negf %46 : vector<1x128xf32>
    %48 = math.exp %47 : vector<1x128xf32>
    %cst_70 = arith.constant 1.000000e+00 : f32
    %49 = vector.broadcast %cst_70 : f32 to vector<1x128xf32>
    %50 = arith.addf %49, %48 : vector<1x128xf32>
    %51 = arith.divf %49, %50 : vector<1x128xf32>
    %52 = vector.shape_cast %51 : vector<1x128xf32> to vector<1x1x128xf32>
    %53 = vector.broadcast %52 : vector<1x1x128xf32> to vector<1x16x128xf32>
    %54 = arith.mulf %33, %53 : vector<1x16x128xf32>
    %55 = arith.truncf %54 : vector<1x16x128xf32> to vector<1x16x128xbf16>
    %c0_71 = arith.constant 0 : index
    %c8_72 = arith.constant 8 : index
    %c0_73 = arith.constant 0 : index
    %56 = vector.load %arg30[%c0_71, %c8_72, %c0_73] : memref<1x32x128xbf16, #tpu.memory_space<vmem>>, vector<1x16x128xbf16>
    tpu.vector_store %arg30[%c0_71, %c8_72, %c0_73], %55 {strides = array<i32>} : memref<1x32x128xbf16, #tpu.memory_space<vmem>>, vector<1x16x128xbf16>,
    %c0_74 = arith.constant 0 : index
    %c4 = arith.constant 4 : index
    %c0_75 = arith.constant 0 : index
    %57 = vector.load %arg30[%c0_74, %c4, %c0_75] : memref<1x32x128xbf16, #tpu.memory_space<vmem>>, vector<1x16x128xbf16>
    %c0_76 = arith.constant 0 : index
    %c0_77 = arith.constant 0 : index
    %c0_78 = arith.constant 0 : index
    %58 = vector.load %arg31[%c0_76, %c0_77, %c0_78] : memref<1x16x2688xbf16, #tpu.memory_space<vmem>>, vector<1x16x128xbf16>
    tpu.vector_store %arg31[%c0_76, %c0_77, %c0_78], %57 {strides = array<i32>} : memref<1x16x2688xbf16, #tpu.memory_space<vmem>>, vector<1x16x128xbf16>,
    %c0_79 = arith.constant 0 : index
    %c5_80 = arith.constant 5 : index
    %c0_81 = arith.constant 0 : index
    %59 = vector.load %arg30[%c0_79, %c5_80, %c0_81] : memref<1x32x128xbf16, #tpu.memory_space<vmem>>, vector<1x16x128xbf16>
    %c0_82 = arith.constant 0 : index
    %c0_83 = arith.constant 0 : index
    %c128 = arith.constant 128 : index
    %60 = vector.load %arg31[%c0_82, %c0_83, %c128] : memref<1x16x2688xbf16, #tpu.memory_space<vmem>>, vector<1x16x128xbf16>
    tpu.vector_store %arg31[%c0_82, %c0_83, %c128], %59 {strides = array<i32>} : memref<1x16x2688xbf16, #tpu.memory_space<vmem>>, vector<1x16x128xbf16>,
    %c0_84 = arith.constant 0 : index
    %c6_85 = arith.constant 6 : index
    %c0_86 = arith.constant 0 : index
    %61 = vector.load %arg30[%c0_84, %c6_85, %c0_86] : memref<1x32x128xbf16, #tpu.memory_space<vmem>>, vector<1x16x128xbf16>
    %c0_87 = arith.constant 0 : index
    %c0_88 = arith.constant 0 : index
    %c256 = arith.constant 256 : index
    %62 = vector.load %arg31[%c0_87, %c0_88, %c256] : memref<1x16x2688xbf16, #tpu.memory_space<vmem>>, vector<1x16x128xbf16>
    tpu.vector_store %arg31[%c0_87, %c0_88, %c256], %61 {strides = array<i32>} : memref<1x16x2688xbf16, #tpu.memory_space<vmem>>, vector<1x16x128xbf16>,
    %c0_89 = arith.constant 0 : index
    %c7_90 = arith.constant 7 : index
    %c0_91 = arith.constant 0 : index
    %63 = vector.load %arg30[%c0_89, %c7_90, %c0_91] : memref<1x32x128xbf16, #tpu.memory_space<vmem>>, vector<1x16x128xbf16>
    %c0_92 = arith.constant 0 : index
    %c0_93 = arith.constant 0 : index
    %c384_94 = arith.constant 384 : index
    %64 = vector.load %arg31[%c0_92, %c0_93, %c384_94] : memref<1x16x2688xbf16, #tpu.memory_space<vmem>>, vector<1x16x128xbf16>
    tpu.vector_store %arg31[%c0_92, %c0_93, %c384_94], %63 {strides = array<i32>} : memref<1x16x2688xbf16, #tpu.memory_space<vmem>>, vector<1x16x128xbf16>,
    %c0_95 = arith.constant 0 : index
    %c8_96 = arith.constant 8 : index
    %c0_97 = arith.constant 0 : index
    %65 = vector.load %arg30[%c0_95, %c8_96, %c0_97] : memref<1x32x128xbf16, #tpu.memory_space<vmem>>, vector<1x16x128xbf16>
    %c0_98 = arith.constant 0 : index
    %c0_99 = arith.constant 0 : index
    %c512 = arith.constant 512 : index
    %66 = vector.load %arg31[%c0_98, %c0_99, %c512] : memref<1x16x2688xbf16, #tpu.memory_space<vmem>>, vector<1x16x128xbf16>
    tpu.vector_store %arg31[%c0_98, %c0_99, %c512], %65 {strides = array<i32>} : memref<1x16x2688xbf16, #tpu.memory_space<vmem>>, vector<1x16x128xbf16>,
    %c0_100 = arith.constant 0 : index
    %c9_101 = arith.constant 9 : index
    %c0_102 = arith.constant 0 : index
    %67 = vector.load %arg30[%c0_100, %c9_101, %c0_102] : memref<1x32x128xbf16, #tpu.memory_space<vmem>>, vector<1x16x128xbf16>
    %c0_103 = arith.constant 0 : index
    %c0_104 = arith.constant 0 : index
    %c640 = arith.constant 640 : index
    %68 = vector.load %arg31[%c0_103, %c0_104, %c640] : memref<1x16x2688xbf16, #tpu.memory_space<vmem>>, vector<1x16x128xbf16>
    tpu.vector_store %arg31[%c0_103, %c0_104, %c640], %67 {strides = array<i32>} : memref<1x16x2688xbf16, #tpu.memory_space<vmem>>, vector<1x16x128xbf16>,
    %c0_105 = arith.constant 0 : index
    %c10_106 = arith.constant 10 : index
    %c0_107 = arith.constant 0 : index
    %69 = vector.load %arg30[%c0_105, %c10_106, %c0_107] : memref<1x32x128xbf16, #tpu.memory_space<vmem>>, vector<1x16x128xbf16>
    %c0_108 = arith.constant 0 : index
    %c0_109 = arith.constant 0 : index
    %c768_110 = arith.constant 768 : index
    %70 = vector.load %arg31[%c0_108, %c0_109, %c768_110] : memref<1x16x2688xbf16, #tpu.memory_space<vmem>>, vector<1x16x128xbf16>
    tpu.vector_store %arg31[%c0_108, %c0_109, %c768_110], %69 {strides = array<i32>} : memref<1x16x2688xbf16, #tpu.memory_space<vmem>>, vector<1x16x128xbf16>,
    %c0_111 = arith.constant 0 : index
    %c11_112 = arith.constant 11 : index
    %c0_113 = arith.constant 0 : index
    %71 = vector.load %arg30[%c0_111, %c11_112, %c0_113] : memref<1x32x128xbf16, #tpu.memory_space<vmem>>, vector<1x16x128xbf16>
    %c0_114 = arith.constant 0 : index
    %c0_115 = arith.constant 0 : index
    %c896 = arith.constant 896 : index
    %72 = vector.load %arg31[%c0_114, %c0_115, %c896] : memref<1x16x2688xbf16, #tpu.memory_space<vmem>>, vector<1x16x128xbf16>
    tpu.vector_store %arg31[%c0_114, %c0_115, %c896], %71 {strides = array<i32>} : memref<1x16x2688xbf16, #tpu.memory_space<vmem>>, vector<1x16x128xbf16>,
    %c0_116 = arith.constant 0 : index
    %c12 = arith.constant 12 : index
    %c0_117 = arith.constant 0 : index
    %73 = vector.load %arg30[%c0_116, %c12, %c0_117] : memref<1x32x128xbf16, #tpu.memory_space<vmem>>, vector<1x16x128xbf16>
    %c0_118 = arith.constant 0 : index
    %c0_119 = arith.constant 0 : index
    %c1024 = arith.constant 1024 : index
    %74 = vector.load %arg31[%c0_118, %c0_119, %c1024] : memref<1x16x2688xbf16, #tpu.memory_space<vmem>>, vector<1x16x128xbf16>
    tpu.vector_store %arg31[%c0_118, %c0_119, %c1024], %73 {strides = array<i32>} : memref<1x16x2688xbf16, #tpu.memory_space<vmem>>, vector<1x16x128xbf16>,
    %c0_120 = arith.constant 0 : index
    %c0_121 = arith.constant 0 : index
    %c0_122 = arith.constant 0 : index
    %75 = vector.load %arg31[%c0_120, %c0_121, %c0_122] : memref<1x16x2688xbf16, #tpu.memory_space<vmem>>, vector<1x16x1152xbf16>
    %76 = vector.shape_cast %75 : vector<1x16x1152xbf16> to vector<16x1152xbf16>
    %c0_123 = arith.constant 0 : index
    %c0_124 = arith.constant 0 : index
    %77 = vector.load %arg8[%c0_123, %c0_124] : memref<1152x128xbf16, #tpu.memory_space<vmem>>, vector<1152x128xbf16>
    %cst_125 = arith.constant dense<0.000000e+00> : vector<16x128xf32>
    %78 = tpu.matmul %76, %77, %cst_125 {dimension_numbers = #tpu.dot_dimension_numbers<[1], [0], [0], [1], [0, 0, 1, 1], [], []>} : vector<16x1152xbf16>, vector<1152x128xbf16>, vector<16x128xf32> -> vector<16x128xf32>
    %c0_126 = arith.constant 0 : index
    %c0_127 = arith.constant 0 : index
    %79 = vector.load %arg9[%c0_126, %c0_127] : memref<1x128xf32, #tpu.memory_space<vmem>>, vector<1x128xf32>
    %80 = vector.broadcast %79 : vector<1x128xf32> to vector<16x128xf32>
    %81 = arith.addf %78, %80 : vector<16x128xf32>
    %cst_128 = arith.constant 0.000000e+00 : f32
    %82 = vector.broadcast %cst_128 : f32 to vector<16x128xf32>
    %83 = arith.maximumf %81, %82 : vector<16x128xf32>
    %84 = vector.shape_cast %83 : vector<16x128xf32> to vector<1x16x128xf32>
    %cst_129 = arith.constant dense<0.000000e+00> : vector<1x128xf32>
    %85 = vector.multi_reduction <add>, %84, %cst_129 [1] : vector<1x16x128xf32> to vector<1x128xf32>
    %cst_130 = arith.constant 1.600000e+01 : f32
    %86 = vector.broadcast %cst_130 : f32 to vector<1x128xf32>
    %87 = arith.divf %85, %86 : vector<1x128xf32>
    %c0_131 = arith.constant 0 : index
    %c0_132 = arith.constant 0 : index
    %88 = vector.load %arg10[%c0_131, %c0_132] : memref<128x8xf32, #tpu.memory_space<vmem>>, vector<128x8xf32>
    %cst_133 = arith.constant dense<0.000000e+00> : vector<1x8xf32>
    %89 = tpu.matmul %87, %88, %cst_133 {dimension_numbers = #tpu.dot_dimension_numbers<[1], [0], [0], [1], [0, 0, 1, 1], [], []>} : vector<1x128xf32>, vector<128x8xf32>, vector<1x8xf32> -> vector<1x8xf32>
    %c0_134 = arith.constant 0 : index
    %c0_135 = arith.constant 0 : index
    %90 = vector.load %arg11[%c0_134, %c0_135] : memref<1x8xf32, #tpu.memory_space<vmem>>, vector<1x8xf32>
    %91 = arith.addf %89, %90 : vector<1x8xf32>
    %cst_136 = arith.constant 0.000000e+00 : f32
    %92 = vector.broadcast %cst_136 : f32 to vector<1x8xf32>
    %93 = arith.maximumf %91, %92 : vector<1x8xf32>
    %c0_137 = arith.constant 0 : index
    %c0_138 = arith.constant 0 : index
    %94 = vector.load %arg12[%c0_137, %c0_138] : memref<8x128xf32, #tpu.memory_space<vmem>>, vector<8x128xf32>
    %cst_139 = arith.constant dense<0.000000e+00> : vector<1x128xf32>
    %95 = tpu.matmul %93, %94, %cst_139 {dimension_numbers = #tpu.dot_dimension_numbers<[1], [0], [0], [1], [0, 0, 1, 1], [], []>} : vector<1x8xf32>, vector<8x128xf32>, vector<1x128xf32> -> vector<1x128xf32>
    %c0_140 = arith.constant 0 : index
    %c0_141 = arith.constant 0 : index
    %96 = vector.load %arg13[%c0_140, %c0_141] : memref<1x128xf32, #tpu.memory_space<vmem>>, vector<1x128xf32>
    %97 = arith.addf %95, %96 : vector<1x128xf32>
    %98 = arith.negf %97 : vector<1x128xf32>
    %99 = math.exp %98 : vector<1x128xf32>
    %cst_142 = arith.constant 1.000000e+00 : f32
    %100 = vector.broadcast %cst_142 : f32 to vector<1x128xf32>
    %101 = arith.addf %100, %99 : vector<1x128xf32>
    %102 = arith.divf %100, %101 : vector<1x128xf32>
    %103 = vector.shape_cast %102 : vector<1x128xf32> to vector<1x1x128xf32>
    %104 = vector.broadcast %103 : vector<1x1x128xf32> to vector<1x16x128xf32>
    %105 = arith.mulf %84, %104 : vector<1x16x128xf32>
    %106 = arith.truncf %105 : vector<1x16x128xf32> to vector<1x16x128xbf16>
    %c0_143 = arith.constant 0 : index
    %c8_144 = arith.constant 8 : index
    %c0_145 = arith.constant 0 : index
    %107 = vector.load %arg30[%c0_143, %c8_144, %c0_145] : memref<1x32x128xbf16, #tpu.memory_space<vmem>>, vector<1x16x128xbf16>
    tpu.vector_store %arg30[%c0_143, %c8_144, %c0_145], %106 {strides = array<i32>} : memref<1x32x128xbf16, #tpu.memory_space<vmem>>, vector<1x16x128xbf16>,
    %c0_146 = arith.constant 0 : index
    %c4_147 = arith.constant 4 : index
    %c0_148 = arith.constant 0 : index
    %108 = vector.load %arg30[%c0_146, %c4_147, %c0_148] : memref<1x32x128xbf16, #tpu.memory_space<vmem>>, vector<1x16x128xbf16>
    %c0_149 = arith.constant 0 : index
    %c0_150 = arith.constant 0 : index
    %c0_151 = arith.constant 0 : index
    %109 = vector.load %arg31[%c0_149, %c0_150, %c0_151] : memref<1x16x2688xbf16, #tpu.memory_space<vmem>>, vector<1x16x128xbf16>
    tpu.vector_store %arg31[%c0_149, %c0_150, %c0_151], %108 {strides = array<i32>} : memref<1x16x2688xbf16, #tpu.memory_space<vmem>>, vector<1x16x128xbf16>,
    %c0_152 = arith.constant 0 : index
    %c5_153 = arith.constant 5 : index
    %c0_154 = arith.constant 0 : index
    %110 = vector.load %arg30[%c0_152, %c5_153, %c0_154] : memref<1x32x128xbf16, #tpu.memory_space<vmem>>, vector<1x16x128xbf16>
    %c0_155 = arith.constant 0 : index
    %c0_156 = arith.constant 0 : index
    %c128_157 = arith.constant 128 : index
    %111 = vector.load %arg31[%c0_155, %c0_156, %c128_157] : memref<1x16x2688xbf16, #tpu.memory_space<vmem>>, vector<1x16x128xbf16>
    tpu.vector_store %arg31[%c0_155, %c0_156, %c128_157], %110 {strides = array<i32>} : memref<1x16x2688xbf16, #tpu.memory_space<vmem>>, vector<1x16x128xbf16>,
    %c0_158 = arith.constant 0 : index
    %c6_159 = arith.constant 6 : index
    %c0_160 = arith.constant 0 : index
    %112 = vector.load %arg30[%c0_158, %c6_159, %c0_160] : memref<1x32x128xbf16, #tpu.memory_space<vmem>>, vector<1x16x128xbf16>
    %c0_161 = arith.constant 0 : index
    %c0_162 = arith.constant 0 : index
    %c256_163 = arith.constant 256 : index
    %113 = vector.load %arg31[%c0_161, %c0_162, %c256_163] : memref<1x16x2688xbf16, #tpu.memory_space<vmem>>, vector<1x16x128xbf16>
    tpu.vector_store %arg31[%c0_161, %c0_162, %c256_163], %112 {strides = array<i32>} : memref<1x16x2688xbf16, #tpu.memory_space<vmem>>, vector<1x16x128xbf16>,
    %c0_164 = arith.constant 0 : index
    %c7_165 = arith.constant 7 : index
    %c0_166 = arith.constant 0 : index
    %114 = vector.load %arg30[%c0_164, %c7_165, %c0_166] : memref<1x32x128xbf16, #tpu.memory_space<vmem>>, vector<1x16x128xbf16>
    %c0_167 = arith.constant 0 : index
    %c0_168 = arith.constant 0 : index
    %c384_169 = arith.constant 384 : index
    %115 = vector.load %arg31[%c0_167, %c0_168, %c384_169] : memref<1x16x2688xbf16, #tpu.memory_space<vmem>>, vector<1x16x128xbf16>
    tpu.vector_store %arg31[%c0_167, %c0_168, %c384_169], %114 {strides = array<i32>} : memref<1x16x2688xbf16, #tpu.memory_space<vmem>>, vector<1x16x128xbf16>,
    %c0_170 = arith.constant 0 : index
    %c8_171 = arith.constant 8 : index
    %c0_172 = arith.constant 0 : index
    %116 = vector.load %arg30[%c0_170, %c8_171, %c0_172] : memref<1x32x128xbf16, #tpu.memory_space<vmem>>, vector<1x16x128xbf16>
    %c0_173 = arith.constant 0 : index
    %c0_174 = arith.constant 0 : index
    %c512_175 = arith.constant 512 : index
    %117 = vector.load %arg31[%c0_173, %c0_174, %c512_175] : memref<1x16x2688xbf16, #tpu.memory_space<vmem>>, vector<1x16x128xbf16>
    tpu.vector_store %arg31[%c0_173, %c0_174, %c512_175], %116 {strides = array<i32>} : memref<1x16x2688xbf16, #tpu.memory_space<vmem>>, vector<1x16x128xbf16>,
    %c0_176 = arith.constant 0 : index
    %c9_177 = arith.constant 9 : index
    %c0_178 = arith.constant 0 : index
    %118 = vector.load %arg30[%c0_176, %c9_177, %c0_178] : memref<1x32x128xbf16, #tpu.memory_space<vmem>>, vector<1x16x128xbf16>
    %c0_179 = arith.constant 0 : index
    %c0_180 = arith.constant 0 : index
    %c640_181 = arith.constant 640 : index
    %119 = vector.load %arg31[%c0_179, %c0_180, %c640_181] : memref<1x16x2688xbf16, #tpu.memory_space<vmem>>, vector<1x16x128xbf16>
    tpu.vector_store %arg31[%c0_179, %c0_180, %c640_181], %118 {strides = array<i32>} : memref<1x16x2688xbf16, #tpu.memory_space<vmem>>, vector<1x16x128xbf16>,
    %c0_182 = arith.constant 0 : index
    %c10_183 = arith.constant 10 : index
    %c0_184 = arith.constant 0 : index
    %120 = vector.load %arg30[%c0_182, %c10_183, %c0_184] : memref<1x32x128xbf16, #tpu.memory_space<vmem>>, vector<1x16x128xbf16>
    %c0_185 = arith.constant 0 : index
    %c0_186 = arith.constant 0 : index
    %c768_187 = arith.constant 768 : index
    %121 = vector.load %arg31[%c0_185, %c0_186, %c768_187] : memref<1x16x2688xbf16, #tpu.memory_space<vmem>>, vector<1x16x128xbf16>
    tpu.vector_store %arg31[%c0_185, %c0_186, %c768_187], %120 {strides = array<i32>} : memref<1x16x2688xbf16, #tpu.memory_space<vmem>>, vector<1x16x128xbf16>,
    %c0_188 = arith.constant 0 : index
    %c11_189 = arith.constant 11 : index
    %c0_190 = arith.constant 0 : index
    %122 = vector.load %arg30[%c0_188, %c11_189, %c0_190] : memref<1x32x128xbf16, #tpu.memory_space<vmem>>, vector<1x16x128xbf16>
    %c0_191 = arith.constant 0 : index
    %c0_192 = arith.constant 0 : index
    %c896_193 = arith.constant 896 : index
    %123 = vector.load %arg31[%c0_191, %c0_192, %c896_193] : memref<1x16x2688xbf16, #tpu.memory_space<vmem>>, vector<1x16x128xbf16>
    tpu.vector_store %arg31[%c0_191, %c0_192, %c896_193], %122 {strides = array<i32>} : memref<1x16x2688xbf16, #tpu.memory_space<vmem>>, vector<1x16x128xbf16>,
    %c0_194 = arith.constant 0 : index
    %c12_195 = arith.constant 12 : index
    %c0_196 = arith.constant 0 : index
    %124 = vector.load %arg30[%c0_194, %c12_195, %c0_196] : memref<1x32x128xbf16, #tpu.memory_space<vmem>>, vector<1x16x128xbf16>
    %c0_197 = arith.constant 0 : index
    %c0_198 = arith.constant 0 : index
    %c1024_199 = arith.constant 1024 : index
    %125 = vector.load %arg31[%c0_197, %c0_198, %c1024_199] : memref<1x16x2688xbf16, #tpu.memory_space<vmem>>, vector<1x16x128xbf16>
    tpu.vector_store %arg31[%c0_197, %c0_198, %c1024_199], %124 {strides = array<i32>} : memref<1x16x2688xbf16, #tpu.memory_space<vmem>>, vector<1x16x128xbf16>,
    %c0_200 = arith.constant 0 : index
    %c0_201 = arith.constant 0 : index
    %c0_202 = arith.constant 0 : index
    %126 = vector.load %arg31[%c0_200, %c0_201, %c0_202] : memref<1x16x2688xbf16, #tpu.memory_space<vmem>>, vector<1x16x1152xbf16>
    %127 = vector.shape_cast %126 : vector<1x16x1152xbf16> to vector<16x1152xbf16>
    %c0_203 = arith.constant 0 : index
    %c0_204 = arith.constant 0 : index
    %128 = vector.load %arg14[%c0_203, %c0_204] : memref<1152x128xbf16, #tpu.memory_space<vmem>>, vector<1152x128xbf16>
    %cst_205 = arith.constant dense<0.000000e+00> : vector<16x128xf32>
    %129 = tpu.matmul %127, %128, %cst_205 {dimension_numbers = #tpu.dot_dimension_numbers<[1], [0], [0], [1], [0, 0, 1, 1], [], []>} : vector<16x1152xbf16>, vector<1152x128xbf16>, vector<16x128xf32> -> vector<16x128xf32>
    %c0_206 = arith.constant 0 : index
    %c0_207 = arith.constant 0 : index
    %130 = vector.load %arg15[%c0_206, %c0_207] : memref<1x128xf32, #tpu.memory_space<vmem>>, vector<1x128xf32>
    %131 = vector.broadcast %130 : vector<1x128xf32> to vector<16x128xf32>
    %132 = arith.addf %129, %131 : vector<16x128xf32>
    %cst_208 = arith.constant 0.000000e+00 : f32
    %133 = vector.broadcast %cst_208 : f32 to vector<16x128xf32>
    %134 = arith.maximumf %132, %133 : vector<16x128xf32>
    %135 = vector.shape_cast %134 : vector<16x128xf32> to vector<1x16x128xf32>
    %cst_209 = arith.constant dense<0.000000e+00> : vector<1x128xf32>
    %136 = vector.multi_reduction <add>, %135, %cst_209 [1] : vector<1x16x128xf32> to vector<1x128xf32>
    %cst_210 = arith.constant 1.600000e+01 : f32
    %137 = vector.broadcast %cst_210 : f32 to vector<1x128xf32>
    %138 = arith.divf %136, %137 : vector<1x128xf32>
    %c0_211 = arith.constant 0 : index
    %c0_212 = arith.constant 0 : index
    %139 = vector.load %arg16[%c0_211, %c0_212] : memref<128x8xf32, #tpu.memory_space<vmem>>, vector<128x8xf32>
    %cst_213 = arith.constant dense<0.000000e+00> : vector<1x8xf32>
    %140 = tpu.matmul %138, %139, %cst_213 {dimension_numbers = #tpu.dot_dimension_numbers<[1], [0], [0], [1], [0, 0, 1, 1], [], []>} : vector<1x128xf32>, vector<128x8xf32>, vector<1x8xf32> -> vector<1x8xf32>
    %c0_214 = arith.constant 0 : index
    %c0_215 = arith.constant 0 : index
    %141 = vector.load %arg17[%c0_214, %c0_215] : memref<1x8xf32, #tpu.memory_space<vmem>>, vector<1x8xf32>
    %142 = arith.addf %140, %141 : vector<1x8xf32>
    %cst_216 = arith.constant 0.000000e+00 : f32
    %143 = vector.broadcast %cst_216 : f32 to vector<1x8xf32>
    %144 = arith.maximumf %142, %143 : vector<1x8xf32>
    %c0_217 = arith.constant 0 : index
    %c0_218 = arith.constant 0 : index
    %145 = vector.load %arg18[%c0_217, %c0_218] : memref<8x128xf32, #tpu.memory_space<vmem>>, vector<8x128xf32>
    %cst_219 = arith.constant dense<0.000000e+00> : vector<1x128xf32>
    %146 = tpu.matmul %144, %145, %cst_219 {dimension_numbers = #tpu.dot_dimension_numbers<[1], [0], [0], [1], [0, 0, 1, 1], [], []>} : vector<1x8xf32>, vector<8x128xf32>, vector<1x128xf32> -> vector<1x128xf32>
    %c0_220 = arith.constant 0 : index
    %c0_221 = arith.constant 0 : index
    %147 = vector.load %arg19[%c0_220, %c0_221] : memref<1x128xf32, #tpu.memory_space<vmem>>, vector<1x128xf32>
    %148 = arith.addf %146, %147 : vector<1x128xf32>
    %149 = arith.negf %148 : vector<1x128xf32>
    %150 = math.exp %149 : vector<1x128xf32>
    %cst_222 = arith.constant 1.000000e+00 : f32
    %151 = vector.broadcast %cst_222 : f32 to vector<1x128xf32>
    %152 = arith.addf %151, %150 : vector<1x128xf32>
    %153 = arith.divf %151, %152 : vector<1x128xf32>
    %154 = vector.shape_cast %153 : vector<1x128xf32> to vector<1x1x128xf32>
    %155 = vector.broadcast %154 : vector<1x1x128xf32> to vector<1x16x128xf32>
    %156 = arith.mulf %135, %155 : vector<1x16x128xf32>
    %157 = arith.truncf %156 : vector<1x16x128xf32> to vector<1x16x128xbf16>
    %c0_223 = arith.constant 0 : index
    %c8_224 = arith.constant 8 : index
    %c0_225 = arith.constant 0 : index
    %158 = vector.load %arg30[%c0_223, %c8_224, %c0_225] : memref<1x32x128xbf16, #tpu.memory_space<vmem>>, vector<1x16x128xbf16>
    tpu.vector_store %arg30[%c0_223, %c8_224, %c0_225], %157 {strides = array<i32>} : memref<1x32x128xbf16, #tpu.memory_space<vmem>>, vector<1x16x128xbf16>,
    %c0_226 = arith.constant 0 : index
    %c4_227 = arith.constant 4 : index
    %c0_228 = arith.constant 0 : index
    %159 = vector.load %arg30[%c0_226, %c4_227, %c0_228] : memref<1x32x128xbf16, #tpu.memory_space<vmem>>, vector<1x16x128xbf16>
    %c0_229 = arith.constant 0 : index
    %c0_230 = arith.constant 0 : index
    %c0_231 = arith.constant 0 : index
    %160 = vector.load %arg31[%c0_229, %c0_230, %c0_231] : memref<1x16x2688xbf16, #tpu.memory_space<vmem>>, vector<1x16x128xbf16>
    tpu.vector_store %arg31[%c0_229, %c0_230, %c0_231], %159 {strides = array<i32>} : memref<1x16x2688xbf16, #tpu.memory_space<vmem>>, vector<1x16x128xbf16>,
    %c0_232 = arith.constant 0 : index
    %c5_233 = arith.constant 5 : index
    %c0_234 = arith.constant 0 : index
    %161 = vector.load %arg30[%c0_232, %c5_233, %c0_234] : memref<1x32x128xbf16, #tpu.memory_space<vmem>>, vector<1x16x128xbf16>
    %c0_235 = arith.constant 0 : index
    %c0_236 = arith.constant 0 : index
    %c128_237 = arith.constant 128 : index
    %162 = vector.load %arg31[%c0_235, %c0_236, %c128_237] : memref<1x16x2688xbf16, #tpu.memory_space<vmem>>, vector<1x16x128xbf16>
    tpu.vector_store %arg31[%c0_235, %c0_236, %c128_237], %161 {strides = array<i32>} : memref<1x16x2688xbf16, #tpu.memory_space<vmem>>, vector<1x16x128xbf16>,
    %c0_238 = arith.constant 0 : index
    %c6_239 = arith.constant 6 : index
    %c0_240 = arith.constant 0 : index
    %163 = vector.load %arg30[%c0_238, %c6_239, %c0_240] : memref<1x32x128xbf16, #tpu.memory_space<vmem>>, vector<1x16x128xbf16>
    %c0_241 = arith.constant 0 : index
    %c0_242 = arith.constant 0 : index
    %c256_243 = arith.constant 256 : index
    %164 = vector.load %arg31[%c0_241, %c0_242, %c256_243] : memref<1x16x2688xbf16, #tpu.memory_space<vmem>>, vector<1x16x128xbf16>
    tpu.vector_store %arg31[%c0_241, %c0_242, %c256_243], %163 {strides = array<i32>} : memref<1x16x2688xbf16, #tpu.memory_space<vmem>>, vector<1x16x128xbf16>,
    %c0_244 = arith.constant 0 : index
    %c7_245 = arith.constant 7 : index
    %c0_246 = arith.constant 0 : index
    %165 = vector.load %arg30[%c0_244, %c7_245, %c0_246] : memref<1x32x128xbf16, #tpu.memory_space<vmem>>, vector<1x16x128xbf16>
    %c0_247 = arith.constant 0 : index
    %c0_248 = arith.constant 0 : index
    %c384_249 = arith.constant 384 : index
    %166 = vector.load %arg31[%c0_247, %c0_248, %c384_249] : memref<1x16x2688xbf16, #tpu.memory_space<vmem>>, vector<1x16x128xbf16>
    tpu.vector_store %arg31[%c0_247, %c0_248, %c384_249], %165 {strides = array<i32>} : memref<1x16x2688xbf16, #tpu.memory_space<vmem>>, vector<1x16x128xbf16>,
    %c0_250 = arith.constant 0 : index
    %c8_251 = arith.constant 8 : index
    %c0_252 = arith.constant 0 : index
    %167 = vector.load %arg30[%c0_250, %c8_251, %c0_252] : memref<1x32x128xbf16, #tpu.memory_space<vmem>>, vector<1x16x128xbf16>
    %c0_253 = arith.constant 0 : index
    %c0_254 = arith.constant 0 : index
    %c512_255 = arith.constant 512 : index
    %168 = vector.load %arg31[%c0_253, %c0_254, %c512_255] : memref<1x16x2688xbf16, #tpu.memory_space<vmem>>, vector<1x16x128xbf16>
    tpu.vector_store %arg31[%c0_253, %c0_254, %c512_255], %167 {strides = array<i32>} : memref<1x16x2688xbf16, #tpu.memory_space<vmem>>, vector<1x16x128xbf16>,
    %c0_256 = arith.constant 0 : index
    %c9_257 = arith.constant 9 : index
    %c0_258 = arith.constant 0 : index
    %169 = vector.load %arg30[%c0_256, %c9_257, %c0_258] : memref<1x32x128xbf16, #tpu.memory_space<vmem>>, vector<1x16x128xbf16>
    %c0_259 = arith.constant 0 : index
    %c0_260 = arith.constant 0 : index
    %c640_261 = arith.constant 640 : index
    %170 = vector.load %arg31[%c0_259, %c0_260, %c640_261] : memref<1x16x2688xbf16, #tpu.memory_space<vmem>>, vector<1x16x128xbf16>
    tpu.vector_store %arg31[%c0_259, %c0_260, %c640_261], %169 {strides = array<i32>} : memref<1x16x2688xbf16, #tpu.memory_space<vmem>>, vector<1x16x128xbf16>,
    %c0_262 = arith.constant 0 : index
    %c10_263 = arith.constant 10 : index
    %c0_264 = arith.constant 0 : index
    %171 = vector.load %arg30[%c0_262, %c10_263, %c0_264] : memref<1x32x128xbf16, #tpu.memory_space<vmem>>, vector<1x16x128xbf16>
    %c0_265 = arith.constant 0 : index
    %c0_266 = arith.constant 0 : index
    %c768_267 = arith.constant 768 : index
    %172 = vector.load %arg31[%c0_265, %c0_266, %c768_267] : memref<1x16x2688xbf16, #tpu.memory_space<vmem>>, vector<1x16x128xbf16>
    tpu.vector_store %arg31[%c0_265, %c0_266, %c768_267], %171 {strides = array<i32>} : memref<1x16x2688xbf16, #tpu.memory_space<vmem>>, vector<1x16x128xbf16>,
    %c0_268 = arith.constant 0 : index
    %c11_269 = arith.constant 11 : index
    %c0_270 = arith.constant 0 : index
    %173 = vector.load %arg30[%c0_268, %c11_269, %c0_270] : memref<1x32x128xbf16, #tpu.memory_space<vmem>>, vector<1x16x128xbf16>
    %c0_271 = arith.constant 0 : index
    %c0_272 = arith.constant 0 : index
    %c896_273 = arith.constant 896 : index
    %174 = vector.load %arg31[%c0_271, %c0_272, %c896_273] : memref<1x16x2688xbf16, #tpu.memory_space<vmem>>, vector<1x16x128xbf16>
    tpu.vector_store %arg31[%c0_271, %c0_272, %c896_273], %173 {strides = array<i32>} : memref<1x16x2688xbf16, #tpu.memory_space<vmem>>, vector<1x16x128xbf16>,
    %c0_274 = arith.constant 0 : index
    %c12_275 = arith.constant 12 : index
    %c0_276 = arith.constant 0 : index
    %175 = vector.load %arg30[%c0_274, %c12_275, %c0_276] : memref<1x32x128xbf16, #tpu.memory_space<vmem>>, vector<1x16x128xbf16>
    %c0_277 = arith.constant 0 : index
    %c0_278 = arith.constant 0 : index
    %c1024_279 = arith.constant 1024 : index
    %176 = vector.load %arg31[%c0_277, %c0_278, %c1024_279] : memref<1x16x2688xbf16, #tpu.memory_space<vmem>>, vector<1x16x128xbf16>
    tpu.vector_store %arg31[%c0_277, %c0_278, %c1024_279], %175 {strides = array<i32>} : memref<1x16x2688xbf16, #tpu.memory_space<vmem>>, vector<1x16x128xbf16>,
    %c0_280 = arith.constant 0 : index
    %c0_281 = arith.constant 0 : index
    %c0_282 = arith.constant 0 : index
    %177 = vector.load %arg31[%c0_280, %c0_281, %c0_282] : memref<1x16x2688xbf16, #tpu.memory_space<vmem>>, vector<1x16x1152xbf16>
    %178 = vector.shape_cast %177 : vector<1x16x1152xbf16> to vector<16x1152xbf16>
    %c0_283 = arith.constant 0 : index
    %c0_284 = arith.constant 0 : index
    %179 = vector.load %arg20[%c0_283, %c0_284] : memref<1152x128xbf16, #tpu.memory_space<vmem>>, vector<1152x128xbf16>
    %cst_285 = arith.constant dense<0.000000e+00> : vector<16x128xf32>
    %180 = tpu.matmul %178, %179, %cst_285 {dimension_numbers = #tpu.dot_dimension_numbers<[1], [0], [0], [1], [0, 0, 1, 1], [], []>} : vector<16x1152xbf16>, vector<1152x128xbf16>, vector<16x128xf32> -> vector<16x128xf32>
    %c0_286 = arith.constant 0 : index
    %c0_287 = arith.constant 0 : index
    %181 = vector.load %arg21[%c0_286, %c0_287] : memref<1x128xf32, #tpu.memory_space<vmem>>, vector<1x128xf32>
    %182 = vector.broadcast %181 : vector<1x128xf32> to vector<16x128xf32>
    %183 = arith.addf %180, %182 : vector<16x128xf32>
    %cst_288 = arith.constant 0.000000e+00 : f32
    %184 = vector.broadcast %cst_288 : f32 to vector<16x128xf32>
    %185 = arith.maximumf %183, %184 : vector<16x128xf32>
    %186 = vector.shape_cast %185 : vector<16x128xf32> to vector<1x16x128xf32>
    %cst_289 = arith.constant dense<0.000000e+00> : vector<1x128xf32>
    %187 = vector.multi_reduction <add>, %186, %cst_289 [1] : vector<1x16x128xf32> to vector<1x128xf32>
    %cst_290 = arith.constant 1.600000e+01 : f32
    %188 = vector.broadcast %cst_290 : f32 to vector<1x128xf32>
    %189 = arith.divf %187, %188 : vector<1x128xf32>
    %c0_291 = arith.constant 0 : index
    %c0_292 = arith.constant 0 : index
    %190 = vector.load %arg22[%c0_291, %c0_292] : memref<128x8xf32, #tpu.memory_space<vmem>>, vector<128x8xf32>
    %cst_293 = arith.constant dense<0.000000e+00> : vector<1x8xf32>
    %191 = tpu.matmul %189, %190, %cst_293 {dimension_numbers = #tpu.dot_dimension_numbers<[1], [0], [0], [1], [0, 0, 1, 1], [], []>} : vector<1x128xf32>, vector<128x8xf32>, vector<1x8xf32> -> vector<1x8xf32>
    %c0_294 = arith.constant 0 : index
    %c0_295 = arith.constant 0 : index
    %192 = vector.load %arg23[%c0_294, %c0_295] : memref<1x8xf32, #tpu.memory_space<vmem>>, vector<1x8xf32>
    %193 = arith.addf %191, %192 : vector<1x8xf32>
    %cst_296 = arith.constant 0.000000e+00 : f32
    %194 = vector.broadcast %cst_296 : f32 to vector<1x8xf32>
    %195 = arith.maximumf %193, %194 : vector<1x8xf32>
    %c0_297 = arith.constant 0 : index
    %c0_298 = arith.constant 0 : index
    %196 = vector.load %arg24[%c0_297, %c0_298] : memref<8x128xf32, #tpu.memory_space<vmem>>, vector<8x128xf32>
    %cst_299 = arith.constant dense<0.000000e+00> : vector<1x128xf32>
    %197 = tpu.matmul %195, %196, %cst_299 {dimension_numbers = #tpu.dot_dimension_numbers<[1], [0], [0], [1], [0, 0, 1, 1], [], []>} : vector<1x8xf32>, vector<8x128xf32>, vector<1x128xf32> -> vector<1x128xf32>
    %c0_300 = arith.constant 0 : index
    %c0_301 = arith.constant 0 : index
    %198 = vector.load %arg25[%c0_300, %c0_301] : memref<1x128xf32, #tpu.memory_space<vmem>>, vector<1x128xf32>
    %199 = arith.addf %197, %198 : vector<1x128xf32>
    %200 = arith.negf %199 : vector<1x128xf32>
    %201 = math.exp %200 : vector<1x128xf32>
    %cst_302 = arith.constant 1.000000e+00 : f32
    %202 = vector.broadcast %cst_302 : f32 to vector<1x128xf32>
    %203 = arith.addf %202, %201 : vector<1x128xf32>
    %204 = arith.divf %202, %203 : vector<1x128xf32>
    %205 = vector.shape_cast %204 : vector<1x128xf32> to vector<1x1x128xf32>
    %206 = vector.broadcast %205 : vector<1x1x128xf32> to vector<1x16x128xf32>
    %207 = arith.mulf %186, %206 : vector<1x16x128xf32>
    %208 = vector.shape_cast %207 : vector<1x16x128xf32> to vector<16x128xf32>
    %209 = arith.truncf %208 : vector<16x128xf32> to vector<16x128xbf16>
    %c0_303 = arith.constant 0 : index
    %c0_304 = arith.constant 0 : index
    %210 = vector.load %arg26[%c0_303, %c0_304] : memref<128x128xbf16, #tpu.memory_space<vmem>>, vector<128x128xbf16>
    %cst_305 = arith.constant dense<0.000000e+00> : vector<16x128xf32>
    %211 = tpu.matmul %209, %210, %cst_305 {dimension_numbers = #tpu.dot_dimension_numbers<[1], [0], [0], [1], [0, 0, 1, 1], [], []>} : vector<16x128xbf16>, vector<128x128xbf16>, vector<16x128xf32> -> vector<16x128xf32>
    %c0_306 = arith.constant 0 : index
    %c0_307 = arith.constant 0 : index
    %212 = vector.load %arg27[%c0_306, %c0_307] : memref<1x128xf32, #tpu.memory_space<vmem>>, vector<1x128xf32>
    %213 = vector.broadcast %212 : vector<1x128xf32> to vector<16x128xf32>
    %214 = arith.addf %211, %213 : vector<16x128xf32>
    %cst_308 = arith.constant dense<0xFF800000> : vector<16xf32>
    %215 = vector.multi_reduction <maximumf>, %214, %cst_308 [1] : vector<16x128xf32> to vector<16xf32>
    %216 = vector.shape_cast %215 : vector<16xf32> to vector<16x1xf32>
    %217 = vector.broadcast %216 : vector<16x1xf32> to vector<16x128xf32>
    %218 = arith.subf %214, %217 : vector<16x128xf32>
    %219 = math.exp %218 : vector<16x128xf32>
    %cst_309 = arith.constant dense<0.000000e+00> : vector<16xf32>
    %220 = vector.multi_reduction <add>, %219, %cst_309 [1] : vector<16x128xf32> to vector<16xf32>
    %221 = vector.shape_cast %220 : vector<16xf32> to vector<16x1xf32>
    %222 = math.log %221 : vector<16x1xf32>
    %223 = vector.broadcast %222 : vector<16x1xf32> to vector<16x128xf32>
    %224 = arith.subf %218, %223 : vector<16x128xf32>
    %225 = vector.shape_cast %224 : vector<16x128xf32> to vector<1x16x128xf32>
    %c0_310 = arith.constant 0 : index
    %c0_311 = arith.constant 0 : index
    %c0_312 = arith.constant 0 : index
    %226 = vector.load %arg28[%c0_310, %c0_311, %c0_312] : memref<1x16x128xf32, #tpu.memory_space<vmem>>, vector<1x16x128xf32>
    tpu.vector_store %arg28[%c0_310, %c0_311, %c0_312], %225 {strides = array<i32>} : memref<1x16x128xf32, #tpu.memory_space<vmem>>, vector<1x16x128xf32>,
    return
  }
  func.func @transform_0(%arg0: i32) -> (i32, i32, i32) {
    %c0_i32 = arith.constant 0 : i32
    %c0_i32_0 = arith.constant 0 : i32
    %c0_i32_1 = arith.constant 0 : i32
    return %arg0, %c0_i32, %c0_i32_0 : i32, i32, i32
  }
  func.func @transform_1(%arg0: i32) -> (i32, i32) {
    %c0_i32 = arith.constant 0 : i32
    %c0_i32_0 = arith.constant 0 : i32
    %c0_i32_1 = arith.constant 0 : i32
    return %c0_i32, %c0_i32_0 : i32, i32
  }
  func.func @transform_2(%arg0: i32) -> (i32, i32) {
    %c0_i32 = arith.constant 0 : i32
    %c0_i32_0 = arith.constant 0 : i32
    %c0_i32_1 = arith.constant 0 : i32
    return %c0_i32, %c0_i32_0 : i32, i32
  }
  func.func @transform_3(%arg0: i32) -> (i32, i32) {
    %c0_i32 = arith.constant 0 : i32
    %c0_i32_0 = arith.constant 0 : i32
    %c0_i32_1 = arith.constant 0 : i32
    return %c0_i32, %c0_i32_0 : i32, i32
  }
  func.func @transform_4(%arg0: i32) -> (i32, i32) {
    %c0_i32 = arith.constant 0 : i32
    %c0_i32_0 = arith.constant 0 : i32
    %c0_i32_1 = arith.constant 0 : i32
    return %c0_i32, %c0_i32_0 : i32, i32
  }
  func.func @transform_5(%arg0: i32) -> (i32, i32) {
    %c0_i32 = arith.constant 0 : i32
    %c0_i32_0 = arith.constant 0 : i32
    %c0_i32_1 = arith.constant 0 : i32
    return %c0_i32, %c0_i32_0 : i32, i32
  }
  func.func @transform_6(%arg0: i32) -> (i32, i32) {
    %c0_i32 = arith.constant 0 : i32
    %c0_i32_0 = arith.constant 0 : i32
    %c0_i32_1 = arith.constant 0 : i32
    return %c0_i32, %c0_i32_0 : i32, i32
  }
  func.func @transform_7(%arg0: i32) -> (i32, i32) {
    %c0_i32 = arith.constant 0 : i32
    %c0_i32_0 = arith.constant 0 : i32
    %c0_i32_1 = arith.constant 0 : i32
    return %c0_i32, %c0_i32_0 : i32, i32
  }
  func.func @transform_8(%arg0: i32) -> (i32, i32) {
    %c0_i32 = arith.constant 0 : i32
    %c0_i32_0 = arith.constant 0 : i32
    %c0_i32_1 = arith.constant 0 : i32
    return %c0_i32, %c0_i32_0 : i32, i32
  }
  func.func @transform_9(%arg0: i32) -> (i32, i32) {
    %c0_i32 = arith.constant 0 : i32
    %c0_i32_0 = arith.constant 0 : i32
    %c0_i32_1 = arith.constant 0 : i32
    return %c0_i32, %c0_i32_0 : i32, i32
  }
  func.func @transform_10(%arg0: i32) -> (i32, i32) {
    %c0_i32 = arith.constant 0 : i32
    %c0_i32_0 = arith.constant 0 : i32
    %c0_i32_1 = arith.constant 0 : i32
    return %c0_i32, %c0_i32_0 : i32, i32
  }
  func.func @transform_11(%arg0: i32) -> (i32, i32) {
    %c0_i32 = arith.constant 0 : i32
    %c0_i32_0 = arith.constant 0 : i32
    %c0_i32_1 = arith.constant 0 : i32
    return %c0_i32, %c0_i32_0 : i32, i32
  }
  func.func @transform_12(%arg0: i32) -> (i32, i32) {
    %c0_i32 = arith.constant 0 : i32
    %c0_i32_0 = arith.constant 0 : i32
    %c0_i32_1 = arith.constant 0 : i32
    return %c0_i32, %c0_i32_0 : i32, i32
  }
  func.func @transform_13(%arg0: i32) -> (i32, i32) {
    %c0_i32 = arith.constant 0 : i32
    %c0_i32_0 = arith.constant 0 : i32
    %c0_i32_1 = arith.constant 0 : i32
    return %c0_i32, %c0_i32_0 : i32, i32
  }
  func.func @transform_14(%arg0: i32) -> (i32, i32) {
    %c0_i32 = arith.constant 0 : i32
    %c0_i32_0 = arith.constant 0 : i32
    %c0_i32_1 = arith.constant 0 : i32
    return %c0_i32, %c0_i32_0 : i32, i32
  }
  func.func @transform_15(%arg0: i32) -> (i32, i32) {
    %c0_i32 = arith.constant 0 : i32
    %c0_i32_0 = arith.constant 0 : i32
    %c0_i32_1 = arith.constant 0 : i32
    return %c0_i32, %c0_i32_0 : i32, i32
  }
  func.func @transform_16(%arg0: i32) -> (i32, i32) {
    %c0_i32 = arith.constant 0 : i32
    %c0_i32_0 = arith.constant 0 : i32
    %c0_i32_1 = arith.constant 0 : i32
    return %c0_i32, %c0_i32_0 : i32, i32
  }
  func.func @transform_17(%arg0: i32) -> (i32, i32) {
    %c0_i32 = arith.constant 0 : i32
    %c0_i32_0 = arith.constant 0 : i32
    %c0_i32_1 = arith.constant 0 : i32
    return %c0_i32, %c0_i32_0 : i32, i32
  }
  func.func @transform_18(%arg0: i32) -> (i32, i32) {
    %c0_i32 = arith.constant 0 : i32
    %c0_i32_0 = arith.constant 0 : i32
    %c0_i32_1 = arith.constant 0 : i32
    return %c0_i32, %c0_i32_0 : i32, i32
  }
  func.func @transform_19(%arg0: i32) -> (i32, i32) {
    %c0_i32 = arith.constant 0 : i32
    %c0_i32_0 = arith.constant 0 : i32
    %c0_i32_1 = arith.constant 0 : i32
    return %c0_i32, %c0_i32_0 : i32, i32
  }
  func.func @transform_20(%arg0: i32) -> (i32, i32) {
    %c0_i32 = arith.constant 0 : i32
    %c0_i32_0 = arith.constant 0 : i32
    %c0_i32_1 = arith.constant 0 : i32
    return %c0_i32, %c0_i32_0 : i32, i32
  }
  func.func @transform_21(%arg0: i32) -> (i32, i32) {
    %c0_i32 = arith.constant 0 : i32
    %c0_i32_0 = arith.constant 0 : i32
    %c0_i32_1 = arith.constant 0 : i32
    return %c0_i32, %c0_i32_0 : i32, i32
  }
  func.func @transform_22(%arg0: i32) -> (i32, i32) {
    %c0_i32 = arith.constant 0 : i32
    %c0_i32_0 = arith.constant 0 : i32
    %c0_i32_1 = arith.constant 0 : i32
    return %c0_i32, %c0_i32_0 : i32, i32
  }
  func.func @transform_23(%arg0: i32) -> (i32, i32) {
    %c0_i32 = arith.constant 0 : i32
    %c0_i32_0 = arith.constant 0 : i32
    %c0_i32_1 = arith.constant 0 : i32
    return %c0_i32, %c0_i32_0 : i32, i32
  }
  func.func @transform_24(%arg0: i32) -> (i32, i32) {
    %c0_i32 = arith.constant 0 : i32
    %c0_i32_0 = arith.constant 0 : i32
    %c0_i32_1 = arith.constant 0 : i32
    return %c0_i32, %c0_i32_0 : i32, i32
  }
  func.func @transform_25(%arg0: i32) -> (i32, i32) {
    %c0_i32 = arith.constant 0 : i32
    %c0_i32_0 = arith.constant 0 : i32
    %c0_i32_1 = arith.constant 0 : i32
    return %c0_i32, %c0_i32_0 : i32, i32
  }
  func.func @transform_26(%arg0: i32) -> (i32, i32) {
    %c0_i32 = arith.constant 0 : i32
    %c0_i32_0 = arith.constant 0 : i32
    %c0_i32_1 = arith.constant 0 : i32
    return %c0_i32, %c0_i32_0 : i32, i32
  }
  func.func @transform_27(%arg0: i32) -> (i32, i32, i32) {
    %c0_i32 = arith.constant 0 : i32
    %c0_i32_0 = arith.constant 0 : i32
    %c0_i32_1 = arith.constant 0 : i32
    return %arg0, %c0_i32, %c0_i32_0 : i32, i32, i32
  }
}

</mosaic_0001>

<llo_original>
// kernel: _lambda_.1
$region0: #{_lambda_.1}
  #allocation0 [shape = 'u32[]', space=smem, size = 0x4, offset = 0x4, fixed_abs, tag = 'smem constant byte address 0x4 - core index']
  #allocation1 [shape = 'u32[72,128]{1,0:T(1,128)}', space=vmem, size = 0x9000, scoped, tag = 'internal scratch']
  #allocation2 [shape = 'bf16[1,32,384]{2,1,0:T(8,128)(2,1)}', space=vmem, size = 0x6000, scoped, tag = 'scratch operand']
  #allocation3 [shape = 'bf16[1,32,128]{2,1,0:T(8,128)(2,1)}', space=vmem, size = 0x2000, scoped, tag = 'scratch operand']
  #allocation4 [shape = 'bf16[1,16,2688]{2,1,0:T(8,128)(2,1)}', space=vmem, size = 0x15000, scoped, tag = 'scratch operand']
  %s0 = inlined_call_operand.vmem [shape: bf16[2,16,384], index: 0, kind: input, shape index: {}]
  %s1 = inlined_call_operand.hbm [shape: bf16[2688,128], index: 1, kind: input, shape index: {}]
  %s2 = inlined_call_operand.hbm [shape: f32[1,128], index: 2, kind: input, shape index: {}]
  %s3 = inlined_call_operand.hbm [shape: f32[128,8], index: 3, kind: input, shape index: {}]
  %s4 = inlined_call_operand.hbm [shape: f32[1,8], index: 4, kind: input, shape index: {}]
  %s5 = inlined_call_operand.hbm [shape: f32[8,128], index: 5, kind: input, shape index: {}]
  %s6 = inlined_call_operand.hbm [shape: f32[1,128], index: 6, kind: input, shape index: {}]
  %s7 = inlined_call_operand.hbm [shape: bf16[1152,128], index: 7, kind: input, shape index: {}]
  %s8 = inlined_call_operand.hbm [shape: f32[1,128], index: 8, kind: input, shape index: {}]
  %s9 = inlined_call_operand.hbm [shape: f32[128,8], index: 9, kind: input, shape index: {}]
  %s10 = inlined_call_operand.hbm [shape: f32[1,8], index: 10, kind: input, shape index: {}]
  %s11 = inlined_call_operand.hbm [shape: f32[8,128], index: 11, kind: input, shape index: {}]
  %s12 = inlined_call_operand.hbm [shape: f32[1,128], index: 12, kind: input, shape index: {}]
  %s13 = inlined_call_operand.hbm [shape: bf16[1152,128], index: 13, kind: input, shape index: {}]
  %s14 = inlined_call_operand.hbm [shape: f32[1,128], index: 14, kind: input, shape index: {}]
  %s15 = inlined_call_operand.vmem [shape: f32[128,8], index: 15, kind: input, shape index: {}]
  %s16 = inlined_call_operand.hbm [shape: f32[1,8], index: 16, kind: input, shape index: {}]
  %s17 = inlined_call_operand.hbm [shape: f32[8,128], index: 17, kind: input, shape index: {}]
  %s18 = inlined_call_operand.hbm [shape: f32[1,128], index: 18, kind: input, shape index: {}]
  %s19 = inlined_call_operand.hbm [shape: bf16[1152,128], index: 19, kind: input, shape index: {}]
  %s20 = inlined_call_operand.hbm [shape: f32[1,128], index: 20, kind: input, shape index: {}]
  %s21 = inlined_call_operand.vmem [shape: f32[128,8], index: 21, kind: input, shape index: {}]
  %s22 = inlined_call_operand.vmem [shape: f32[1,8], index: 22, kind: input, shape index: {}]
  %s23 = inlined_call_operand.hbm [shape: f32[8,128], index: 23, kind: input, shape index: {}]
  %s24 = inlined_call_operand.vmem [shape: f32[1,128], index: 24, kind: input, shape index: {}]
  %s25 = inlined_call_operand.hbm [shape: bf16[128,128], index: 25, kind: input, shape index: {}]
  %s26 = inlined_call_operand.vmem [shape: f32[1,128], index: 26, kind: input, shape index: {}]
  %s27 = inlined_call_operand.vmem [shape: f32[2,16,128], index: 27, kind: output, shape index: {}]
  %s28 = sld [smem:[#allocation0]]
  $region225: #{_lambda_.1} parent=0
    _
  %s30 = ssub.s32 1, %s28
  %s31 = scalar_select 0, %s30, %s28
  $region1: #{_lambda_.1} parent=0
    #allocation5 [shape = 'u8[688128]{0}', space=vmem, size = 0xa8000, scoped, tag = 'input window, operand 1, single buffered']
    #allocation6 [shape = 's32[2]{0}', space=sflag, size = 0x8, scoped, tag = 'scoped memory for _lambda_.1']
    #allocation7 [shape = 'u8[512]{0}', space=vmem, size = 0x400, scoped, tag = 'input window, operand 2, single buffered']
    #allocation8 [shape = 's32[1]{0}', space=sflag, size = 0x4, scoped, tag = 'scoped memory for _lambda_.1']
    #allocation9 [shape = 'u8[65536]{0}', space=vmem, size = 0x10000, scoped, tag = 'input window, operand 3, single buffered']
    #allocation10 [shape = 'u8[512]{0}', space=vmem, size = 0x400, scoped, tag = 'input window, operand 4, single buffered']
    #allocation11 [shape = 's32[1]{0}', space=sflag, size = 0x4, scoped, tag = 'scoped memory for _lambda_.1']
    #allocation12 [shape = 'u8[4096]{0}', space=vmem, size = 0x1000, scoped, tag = 'input window, operand 5, single buffered']
    #allocation13 [shape = 'u8[512]{0}', space=vmem, size = 0x400, scoped, tag = 'input window, operand 6, single buffered']
    #allocation14 [shape = 's32[1]{0}', space=sflag, size = 0x4, scoped, tag = 'scoped memory for _lambda_.1']
    #allocation15 [shape = 'u8[294912]{0}', space=vmem, size = 0x48000, scoped, tag = 'input window, operand 7, single buffered']
    #allocation16 [shape = 'u8[512]{0}', space=vmem, size = 0x400, scoped, tag = 'input window, operand 8, single buffered']
    #allocation17 [shape = 's32[1]{0}', space=sflag, size = 0x4, scoped, tag = 'scoped memory for _lambda_.1']
    #allocation18 [shape = 'u8[65536]{0}', space=vmem, size = 0x10000, scoped, tag = 'input window, operand 9, single buffered']
    #allocation19 [shape = 'u8[512]{0}', space=vmem, size = 0x400, scoped, tag = 'input window, operand 10, single buffered']
    #allocation20 [shape = 's32[1]{0}', space=sflag, size = 0x4, scoped, tag = 'scoped memory for _lambda_.1']
    #allocation21 [shape = 'u8[4096]{0}', space=vmem, size = 0x1000, scoped, tag = 'input window, operand 11, single buffered']
    #allocation22 [shape = 'u8[512]{0}', space=vmem, size = 0x400, scoped, tag = 'input window, operand 12, single buffered']
    #allocation23 [shape = 's32[1]{0}', space=sflag, size = 0x4, scoped, tag = 'scoped memory for _lambda_.1']
    #allocation24 [shape = 'u8[294912]{0}', space=vmem, size = 0x48000, scoped, tag = 'input window, operand 13, single buffered']
    #allocation25 [shape = 'u8[512]{0}', space=vmem, size = 0x400, scoped, tag = 'input window, operand 14, single buffered']
    #allocation26 [shape = 's32[1]{0}', space=sflag, size = 0x4, scoped, tag = 'scoped memory for _lambda_.1']
    #allocation27 [shape = 'u8[512]{0}', space=vmem, size = 0x400, scoped, tag = 'input window, operand 16, single buffered']
    #allocation28 [shape = 'u8[4096]{0}', space=vmem, size = 0x1000, scoped, tag = 'input window, operand 17, single buffered']
    #allocation29 [shape = 's32[1]{0}', space=sflag, size = 0x4, scoped, tag = 'scoped memory for _lambda_.1']
    #allocation30 [shape = 'u8[512]{0}', space=vmem, size = 0x400, scoped, tag = 'input window, operand 18, single buffered']
    #allocation31 [shape = 'u8[294912]{0}', space=vmem, size = 0x48000, scoped, tag = 'input window, operand 19, single buffered']
    #allocation32 [shape = 's32[1]{0}', space=sflag, size = 0x4, scoped, tag = 'scoped memory for _lambda_.1']
    #allocation33 [shape = 'u8[512]{0}', space=vmem, size = 0x400, scoped, tag = 'input window, operand 20, single buffered']
    #allocation34 [shape = 'u8[4096]{0}', space=vmem, size = 0x1000, scoped, tag = 'input window, operand 23, single buffered']
    #allocation35 [shape = 's32[1]{0}', space=sflag, size = 0x4, scoped, tag = 'scoped memory for _lambda_.1']
    #allocation36 [shape = 'u8[32768]{0}', space=vmem, size = 0x8000, scoped, tag = 'input window, operand 25, single buffered']
    %32 = vsyncpa [#allocation6], 0
    %33 = vsyncpa [#allocation8], 0
    %34 = vsyncpa [#allocation11], 0
    %35 = vsyncpa [#allocation14], 0
    %36 = vsyncpa [#allocation17], 0
    %37 = vsyncpa [#allocation20], 0
    %38 = vsyncpa [#allocation23], 0
    %39 = vsyncpa [#allocation26], 0
    %40 = vsyncpa [#allocation29], 0
    %41 = vsyncpa [#allocation32], 0
    %42 = vsyncpa [#allocation35], 0
    loop: start=0, step=1, limit=4
    $region2: #{_lambda_.1} parent=1 // loop_pre_header
      _
    $region3: #{_lambda_.1} parent=1 // loop_header
      %s44 = sphi 0, %s48
      %p45 = scmp.ge.s32.totalorder %s44, 4
      %s54 = sphi 0, %s56
      %s57 = sphi 0, %s54
      %s58 = sphi 0, %s57
      %s74 = sphi 0, %s58
      %s78 = sphi 0, %s78
      %s80 = sphi 0, %s78
      %s81 = sphi 0, %s80
      %s95 = sphi 0, %s81
      %s99 = sphi 0, %s99
      %s101 = sphi 0, %s99
      %s102 = sphi 0, %s101
      %s116 = sphi 0, %s102
      %s120 = sphi 0, %s120
      %s122 = sphi 0, %s120
      %s123 = sphi 0, %s122
      %s137 = sphi 0, %s123
      %s141 = sphi 0, %s141
      %s143 = sphi 0, %s141
      %s144 = sphi 0, %s143
      %s158 = sphi 0, %s144
      %s162 = sphi 0, %s162
      %s164 = sphi 0, %s162
      %s165 = sphi 0, %s164
      %s179 = sphi 0, %s165
      %s183 = sphi 0, %s183
      %s185 = sphi 0, %s183
      %s186 = sphi 0, %s185
      %s200 = sphi 0, %s186
      %s204 = sphi 0, %s204
      %s206 = sphi 0, %s204
      %s207 = sphi 0, %s206
      %s221 = sphi 0, %s207
      %s225 = sphi 0, %s225
      %s227 = sphi 0, %s225
      %s228 = sphi 0, %s227
      %s242 = sphi 0, %s228
      %s246 = sphi 0, %s246
      %s248 = sphi 0, %s246
      %s249 = sphi 0, %s248
      %s263 = sphi 0, %s249
      %s267 = sphi 0, %s267
      %s269 = sphi 0, %s267
      %s270 = sphi 0, %s269
      %s284 = sphi 0, %s270
      %s288 = sphi 0, %s288
      %s290 = sphi 0, %s288
      %s291 = sphi 0, %s290
      %s305 = sphi 0, %s291
      %s309 = sphi 0, %s309
      %s311 = sphi 0, %s309
      %s312 = sphi 0, %s311
      %s326 = sphi 0, %s312
      %s330 = sphi 0, %s330
      %s332 = sphi 0, %s330
      %s333 = sphi 0, %s332
      %s347 = sphi 0, %s333
      %s351 = sphi 0, %s351
      %s353 = sphi 0, %s351
      %s354 = sphi 0, %s353
      %s368 = sphi 0, %s354
      %s372 = sphi 0, %s372
      %s374 = sphi 0, %s372
      %s375 = sphi 0, %s374
      %s389 = sphi 0, %s375
      %s393 = sphi 0, %s393
      %s395 = sphi 0, %s393
      %s396 = sphi 0, %s395
      %s410 = sphi 0, %s396
      %s414 = sphi 0, %s414
      %s416 = sphi 0, %s414
      %s417 = sphi 0, %s416
      %s431 = sphi 0, %s417
      %s435 = sphi 0, %s435
      %s437 = sphi 0, %s435
      %s438 = sphi 0, %s437
      %s452 = sphi 0, %s438
      %s456 = sphi 0, %s456
      %s458 = sphi 0, %s456
      %s459 = sphi 0, %s458
      %s473 = sphi 0, %s459
      %s477 = sphi 0, %s477
      %s479 = sphi 0, %s477
      %s480 = sphi 0, %s479
      %s494 = sphi 0, %s480
      %s498 = sphi 0, %s498
      %s500 = sphi 0, %s498
      %s501 = sphi 0, %s500
      %s515 = sphi 0, %s501
      %s519 = sphi 0, %s519
      %s521 = sphi 0, %s519
      %s522 = sphi 0, %s521
      %s536 = sphi 0, %s522
      %s540 = sphi 0, %s540
      %s542 = sphi 0, %s540
      %s543 = sphi 0, %s542
      %s557 = sphi 0, %s543
      %s561 = sphi 0, %s561
      %s563 = sphi 0, %s561
      %s564 = sphi 0, %s563
      %s578 = sphi 0, %s564
      %s582 = sphi 0, %s582
      %s584 = sphi 0, %s582
      %s585 = sphi 0, %s584
      %s599 = sphi 0, %s585
      %s603 = sphi 0, %s603
      %s605 = sphi 0, %s603
      %s606 = sphi 0, %s605
      %s620 = sphi 0, %s606
      %s626 = sphi 0, %s628
      %s629 = sphi 0, %s626
      %s630 = sphi 0, %s629
      %s646 = sphi 0, %s630
    $region4: #{_lambda_.1} parent=1 // loop_header_branch
      %47 = sbr.rel (%p45) target = $region8
    $region5: #{_lambda_.1} parent=1 // loop_body
      %s49 = ssub.s32 %s44, 1
      %s50 = ssub.s32 %s44, 2
      %s51 = sadd.s32 %s44, 1
      %s52 = ssub.s32 %s44, %s51
      %p53 = scmp.eq.s32.totalorder %s52, 0
      %s55 = sadd.s32 %s54, 1
      %s56 = scalar_select %p53, %s54, %s55
      %p59 = pneg %p53
      %p60 = scmp.eq.s32.totalorder %s44, 1
      %p61 = por %p59, %p60
      %p62 = scmp.ne.s32.totalorder %s54, %s57
      %p63 = scmp.eq.s32.totalorder %s44, 0
      %p64 = por %p62, %p63
      %p65 = scmp.ne.s32.totalorder %s54, %s57
      %p66 = scmp.eq.s32.totalorder %s49, 1
      %p67 = por %p65, %p66
      %p68 = scmp.ne.s32.totalorder %s57, %s58
      %p69 = scmp.eq.s32.totalorder %s49, 0
      %p70 = por %p68, %p69
      %p71 = scmp.ne.s32.totalorder %s57, %s58
      %p72 = scmp.eq.s32.totalorder %s50, 1
      %p73 = por %p71, %p72
      %p75 = scmp.ne.s32.totalorder %s58, %s74
      %p76 = scmp.eq.s32.totalorder %s50, 0
      %p77 = por %p75, %p76
      %s79 = sadd.s32 %s78, 1
      %p82 = scmp.eq.s32.totalorder %s44, 1
      %p83 = scmp.ne.s32.totalorder %s78, %s80
      %p84 = scmp.eq.s32.totalorder %s44, 0
      %p85 = por %p83, %p84
      %p86 = scmp.ne.s32.totalorder %s78, %s80
      %p87 = scmp.eq.s32.totalorder %s49, 1
      %p88 = por %p86, %p87
      %p89 = scmp.ne.s32.totalorder %s80, %s81
      %p90 = scmp.eq.s32.totalorder %s49, 0
      %p91 = por %p89, %p90
      %p92 = scmp.ne.s32.totalorder %s80, %s81
      %p93 = scmp.eq.s32.totalorder %s50, 1
      %p94 = por %p92, %p93
      %p96 = scmp.ne.s32.totalorder %s81, %s95
      %p97 = scmp.eq.s32.totalorder %s50, 0
      %p98 = por %p96, %p97
      %s100 = sadd.s32 %s99, 1
      %p103 = scmp.eq.s32.totalorder %s44, 1
      %p104 = scmp.ne.s32.totalorder %s99, %s101
      %p105 = scmp.eq.s32.totalorder %s44, 0
      %p106 = por %p104, %p105
      %p107 = scmp.ne.s32.totalorder %s99, %s101
      %p108 = scmp.eq.s32.totalorder %s49, 1
      %p109 = por %p107, %p108
      %p110 = scmp.ne.s32.totalorder %s101, %s102
      %p111 = scmp.eq.s32.totalorder %s49, 0
      %p112 = por %p110, %p111
      %p113 = scmp.ne.s32.totalorder %s101, %s102
      %p114 = scmp.eq.s32.totalorder %s50, 1
      %p115 = por %p113, %p114
      %p117 = scmp.ne.s32.totalorder %s102, %s116
      %p118 = scmp.eq.s32.totalorder %s50, 0
      %p119 = por %p117, %p118
      %s121 = sadd.s32 %s120, 1
      %p124 = scmp.eq.s32.totalorder %s44, 1
      %p125 = scmp.ne.s32.totalorder %s120, %s122
      %p126 = scmp.eq.s32.totalorder %s44, 0
      %p127 = por %p125, %p126
      %p128 = scmp.ne.s32.totalorder %s120, %s122
      %p129 = scmp.eq.s32.totalorder %s49, 1
      %p130 = por %p128, %p129
      %p131 = scmp.ne.s32.totalorder %s122, %s123
      %p132 = scmp.eq.s32.totalorder %s49, 0
      %p133 = por %p131, %p132
      %p134 = scmp.ne.s32.totalorder %s122, %s123
      %p135 = scmp.eq.s32.totalorder %s50, 1
      %p136 = por %p134, %p135
      %p138 = scmp.ne.s32.totalorder %s123, %s137
      %p139 = scmp.eq.s32.totalorder %s50, 0
      %p140 = por %p138, %p139
      %s142 = sadd.s32 %s141, 1
      %p145 = scmp.eq.s32.totalorder %s44, 1
      %p146 = scmp.ne.s32.totalorder %s141, %s143
      %p147 = scmp.eq.s32.totalorder %s44, 0
      %p148 = por %p146, %p147
      %p149 = scmp.ne.s32.totalorder %s141, %s143
      %p150 = scmp.eq.s32.totalorder %s49, 1
      %p151 = por %p149, %p150
      %p152 = scmp.ne.s32.totalorder %s143, %s144
      %p153 = scmp.eq.s32.totalorder %s49, 0
      %p154 = por %p152, %p153
      %p155 = scmp.ne.s32.totalorder %s143, %s144
      %p156 = scmp.eq.s32.totalorder %s50, 1
      %p157 = por %p155, %p156
      %p159 = scmp.ne.s32.totalorder %s144, %s158
      %p160 = scmp.eq.s32.totalorder %s50, 0
      %p161 = por %p159, %p160
      %s163 = sadd.s32 %s162, 1
      %p166 = scmp.eq.s32.totalorder %s44, 1
      %p167 = scmp.ne.s32.totalorder %s162, %s164
      %p168 = scmp.eq.s32.totalorder %s44, 0
      %p169 = por %p167, %p168
      %p170 = scmp.ne.s32.totalorder %s162, %s164
      %p171 = scmp.eq.s32.totalorder %s49, 1
      %p172 = por %p170, %p171
      %p173 = scmp.ne.s32.totalorder %s164, %s165
      %p174 = scmp.eq.s32.totalorder %s49, 0
      %p175 = por %p173, %p174
      %p176 = scmp.ne.s32.totalorder %s164, %s165
      %p177 = scmp.eq.s32.totalorder %s50, 1
      %p178 = por %p176, %p177
      %p180 = scmp.ne.s32.totalorder %s165, %s179
      %p181 = scmp.eq.s32.totalorder %s50, 0
      %p182 = por %p180, %p181
      %s184 = sadd.s32 %s183, 1
      %p187 = scmp.eq.s32.totalorder %s44, 1
      %p188 = scmp.ne.s32.totalorder %s183, %s185
      %p189 = scmp.eq.s32.totalorder %s44, 0
      %p190 = por %p188, %p189
      %p191 = scmp.ne.s32.totalorder %s183, %s185
      %p192 = scmp.eq.s32.totalorder %s49, 1
      %p193 = por %p191, %p192
      %p194 = scmp.ne.s32.totalorder %s185, %s186
      %p195 = scmp.eq.s32.totalorder %s49, 0
      %p196 = por %p194, %p195
      %p197 = scmp.ne.s32.totalorder %s185, %s186
      %p198 = scmp.eq.s32.totalorder %s50, 1
      %p199 = por %p197, %p198
      %p201 = scmp.ne.s32.totalorder %s186, %s200
      %p202 = scmp.eq.s32.totalorder %s50, 0
      %p203 = por %p201, %p202
      %s205 = sadd.s32 %s204, 1
      %p208 = scmp.eq.s32.totalorder %s44, 1
      %p209 = scmp.ne.s32.totalorder %s204, %s206
      %p210 = scmp.eq.s32.totalorder %s44, 0
      %p211 = por %p209, %p210
      %p212 = scmp.ne.s32.totalorder %s204, %s206
      %p213 = scmp.eq.s32.totalorder %s49, 1
      %p214 = por %p212, %p213
      %p215 = scmp.ne.s32.totalorder %s206, %s207
      %p216 = scmp.eq.s32.totalorder %s49, 0
      %p217 = por %p215, %p216
      %p218 = scmp.ne.s32.totalorder %s206, %s207
      %p219 = scmp.eq.s32.totalorder %s50, 1
      %p220 = por %p218, %p219
      %p222 = scmp.ne.s32.totalorder %s207, %s221
      %p223 = scmp.eq.s32.totalorder %s50, 0
      %p224 = por %p222, %p223
      %s226 = sadd.s32 %s225, 1
      %p229 = scmp.eq.s32.totalorder %s44, 1
      %p230 = scmp.ne.s32.totalorder %s225, %s227
      %p231 = scmp.eq.s32.totalorder %s44, 0
      %p232 = por %p230, %p231
      %p233 = scmp.ne.s32.totalorder %s225, %s227
      %p234 = scmp.eq.s32.totalorder %s49, 1
      %p235 = por %p233, %p234
      %p236 = scmp.ne.s32.totalorder %s227, %s228
      %p237 = scmp.eq.s32.totalorder %s49, 0
      %p238 = por %p236, %p237
      %p239 = scmp.ne.s32.totalorder %s227, %s228
      %p240 = scmp.eq.s32.totalorder %s50, 1
      %p241 = por %p239, %p240
      %p243 = scmp.ne.s32.totalorder %s228, %s242
      %p244 = scmp.eq.s32.totalorder %s50, 0
      %p245 = por %p243, %p244
      %s247 = sadd.s32 %s246, 1
      %p250 = scmp.eq.s32.totalorder %s44, 1
      %p251 = scmp.ne.s32.totalorder %s246, %s248
      %p252 = scmp.eq.s32.totalorder %s44, 0
      %p253 = por %p251, %p252
      %p254 = scmp.ne.s32.totalorder %s246, %s248
      %p255 = scmp.eq.s32.totalorder %s49, 1
      %p256 = por %p254, %p255
      %p257 = scmp.ne.s32.totalorder %s248, %s249
      %p258 = scmp.eq.s32.totalorder %s49, 0
      %p259 = por %p257, %p258
      %p260 = scmp.ne.s32.totalorder %s248, %s249
      %p261 = scmp.eq.s32.totalorder %s50, 1
      %p262 = por %p260, %p261
      %p264 = scmp.ne.s32.totalorder %s249, %s263
      %p265 = scmp.eq.s32.totalorder %s50, 0
      %p266 = por %p264, %p265
      %s268 = sadd.s32 %s267, 1
      %p271 = scmp.eq.s32.totalorder %s44, 1
      %p272 = scmp.ne.s32.totalorder %s267, %s269
      %p273 = scmp.eq.s32.totalorder %s44, 0
      %p274 = por %p272, %p273
      %p275 = scmp.ne.s32.totalorder %s267, %s269
      %p276 = scmp.eq.s32.totalorder %s49, 1
      %p277 = por %p275, %p276
      %p278 = scmp.ne.s32.totalorder %s269, %s270
      %p279 = scmp.eq.s32.totalorder %s49, 0
      %p280 = por %p278, %p279
      %p281 = scmp.ne.s32.totalorder %s269, %s270
      %p282 = scmp.eq.s32.totalorder %s50, 1
      %p283 = por %p281, %p282
      %p285 = scmp.ne.s32.totalorder %s270, %s284
      %p286 = scmp.eq.s32.totalorder %s50, 0
      %p287 = por %p285, %p286
      %s289 = sadd.s32 %s288, 1
      %p292 = scmp.eq.s32.totalorder %s44, 1
      %p293 = scmp.ne.s32.totalorder %s288, %s290
      %p294 = scmp.eq.s32.totalorder %s44, 0
      %p295 = por %p293, %p294
      %p296 = scmp.ne.s32.totalorder %s288, %s290
      %p297 = scmp.eq.s32.totalorder %s49, 1
      %p298 = por %p296, %p297
      %p299 = scmp.ne.s32.totalorder %s290, %s291
      %p300 = scmp.eq.s32.totalorder %s49, 0
      %p301 = por %p299, %p300
      %p302 = scmp.ne.s32.totalorder %s290, %s291
      %p303 = scmp.eq.s32.totalorder %s50, 1
      %p304 = por %p302, %p303
      %p306 = scmp.ne.s32.totalorder %s291, %s305
      %p307 = scmp.eq.s32.totalorder %s50, 0
      %p308 = por %p306, %p307
      %s310 = sadd.s32 %s309, 1
      %p313 = scmp.eq.s32.totalorder %s44, 1
      %p314 = scmp.ne.s32.totalorder %s309, %s311
      %p315 = scmp.eq.s32.totalorder %s44, 0
      %p316 = por %p314, %p315
      %p317 = scmp.ne.s32.totalorder %s309, %s311
      %p318 = scmp.eq.s32.totalorder %s49, 1
      %p319 = por %p317, %p318
      %p320 = scmp.ne.s32.totalorder %s311, %s312
      %p321 = scmp.eq.s32.totalorder %s49, 0
      %p322 = por %p320, %p321
      %p323 = scmp.ne.s32.totalorder %s311, %s312
      %p324 = scmp.eq.s32.totalorder %s50, 1
      %p325 = por %p323, %p324
      %p327 = scmp.ne.s32.totalorder %s312, %s326
      %p328 = scmp.eq.s32.totalorder %s50, 0
      %p329 = por %p327, %p328
      %s331 = sadd.s32 %s330, 1
      %p334 = scmp.eq.s32.totalorder %s44, 1
      %p335 = scmp.ne.s32.totalorder %s330, %s332
      %p336 = scmp.eq.s32.totalorder %s44, 0
      %p337 = por %p335, %p336
      %p338 = scmp.ne.s32.totalorder %s330, %s332
      %p339 = scmp.eq.s32.totalorder %s49, 1
      %p340 = por %p338, %p339
      %p341 = scmp.ne.s32.totalorder %s332, %s333
      %p342 = scmp.eq.s32.totalorder %s49, 0
      %p343 = por %p341, %p342
      %p344 = scmp.ne.s32.totalorder %s332, %s333
      %p345 = scmp.eq.s32.totalorder %s50, 1
      %p346 = por %p344, %p345
      %p348 = scmp.ne.s32.totalorder %s333, %s347
      %p349 = scmp.eq.s32.totalorder %s50, 0
      %p350 = por %p348, %p349
      %s352 = sadd.s32 %s351, 1
      %p355 = scmp.eq.s32.totalorder %s44, 1
      %p356 = scmp.ne.s32.totalorder %s351, %s353
      %p357 = scmp.eq.s32.totalorder %s44, 0
      %p358 = por %p356, %p357
      %p359 = scmp.ne.s32.totalorder %s351, %s353
      %p360 = scmp.eq.s32.totalorder %s49, 1
      %p361 = por %p359, %p360
      %p362 = scmp.ne.s32.totalorder %s353, %s354
      %p363 = scmp.eq.s32.totalorder %s49, 0
      %p364 = por %p362, %p363
      %p365 = scmp.ne.s32.totalorder %s353, %s354
      %p366 = scmp.eq.s32.totalorder %s50, 1
      %p367 = por %p365, %p366
      %p369 = scmp.ne.s32.totalorder %s354, %s368
      %p370 = scmp.eq.s32.totalorder %s50, 0
      %p371 = por %p369, %p370
      %s373 = sadd.s32 %s372, 1
      %p376 = scmp.eq.s32.totalorder %s44, 1
      %p377 = scmp.ne.s32.totalorder %s372, %s374
      %p378 = scmp.eq.s32.totalorder %s44, 0
      %p379 = por %p377, %p378
      %p380 = scmp.ne.s32.totalorder %s372, %s374
      %p381 = scmp.eq.s32.totalorder %s49, 1
      %p382 = por %p380, %p381
      %p383 = scmp.ne.s32.totalorder %s374, %s375
      %p384 = scmp.eq.s32.totalorder %s49, 0
      %p385 = por %p383, %p384
      %p386 = scmp.ne.s32.totalorder %s374, %s375
      %p387 = scmp.eq.s32.totalorder %s50, 1
      %p388 = por %p386, %p387
      %p390 = scmp.ne.s32.totalorder %s375, %s389
      %p391 = scmp.eq.s32.totalorder %s50, 0
      %p392 = por %p390, %p391
      %s394 = sadd.s32 %s393, 1
      %p397 = scmp.eq.s32.totalorder %s44, 1
      %p398 = scmp.ne.s32.totalorder %s393, %s395
      %p399 = scmp.eq.s32.totalorder %s44, 0
      %p400 = por %p398, %p399
      %p401 = scmp.ne.s32.totalorder %s393, %s395
      %p402 = scmp.eq.s32.totalorder %s49, 1
      %p403 = por %p401, %p402
      %p404 = scmp.ne.s32.totalorder %s395, %s396
      %p405 = scmp.eq.s32.totalorder %s49, 0
      %p406 = por %p404, %p405
      %p407 = scmp.ne.s32.totalorder %s395, %s396
      %p408 = scmp.eq.s32.totalorder %s50, 1
      %p409 = por %p407, %p408
      %p411 = scmp.ne.s32.totalorder %s396, %s410
      %p412 = scmp.eq.s32.totalorder %s50, 0
      %p413 = por %p411, %p412
      %s415 = sadd.s32 %s414, 1
      %p418 = scmp.eq.s32.totalorder %s44, 1
      %p419 = scmp.ne.s32.totalorder %s414, %s416
      %p420 = scmp.eq.s32.totalorder %s44, 0
      %p421 = por %p419, %p420
      %p422 = scmp.ne.s32.totalorder %s414, %s416
      %p423 = scmp.eq.s32.totalorder %s49, 1
      %p424 = por %p422, %p423
      %p425 = scmp.ne.s32.totalorder %s416, %s417
      %p426 = scmp.eq.s32.totalorder %s49, 0
      %p427 = por %p425, %p426
      %p428 = scmp.ne.s32.totalorder %s416, %s417
      %p429 = scmp.eq.s32.totalorder %s50, 1
      %p430 = por %p428, %p429
      %p432 = scmp.ne.s32.totalorder %s417, %s431
      %p433 = scmp.eq.s32.totalorder %s50, 0
      %p434 = por %p432, %p433
      %s436 = sadd.s32 %s435, 1
      %p439 = scmp.eq.s32.totalorder %s44, 1
      %p440 = scmp.ne.s32.totalorder %s435, %s437
      %p441 = scmp.eq.s32.totalorder %s44, 0
      %p442 = por %p440, %p441
      %p443 = scmp.ne.s32.totalorder %s435, %s437
      %p444 = scmp.eq.s32.totalorder %s49, 1
      %p445 = por %p443, %p444
      %p446 = scmp.ne.s32.totalorder %s437, %s438
      %p447 = scmp.eq.s32.totalorder %s49, 0
      %p448 = por %p446, %p447
      %p449 = scmp.ne.s32.totalorder %s437, %s438
      %p450 = scmp.eq.s32.totalorder %s50, 1
      %p451 = por %p449, %p450
      %p453 = scmp.ne.s32.totalorder %s438, %s452
      %p454 = scmp.eq.s32.totalorder %s50, 0
      %p455 = por %p453, %p454
      %s457 = sadd.s32 %s456, 1
      %p460 = scmp.eq.s32.totalorder %s44, 1
      %p461 = scmp.ne.s32.totalorder %s456, %s458
      %p462 = scmp.eq.s32.totalorder %s44, 0
      %p463 = por %p461, %p462
      %p464 = scmp.ne.s32.totalorder %s456, %s458
      %p465 = scmp.eq.s32.totalorder %s49, 1
      %p466 = por %p464, %p465
      %p467 = scmp.ne.s32.totalorder %s458, %s459
      %p468 = scmp.eq.s32.totalorder %s49, 0
      %p469 = por %p467, %p468
      %p470 = scmp.ne.s32.totalorder %s458, %s459
      %p471 = scmp.eq.s32.totalorder %s50, 1
      %p472 = por %p470, %p471
      %p474 = scmp.ne.s32.totalorder %s459, %s473
      %p475 = scmp.eq.s32.totalorder %s50, 0
      %p476 = por %p474, %p475
      %s478 = sadd.s32 %s477, 1
      %p481 = scmp.eq.s32.totalorder %s44, 1
      %p482 = scmp.ne.s32.totalorder %s477, %s479
      %p483 = scmp.eq.s32.totalorder %s44, 0
      %p484 = por %p482, %p483
      %p485 = scmp.ne.s32.totalorder %s477, %s479
      %p486 = scmp.eq.s32.totalorder %s49, 1
      %p487 = por %p485, %p486
      %p488 = scmp.ne.s32.totalorder %s479, %s480
      %p489 = scmp.eq.s32.totalorder %s49, 0
      %p490 = por %p488, %p489
      %p491 = scmp.ne.s32.totalorder %s479, %s480
      %p492 = scmp.eq.s32.totalorder %s50, 1
      %p493 = por %p491, %p492
      %p495 = scmp.ne.s32.totalorder %s480, %s494
      %p496 = scmp.eq.s32.totalorder %s50, 0
      %p497 = por %p495, %p496
      %s499 = sadd.s32 %s498, 1
      %p502 = scmp.eq.s32.totalorder %s44, 1
      %p503 = scmp.ne.s32.totalorder %s498, %s500
      %p504 = scmp.eq.s32.totalorder %s44, 0
      %p505 = por %p503, %p504
      %p506 = scmp.ne.s32.totalorder %s498, %s500
      %p507 = scmp.eq.s32.totalorder %s49, 1
      %p508 = por %p506, %p507
      %p509 = scmp.ne.s32.totalorder %s500, %s501
      %p510 = scmp.eq.s32.totalorder %s49, 0
      %p511 = por %p509, %p510
      %p512 = scmp.ne.s32.totalorder %s500, %s501
      %p513 = scmp.eq.s32.totalorder %s50, 1
      %p514 = por %p512, %p513
      %p516 = scmp.ne.s32.totalorder %s501, %s515
      %p517 = scmp.eq.s32.totalorder %s50, 0
      %p518 = por %p516, %p517
      %s520 = sadd.s32 %s519, 1
      %p523 = scmp.eq.s32.totalorder %s44, 1
      %p524 = scmp.ne.s32.totalorder %s519, %s521
      %p525 = scmp.eq.s32.totalorder %s44, 0
      %p526 = por %p524, %p525
      %p527 = scmp.ne.s32.totalorder %s519, %s521
      %p528 = scmp.eq.s32.totalorder %s49, 1
      %p529 = por %p527, %p528
      %p530 = scmp.ne.s32.totalorder %s521, %s522
      %p531 = scmp.eq.s32.totalorder %s49, 0
      %p532 = por %p530, %p531
      %p533 = scmp.ne.s32.totalorder %s521, %s522
      %p534 = scmp.eq.s32.totalorder %s50, 1
      %p535 = por %p533, %p534
      %p537 = scmp.ne.s32.totalorder %s522, %s536
      %p538 = scmp.eq.s32.totalorder %s50, 0
      %p539 = por %p537, %p538
      %s541 = sadd.s32 %s540, 1
      %p544 = scmp.eq.s32.totalorder %s44, 1
      %p545 = scmp.ne.s32.totalorder %s540, %s542
      %p546 = scmp.eq.s32.totalorder %s44, 0
      %p547 = por %p545, %p546
      %p548 = scmp.ne.s32.totalorder %s540, %s542
      %p549 = scmp.eq.s32.totalorder %s49, 1
      %p550 = por %p548, %p549
      %p551 = scmp.ne.s32.totalorder %s542, %s543
      %p552 = scmp.eq.s32.totalorder %s49, 0
      %p553 = por %p551, %p552
      %p554 = scmp.ne.s32.totalorder %s542, %s543
      %p555 = scmp.eq.s32.totalorder %s50, 1
      %p556 = por %p554, %p555
      %p558 = scmp.ne.s32.totalorder %s543, %s557
      %p559 = scmp.eq.s32.totalorder %s50, 0
      %p560 = por %p558, %p559
      %s562 = sadd.s32 %s561, 1
      %p565 = scmp.eq.s32.totalorder %s44, 1
      %p566 = scmp.ne.s32.totalorder %s561, %s563
      %p567 = scmp.eq.s32.totalorder %s44, 0
      %p568 = por %p566, %p567
      %p569 = scmp.ne.s32.totalorder %s561, %s563
      %p570 = scmp.eq.s32.totalorder %s49, 1
      %p571 = por %p569, %p570
      %p572 = scmp.ne.s32.totalorder %s563, %s564
      %p573 = scmp.eq.s32.totalorder %s49, 0
      %p574 = por %p572, %p573
      %p575 = scmp.ne.s32.totalorder %s563, %s564
      %p576 = scmp.eq.s32.totalorder %s50, 1
      %p577 = por %p575, %p576
      %p579 = scmp.ne.s32.totalorder %s564, %s578
      %p580 = scmp.eq.s32.totalorder %s50, 0
      %p581 = por %p579, %p580
      %s583 = sadd.s32 %s582, 1
      %p586 = scmp.eq.s32.totalorder %s44, 1
      %p587 = scmp.ne.s32.totalorder %s582, %s584
      %p588 = scmp.eq.s32.totalorder %s44, 0
      %p589 = por %p587, %p588
      %p590 = scmp.ne.s32.totalorder %s582, %s584
      %p591 = scmp.eq.s32.totalorder %s49, 1
      %p592 = por %p590, %p591
      %p593 = scmp.ne.s32.totalorder %s584, %s585
      %p594 = scmp.eq.s32.totalorder %s49, 0
      %p595 = por %p593, %p594
      %p596 = scmp.ne.s32.totalorder %s584, %s585
      %p597 = scmp.eq.s32.totalorder %s50, 1
      %p598 = por %p596, %p597
      %p600 = scmp.ne.s32.totalorder %s585, %s599
      %p601 = scmp.eq.s32.totalorder %s50, 0
      %p602 = por %p600, %p601
      %s604 = sadd.s32 %s603, 1
      %p607 = scmp.eq.s32.totalorder %s44, 1
      %p608 = scmp.ne.s32.totalorder %s603, %s605
      %p609 = scmp.eq.s32.totalorder %s44, 0
      %p610 = por %p608, %p609
      %p611 = scmp.ne.s32.totalorder %s603, %s605
      %p612 = scmp.eq.s32.totalorder %s49, 1
      %p613 = por %p611, %p612
      %p614 = scmp.ne.s32.totalorder %s605, %s606
      %p615 = scmp.eq.s32.totalorder %s49, 0
      %p616 = por %p614, %p615
      %p617 = scmp.ne.s32.totalorder %s605, %s606
      %p618 = scmp.eq.s32.totalorder %s50, 1
      %p619 = por %p617, %p618
      %p621 = scmp.ne.s32.totalorder %s606, %s620
      %p622 = scmp.eq.s32.totalorder %s50, 0
      %p623 = por %p621, %p622
      %s624 = ssub.s32 %s44, %s51
      %p625 = scmp.eq.s32.totalorder %s624, 0
      %s627 = sadd.s32 %s626, 1
      %s628 = scalar_select %p625, %s626, %s627
      %p631 = pneg %p625
      %p632 = scmp.eq.s32.totalorder %s44, 1
      %p633 = por %p631, %p632
      %p634 = scmp.ne.s32.totalorder %s626, %s629
      %p635 = scmp.eq.s32.totalorder %s44, 0
      %p636 = por %p634, %p635
      %p637 = scmp.ne.s32.totalorder %s626, %s629
      %p638 = scmp.eq.s32.totalorder %s49, 1
      %p639 = por %p637, %p638
      %p640 = scmp.ne.s32.totalorder %s629, %s630
      %p641 = scmp.eq.s32.totalorder %s49, 0
      %p642 = por %p640, %p641
      %p643 = scmp.ne.s32.totalorder %s629, %s630
      %p644 = scmp.eq.s32.totalorder %s50, 1
      %p645 = por %p643, %p644
      %p647 = scmp.ne.s32.totalorder %s630, %s646
      %p648 = scmp.eq.s32.totalorder %s50, 0
      %p649 = por %p647, %p648
      %p650 = scmp.le.s32.totalorder 1, %s44
      %p651 = scmp.lt.s32.totalorder %s44, 3
      %p652 = pnand %p650, %p651
      %p653 = pneg %p652
      // Predicated region
      $region9: #{_lambda_.1} parent=5 // pred_check
        _
      $region10: #{_lambda_.1} parent=5 // pred_check_branch
        %655 = sbr.rel (%p652) target = $region12
      $region11: #{_lambda_.1} parent=5 // pred_region
        %s656 = ssub.s32 %s44, 1
        // Predicated region
        $region13: #{_lambda_.1} parent=11 // pred_check
          %p657 = pneg %p91
        $region14: #{_lambda_.1} parent=11 // pred_check_branch
          %659 = sbr.rel (%p657) target = $region16
        $region15: #{_lambda_.1} parent=11 // pred_region
          %661 = vsyncadd [#allocation6], 0
          %s662 = sshll.u32 %s1, 4
          %s663 = int_to_ptr.hbm [resolvable:$true] %s662
          %s664 = sshll.u32 [#allocation5], 4
          %s665 = int_to_ptr.vmem [resolvable:$true] %s664
          %670 = dma.hbm_to_vmem [thread:$0]  %s663, 21504, %s665, [#allocation6], 64, 64, 4
        $region16: #{_lambda_.1} parent=11 // pred_fallthru
          _
        // Predicated region
        $region17: #{_lambda_.1} parent=11 // pred_check
          %p671 = pneg %p112
        $region18: #{_lambda_.1} parent=11 // pred_check_branch
          %673 = sbr.rel (%p671) target = $region20
        $region19: #{_lambda_.1} parent=11 // pred_region
          %675 = vsyncadd [#allocation8], 0
          %s677 = sshll.u32 %s2, 4
          %s678 = int_to_ptr.hbm [resolvable:$true] %s677
          %s679 = sshll.u32 [#allocation7], 4
          %s680 = int_to_ptr.vmem [resolvable:$true] %s679
          %682 = dma.hbm_to_vmem [thread:$0]  %s678, 16, %s680, [#allocation8]
        $region20: #{_lambda_.1} parent=11 // pred_fallthru
          _
        // Predicated region
        $region21: #{_lambda_.1} parent=11 // pred_check
          %p683 = pneg %p133
        $region22: #{_lambda_.1} parent=11 // pred_check_branch
          %685 = sbr.rel (%p683) target = $region24
        $region23: #{_lambda_.1} parent=11 // pred_region
          %687 = vsyncadd [#allocation8], 0
          %s688 = sshll.u32 %s3, 4
          %s689 = int_to_ptr.hbm [resolvable:$true] %s688
          %s690 = sshll.u32 [#allocation9], 4
          %s691 = int_to_ptr.vmem [resolvable:$true] %s690
          %696 = dma.hbm_to_vmem [thread:$0]  %s689, 2048, %s691, [#allocation8], 128, 128, 8
        $region24: #{_lambda_.1} parent=11 // pred_fallthru
          _
        // Predicated region
        $region25: #{_lambda_.1} parent=11 // pred_check
          %p697 = pneg %p154
        $region26: #{_lambda_.1} parent=11 // pred_check_branch
          %699 = sbr.rel (%p697) target = $region28
        $region27: #{_lambda_.1} parent=11 // pred_region
          %701 = vsyncadd [#allocation11], 0
          %s703 = sshll.u32 %s4, 4
          %s704 = int_to_ptr.hbm [resolvable:$true] %s703
          %s705 = sshll.u32 [#allocation10], 4
          %s706 = int_to_ptr.vmem [resolvable:$true] %s705
          %708 = dma.hbm_to_vmem [thread:$0]  %s704, 16, %s706, [#allocation11]
        $region28: #{_lambda_.1} parent=11 // pred_fallthru
          _
        // Predicated region
        $region29: #{_lambda_.1} parent=11 // pred_check
          %p709 = pneg %p175
        $region30: #{_lambda_.1} parent=11 // pred_check_branch
          %711 = sbr.rel (%p709) target = $region32
        $region31: #{_lambda_.1} parent=11 // pred_region
          %713 = vsyncadd [#allocation11], 0
          %s715 = sshll.u32 %s5, 4
          %s716 = int_to_ptr.hbm [resolvable:$true] %s715
          %s717 = sshll.u32 [#allocation12], 4
          %s718 = int_to_ptr.vmem [resolvable:$true] %s717
          %720 = dma.hbm_to_vmem [thread:$0]  %s716, 128, %s718, [#allocation11]
        $region32: #{_lambda_.1} parent=11 // pred_fallthru
          _
        // Predicated region
        $region33: #{_lambda_.1} parent=11 // pred_check
          %p721 = pneg %p196
        $region34: #{_lambda_.1} parent=11 // pred_check_branch
          %723 = sbr.rel (%p721) target = $region36
        $region35: #{_lambda_.1} parent=11 // pred_region
          %725 = vsyncadd [#allocation14], 0
          %s727 = sshll.u32 %s6, 4
          %s728 = int_to_ptr.hbm [resolvable:$true] %s727
          %s729 = sshll.u32 [#allocation13], 4
          %s730 = int_to_ptr.vmem [resolvable:$true] %s729
          %732 = dma.hbm_to_vmem [thread:$0]  %s728, 16, %s730, [#allocation14]
        $region36: #{_lambda_.1} parent=11 // pred_fallthru
          _
        // Predicated region
        $region37: #{_lambda_.1} parent=11 // pred_check
          %p733 = pneg %p217
        $region38: #{_lambda_.1} parent=11 // pred_check_branch
          %735 = sbr.rel (%p733) target = $region40
        $region39: #{_lambda_.1} parent=11 // pred_region
          %737 = vsyncadd [#allocation14], 0
          %s738 = sshll.u32 %s7, 4
          %s739 = int_to_ptr.hbm [resolvable:$true] %s738
          %s740 = sshll.u32 [#allocation15], 4
          %s741 = int_to_ptr.vmem [resolvable:$true] %s740
          %746 = dma.hbm_to_vmem [thread:$0]  %s739, 9216, %s741, [#allocation14], 64, 64, 4
        $region40: #{_lambda_.1} parent=11 // pred_fallthru
          _
        // Predicated region
        $region41: #{_lambda_.1} parent=11 // pred_check
          %p747 = pneg %p238
        $region42: #{_lambda_.1} parent=11 // pred_check_branch
          %749 = sbr.rel (%p747) target = $region44
        $region43: #{_lambda_.1} parent=11 // pred_region
          %751 = vsyncadd [#allocation17], 0
          %s753 = sshll.u32 %s8, 4
          %s754 = int_to_ptr.hbm [resolvable:$true] %s753
          %s755 = sshll.u32 [#allocation16], 4
          %s756 = int_to_ptr.vmem [resolvable:$true] %s755
          %758 = dma.hbm_to_vmem [thread:$0]  %s754, 16, %s756, [#allocation17]
        $region44: #{_lambda_.1} parent=11 // pred_fallthru
          _
        // Predicated region
        $region45: #{_lambda_.1} parent=11 // pred_check
          %p759 = pneg %p259
        $region46: #{_lambda_.1} parent=11 // pred_check_branch
          %761 = sbr.rel (%p759) target = $region48
        $region47: #{_lambda_.1} parent=11 // pred_region
          %763 = vsyncadd [#allocation17], 0
          %s764 = sshll.u32 %s9, 4
          %s765 = int_to_ptr.hbm [resolvable:$true] %s764
          %s766 = sshll.u32 [#allocation18], 4
          %s767 = int_to_ptr.vmem [resolvable:$true] %s766
          %772 = dma.hbm_to_vmem [thread:$0]  %s765, 2048, %s767, [#allocation17], 128, 128, 8
        $region48: #{_lambda_.1} parent=11 // pred_fallthru
          _
        // Predicated region
        $region49: #{_lambda_.1} parent=11 // pred_check
          %p773 = pneg %p280
        $region50: #{_lambda_.1} parent=11 // pred_check_branch
          %775 = sbr.rel (%p773) target = $region52
        $region51: #{_lambda_.1} parent=11 // pred_region
          %777 = vsyncadd [#allocation20], 0
          %s779 = sshll.u32 %s10, 4
          %s780 = int_to_ptr.hbm [resolvable:$true] %s779
          %s781 = sshll.u32 [#allocation19], 4
          %s782 = int_to_ptr.vmem [resolvable:$true] %s781
          %784 = dma.hbm_to_vmem [thread:$0]  %s780, 16, %s782, [#allocation20]
        $region52: #{_lambda_.1} parent=11 // pred_fallthru
          _
        // Predicated region
        $region53: #{_lambda_.1} parent=11 // pred_check
          %p785 = pneg %p301
        $region54: #{_lambda_.1} parent=11 // pred_check_branch
          %787 = sbr.rel (%p785) target = $region56
        $region55: #{_lambda_.1} parent=11 // pred_region
          %789 = vsyncadd [#allocation20], 0
          %s791 = sshll.u32 %s11, 4
          %s792 = int_to_ptr.hbm [resolvable:$true] %s791
          %s793 = sshll.u32 [#allocation21], 4
          %s794 = int_to_ptr.vmem [resolvable:$true] %s793
          %796 = dma.hbm_to_vmem [thread:$0]  %s792, 128, %s794, [#allocation20]
        $region56: #{_lambda_.1} parent=11 // pred_fallthru
          _
        // Predicated region
        $region57: #{_lambda_.1} parent=11 // pred_check
          %p797 = pneg %p322
        $region58: #{_lambda_.1} parent=11 // pred_check_branch
          %799 = sbr.rel (%p797) target = $region60
        $region59: #{_lambda_.1} parent=11 // pred_region
          %801 = vsyncadd [#allocation23], 0
          %s803 = sshll.u32 %s12, 4
          %s804 = int_to_ptr.hbm [resolvable:$true] %s803
          %s805 = sshll.u32 [#allocation22], 4
          %s806 = int_to_ptr.vmem [resolvable:$true] %s805
          %808 = dma.hbm_to_vmem [thread:$0]  %s804, 16, %s806, [#allocation23]
        $region60: #{_lambda_.1} parent=11 // pred_fallthru
          _
        // Predicated region
        $region61: #{_lambda_.1} parent=11 // pred_check
          %p809 = pneg %p343
        $region62: #{_lambda_.1} parent=11 // pred_check_branch
          %811 = sbr.rel (%p809) target = $region64
        $region63: #{_lambda_.1} parent=11 // pred_region
          %813 = vsyncadd [#allocation23], 0
          %s814 = sshll.u32 %s13, 4
          %s815 = int_to_ptr.hbm [resolvable:$true] %s814
          %s816 = sshll.u32 [#allocation24], 4
          %s817 = int_to_ptr.vmem [resolvable:$true] %s816
          %822 = dma.hbm_to_vmem [thread:$0]  %s815, 9216, %s817, [#allocation23], 64, 64, 4
        $region64: #{_lambda_.1} parent=11 // pred_fallthru
          _
        // Predicated region
        $region65: #{_lambda_.1} parent=11 // pred_check
          %p823 = pneg %p364
        $region66: #{_lambda_.1} parent=11 // pred_check_branch
          %825 = sbr.rel (%p823) target = $region68
        $region67: #{_lambda_.1} parent=11 // pred_region
          %827 = vsyncadd [#allocation26], 0
          %s829 = sshll.u32 %s14, 4
          %s830 = int_to_ptr.hbm [resolvable:$true] %s829
          %s831 = sshll.u32 [#allocation25], 4
          %s832 = int_to_ptr.vmem [resolvable:$true] %s831
          %834 = dma.hbm_to_vmem [thread:$0]  %s830, 16, %s832, [#allocation26]
        $region68: #{_lambda_.1} parent=11 // pred_fallthru
          _
        // Predicated region
        $region69: #{_lambda_.1} parent=11 // pred_check
          %p835 = pneg %p385
        $region70: #{_lambda_.1} parent=11 // pred_check_branch
          %837 = sbr.rel (%p835) target = $region72
        $region71: #{_lambda_.1} parent=11 // pred_region
          _
        $region72: #{_lambda_.1} parent=11 // pred_fallthru
          _
        // Predicated region
        $region73: #{_lambda_.1} parent=11 // pred_check
          %p838 = pneg %p406
        $region74: #{_lambda_.1} parent=11 // pred_check_branch
          %840 = sbr.rel (%p838) target = $region76
        $region75: #{_lambda_.1} parent=11 // pred_region
          %842 = vsyncadd [#allocation26], 0
          %s844 = sshll.u32 %s16, 4
          %s845 = int_to_ptr.hbm [resolvable:$true] %s844
          %s846 = sshll.u32 [#allocation27], 4
          %s847 = int_to_ptr.vmem [resolvable:$true] %s846
          %849 = dma.hbm_to_vmem [thread:$0]  %s845, 16, %s847, [#allocation26]
        $region76: #{_lambda_.1} parent=11 // pred_fallthru
          _
        // Predicated region
        $region77: #{_lambda_.1} parent=11 // pred_check
          %p850 = pneg %p427
        $region78: #{_lambda_.1} parent=11 // pred_check_branch
          %852 = sbr.rel (%p850) target = $region80
        $region79: #{_lambda_.1} parent=11 // pred_region
          %854 = vsyncadd [#allocation29], 0
          %s856 = sshll.u32 %s17, 4
          %s857 = int_to_ptr.hbm [resolvable:$true] %s856
          %s858 = sshll.u32 [#allocation28], 4
          %s859 = int_to_ptr.vmem [resolvable:$true] %s858
          %861 = dma.hbm_to_vmem [thread:$0]  %s857, 128, %s859, [#allocation29]
        $region80: #{_lambda_.1} parent=11 // pred_fallthru
          _
        // Predicated region
        $region81: #{_lambda_.1} parent=11 // pred_check
          %p862 = pneg %p448
        $region82: #{_lambda_.1} parent=11 // pred_check_branch
          %864 = sbr.rel (%p862) target = $region84
        $region83: #{_lambda_.1} parent=11 // pred_region
          %866 = vsyncadd [#allocation29], 0
          %s868 = sshll.u32 %s18, 4
          %s869 = int_to_ptr.hbm [resolvable:$true] %s868
          %s870 = sshll.u32 [#allocation30], 4
          %s871 = int_to_ptr.vmem [resolvable:$true] %s870
          %873 = dma.hbm_to_vmem [thread:$0]  %s869, 16, %s871, [#allocation29]
        $region84: #{_lambda_.1} parent=11 // pred_fallthru
          _
        // Predicated region
        $region85: #{_lambda_.1} parent=11 // pred_check
          %p874 = pneg %p469
        $region86: #{_lambda_.1} parent=11 // pred_check_branch
          %876 = sbr.rel (%p874) target = $region88
        $region87: #{_lambda_.1} parent=11 // pred_region
          %878 = vsyncadd [#allocation32], 0
          %s879 = sshll.u32 %s19, 4
          %s880 = int_to_ptr.hbm [resolvable:$true] %s879
          %s881 = sshll.u32 [#allocation31], 4
          %s882 = int_to_ptr.vmem [resolvable:$true] %s881
          %887 = dma.hbm_to_vmem [thread:$0]  %s880, 9216, %s882, [#allocation32], 64, 64, 4
        $region88: #{_lambda_.1} parent=11 // pred_fallthru
          _
        // Predicated region
        $region89: #{_lambda_.1} parent=11 // pred_check
          %p888 = pneg %p490
        $region90: #{_lambda_.1} parent=11 // pred_check_branch
          %890 = sbr.rel (%p888) target = $region92
        $region91: #{_lambda_.1} parent=11 // pred_region
          %892 = vsyncadd [#allocation32], 0
          %s894 = sshll.u32 %s20, 4
          %s895 = int_to_ptr.hbm [resolvable:$true] %s894
          %s896 = sshll.u32 [#allocation33], 4
          %s897 = int_to_ptr.vmem [resolvable:$true] %s896
          %899 = dma.hbm_to_vmem [thread:$0]  %s895, 16, %s897, [#allocation32]
        $region92: #{_lambda_.1} parent=11 // pred_fallthru
          _
        // Predicated region
        $region93: #{_lambda_.1} parent=11 // pred_check
          %p900 = pneg %p511
        $region94: #{_lambda_.1} parent=11 // pred_check_branch
          %902 = sbr.rel (%p900) target = $region96
        $region95: #{_lambda_.1} parent=11 // pred_region
          _
        $region96: #{_lambda_.1} parent=11 // pred_fallthru
          _
        // Predicated region
        $region97: #{_lambda_.1} parent=11 // pred_check
          %p903 = pneg %p532
        $region98: #{_lambda_.1} parent=11 // pred_check_branch
          %905 = sbr.rel (%p903) target = $region100
        $region99: #{_lambda_.1} parent=11 // pred_region
          _
        $region100: #{_lambda_.1} parent=11 // pred_fallthru
          _
        // Predicated region
        $region101: #{_lambda_.1} parent=11 // pred_check
          %p906 = pneg %p553
        $region102: #{_lambda_.1} parent=11 // pred_check_branch
          %908 = sbr.rel (%p906) target = $region104
        $region103: #{_lambda_.1} parent=11 // pred_region
          %910 = vsyncadd [#allocation35], 0
          %s912 = sshll.u32 %s23, 4
          %s913 = int_to_ptr.hbm [resolvable:$true] %s912
          %s914 = sshll.u32 [#allocation34], 4
          %s915 = int_to_ptr.vmem [resolvable:$true] %s914
          %917 = dma.hbm_to_vmem [thread:$0]  %s913, 128, %s915, [#allocation35]
        $region104: #{_lambda_.1} parent=11 // pred_fallthru
          _
        // Predicated region
        $region105: #{_lambda_.1} parent=11 // pred_check
          %p918 = pneg %p574
        $region106: #{_lambda_.1} parent=11 // pred_check_branch
          %920 = sbr.rel (%p918) target = $region108
        $region107: #{_lambda_.1} parent=11 // pred_region
          _
        $region108: #{_lambda_.1} parent=11 // pred_fallthru
          _
        // Predicated region
        $region109: #{_lambda_.1} parent=11 // pred_check
          %p921 = pneg %p595
        $region110: #{_lambda_.1} parent=11 // pred_check_branch
          %923 = sbr.rel (%p921) target = $region112
        $region111: #{_lambda_.1} parent=11 // pred_region
          %925 = vsyncadd [#allocation35], 0
          %s926 = sshll.u32 %s25, 4
          %s927 = int_to_ptr.hbm [resolvable:$true] %s926
          %s928 = sshll.u32 [#allocation36], 4
          %s929 = int_to_ptr.vmem [resolvable:$true] %s928
          %934 = dma.hbm_to_vmem [thread:$0]  %s927, 1024, %s929, [#allocation35], 64, 64, 4
        $region112: #{_lambda_.1} parent=11 // pred_fallthru
          _
        // Predicated region
        $region113: #{_lambda_.1} parent=11 // pred_check
          %p935 = pneg %p616
        $region114: #{_lambda_.1} parent=11 // pred_check_branch
          %937 = sbr.rel (%p935) target = $region116
        $region115: #{_lambda_.1} parent=11 // pred_region
          _
        $region116: #{_lambda_.1} parent=11 // pred_fallthru
          _
      $region12: #{_lambda_.1} parent=5 // pred_fallthru
        _
      %p938 = scmp.lt.s32.totalorder %s44, 2
      // Predicated region
      $region117: #{_lambda_.1} parent=5 // pred_check
        %p939 = pneg %p938
      $region118: #{_lambda_.1} parent=5 // pred_check_branch
        %941 = sbr.rel (%p939) target = $region120
      $region119: #{_lambda_.1} parent=5 // pred_region
        // Predicated region
        $region121: #{_lambda_.1} parent=119 // pred_check
          %p942 = pneg %p64
        $region122: #{_lambda_.1} parent=119 // pred_check_branch
          %944 = sbr.rel (%p942) target = $region124
        $region123: #{_lambda_.1} parent=119 // pred_region
          %p945 = scmp.lt.s32.totalorder %s44, 1
          %s946 = scalar_select %p945, %s44, 1
          %s947 = smul.addr %s946, 6
          %s948 = smul.addr %s947, 4
          %s949 = scalar_lea.vmem %s0, %s948
        $region124: #{_lambda_.1} parent=119 // pred_fallthru
          _
      $region120: #{_lambda_.1} parent=5 // pred_fallthru
        _
      %p950 = scmp.le.s32.totalorder 1, %s44
      %p951 = scmp.lt.s32.totalorder %s44, 3
      %p952 = pnand %p950, %p951
      %p953 = pneg %p952
      // Predicated region
      $region125: #{_lambda_.1} parent=5 // pred_check
        _
      $region126: #{_lambda_.1} parent=5 // pred_check_branch
        %955 = sbr.rel (%p952) target = $region128
      $region127: #{_lambda_.1} parent=5 // pred_region
        %s956 = ssub.s32 %s44, 1
        // Predicated region
        $region129: #{_lambda_.1} parent=127 // pred_check
          %p957 = pneg %p91
        $region130: #{_lambda_.1} parent=127 // pred_check_branch
          %959 = sbr.rel (%p957) target = $region132
        $region131: #{_lambda_.1} parent=127 // pred_region
          %961 = dma.done [#allocation6], 21504
        $region132: #{_lambda_.1} parent=127 // pred_fallthru
          _
        // Predicated region
        $region133: #{_lambda_.1} parent=127 // pred_check
          %p962 = pneg %p112
        $region134: #{_lambda_.1} parent=127 // pred_check_branch
          %964 = sbr.rel (%p962) target = $region136
        $region135: #{_lambda_.1} parent=127 // pred_region
          %966 = dma.done [#allocation8], 16
        $region136: #{_lambda_.1} parent=127 // pred_fallthru
          _
        // Predicated region
        $region137: #{_lambda_.1} parent=127 // pred_check
          %p967 = pneg %p133
        $region138: #{_lambda_.1} parent=127 // pred_check_branch
          %969 = sbr.rel (%p967) target = $region140
        $region139: #{_lambda_.1} parent=127 // pred_region
          %971 = dma.done [#allocation8], 2048
        $region140: #{_lambda_.1} parent=127 // pred_fallthru
          _
        // Predicated region
        $region141: #{_lambda_.1} parent=127 // pred_check
          %p972 = pneg %p154
        $region142: #{_lambda_.1} parent=127 // pred_check_branch
          %974 = sbr.rel (%p972) target = $region144
        $region143: #{_lambda_.1} parent=127 // pred_region
          %976 = dma.done [#allocation11], 16
        $region144: #{_lambda_.1} parent=127 // pred_fallthru
          _
        // Predicated region
        $region145: #{_lambda_.1} parent=127 // pred_check
          %p977 = pneg %p175
        $region146: #{_lambda_.1} parent=127 // pred_check_branch
          %979 = sbr.rel (%p977) target = $region148
        $region147: #{_lambda_.1} parent=127 // pred_region
          %981 = dma.done [#allocation11], 128
        $region148: #{_lambda_.1} parent=127 // pred_fallthru
          _
        // Predicated region
        $region149: #{_lambda_.1} parent=127 // pred_check
          %p982 = pneg %p196
        $region150: #{_lambda_.1} parent=127 // pred_check_branch
          %984 = sbr.rel (%p982) target = $region152
        $region151: #{_lambda_.1} parent=127 // pred_region
          %986 = dma.done [#allocation14], 16
        $region152: #{_lambda_.1} parent=127 // pred_fallthru
          _
        // Predicated region
        $region153: #{_lambda_.1} parent=127 // pred_check
          %p987 = pneg %p217
        $region154: #{_lambda_.1} parent=127 // pred_check_branch
          %989 = sbr.rel (%p987) target = $region156
        $region155: #{_lambda_.1} parent=127 // pred_region
          %991 = dma.done [#allocation14], 9216
        $region156: #{_lambda_.1} parent=127 // pred_fallthru
          _
        // Predicated region
        $region157: #{_lambda_.1} parent=127 // pred_check
          %p992 = pneg %p238
        $region158: #{_lambda_.1} parent=127 // pred_check_branch
          %994 = sbr.rel (%p992) target = $region160
        $region159: #{_lambda_.1} parent=127 // pred_region
          %996 = dma.done [#allocation17], 16
        $region160: #{_lambda_.1} parent=127 // pred_fallthru
          _
        // Predicated region
        $region161: #{_lambda_.1} parent=127 // pred_check
          %p997 = pneg %p259
        $region162: #{_lambda_.1} parent=127 // pred_check_branch
          %999 = sbr.rel (%p997) target = $region164
        $region163: #{_lambda_.1} parent=127 // pred_region
          %1001 = dma.done [#allocation17], 2048
        $region164: #{_lambda_.1} parent=127 // pred_fallthru
          _
        // Predicated region
        $region165: #{_lambda_.1} parent=127 // pred_check
          %p1002 = pneg %p280
        $region166: #{_lambda_.1} parent=127 // pred_check_branch
          %1004 = sbr.rel (%p1002) target = $region168
        $region167: #{_lambda_.1} parent=127 // pred_region
          %1006 = dma.done [#allocation20], 16
        $region168: #{_lambda_.1} parent=127 // pred_fallthru
          _
        // Predicated region
        $region169: #{_lambda_.1} parent=127 // pred_check
          %p1007 = pneg %p301
        $region170: #{_lambda_.1} parent=127 // pred_check_branch
          %1009 = sbr.rel (%p1007) target = $region172
        $region171: #{_lambda_.1} parent=127 // pred_region
          %1011 = dma.done [#allocation20], 128
        $region172: #{_lambda_.1} parent=127 // pred_fallthru
          _
        // Predicated region
        $region173: #{_lambda_.1} parent=127 // pred_check
          %p1012 = pneg %p322
        $region174: #{_lambda_.1} parent=127 // pred_check_branch
          %1014 = sbr.rel (%p1012) target = $region176
        $region175: #{_lambda_.1} parent=127 // pred_region
          %1016 = dma.done [#allocation23], 16
        $region176: #{_lambda_.1} parent=127 // pred_fallthru
          _
        // Predicated region
        $region177: #{_lambda_.1} parent=127 // pred_check
          %p1017 = pneg %p343
        $region178: #{_lambda_.1} parent=127 // pred_check_branch
          %1019 = sbr.rel (%p1017) target = $region180
        $region179: #{_lambda_.1} parent=127 // pred_region
          %1021 = dma.done [#allocation23], 9216
        $region180: #{_lambda_.1} parent=127 // pred_fallthru
          _
        // Predicated region
        $region181: #{_lambda_.1} parent=127 // pred_check
          %p1022 = pneg %p364
        $region182: #{_lambda_.1} parent=127 // pred_check_branch
          %1024 = sbr.rel (%p1022) target = $region184
        $region183: #{_lambda_.1} parent=127 // pred_region
          %1026 = dma.done [#allocation26], 16
        $region184: #{_lambda_.1} parent=127 // pred_fallthru
          _
        // Predicated region
        $region185: #{_lambda_.1} parent=127 // pred_check
          %p1027 = pneg %p406
        $region186: #{_lambda_.1} parent=127 // pred_check_branch
          %1029 = sbr.rel (%p1027) target = $region188
        $region187: #{_lambda_.1} parent=127 // pred_region
          %1031 = dma.done [#allocation26], 16
        $region188: #{_lambda_.1} parent=127 // pred_fallthru
          _
        // Predicated region
        $region189: #{_lambda_.1} parent=127 // pred_check
          %p1032 = pneg %p427
        $region190: #{_lambda_.1} parent=127 // pred_check_branch
          %1034 = sbr.rel (%p1032) target = $region192
        $region191: #{_lambda_.1} parent=127 // pred_region
          %1036 = dma.done [#allocation29], 128
        $region192: #{_lambda_.1} parent=127 // pred_fallthru
          _
        // Predicated region
        $region193: #{_lambda_.1} parent=127 // pred_check
          %p1037 = pneg %p448
        $region194: #{_lambda_.1} parent=127 // pred_check_branch
          %1039 = sbr.rel (%p1037) target = $region196
        $region195: #{_lambda_.1} parent=127 // pred_region
          %1041 = dma.done [#allocation29], 16
        $region196: #{_lambda_.1} parent=127 // pred_fallthru
          _
        // Predicated region
        $region197: #{_lambda_.1} parent=127 // pred_check
          %p1042 = pneg %p469
        $region198: #{_lambda_.1} parent=127 // pred_check_branch
          %1044 = sbr.rel (%p1042) target = $region200
        $region199: #{_lambda_.1} parent=127 // pred_region
          %1046 = dma.done [#allocation32], 9216
        $region200: #{_lambda_.1} parent=127 // pred_fallthru
          _
        // Predicated region
        $region201: #{_lambda_.1} parent=127 // pred_check
          %p1047 = pneg %p490
        $region202: #{_lambda_.1} parent=127 // pred_check_branch
          %1049 = sbr.rel (%p1047) target = $region204
        $region203: #{_lambda_.1} parent=127 // pred_region
          %1051 = dma.done [#allocation32], 16
        $region204: #{_lambda_.1} parent=127 // pred_fallthru
          _
        // Predicated region
        $region205: #{_lambda_.1} parent=127 // pred_check
          %p1052 = pneg %p553
        $region206: #{_lambda_.1} parent=127 // pred_check_branch
          %1054 = sbr.rel (%p1052) target = $region208
        $region207: #{_lambda_.1} parent=127 // pred_region
          %1056 = dma.done [#allocation35], 128
        $region208: #{_lambda_.1} parent=127 // pred_fallthru
          _
        // Predicated region
        $region209: #{_lambda_.1} parent=127 // pred_check
          %p1057 = pneg %p595
        $region210: #{_lambda_.1} parent=127 // pred_check_branch
          %1059 = sbr.rel (%p1057) target = $region212
        $region211: #{_lambda_.1} parent=127 // pred_region
          %1061 = dma.done [#allocation35], 1024
        $region212: #{_lambda_.1} parent=127 // pred_fallthru
          _
        %p1062 = scmp.lt.s32.totalorder %s49, 1
        %s1063 = scalar_select %p1062, %s49, 1
        %s1064 = smul.addr %s1063, 6
        %s1065 = smul.addr %s1064, 4
        %s1066 = scalar_lea.vmem %s0, %s1065
        %p1067 = pneg %p70
        %p1068 = pneg %p67
        %p1069 = pneg %p91
        %p1070 = pneg %p88
        %p1071 = pneg %p112
        %p1072 = pneg %p109
        %p1073 = pneg %p133
        %p1074 = pneg %p130
        %p1075 = pneg %p154
        %p1076 = pneg %p151
        %p1077 = pneg %p175
        %p1078 = pneg %p172
        %p1079 = pneg %p196
        %p1080 = pneg %p193
        %p1081 = pneg %p217
        %p1082 = pneg %p214
        %p1083 = pneg %p238
        %p1084 = pneg %p235
        %p1085 = pneg %p259
        %p1086 = pneg %p256
        %p1087 = pneg %p280
        %p1088 = pneg %p277
        %p1089 = pneg %p301
        %p1090 = pneg %p298
        %p1091 = pneg %p322
        %p1092 = pneg %p319
        %p1093 = pneg %p343
        %p1094 = pneg %p340
        %p1095 = pneg %p364
        %p1096 = pneg %p361
        %p1097 = pneg %p385
        %p1098 = pneg %p382
        %p1099 = pneg %p406
        %p1100 = pneg %p403
        %p1101 = pneg %p427
        %p1102 = pneg %p424
        %p1103 = pneg %p448
        %p1104 = pneg %p445
        %p1105 = pneg %p469
        %p1106 = pneg %p466
        %p1107 = pneg %p490
        %p1108 = pneg %p487
        %p1109 = pneg %p511
        %p1110 = pneg %p508
        %p1111 = pneg %p532
        %p1112 = pneg %p529
        %p1113 = pneg %p553
        %p1114 = pneg %p550
        %p1115 = pneg %p574
        %p1116 = pneg %p571
        %p1117 = pneg %p595
        %p1118 = pneg %p592
        %p1119 = pneg %p616
        %p1120 = pneg %p613
        %p1121 = pneg %p642
        %p1122 = pneg %p639
        %p1123 = scmp.lt.s32.totalorder %s49, 1
        %s1124 = scalar_select %p1123, %s49, 1
        %s1125 = smul.addr %s1124, 2
        %s1126 = smul.addr %s1125, 8
        %s1127 = scalar_lea.vmem %s27, %s1126
        %p1128 = scmp.lt.s32.totalorder %s49, 1
        %s1129 = scalar_select %p1128, %s49, 1
        %s1130 = smul.addr %s1129, 6
        %s1131 = smul.addr %s1130, 4
        %s1132 = scalar_lea.vmem %s0, %s1131
        %p1133 = scmp.lt.s32.totalorder %s49, 1
        %s1134 = scalar_select %p1133, %s49, 1
        %s1135 = smul.addr %s1134, 2
        %s1136 = smul.addr %s1135, 8
        %s1137 = scalar_lea.vmem %s27, %s1136
        %1139 = vst [vmem:[#allocation2] sm:$0xff] 0
        %1140 = vst [vmem:[#allocation2 + $0x8] sm:$0xf] 0
        %1141 = vst [vmem:[#allocation2 + $0x24] sm:$0xff] 0
        %1142 = vst [vmem:[#allocation2 + $0x2c] sm:$0xf] 0
        %1143 = vst [vmem:[#allocation3] sm:$0xf] 0
        %1144 = vst [vmem:[#allocation3 + $0xc] sm:$0xf] 0
        %v1145 = vld [vmem:[%s1132] sm:$0xff]
        %v1146 = vld [vmem:[%s1132 + $0x8] sm:$0xf]
        %v1147 = vld [vmem:[%s1132 + $0xc] sm:$0xff]
        %v1148 = vld [vmem:[%s1132 + $0x14] sm:$0xf]
        %1149 = vst [vmem:[#allocation2 + $0xc] sm:$0xff] %v1145
        %1150 = vst [vmem:[#allocation2 + $0x14] sm:$0xf] %v1146
        %1151 = vst [vmem:[#allocation2 + $0x18] sm:$0xff] %v1147
        %1152 = vst [vmem:[#allocation2 + $0x20] sm:$0xf] %v1148
        %v1153 = vld [vmem:[#allocation2] sm:$0xcc]
        %v1154 = vld [vmem:[#allocation2 + $0x8] sm:$0xc]
        %v1155 = vld [vmem:[#allocation2 + $0xc] sm:$0xff]
        %v1156 = vld [vmem:[#allocation2 + $0x14] sm:$0xf]
        %v1157 = vld [vmem:[#allocation2 + $0x18] sm:$0x77]
        %v1158 = vld [vmem:[#allocation2 + $0x20] sm:$0x7]
        %vm1159 = vsmask.f32 1280
        %vm1160 = vsmask.f32 5392
        %vm1161 = vmor %vm1159, %vm1160
        %v1163 = vshrl.u32 %v1153, 16
        %v1165 = vrot.slane %v1163, 6
        %v1166 = vshll.u32 %v1153, 16
        %v1168 = vrot.slane %v1166, 7
        %v1169 = vor.u32 %v1165, %v1168
        %v1170 = vrot.slane %v1169, 4
        %v1172 = vshrl.u32 %v1155, 16
        %v1174 = vrot.slane %v1172, 6
        %v1175 = vshll.u32 %v1155, 16
        %v1177 = vrot.slane %v1175, 7
        %v1178 = vor.u32 %v1174, %v1177
        %v1179 = vsel %vm1161, %v1170, %v1178
        %v1181 = vshrl.u32 %v1154, 16
        %v1183 = vrot.slane %v1181, 6
        %v1184 = vshll.u32 %v1154, 16
        %v1186 = vrot.slane %v1184, 7
        %v1187 = vor.u32 %v1183, %v1186
        %v1188 = vrot.slane %v1187, 4
        %v1190 = vshrl.u32 %v1156, 16
        %v1192 = vrot.slane %v1190, 6
        %v1193 = vshll.u32 %v1156, 16
        %v1195 = vrot.slane %v1193, 7
        %v1196 = vor.u32 %v1192, %v1195
        %v1197 = vsel %vm1161, %v1188, %v1196
        %v1198 = vrot.slane %v1178, 4
        %v1200 = vshrl.u32 %v1157, 16
        %v1202 = vrot.slane %v1200, 6
        %v1203 = vshll.u32 %v1157, 16
        %v1205 = vrot.slane %v1203, 7
        %v1206 = vor.u32 %v1202, %v1205
        %v1207 = vsel %vm1161, %v1198, %v1206
        %v1208 = vrot.slane %v1196, 4
        %v1210 = vshrl.u32 %v1158, 16
        %v1212 = vrot.slane %v1210, 6
        %v1213 = vshll.u32 %v1158, 16
        %v1215 = vrot.slane %v1213, 7
        %v1216 = vor.u32 %v1212, %v1215
        %v1217 = vsel %vm1161, %v1208, %v1216
        %1222 = vst [vmem:[#allocation4] sm:$0xff] %v1179
        %1223 = vst [vmem:[#allocation4 + $0x8] sm:$0xf] %v1197
        %1224 = vst [vmem:[#allocation4 + $0x54] sm:$0xff] %v1207
        %1225 = vst [vmem:[#allocation4 + $0x5c] sm:$0xf] %v1217
        %v1226 = vld [vmem:[#allocation2] sm:$0x88]
        %v1227 = vld [vmem:[#allocation2 + $0x8] sm:$0x8]
        %v1228 = vld [vmem:[#allocation2 + $0xc] sm:$0xff]
        %v1229 = vld [vmem:[#allocation2 + $0x14] sm:$0xf]
        %v1230 = vld [vmem:[#allocation2 + $0x18] sm:$0x77]
        %v1231 = vld [vmem:[#allocation2 + $0x20] sm:$0x7]
        %vm1238 = vcmask 1040384
        %vm1239 = vcmask 1044484
        %vm1240 = vmor %vm1238, %vm1239
        %v1241 = vrot.slane %v1226, 7
        %v1242 = vrot.slane %v1241, 4
        %v1243 = vrot.slane %v1228, 7
        %v1244 = vsel %vm1240, %v1242, %v1243
        %v1245 = vrot.slane %v1227, 7
        %v1246 = vrot.slane %v1245, 4
        %v1247 = vrot.slane %v1229, 7
        %v1248 = vsel %vm1240, %v1246, %v1247
        %v1249 = vrot.slane %v1243, 4
        %v1250 = vrot.slane %v1230, 7
        %v1251 = vsel %vm1240, %v1249, %v1250
        %v1252 = vrot.slane %v1247, 4
        %v1253 = vrot.slane %v1231, 7
        %v1254 = vsel %vm1240, %v1252, %v1253
        %1259 = vst [vmem:[#allocation4 + $0xc] sm:$0xff] %v1244
        %1260 = vst [vmem:[#allocation4 + $0x14] sm:$0xf] %v1248
        %1261 = vst [vmem:[#allocation4 + $0x60] sm:$0xff] %v1251
        %1262 = vst [vmem:[#allocation4 + $0x68] sm:$0xf] %v1254
        %v1263 = vld [vmem:[#allocation2] sm:$0x88]
        %v1264 = vld [vmem:[#allocation2 + $0x8] sm:$0x8]
        %v1265 = vld [vmem:[#allocation2 + $0xc] sm:$0xff]
        %v1266 = vld [vmem:[#allocation2 + $0x14] sm:$0xf]
        %v1267 = vld [vmem:[#allocation2 + $0x18] sm:$0xff]
        %v1268 = vld [vmem:[#allocation2 + $0x20] sm:$0xf]
        %vm1269 = vsmask.f32 256
        %vm1270 = vsmask.f32 4368
        %vm1271 = vmor %vm1269, %vm1270
        %v1273 = vshrl.u32 %v1263, 16
        %v1275 = vrot.slane %v1273, 7
        %v1276 = vrot.slane %v1275, 4
        %v1278 = vshrl.u32 %v1265, 16
        %v1280 = vrot.slane %v1278, 7
        %v1281 = vshll.u32 %v1265, 16
        %v1283 = vor.u32 %v1280, %v1281
        %v1284 = vsel %vm1271, %v1276, %v1283
        %v1286 = vshrl.u32 %v1264, 16
        %v1288 = vrot.slane %v1286, 7
        %v1289 = vrot.slane %v1288, 4
        %v1291 = vshrl.u32 %v1266, 16
        %v1293 = vrot.slane %v1291, 7
        %v1294 = vshll.u32 %v1266, 16
        %v1296 = vor.u32 %v1293, %v1294
        %v1297 = vsel %vm1271, %v1289, %v1296
        %v1298 = vrot.slane %v1280, 4
        %v1300 = vshrl.u32 %v1267, 16
        %v1302 = vrot.slane %v1300, 7
        %v1303 = vshll.u32 %v1267, 16
        %v1305 = vor.u32 %v1302, %v1303
        %v1306 = vsel %vm1271, %v1298, %v1305
        %v1307 = vrot.slane %v1293, 4
        %v1309 = vshrl.u32 %v1268, 16
        %v1311 = vrot.slane %v1309, 7
        %v1312 = vshll.u32 %v1268, 16
        %v1314 = vor.u32 %v1311, %v1312
        %v1315 = vsel %vm1271, %v1307, %v1314
        %1320 = vst [vmem:[#allocation4 + $0x18] sm:$0xff] %v1284
        %1321 = vst [vmem:[#allocation4 + $0x20] sm:$0xf] %v1297
        %1322 = vst [vmem:[#allocation4 + $0x6c] sm:$0xff] %v1306
        %1323 = vst [vmem:[#allocation4 + $0x74] sm:$0xf] %v1315
        %v1324 = vld [vmem:[#allocation2 + $0xc] sm:$0xff]
        %v1325 = vld [vmem:[#allocation2 + $0x14] sm:$0xf]
        %v1326 = vld [vmem:[#allocation2 + $0x18] sm:$0xff]
        %v1327 = vld [vmem:[#allocation2 + $0x20] sm:$0xf]
        %1328 = vst [vmem:[#allocation4 + $0x24] sm:$0xff] %v1324
        %1329 = vst [vmem:[#allocation4 + $0x2c] sm:$0xf] %v1325
        %1330 = vst [vmem:[#allocation4 + $0x78] sm:$0xff] %v1326
        %1331 = vst [vmem:[#allocation4 + $0x80] sm:$0xf] %v1327
        %v1332 = vld [vmem:[#allocation2 + $0xc] sm:$0xff]
        %v1333 = vld [vmem:[#allocation2 + $0x14] sm:$0xf]
        %v1334 = vld [vmem:[#allocation2 + $0x18] sm:$0xff]
        %v1335 = vld [vmem:[#allocation2 + $0x20] sm:$0xf]
        %v1336 = vld [vmem:[#allocation2 + $0x24] sm:$0x11]
        %v1337 = vld [vmem:[#allocation2 + $0x2c] sm:$0x1]
        %vm1338 = vsmask.f32 3328
        %vm1339 = vsmask.f32 7440
        %vm1340 = vmor %vm1338, %vm1339
        %v1342 = vshrl.u32 %v1332, 16
        %v1344 = vrot.slane %v1342, 4
        %v1345 = vshll.u32 %v1332, 16
        %v1347 = vrot.slane %v1345, 5
        %v1348 = vor.u32 %v1344, %v1347
        %v1349 = vrot.slane %v1348, 4
        %v1351 = vshll.u32 %v1334, 16
        %v1353 = vrot.slane %v1351, 5
        %v1354 = vsel %vm1340, %v1349, %v1353
        %v1356 = vshrl.u32 %v1333, 16
        %v1358 = vrot.slane %v1356, 4
        %v1359 = vshll.u32 %v1333, 16
        %v1361 = vrot.slane %v1359, 5
        %v1362 = vor.u32 %v1358, %v1361
        %v1363 = vrot.slane %v1362, 4
        %v1365 = vshll.u32 %v1335, 16
        %v1367 = vrot.slane %v1365, 5
        %v1368 = vsel %vm1340, %v1363, %v1367
        %v1369 = vshrl.u32 %v1334, 16
        %v1371 = vrot.slane %v1369, 4
        %v1372 = vor.u32 %v1371, %v1353
        %v1373 = vrot.slane %v1372, 4
        %v1375 = vshll.u32 %v1336, 16
        %v1377 = vrot.slane %v1375, 5
        %v1378 = vsel %vm1340, %v1373, %v1377
        %v1379 = vshrl.u32 %v1335, 16
        %v1381 = vrot.slane %v1379, 4
        %v1382 = vor.u32 %v1381, %v1367
        %v1383 = vrot.slane %v1382, 4
        %v1385 = vshll.u32 %v1337, 16
        %v1387 = vrot.slane %v1385, 5
        %v1388 = vsel %vm1340, %v1383, %v1387
        %1393 = vst [vmem:[#allocation4 + $0x30] sm:$0xff] %v1354
        %1394 = vst [vmem:[#allocation4 + $0x38] sm:$0xf] %v1368
        %1395 = vst [vmem:[#allocation4 + $0x84] sm:$0xff] %v1378
        %1396 = vst [vmem:[#allocation4 + $0x8c] sm:$0xf] %v1388
        %v1397 = vld [vmem:[#allocation2 + $0xc] sm:$0xee]
        %v1398 = vld [vmem:[#allocation2 + $0x14] sm:$0xe]
        %v1399 = vld [vmem:[#allocation2 + $0x18] sm:$0xff]
        %v1400 = vld [vmem:[#allocation2 + $0x20] sm:$0xf]
        %v1401 = vld [vmem:[#allocation2 + $0x24] sm:$0x11]
        %v1402 = vld [vmem:[#allocation2 + $0x2c] sm:$0x1]
        %vm1409 = vcmask 1042432
        %vm1410 = vcmask 1046532
        %vm1411 = vmor %vm1409, %vm1410
        %v1412 = vrot.slane %v1397, 5
        %v1413 = vrot.slane %v1412, 4
        %v1414 = vrot.slane %v1399, 5
        %v1415 = vsel %vm1411, %v1413, %v1414
        %v1416 = vrot.slane %v1398, 5
        %v1417 = vrot.slane %v1416, 4
        %v1418 = vrot.slane %v1400, 5
        %v1419 = vsel %vm1411, %v1417, %v1418
        %v1420 = vrot.slane %v1414, 4
        %v1421 = vrot.slane %v1401, 5
        %v1422 = vsel %vm1411, %v1420, %v1421
        %v1423 = vrot.slane %v1418, 4
        %v1424 = vrot.slane %v1402, 5
        %v1425 = vsel %vm1411, %v1423, %v1424
        %1430 = vst [vmem:[#allocation4 + $0x3c] sm:$0xff] %v1415
        %1431 = vst [vmem:[#allocation4 + $0x44] sm:$0xf] %v1419
        %1432 = vst [vmem:[#allocation4 + $0x90] sm:$0xff] %v1422
        %1433 = vst [vmem:[#allocation4 + $0x98] sm:$0xf] %v1425
        %v1434 = vld [vmem:[#allocation2 + $0xc] sm:$0xee]
        %v1435 = vld [vmem:[#allocation2 + $0x14] sm:$0xe]
        %v1436 = vld [vmem:[#allocation2 + $0x18] sm:$0xff]
        %v1437 = vld [vmem:[#allocation2 + $0x20] sm:$0xf]
        %v1438 = vld [vmem:[#allocation2 + $0x24] sm:$0x33]
        %v1439 = vld [vmem:[#allocation2 + $0x2c] sm:$0x3]
        %vm1440 = vsmask.f32 2304
        %vm1441 = vsmask.f32 6416
        %vm1442 = vmor %vm1440, %vm1441
        %v1444 = vshrl.u32 %v1434, 16
        %v1446 = vrot.slane %v1444, 5
        %v1447 = vshll.u32 %v1434, 16
        %v1449 = vrot.slane %v1447, 6
        %v1450 = vor.u32 %v1446, %v1449
        %v1451 = vrot.slane %v1450, 4
        %v1453 = vshrl.u32 %v1436, 16
        %v1455 = vrot.slane %v1453, 5
        %v1456 = vshll.u32 %v1436, 16
        %v1458 = vrot.slane %v1456, 6
        %v1459 = vor.u32 %v1455, %v1458
        %v1460 = vsel %vm1442, %v1451, %v1459
        %v1462 = vshrl.u32 %v1435, 16
        %v1464 = vrot.slane %v1462, 5
        %v1465 = vshll.u32 %v1435, 16
        %v1467 = vrot.slane %v1465, 6
        %v1468 = vor.u32 %v1464, %v1467
        %v1469 = vrot.slane %v1468, 4
        %v1471 = vshrl.u32 %v1437, 16
        %v1473 = vrot.slane %v1471, 5
        %v1474 = vshll.u32 %v1437, 16
        %v1476 = vrot.slane %v1474, 6
        %v1477 = vor.u32 %v1473, %v1476
        %v1478 = vsel %vm1442, %v1469, %v1477
        %v1479 = vrot.slane %v1459, 4
        %v1481 = vshrl.u32 %v1438, 16
        %v1483 = vrot.slane %v1481, 5
        %v1484 = vshll.u32 %v1438, 16
        %v1486 = vrot.slane %v1484, 6
        %v1487 = vor.u32 %v1483, %v1486
        %v1488 = vsel %vm1442, %v1479, %v1487
        %v1489 = vrot.slane %v1477, 4
        %v1491 = vshrl.u32 %v1439, 16
        %v1493 = vrot.slane %v1491, 5
        %v1494 = vshll.u32 %v1439, 16
        %v1496 = vrot.slane %v1494, 6
        %v1497 = vor.u32 %v1493, %v1496
        %v1498 = vsel %vm1442, %v1489, %v1497
        %1503 = vst [vmem:[#allocation4 + $0x48] sm:$0xff] %v1460
        %1504 = vst [vmem:[#allocation4 + $0x50] sm:$0xf] %v1478
        %1505 = vst [vmem:[#allocation4 + $0x9c] sm:$0xff] %v1488
        %1506 = vst [vmem:[#allocation4 + $0xa4] sm:$0xf] %v1498
        %v1507 = vld [vmem:[#allocation4] sm:$0xff]
        %v1508 = vld [vmem:[#allocation4 + $0x8] sm:$0xff]
        %v1509 = vld [vmem:[#allocation4 + $0x10] sm:$0xff]
        %v1510 = vld [vmem:[#allocation4 + $0x18] sm:$0xff]
        %v1511 = vld [vmem:[#allocation4 + $0x20] sm:$0xff]
        %v1512 = vld [vmem:[#allocation4 + $0x28] sm:$0xff]
        %v1513 = vld [vmem:[#allocation4 + $0x30] sm:$0xff]
        %v1514 = vld [vmem:[#allocation4 + $0x38] sm:$0xff]
        %v1515 = vld [vmem:[#allocation4 + $0x40] sm:$0xff]
        %v1516 = vld [vmem:[#allocation4 + $0x48] sm:$0xff]
        %v1517 = vld [vmem:[#allocation4 + $0x50] sm:$0xf]
        %v1518 = vld [vmem:[#allocation4 + $0x54] sm:$0xff]
        %v1519 = vld [vmem:[#allocation4 + $0x5c] sm:$0xff]
        %v1520 = vld [vmem:[#allocation4 + $0x64] sm:$0xff]
        %v1521 = vld [vmem:[#allocation4 + $0x6c] sm:$0xff]
        %v1522 = vld [vmem:[#allocation4 + $0x74] sm:$0xff]
        %v1523 = vld [vmem:[#allocation4 + $0x7c] sm:$0xff]
        %v1524 = vld [vmem:[#allocation4 + $0x84] sm:$0xff]
        %v1525 = vld [vmem:[#allocation4 + $0x8c] sm:$0xff]
        %v1526 = vld [vmem:[#allocation4 + $0x94] sm:$0xff]
        %v1527 = vld [vmem:[#allocation4 + $0x9c] sm:$0xff]
        %v1528 = vld [vmem:[#allocation4 + $0xa4] sm:$0xf]
        %v1529 = vld [vmem:[#allocation5] sm:$0xf]
        %v1530 = vld [vmem:[#allocation5 + $0x4] sm:$0xf]
        %v1531 = vld [vmem:[#allocation5 + $0x8] sm:$0xf]
        %v1532 = vld [vmem:[#allocation5 + $0xc] sm:$0xf]
        %v1533 = vld [vmem:[#allocation5 + $0x10] sm:$0xf]
        %v1534 = vld [vmem:[#allocation5 + $0x14] sm:$0xf]
        %v1535 = vld [vmem:[#allocation5 + $0x18] sm:$0xf]
        %v1536 = vld [vmem:[#allocation5 + $0x1c] sm:$0xf]
        %v1537 = vld [vmem:[#allocation5 + $0x20] sm:$0xf]
        %v1538 = vld [vmem:[#allocation5 + $0x24] sm:$0xf]
        %v1539 = vld [vmem:[#allocation5 + $0x28] sm:$0xf]
        %v1540 = vld [vmem:[#allocation5 + $0x2c] sm:$0xf]
        %v1541 = vld [vmem:[#allocation5 + $0x30] sm:$0xf]
        %v1542 = vld [vmem:[#allocation5 + $0x34] sm:$0xf]
        %v1543 = vld [vmem:[#allocation5 + $0x38] sm:$0xf]
        %v1544 = vld [vmem:[#allocation5 + $0x3c] sm:$0xf]
        %v1545 = vld [vmem:[#allocation5 + $0x40] sm:$0xf]
        %v1546 = vld [vmem:[#allocation5 + $0x44] sm:$0xf]
        %v1547 = vld [vmem:[#allocation5 + $0x48] sm:$0xf]
        %v1548 = vld [vmem:[#allocation5 + $0x4c] sm:$0xf]
        %v1549 = vld [vmem:[#allocation5 + $0x50] sm:$0xf]
        %v1550 = vld [vmem:[#allocation5 + $0x54] sm:$0xf]
        %v1551 = vld [vmem:[#allocation5 + $0x58] sm:$0xf]
        %v1552 = vld [vmem:[#allocation5 + $0x5c] sm:$0xf]
        %v1553 = vld [vmem:[#allocation5 + $0x60] sm:$0xf]
        %v1554 = vld [vmem:[#allocation5 + $0x64] sm:$0xf]
        %v1555 = vld [vmem:[#allocation5 + $0x68] sm:$0xf]
        %v1556 = vld [vmem:[#allocation5 + $0x6c] sm:$0xf]
        %v1557 = vld [vmem:[#allocation5 + $0x70] sm:$0xf]
        %v1558 = vld [vmem:[#allocation5 + $0x74] sm:$0xf]
        %v1559 = vld [vmem:[#allocation5 + $0x78] sm:$0xf]
        %v1560 = vld [vmem:[#allocation5 + $0x7c] sm:$0xf]
        %v1561 = vld [vmem:[#allocation5 + $0x80] sm:$0xf]
        %v1562 = vld [vmem:[#allocation5 + $0x84] sm:$0xf]
        %v1563 = vld [vmem:[#allocation5 + $0x88] sm:$0xf]
        %v1564 = vld [vmem:[#allocation5 + $0x8c] sm:$0xf]
        %v1565 = vld [vmem:[#allocation5 + $0x90] sm:$0xf]
        %v1566 = vld [vmem:[#allocation5 + $0x94] sm:$0xf]
        %v1567 = vld [vmem:[#allocation5 + $0x98] sm:$0xf]
        %v1568 = vld [vmem:[#allocation5 + $0x9c] sm:$0xf]
        %v1569 = vld [vmem:[#allocation5 + $0xa0] sm:$0xf]
        %v1570 = vld [vmem:[#allocation5 + $0xa4] sm:$0xf]
        %v1571 = vld [vmem:[#allocation5 + $0xa8] sm:$0xf]
        %v1572 = vld [vmem:[#allocation5 + $0xac] sm:$0xf]
        %v1573 = vld [vmem:[#allocation5 + $0xb0] sm:$0xf]
        %v1574 = vld [vmem:[#allocation5 + $0xb4] sm:$0xf]
        %v1575 = vld [vmem:[#allocation5 + $0xb8] sm:$0xf]
        %v1576 = vld [vmem:[#allocation5 + $0xbc] sm:$0xf]
        %v1577 = vld [vmem:[#allocation5 + $0xc0] sm:$0xf]
        %v1578 = vld [vmem:[#allocation5 + $0xc4] sm:$0xf]
        %v1579 = vld [vmem:[#allocation5 + $0xc8] sm:$0xf]
        %v1580 = vld [vmem:[#allocation5 + $0xcc] sm:$0xf]
        %v1581 = vld [vmem:[#allocation5 + $0xd0] sm:$0xf]
        %v1582 = vld [vmem:[#allocation5 + $0xd4] sm:$0xf]
        %v1583 = vld [vmem:[#allocation5 + $0xd8] sm:$0xf]
        %v1584 = vld [vmem:[#allocation5 + $0xdc] sm:$0xf]
        %v1585 = vld [vmem:[#allocation5 + $0xe0] sm:$0xf]
        %v1586 = vld [vmem:[#allocation5 + $0xe4] sm:$0xf]
        %v1587 = vld [vmem:[#allocation5 + $0xe8] sm:$0xf]
        %v1588 = vld [vmem:[#allocation5 + $0xec] sm:$0xf]
        %v1589 = vld [vmem:[#allocation5 + $0xf0] sm:$0xf]
        %v1590 = vld [vmem:[#allocation5 + $0xf4] sm:$0xf]
        %v1591 = vld [vmem:[#allocation5 + $0xf8] sm:$0xf]
        %v1592 = vld [vmem:[#allocation5 + $0xfc] sm:$0xf]
        %v1593 = vld [vmem:[#allocation5 + $0x100] sm:$0xf]
        %v1594 = vld [vmem:[#allocation5 + $0x104] sm:$0xf]
        %v1595 = vld [vmem:[#allocation5 + $0x108] sm:$0xf]
        %v1596 = vld [vmem:[#allocation5 + $0x10c] sm:$0xf]
        %v1597 = vld [vmem:[#allocation5 + $0x110] sm:$0xf]
        %v1598 = vld [vmem:[#allocation5 + $0x114] sm:$0xf]
        %v1599 = vld [vmem:[#allocation5 + $0x118] sm:$0xf]
        %v1600 = vld [vmem:[#allocation5 + $0x11c] sm:$0xf]
        %v1601 = vld [vmem:[#allocation5 + $0x120] sm:$0xf]
        %v1602 = vld [vmem:[#allocation5 + $0x124] sm:$0xf]
        %v1603 = vld [vmem:[#allocation5 + $0x128] sm:$0xf]
        %v1604 = vld [vmem:[#allocation5 + $0x12c] sm:$0xf]
        %v1605 = vld [vmem:[#allocation5 + $0x130] sm:$0xf]
        %v1606 = vld [vmem:[#allocation5 + $0x134] sm:$0xf]
        %v1607 = vld [vmem:[#allocation5 + $0x138] sm:$0xf]
        %v1608 = vld [vmem:[#allocation5 + $0x13c] sm:$0xf]
        %v1609 = vld [vmem:[#allocation5 + $0x140] sm:$0xf]
        %v1610 = vld [vmem:[#allocation5 + $0x144] sm:$0xf]
        %v1611 = vld [vmem:[#allocation5 + $0x148] sm:$0xf]
        %v1612 = vld [vmem:[#allocation5 + $0x14c] sm:$0xf]
        %v1613 = vld [vmem:[#allocation5 + $0x150] sm:$0xf]
        %v1614 = vld [vmem:[#allocation5 + $0x154] sm:$0xf]
        %v1615 = vld [vmem:[#allocation5 + $0x158] sm:$0xf]
        %v1616 = vld [vmem:[#allocation5 + $0x15c] sm:$0xf]
        %v1617 = vld [vmem:[#allocation5 + $0x160] sm:$0xf]
        %v1618 = vld [vmem:[#allocation5 + $0x164] sm:$0xf]
        %v1619 = vld [vmem:[#allocation5 + $0x168] sm:$0xf]
        %v1620 = vld [vmem:[#allocation5 + $0x16c] sm:$0xf]
        %v1621 = vld [vmem:[#allocation5 + $0x170] sm:$0xf]
        %v1622 = vld [vmem:[#allocation5 + $0x174] sm:$0xf]
        %v1623 = vld [vmem:[#allocation5 + $0x178] sm:$0xf]
        %v1624 = vld [vmem:[#allocation5 + $0x17c] sm:$0xf]
        %v1625 = vld [vmem:[#allocation5 + $0x180] sm:$0xf]
        %v1626 = vld [vmem:[#allocation5 + $0x184] sm:$0xf]
        %v1627 = vld [vmem:[#allocation5 + $0x188] sm:$0xf]
        %v1628 = vld [vmem:[#allocation5 + $0x18c] sm:$0xf]
        %v1629 = vld [vmem:[#allocation5 + $0x190] sm:$0xf]
        %v1630 = vld [vmem:[#allocation5 + $0x194] sm:$0xf]
        %v1631 = vld [vmem:[#allocation5 + $0x198] sm:$0xf]
        %v1632 = vld [vmem:[#allocation5 + $0x19c] sm:$0xf]
        %v1633 = vld [vmem:[#allocation5 + $0x1a0] sm:$0xf]
        %v1634 = vld [vmem:[#allocation5 + $0x1a4] sm:$0xf]
        %v1635 = vld [vmem:[#allocation5 + $0x1a8] sm:$0xf]
        %v1636 = vld [vmem:[#allocation5 + $0x1ac] sm:$0xf]
        %v1637 = vld [vmem:[#allocation5 + $0x1b0] sm:$0xf]
        %v1638 = vld [vmem:[#allocation5 + $0x1b4] sm:$0xf]
        %v1639 = vld [vmem:[#allocation5 + $0x1b8] sm:$0xf]
        %v1640 = vld [vmem:[#allocation5 + $0x1bc] sm:$0xf]
        %v1641 = vld [vmem:[#allocation5 + $0x1c0] sm:$0xf]
        %v1642 = vld [vmem:[#allocation5 + $0x1c4] sm:$0xf]
        %v1643 = vld [vmem:[#allocation5 + $0x1c8] sm:$0xf]
        %v1644 = vld [vmem:[#allocation5 + $0x1cc] sm:$0xf]
        %v1645 = vld [vmem:[#allocation5 + $0x1d0] sm:$0xf]
        %v1646 = vld [vmem:[#allocation5 + $0x1d4] sm:$0xf]
        %v1647 = vld [vmem:[#allocation5 + $0x1d8] sm:$0xf]
        %v1648 = vld [vmem:[#allocation5 + $0x1dc] sm:$0xf]
        %v1649 = vld [vmem:[#allocation5 + $0x1e0] sm:$0xf]
        %v1650 = vld [vmem:[#allocation5 + $0x1e4] sm:$0xf]
        %v1651 = vld [vmem:[#allocation5 + $0x1e8] sm:$0xf]
        %v1652 = vld [vmem:[#allocation5 + $0x1ec] sm:$0xf]
        %v1653 = vld [vmem:[#allocation5 + $0x1f0] sm:$0xf]
        %v1654 = vld [vmem:[#allocation5 + $0x1f4] sm:$0xf]
        %v1655 = vld [vmem:[#allocation5 + $0x1f8] sm:$0xf]
        %v1656 = vld [vmem:[#allocation5 + $0x1fc] sm:$0xf]
        %v1657 = vld [vmem:[#allocation5 + $0x200] sm:$0xf]
        %v1658 = vld [vmem:[#allocation5 + $0x204] sm:$0xf]
        %v1659 = vld [vmem:[#allocation5 + $0x208] sm:$0xf]
        %v1660 = vld [vmem:[#allocation5 + $0x20c] sm:$0xf]
        %v1661 = vld [vmem:[#allocation5 + $0x210] sm:$0xf]
        %v1662 = vld [vmem:[#allocation5 + $0x214] sm:$0xf]
        %v1663 = vld [vmem:[#allocation5 + $0x218] sm:$0xf]
        %v1664 = vld [vmem:[#allocation5 + $0x21c] sm:$0xf]
        %v1665 = vld [vmem:[#allocation5 + $0x220] sm:$0xf]
        %v1666 = vld [vmem:[#allocation5 + $0x224] sm:$0xf]
        %v1667 = vld [vmem:[#allocation5 + $0x228] sm:$0xf]
        %v1668 = vld [vmem:[#allocation5 + $0x22c] sm:$0xf]
        %v1669 = vld [vmem:[#allocation5 + $0x230] sm:$0xf]
        %v1670 = vld [vmem:[#allocation5 + $0x234] sm:$0xf]
        %v1671 = vld [vmem:[#allocation5 + $0x238] sm:$0xf]
        %v1672 = vld [vmem:[#allocation5 + $0x23c] sm:$0xf]
        %v1673 = vld [vmem:[#allocation5 + $0x240] sm:$0xf]
        %v1674 = vld [vmem:[#allocation5 + $0x244] sm:$0xf]
        %v1675 = vld [vmem:[#allocation5 + $0x248] sm:$0xf]
        %v1676 = vld [vmem:[#allocation5 + $0x24c] sm:$0xf]
        %v1677 = vld [vmem:[#allocation5 + $0x250] sm:$0xf]
        %v1678 = vld [vmem:[#allocation5 + $0x254] sm:$0xf]
        %v1679 = vld [vmem:[#allocation5 + $0x258] sm:$0xf]
        %v1680 = vld [vmem:[#allocation5 + $0x25c] sm:$0xf]
        %v1681 = vld [vmem:[#allocation5 + $0x260] sm:$0xf]
        %v1682 = vld [vmem:[#allocation5 + $0x264] sm:$0xf]
        %v1683 = vld [vmem:[#allocation5 + $0x268] sm:$0xf]
        %v1684 = vld [vmem:[#allocation5 + $0x26c] sm:$0xf]
        %v1685 = vld [vmem:[#allocation5 + $0x270] sm:$0xf]
        %v1686 = vld [vmem:[#allocation5 + $0x274] sm:$0xf]
        %v1687 = vld [vmem:[#allocation5 + $0x278] sm:$0xf]
        %v1688 = vld [vmem:[#allocation5 + $0x27c] sm:$0xf]
        %v1689 = vld [vmem:[#allocation5 + $0x280] sm:$0xf]
        %v1690 = vld [vmem:[#allocation5 + $0x284] sm:$0xf]
        %v1691 = vld [vmem:[#allocation5 + $0x288] sm:$0xf]
        %v1692 = vld [vmem:[#allocation5 + $0x28c] sm:$0xf]
        %v1693 = vld [vmem:[#allocation5 + $0x290] sm:$0xf]
        %v1694 = vld [vmem:[#allocation5 + $0x294] sm:$0xf]
        %v1695 = vld [vmem:[#allocation5 + $0x298] sm:$0xf]
        %v1696 = vld [vmem:[#allocation5 + $0x29c] sm:$0xf]
        %v1697 = vld [vmem:[#allocation5 + $0x2a0] sm:$0xf]
        %v1698 = vld [vmem:[#allocation5 + $0x2a4] sm:$0xf]
        %v1699 = vld [vmem:[#allocation5 + $0x2a8] sm:$0xf]
        %v1700 = vld [vmem:[#allocation5 + $0x2ac] sm:$0xf]
        %v1701 = vld [vmem:[#allocation5 + $0x2b0] sm:$0xf]
        %v1702 = vld [vmem:[#allocation5 + $0x2b4] sm:$0xf]
        %v1703 = vld [vmem:[#allocation5 + $0x2b8] sm:$0xf]
        %v1704 = vld [vmem:[#allocation5 + $0x2bc] sm:$0xf]
        %v1705 = vld [vmem:[#allocation5 + $0x2c0] sm:$0xf]
        %v1706 = vld [vmem:[#allocation5 + $0x2c4] sm:$0xf]
        %v1707 = vld [vmem:[#allocation5 + $0x2c8] sm:$0xf]
        %v1708 = vld [vmem:[#allocation5 + $0x2cc] sm:$0xf]
        %v1709 = vld [vmem:[#allocation5 + $0x2d0] sm:$0xf]
        %v1710 = vld [vmem:[#allocation5 + $0x2d4] sm:$0xf]
        %v1711 = vld [vmem:[#allocation5 + $0x2d8] sm:$0xf]
        %v1712 = vld [vmem:[#allocation5 + $0x2dc] sm:$0xf]
        %v1713 = vld [vmem:[#allocation5 + $0x2e0] sm:$0xf]
        %v1714 = vld [vmem:[#allocation5 + $0x2e4] sm:$0xf]
        %v1715 = vld [vmem:[#allocation5 + $0x2e8] sm:$0xf]
        %v1716 = vld [vmem:[#allocation5 + $0x2ec] sm:$0xf]
        %v1717 = vld [vmem:[#allocation5 + $0x2f0] sm:$0xf]
        %v1718 = vld [vmem:[#allocation5 + $0x2f4] sm:$0xf]
        %v1719 = vld [vmem:[#allocation5 + $0x2f8] sm:$0xf]
        %v1720 = vld [vmem:[#allocation5 + $0x2fc] sm:$0xf]
        %v1721 = vld [vmem:[#allocation5 + $0x300] sm:$0xf]
        %v1722 = vld [vmem:[#allocation5 + $0x304] sm:$0xf]
        %v1723 = vld [vmem:[#allocation5 + $0x308] sm:$0xf]
        %v1724 = vld [vmem:[#allocation5 + $0x30c] sm:$0xf]
        %v1725 = vld [vmem:[#allocation5 + $0x310] sm:$0xf]
        %v1726 = vld [vmem:[#allocation5 + $0x314] sm:$0xf]
        %v1727 = vld [vmem:[#allocation5 + $0x318] sm:$0xf]
        %v1728 = vld [vmem:[#allocation5 + $0x31c] sm:$0xf]
        %v1729 = vld [vmem:[#allocation5 + $0x320] sm:$0xf]
        %v1730 = vld [vmem:[#allocation5 + $0x324] sm:$0xf]
        %v1731 = vld [vmem:[#allocation5 + $0x328] sm:$0xf]
        %v1732 = vld [vmem:[#allocation5 + $0x32c] sm:$0xf]
        %v1733 = vld [vmem:[#allocation5 + $0x330] sm:$0xf]
        %v1734 = vld [vmem:[#allocation5 + $0x334] sm:$0xf]
        %v1735 = vld [vmem:[#allocation5 + $0x338] sm:$0xf]
        %v1736 = vld [vmem:[#allocation5 + $0x33c] sm:$0xf]
        %v1737 = vld [vmem:[#allocation5 + $0x340] sm:$0xf]
        %v1738 = vld [vmem:[#allocation5 + $0x344] sm:$0xf]
        %v1739 = vld [vmem:[#allocation5 + $0x348] sm:$0xf]
        %v1740 = vld [vmem:[#allocation5 + $0x34c] sm:$0xf]
        %v1741 = vld [vmem:[#allocation5 + $0x350] sm:$0xf]
        %v1742 = vld [vmem:[#allocation5 + $0x354] sm:$0xf]
        %v1743 = vld [vmem:[#allocation5 + $0x358] sm:$0xf]
        %v1744 = vld [vmem:[#allocation5 + $0x35c] sm:$0xf]
        %v1745 = vld [vmem:[#allocation5 + $0x360] sm:$0xf]
        %v1746 = vld [vmem:[#allocation5 + $0x364] sm:$0xf]
        %v1747 = vld [vmem:[#allocation5 + $0x368] sm:$0xf]
        %v1748 = vld [vmem:[#allocation5 + $0x36c] sm:$0xf]
        %v1749 = vld [vmem:[#allocation5 + $0x370] sm:$0xf]
        %v1750 = vld [vmem:[#allocation5 + $0x374] sm:$0xf]
        %v1751 = vld [vmem:[#allocation5 + $0x378] sm:$0xf]
        %v1752 = vld [vmem:[#allocation5 + $0x37c] sm:$0xf]
        %v1753 = vld [vmem:[#allocation5 + $0x380] sm:$0xf]
        %v1754 = vld [vmem:[#allocation5 + $0x384] sm:$0xf]
        %v1755 = vld [vmem:[#allocation5 + $0x388] sm:$0xf]
        %v1756 = vld [vmem:[#allocation5 + $0x38c] sm:$0xf]
        %v1757 = vld [vmem:[#allocation5 + $0x390] sm:$0xf]
        %v1758 = vld [vmem:[#allocation5 + $0x394] sm:$0xf]
        %v1759 = vld [vmem:[#allocation5 + $0x398] sm:$0xf]
        %v1760 = vld [vmem:[#allocation5 + $0x39c] sm:$0xf]
        %v1761 = vld [vmem:[#allocation5 + $0x3a0] sm:$0xf]
        %v1762 = vld [vmem:[#allocation5 + $0x3a4] sm:$0xf]
        %v1763 = vld [vmem:[#allocation5 + $0x3a8] sm:$0xf]
        %v1764 = vld [vmem:[#allocation5 + $0x3ac] sm:$0xf]
        %v1765 = vld [vmem:[#allocation5 + $0x3b0] sm:$0xf]
        %v1766 = vld [vmem:[#allocation5 + $0x3b4] sm:$0xf]
        %v1767 = vld [vmem:[#allocation5 + $0x3b8] sm:$0xf]
        %v1768 = vld [vmem:[#allocation5 + $0x3bc] sm:$0xf]
        %v1769 = vld [vmem:[#allocation5 + $0x3c0] sm:$0xf]
        %v1770 = vld [vmem:[#allocation5 + $0x3c4] sm:$0xf]
        %v1771 = vld [vmem:[#allocation5 + $0x3c8] sm:$0xf]
        %v1772 = vld [vmem:[#allocation5 + $0x3cc] sm:$0xf]
        %v1773 = vld [vmem:[#allocation5 + $0x3d0] sm:$0xf]
        %v1774 = vld [vmem:[#allocation5 + $0x3d4] sm:$0xf]
        %v1775 = vld [vmem:[#allocation5 + $0x3d8] sm:$0xf]
        %v1776 = vld [vmem:[#allocation5 + $0x3dc] sm:$0xf]
        %v1777 = vld [vmem:[#allocation5 + $0x3e0] sm:$0xf]
        %v1778 = vld [vmem:[#allocation5 + $0x3e4] sm:$0xf]
        %v1779 = vld [vmem:[#allocation5 + $0x3e8] sm:$0xf]
        %v1780 = vld [vmem:[#allocation5 + $0x3ec] sm:$0xf]
        %v1781 = vld [vmem:[#allocation5 + $0x3f0] sm:$0xf]
        %v1782 = vld [vmem:[#allocation5 + $0x3f4] sm:$0xf]
        %v1783 = vld [vmem:[#allocation5 + $0x3f8] sm:$0xf]
        %v1784 = vld [vmem:[#allocation5 + $0x3fc] sm:$0xf]
        %v1785 = vld [vmem:[#allocation5 + $0x400] sm:$0xf]
        %v1786 = vld [vmem:[#allocation5 + $0x404] sm:$0xf]
        %v1787 = vld [vmem:[#allocation5 + $0x408] sm:$0xf]
        %v1788 = vld [vmem:[#allocation5 + $0x40c] sm:$0xf]
        %v1789 = vld [vmem:[#allocation5 + $0x410] sm:$0xf]
        %v1790 = vld [vmem:[#allocation5 + $0x414] sm:$0xf]
        %v1791 = vld [vmem:[#allocation5 + $0x418] sm:$0xf]
        %v1792 = vld [vmem:[#allocation5 + $0x41c] sm:$0xf]
        %v1793 = vld [vmem:[#allocation5 + $0x420] sm:$0xf]
        %v1794 = vld [vmem:[#allocation5 + $0x424] sm:$0xf]
        %v1795 = vld [vmem:[#allocation5 + $0x428] sm:$0xf]
        %v1796 = vld [vmem:[#allocation5 + $0x42c] sm:$0xf]
        %v1797 = vld [vmem:[#allocation5 + $0x430] sm:$0xf]
        %v1798 = vld [vmem:[#allocation5 + $0x434] sm:$0xf]
        %v1799 = vld [vmem:[#allocation5 + $0x438] sm:$0xf]
        %v1800 = vld [vmem:[#allocation5 + $0x43c] sm:$0xf]
        %v1801 = vld [vmem:[#allocation5 + $0x440] sm:$0xf]
        %v1802 = vld [vmem:[#allocation5 + $0x444] sm:$0xf]
        %v1803 = vld [vmem:[#allocation5 + $0x448] sm:$0xf]
        %v1804 = vld [vmem:[#allocation5 + $0x44c] sm:$0xf]
        %v1805 = vld [vmem:[#allocation5 + $0x450] sm:$0xf]
        %v1806 = vld [vmem:[#allocation5 + $0x454] sm:$0xf]
        %v1807 = vld [vmem:[#allocation5 + $0x458] sm:$0xf]
        %v1808 = vld [vmem:[#allocation5 + $0x45c] sm:$0xf]
        %v1809 = vld [vmem:[#allocation5 + $0x460] sm:$0xf]
        %v1810 = vld [vmem:[#allocation5 + $0x464] sm:$0xf]
        %v1811 = vld [vmem:[#allocation5 + $0x468] sm:$0xf]
        %v1812 = vld [vmem:[#allocation5 + $0x46c] sm:$0xf]
        %v1813 = vld [vmem:[#allocation5 + $0x470] sm:$0xf]
        %v1814 = vld [vmem:[#allocation5 + $0x474] sm:$0xf]
        %v1815 = vld [vmem:[#allocation5 + $0x478] sm:$0xf]
        %v1816 = vld [vmem:[#allocation5 + $0x47c] sm:$0xf]
        %v1817 = vld [vmem:[#allocation5 + $0x480] sm:$0xf]
        %v1818 = vld [vmem:[#allocation5 + $0x484] sm:$0xf]
        %v1819 = vld [vmem:[#allocation5 + $0x488] sm:$0xf]
        %v1820 = vld [vmem:[#allocation5 + $0x48c] sm:$0xf]
        %v1821 = vld [vmem:[#allocation5 + $0x490] sm:$0xf]
        %v1822 = vld [vmem:[#allocation5 + $0x494] sm:$0xf]
        %v1823 = vld [vmem:[#allocation5 + $0x498] sm:$0xf]
        %v1824 = vld [vmem:[#allocation5 + $0x49c] sm:$0xf]
        %v1825 = vld [vmem:[#allocation5 + $0x4a0] sm:$0xf]
        %v1826 = vld [vmem:[#allocation5 + $0x4a4] sm:$0xf]
        %v1827 = vld [vmem:[#allocation5 + $0x4a8] sm:$0xf]
        %v1828 = vld [vmem:[#allocation5 + $0x4ac] sm:$0xf]
        %v1829 = vld [vmem:[#allocation5 + $0x4b0] sm:$0xf]
        %v1830 = vld [vmem:[#allocation5 + $0x4b4] sm:$0xf]
        %v1831 = vld [vmem:[#allocation5 + $0x4b8] sm:$0xf]
        %v1832 = vld [vmem:[#allocation5 + $0x4bc] sm:$0xf]
        %v1833 = vld [vmem:[#allocation5 + $0x4c0] sm:$0xf]
        %v1834 = vld [vmem:[#allocation5 + $0x4c4] sm:$0xf]
        %v1835 = vld [vmem:[#allocation5 + $0x4c8] sm:$0xf]
        %v1836 = vld [vmem:[#allocation5 + $0x4cc] sm:$0xf]
        %v1837 = vld [vmem:[#allocation5 + $0x4d0] sm:$0xf]
        %v1838 = vld [vmem:[#allocation5 + $0x4d4] sm:$0xf]
        %v1839 = vld [vmem:[#allocation5 + $0x4d8] sm:$0xf]
        %v1840 = vld [vmem:[#allocation5 + $0x4dc] sm:$0xf]
        %v1841 = vld [vmem:[#allocation5 + $0x4e0] sm:$0xf]
        %v1842 = vld [vmem:[#allocation5 + $0x4e4] sm:$0xf]
        %v1843 = vld [vmem:[#allocation5 + $0x4e8] sm:$0xf]
        %v1844 = vld [vmem:[#allocation5 + $0x4ec] sm:$0xf]
        %v1845 = vld [vmem:[#allocation5 + $0x4f0] sm:$0xf]
        %v1846 = vld [vmem:[#allocation5 + $0x4f4] sm:$0xf]
        %v1847 = vld [vmem:[#allocation5 + $0x4f8] sm:$0xf]
        %v1848 = vld [vmem:[#allocation5 + $0x4fc] sm:$0xf]
        %v1849 = vld [vmem:[#allocation5 + $0x500] sm:$0xf]
        %v1850 = vld [vmem:[#allocation5 + $0x504] sm:$0xf]
        %v1851 = vld [vmem:[#allocation5 + $0x508] sm:$0xf]
        %v1852 = vld [vmem:[#allocation5 + $0x50c] sm:$0xf]
        %v1853 = vld [vmem:[#allocation5 + $0x510] sm:$0xf]
        %v1854 = vld [vmem:[#allocation5 + $0x514] sm:$0xf]
        %v1855 = vld [vmem:[#allocation5 + $0x518] sm:$0xf]
        %v1856 = vld [vmem:[#allocation5 + $0x51c] sm:$0xf]
        %v1857 = vld [vmem:[#allocation5 + $0x520] sm:$0xf]
        %v1858 = vld [vmem:[#allocation5 + $0x524] sm:$0xf]
        %v1859 = vld [vmem:[#allocation5 + $0x528] sm:$0xf]
        %v1860 = vld [vmem:[#allocation5 + $0x52c] sm:$0xf]
        %v1861 = vld [vmem:[#allocation5 + $0x530] sm:$0xf]
        %v1862 = vld [vmem:[#allocation5 + $0x534] sm:$0xf]
        %v1863 = vld [vmem:[#allocation5 + $0x538] sm:$0xf]
        %v1864 = vld [vmem:[#allocation5 + $0x53c] sm:$0xf]
        %v1865 = vld [vmem:[#allocation7] sm:$0x1]
        %v1867 = vperm.slane %v1865, 0
        %v1891 = vunpack.c.l.b16 %v1507
        %v1892 = vunpack.c.h.b16 %v1507
        %v1893 = vunpack.c.l.b16 %v1508
        %v1894 = vunpack.c.h.b16 %v1508
        %v1895 = vunpack.c.l.b16 %v1509
        %v1896 = vunpack.c.h.b16 %v1509
        %v1897 = vunpack.c.l.b16 %v1510
        %v1898 = vunpack.c.h.b16 %v1510
        %v1899 = vunpack.c.l.b16 %v1511
        %v1900 = vunpack.c.h.b16 %v1511
        %v1901 = vunpack.c.l.b16 %v1512
        %v1902 = vunpack.c.h.b16 %v1512
        %v1903 = vunpack.c.l.b16 %v1513
        %v1904 = vunpack.c.h.b16 %v1513
        %v1905 = vunpack.c.l.b16 %v1514
        %v1906 = vunpack.c.h.b16 %v1514
        %v1907 = vunpack.c.l.b16 %v1515
        %v1908 = vunpack.c.h.b16 %v1515
        %v1909 = vunpack.c.l.b16 %v1516
        %v1910 = vunpack.c.h.b16 %v1516
        %v1911 = vunpack.c.l.b16 %v1517
        %v1912 = vunpack.c.l.b16 %v1518
        %v1913 = vunpack.c.h.b16 %v1518
        %v1914 = vunpack.c.l.b16 %v1519
        %v1915 = vunpack.c.h.b16 %v1519
        %v1916 = vunpack.c.l.b16 %v1520
        %v1917 = vunpack.c.h.b16 %v1520
        %v1918 = vunpack.c.l.b16 %v1521
        %v1919 = vunpack.c.h.b16 %v1521
        %v1920 = vunpack.c.l.b16 %v1522
        %v1921 = vunpack.c.h.b16 %v1522
        %v1922 = vunpack.c.l.b16 %v1523
        %v1923 = vunpack.c.h.b16 %v1523
        %v1924 = vunpack.c.l.b16 %v1524
        %v1925 = vunpack.c.h.b16 %v1524
        %v1926 = vunpack.c.l.b16 %v1525
        %v1927 = vunpack.c.h.b16 %v1525
        %v1928 = vunpack.c.l.b16 %v1526
        %v1929 = vunpack.c.h.b16 %v1526
        %v1930 = vunpack.c.l.b16 %v1527
        %v1931 = vunpack.c.h.b16 %v1527
        %v1932 = vunpack.c.l.b16 %v1528
        %v1933 = vpack.c.b16 %v1912, %v1891
        %v1934 = vpack.c.b16 %v1913, %v1892
        %v1935 = vpack.c.b16 %v1914, %v1893
        %v1936 = vpack.c.b16 %v1915, %v1894
        %v1937 = vpack.c.b16 %v1916, %v1895
        %v1938 = vpack.c.b16 %v1917, %v1896
        %v1939 = vpack.c.b16 %v1918, %v1897
        %v1940 = vpack.c.b16 %v1919, %v1898
        %v1941 = vpack.c.b16 %v1920, %v1899
        %v1942 = vpack.c.b16 %v1921, %v1900
        %v1943 = vpack.c.b16 %v1922, %v1901
        %v1944 = vpack.c.b16 %v1923, %v1902
        %v1945 = vpack.c.b16 %v1924, %v1903
        %v1946 = vpack.c.b16 %v1925, %v1904
        %v1947 = vpack.c.b16 %v1926, %v1905
        %v1948 = vpack.c.b16 %v1927, %v1906
        %v1949 = vpack.c.b16 %v1928, %v1907
        %v1950 = vpack.c.b16 %v1929, %v1908
        %v1951 = vpack.c.b16 %v1930, %v1909
        %v1952 = vpack.c.b16 %v1931, %v1910
        %v1953 = vpack.c.b16 %v1932, %v1911
        %v2311 = vunpack.c.l.b16 %v1529
        %v2312 = vunpack.c.l.b16 %v1530
        %v2313 = vunpack.c.l.b16 %v1531
        %v2314 = vunpack.c.l.b16 %v1532
        %v2315 = vunpack.c.l.b16 %v1533
        %v2316 = vunpack.c.l.b16 %v1534
        %v2317 = vunpack.c.l.b16 %v1535
        %v2318 = vunpack.c.l.b16 %v1536
        %v2319 = vunpack.c.l.b16 %v1537
        %v2320 = vunpack.c.l.b16 %v1538
        %v2321 = vunpack.c.l.b16 %v1539
        %v2322 = vunpack.c.l.b16 %v1540
        %v2323 = vunpack.c.l.b16 %v1541
        %v2324 = vunpack.c.l.b16 %v1542
        %v2325 = vunpack.c.l.b16 %v1543
        %v2326 = vunpack.c.l.b16 %v1544
        %v2327 = vunpack.c.l.b16 %v1545
        %v2328 = vunpack.c.l.b16 %v1546
        %v2329 = vunpack.c.l.b16 %v1547
        %v2330 = vunpack.c.l.b16 %v1548
        %v2331 = vunpack.c.l.b16 %v1549
        %v2332 = vunpack.c.l.b16 %v1550
        %v2333 = vunpack.c.l.b16 %v1551
        %v2334 = vunpack.c.l.b16 %v1552
        %v2335 = vunpack.c.l.b16 %v1553
        %v2336 = vunpack.c.l.b16 %v1554
        %v2337 = vunpack.c.l.b16 %v1555
        %v2338 = vunpack.c.l.b16 %v1556
        %v2339 = vunpack.c.l.b16 %v1557
        %v2340 = vunpack.c.l.b16 %v1558
        %v2341 = vunpack.c.l.b16 %v1559
        %v2342 = vunpack.c.l.b16 %v1560
        %v2343 = vunpack.c.l.b16 %v1561
        %v2344 = vunpack.c.l.b16 %v1562
        %v2345 = vunpack.c.l.b16 %v1563
        %v2346 = vunpack.c.l.b16 %v1564
        %v2347 = vunpack.c.l.b16 %v1565
        %v2348 = vunpack.c.l.b16 %v1566
        %v2349 = vunpack.c.l.b16 %v1567
        %v2350 = vunpack.c.l.b16 %v1568
        %v2351 = vunpack.c.l.b16 %v1569
        %v2352 = vunpack.c.l.b16 %v1570
        %v2353 = vunpack.c.l.b16 %v1571
        %v2354 = vunpack.c.l.b16 %v1572
        %v2355 = vunpack.c.l.b16 %v1573
        %v2356 = vunpack.c.l.b16 %v1574
        %v2357 = vunpack.c.l.b16 %v1575
        %v2358 = vunpack.c.l.b16 %v1576
        %v2359 = vunpack.c.l.b16 %v1577
        %v2360 = vunpack.c.l.b16 %v1578
        %v2361 = vunpack.c.l.b16 %v1579
        %v2362 = vunpack.c.l.b16 %v1580
        %v2363 = vunpack.c.l.b16 %v1581
        %v2364 = vunpack.c.l.b16 %v1582
        %v2365 = vunpack.c.l.b16 %v1583
        %v2366 = vunpack.c.l.b16 %v1584
        %v2367 = vunpack.c.l.b16 %v1585
        %v2368 = vunpack.c.l.b16 %v1586
        %v2369 = vunpack.c.l.b16 %v1587
        %v2370 = vunpack.c.l.b16 %v1588
        %v2371 = vunpack.c.l.b16 %v1589
        %v2372 = vunpack.c.l.b16 %v1590
        %v2373 = vunpack.c.l.b16 %v1591
        %v2374 = vunpack.c.l.b16 %v1592
        %v2375 = vunpack.c.l.b16 %v1593
        %v2376 = vunpack.c.l.b16 %v1594
        %v2377 = vunpack.c.l.b16 %v1595
        %v2378 = vunpack.c.l.b16 %v1596
        %v2379 = vunpack.c.l.b16 %v1597
        %v2380 = vunpack.c.l.b16 %v1598
        %v2381 = vunpack.c.l.b16 %v1599
        %v2382 = vunpack.c.l.b16 %v1600
        %v2383 = vunpack.c.l.b16 %v1601
        %v2384 = vunpack.c.l.b16 %v1602
        %v2385 = vunpack.c.l.b16 %v1603
        %v2386 = vunpack.c.l.b16 %v1604
        %v2387 = vunpack.c.l.b16 %v1605
        %v2388 = vunpack.c.l.b16 %v1606
        %v2389 = vunpack.c.l.b16 %v1607
        %v2390 = vunpack.c.l.b16 %v1608
        %v2391 = vunpack.c.l.b16 %v1609
        %v2392 = vunpack.c.l.b16 %v1610
        %v2393 = vunpack.c.l.b16 %v1611
        %v2394 = vunpack.c.l.b16 %v1612
        %v2395 = vunpack.c.l.b16 %v1613
        %v2396 = vunpack.c.l.b16 %v1614
        %v2397 = vunpack.c.l.b16 %v1615
        %v2398 = vunpack.c.l.b16 %v1616
        %v2399 = vunpack.c.l.b16 %v1617
        %v2400 = vunpack.c.l.b16 %v1618
        %v2401 = vunpack.c.l.b16 %v1619
        %v2402 = vunpack.c.l.b16 %v1620
        %v2403 = vunpack.c.l.b16 %v1621
        %v2404 = vunpack.c.l.b16 %v1622
        %v2405 = vunpack.c.l.b16 %v1623
        %v2406 = vunpack.c.l.b16 %v1624
        %v2407 = vunpack.c.l.b16 %v1625
        %v2408 = vunpack.c.l.b16 %v1626
        %v2409 = vunpack.c.l.b16 %v1627
        %v2410 = vunpack.c.l.b16 %v1628
        %v2411 = vunpack.c.l.b16 %v1629
        %v2412 = vunpack.c.l.b16 %v1630
        %v2413 = vunpack.c.l.b16 %v1631
        %v2414 = vunpack.c.l.b16 %v1632
        %v2415 = vunpack.c.l.b16 %v1633
        %v2416 = vunpack.c.l.b16 %v1634
        %v2417 = vunpack.c.l.b16 %v1635
        %v2418 = vunpack.c.l.b16 %v1636
        %v2419 = vunpack.c.l.b16 %v1637
        %v2420 = vunpack.c.l.b16 %v1638
        %v2421 = vunpack.c.l.b16 %v1639
        %v2422 = vunpack.c.l.b16 %v1640
        %v2423 = vunpack.c.l.b16 %v1641
        %v2424 = vunpack.c.l.b16 %v1642
        %v2425 = vunpack.c.l.b16 %v1643
        %v2426 = vunpack.c.l.b16 %v1644
        %v2427 = vunpack.c.l.b16 %v1645
        %v2428 = vunpack.c.l.b16 %v1646
        %v2429 = vunpack.c.l.b16 %v1647
        %v2430 = vunpack.c.l.b16 %v1648
        %v2431 = vunpack.c.l.b16 %v1649
        %v2432 = vunpack.c.l.b16 %v1650
        %v2433 = vunpack.c.l.b16 %v1651
        %v2434 = vunpack.c.l.b16 %v1652
        %v2435 = vunpack.c.l.b16 %v1653
        %v2436 = vunpack.c.l.b16 %v1654
        %v2437 = vunpack.c.l.b16 %v1655
        %v2438 = vunpack.c.l.b16 %v1656
        %v2439 = vunpack.c.l.b16 %v1657
        %v2440 = vunpack.c.l.b16 %v1658
        %v2441 = vunpack.c.l.b16 %v1659
        %v2442 = vunpack.c.l.b16 %v1660
        %v2443 = vunpack.c.l.b16 %v1661
        %v2444 = vunpack.c.l.b16 %v1662
        %v2445 = vunpack.c.l.b16 %v1663
        %v2446 = vunpack.c.l.b16 %v1664
        %v2447 = vunpack.c.l.b16 %v1665
        %v2448 = vunpack.c.l.b16 %v1666
        %v2449 = vunpack.c.l.b16 %v1667
        %v2450 = vunpack.c.l.b16 %v1668
        %v2451 = vunpack.c.l.b16 %v1669
        %v2452 = vunpack.c.l.b16 %v1670
        %v2453 = vunpack.c.l.b16 %v1671
        %v2454 = vunpack.c.l.b16 %v1672
        %v2455 = vunpack.c.l.b16 %v1673
        %v2456 = vunpack.c.l.b16 %v1674
        %v2457 = vunpack.c.l.b16 %v1675
        %v2458 = vunpack.c.l.b16 %v1676
        %v2459 = vunpack.c.l.b16 %v1677
        %v2460 = vunpack.c.l.b16 %v1678
        %v2461 = vunpack.c.l.b16 %v1679
        %v2462 = vunpack.c.l.b16 %v1680
        %v2463 = vunpack.c.l.b16 %v1681
        %v2464 = vunpack.c.l.b16 %v1682
        %v2465 = vunpack.c.l.b16 %v1683
        %v2466 = vunpack.c.l.b16 %v1684
        %v2467 = vunpack.c.l.b16 %v1685
        %v2468 = vunpack.c.l.b16 %v1686
        %v2469 = vunpack.c.l.b16 %v1687
        %v2470 = vunpack.c.l.b16 %v1688
        %v2471 = vunpack.c.l.b16 %v1689
        %v2472 = vunpack.c.l.b16 %v1690
        %v2473 = vunpack.c.l.b16 %v1691
        %v2474 = vunpack.c.l.b16 %v1692
        %v2475 = vunpack.c.l.b16 %v1693
        %v2476 = vunpack.c.l.b16 %v1694
        %v2477 = vunpack.c.l.b16 %v1695
        %v2478 = vunpack.c.l.b16 %v1696
        %v2479 = vunpack.c.l.b16 %v1697
        %v2480 = vunpack.c.l.b16 %v1698
        %v2481 = vunpack.c.l.b16 %v1699
        %v2482 = vunpack.c.l.b16 %v1700
        %v2483 = vunpack.c.l.b16 %v1701
        %v2484 = vunpack.c.l.b16 %v1702
        %v2485 = vunpack.c.l.b16 %v1703
        %v2486 = vunpack.c.l.b16 %v1704
        %v2487 = vunpack.c.l.b16 %v1705
        %v2488 = vunpack.c.l.b16 %v1706
        %v2489 = vunpack.c.l.b16 %v1707
        %v2490 = vunpack.c.l.b16 %v1708
        %v2491 = vunpack.c.l.b16 %v1709
        %v2492 = vunpack.c.l.b16 %v1710
        %v2493 = vunpack.c.l.b16 %v1711
        %v2494 = vunpack.c.l.b16 %v1712
        %v2495 = vunpack.c.l.b16 %v1713
        %v2496 = vunpack.c.l.b16 %v1714
        %v2497 = vunpack.c.l.b16 %v1715
        %v2498 = vunpack.c.l.b16 %v1716
        %v2499 = vunpack.c.l.b16 %v1717
        %v2500 = vunpack.c.l.b16 %v1718
        %v2501 = vunpack.c.l.b16 %v1719
        %v2502 = vunpack.c.l.b16 %v1720
        %v2503 = vunpack.c.l.b16 %v1721
        %v2504 = vunpack.c.l.b16 %v1722
        %v2505 = vunpack.c.l.b16 %v1723
        %v2506 = vunpack.c.l.b16 %v1724
        %v2507 = vunpack.c.l.b16 %v1725
        %v2508 = vunpack.c.l.b16 %v1726
        %v2509 = vunpack.c.l.b16 %v1727
        %v2510 = vunpack.c.l.b16 %v1728
        %v2511 = vunpack.c.l.b16 %v1729
        %v2512 = vunpack.c.l.b16 %v1730
        %v2513 = vunpack.c.l.b16 %v1731
        %v2514 = vunpack.c.l.b16 %v1732
        %v2515 = vunpack.c.l.b16 %v1733
        %v2516 = vunpack.c.l.b16 %v1734
        %v2517 = vunpack.c.l.b16 %v1735
        %v2518 = vunpack.c.l.b16 %v1736
        %v2519 = vunpack.c.l.b16 %v1737
        %v2520 = vunpack.c.l.b16 %v1738
        %v2521 = vunpack.c.l.b16 %v1739
        %v2522 = vunpack.c.l.b16 %v1740
        %v2523 = vunpack.c.l.b16 %v1741
        %v2524 = vunpack.c.l.b16 %v1742
        %v2525 = vunpack.c.l.b16 %v1743
        %v2526 = vunpack.c.l.b16 %v1744
        %v2527 = vunpack.c.l.b16 %v1745
        %v2528 = vunpack.c.l.b16 %v1746
        %v2529 = vunpack.c.l.b16 %v1747
        %v2530 = vunpack.c.l.b16 %v1748
        %v2531 = vunpack.c.l.b16 %v1749
        %v2532 = vunpack.c.l.b16 %v1750
        %v2533 = vunpack.c.l.b16 %v1751
        %v2534 = vunpack.c.l.b16 %v1752
        %v2535 = vunpack.c.l.b16 %v1753
        %v2536 = vunpack.c.l.b16 %v1754
        %v2537 = vunpack.c.l.b16 %v1755
        %v2538 = vunpack.c.l.b16 %v1756
        %v2539 = vunpack.c.l.b16 %v1757
        %v2540 = vunpack.c.l.b16 %v1758
        %v2541 = vunpack.c.l.b16 %v1759
        %v2542 = vunpack.c.l.b16 %v1760
        %v2543 = vunpack.c.l.b16 %v1761
        %v2544 = vunpack.c.l.b16 %v1762
        %v2545 = vunpack.c.l.b16 %v1763
        %v2546 = vunpack.c.l.b16 %v1764
        %v2547 = vunpack.c.l.b16 %v1765
        %v2548 = vunpack.c.l.b16 %v1766
        %v2549 = vunpack.c.l.b16 %v1767
        %v2550 = vunpack.c.l.b16 %v1768
        %v2551 = vunpack.c.l.b16 %v1769
        %v2552 = vunpack.c.l.b16 %v1770
        %v2553 = vunpack.c.l.b16 %v1771
        %v2554 = vunpack.c.l.b16 %v1772
        %v2555 = vunpack.c.l.b16 %v1773
        %v2556 = vunpack.c.l.b16 %v1774
        %v2557 = vunpack.c.l.b16 %v1775
        %v2558 = vunpack.c.l.b16 %v1776
        %v2559 = vunpack.c.l.b16 %v1777
        %v2560 = vunpack.c.l.b16 %v1778
        %v2561 = vunpack.c.l.b16 %v1779
        %v2562 = vunpack.c.l.b16 %v1780
        %v2563 = vunpack.c.l.b16 %v1781
        %v2564 = vunpack.c.l.b16 %v1782
        %v2565 = vunpack.c.l.b16 %v1783
        %v2566 = vunpack.c.l.b16 %v1784
        %v2567 = vunpack.c.l.b16 %v1785
        %v2568 = vunpack.c.l.b16 %v1786
        %v2569 = vunpack.c.l.b16 %v1787
        %v2570 = vunpack.c.l.b16 %v1788
        %v2571 = vunpack.c.l.b16 %v1789
        %v2572 = vunpack.c.l.b16 %v1790
        %v2573 = vunpack.c.l.b16 %v1791
        %v2574 = vunpack.c.l.b16 %v1792
        %v2575 = vunpack.c.l.b16 %v1793
        %v2576 = vunpack.c.l.b16 %v1794
        %v2577 = vunpack.c.l.b16 %v1795
        %v2578 = vunpack.c.l.b16 %v1796
        %v2579 = vunpack.c.l.b16 %v1797
        %v2580 = vunpack.c.l.b16 %v1798
        %v2581 = vunpack.c.l.b16 %v1799
        %v2582 = vunpack.c.l.b16 %v1800
        %v2583 = vunpack.c.l.b16 %v1801
        %v2584 = vunpack.c.l.b16 %v1802
        %v2585 = vunpack.c.l.b16 %v1803
        %v2586 = vunpack.c.l.b16 %v1804
        %v2587 = vunpack.c.l.b16 %v1805
        %v2588 = vunpack.c.l.b16 %v1806
        %v2589 = vunpack.c.l.b16 %v1807
        %v2590 = vunpack.c.l.b16 %v1808
        %v2591 = vunpack.c.l.b16 %v1809
        %v2592 = vunpack.c.l.b16 %v1810
        %v2593 = vunpack.c.l.b16 %v1811
        %v2594 = vunpack.c.l.b16 %v1812
        %v2595 = vunpack.c.l.b16 %v1813
        %v2596 = vunpack.c.l.b16 %v1814
        %v2597 = vunpack.c.l.b16 %v1815
        %v2598 = vunpack.c.l.b16 %v1816
        %v2599 = vunpack.c.l.b16 %v1817
        %v2600 = vunpack.c.l.b16 %v1818
        %v2601 = vunpack.c.l.b16 %v1819
        %v2602 = vunpack.c.l.b16 %v1820
        %v2603 = vunpack.c.l.b16 %v1821
        %v2604 = vunpack.c.l.b16 %v1822
        %v2605 = vunpack.c.l.b16 %v1823
        %v2606 = vunpack.c.l.b16 %v1824
        %v2607 = vunpack.c.l.b16 %v1825
        %v2608 = vunpack.c.l.b16 %v1826
        %v2609 = vunpack.c.l.b16 %v1827
        %v2610 = vunpack.c.l.b16 %v1828
        %v2611 = vunpack.c.l.b16 %v1829
        %v2612 = vunpack.c.l.b16 %v1830
        %v2613 = vunpack.c.l.b16 %v1831
        %v2614 = vunpack.c.l.b16 %v1832
        %v2615 = vunpack.c.l.b16 %v1833
        %v2616 = vunpack.c.l.b16 %v1834
        %v2617 = vunpack.c.l.b16 %v1835
        %v2618 = vunpack.c.l.b16 %v1836
        %v2619 = vunpack.c.l.b16 %v1837
        %v2620 = vunpack.c.l.b16 %v1838
        %v2621 = vunpack.c.l.b16 %v1839
        %v2622 = vunpack.c.l.b16 %v1840
        %v2623 = vunpack.c.l.b16 %v1841
        %v2624 = vunpack.c.l.b16 %v1842
        %v2625 = vunpack.c.l.b16 %v1843
        %v2626 = vunpack.c.l.b16 %v1844
        %v2627 = vunpack.c.l.b16 %v1845
        %v2628 = vunpack.c.l.b16 %v1846
        %v2629 = vunpack.c.l.b16 %v1847
        %v2630 = vunpack.c.l.b16 %v1848
        %v2631 = vunpack.c.l.b16 %v1849
        %v2632 = vunpack.c.l.b16 %v1850
        %v2633 = vunpack.c.l.b16 %v1851
        %v2634 = vunpack.c.l.b16 %v1852
        %v2635 = vunpack.c.l.b16 %v1853
        %v2636 = vunpack.c.l.b16 %v1854
        %v2637 = vunpack.c.l.b16 %v1855
        %v2638 = vunpack.c.l.b16 %v1856
        %v2639 = vunpack.c.l.b16 %v1857
        %v2640 = vunpack.c.l.b16 %v1858
        %v2641 = vunpack.c.l.b16 %v1859
        %v2642 = vunpack.c.l.b16 %v1860
        %v2643 = vunpack.c.l.b16 %v1861
        %v2644 = vunpack.c.l.b16 %v1862
        %v2645 = vunpack.c.l.b16 %v1863
        %v2646 = vunpack.c.l.b16 %v1864
        %v2647 = vpack.c.b16 %v2312, %v2311
        %v2648 = vpack.c.b16 %v2314, %v2313
        %v2649 = vpack.c.b16 %v2316, %v2315
        %v2650 = vpack.c.b16 %v2318, %v2317
        %v2651 = vpack.c.b16 %v2320, %v2319
        %v2652 = vpack.c.b16 %v2322, %v2321
        %v2653 = vpack.c.b16 %v2324, %v2323
        %v2654 = vpack.c.b16 %v2326, %v2325
        %v2655 = vpack.c.b16 %v2328, %v2327
        %v2656 = vpack.c.b16 %v2330, %v2329
        %v2657 = vpack.c.b16 %v2332, %v2331
        %v2658 = vpack.c.b16 %v2334, %v2333
        %v2659 = vpack.c.b16 %v2336, %v2335
        %v2660 = vpack.c.b16 %v2338, %v2337
        %v2661 = vpack.c.b16 %v2340, %v2339
        %v2662 = vpack.c.b16 %v2342, %v2341
        %v2663 = vpack.c.b16 %v2344, %v2343
        %v2664 = vpack.c.b16 %v2346, %v2345
        %v2665 = vpack.c.b16 %v2348, %v2347
        %v2666 = vpack.c.b16 %v2350, %v2349
        %v2667 = vpack.c.b16 %v2352, %v2351
        %v2668 = vpack.c.b16 %v2354, %v2353
        %v2669 = vpack.c.b16 %v2356, %v2355
        %v2670 = vpack.c.b16 %v2358, %v2357
        %v2671 = vpack.c.b16 %v2360, %v2359
        %v2672 = vpack.c.b16 %v2362, %v2361
        %v2673 = vpack.c.b16 %v2364, %v2363
        %v2674 = vpack.c.b16 %v2366, %v2365
        %v2675 = vpack.c.b16 %v2368, %v2367
        %v2676 = vpack.c.b16 %v2370, %v2369
        %v2677 = vpack.c.b16 %v2372, %v2371
        %v2678 = vpack.c.b16 %v2374, %v2373
        %v2679 = vpack.c.b16 %v2376, %v2375
        %v2680 = vpack.c.b16 %v2378, %v2377
        %v2681 = vpack.c.b16 %v2380, %v2379
        %v2682 = vpack.c.b16 %v2382, %v2381
        %v2683 = vpack.c.b16 %v2384, %v2383
        %v2684 = vpack.c.b16 %v2386, %v2385
        %v2685 = vpack.c.b16 %v2388, %v2387
        %v2686 = vpack.c.b16 %v2390, %v2389
        %v2687 = vpack.c.b16 %v2392, %v2391
        %v2688 = vpack.c.b16 %v2394, %v2393
        %v2689 = vpack.c.b16 %v2396, %v2395
        %v2690 = vpack.c.b16 %v2398, %v2397
        %v2691 = vpack.c.b16 %v2400, %v2399
        %v2692 = vpack.c.b16 %v2402, %v2401
        %v2693 = vpack.c.b16 %v2404, %v2403
        %v2694 = vpack.c.b16 %v2406, %v2405
        %v2695 = vpack.c.b16 %v2408, %v2407
        %v2696 = vpack.c.b16 %v2410, %v2409
        %v2697 = vpack.c.b16 %v2412, %v2411
        %v2698 = vpack.c.b16 %v2414, %v2413
        %v2699 = vpack.c.b16 %v2416, %v2415
        %v2700 = vpack.c.b16 %v2418, %v2417
        %v2701 = vpack.c.b16 %v2420, %v2419
        %v2702 = vpack.c.b16 %v2422, %v2421
        %v2703 = vpack.c.b16 %v2424, %v2423
        %v2704 = vpack.c.b16 %v2426, %v2425
        %v2705 = vpack.c.b16 %v2428, %v2427
        %v2706 = vpack.c.b16 %v2430, %v2429
        %v2707 = vpack.c.b16 %v2432, %v2431
        %v2708 = vpack.c.b16 %v2434, %v2433
        %v2709 = vpack.c.b16 %v2436, %v2435
        %v2710 = vpack.c.b16 %v2438, %v2437
        %v2711 = vpack.c.b16 %v2440, %v2439
        %v2712 = vpack.c.b16 %v2442, %v2441
        %v2713 = vpack.c.b16 %v2444, %v2443
        %v2714 = vpack.c.b16 %v2446, %v2445
        %v2715 = vpack.c.b16 %v2448, %v2447
        %v2716 = vpack.c.b16 %v2450, %v2449
        %v2717 = vpack.c.b16 %v2452, %v2451
        %v2718 = vpack.c.b16 %v2454, %v2453
        %v2719 = vpack.c.b16 %v2456, %v2455
        %v2720 = vpack.c.b16 %v2458, %v2457
        %v2721 = vpack.c.b16 %v2460, %v2459
        %v2722 = vpack.c.b16 %v2462, %v2461
        %v2723 = vpack.c.b16 %v2464, %v2463
        %v2724 = vpack.c.b16 %v2466, %v2465
        %v2725 = vpack.c.b16 %v2468, %v2467
        %v2726 = vpack.c.b16 %v2470, %v2469
        %v2727 = vpack.c.b16 %v2472, %v2471
        %v2728 = vpack.c.b16 %v2474, %v2473
        %v2729 = vpack.c.b16 %v2476, %v2475
        %v2730 = vpack.c.b16 %v2478, %v2477
        %v2731 = vpack.c.b16 %v2480, %v2479
        %v2732 = vpack.c.b16 %v2482, %v2481
        %v2733 = vpack.c.b16 %v2484, %v2483
        %v2734 = vpack.c.b16 %v2486, %v2485
        %v2735 = vpack.c.b16 %v2488, %v2487
        %v2736 = vpack.c.b16 %v2490, %v2489
        %v2737 = vpack.c.b16 %v2492, %v2491
        %v2738 = vpack.c.b16 %v2494, %v2493
        %v2739 = vpack.c.b16 %v2496, %v2495
        %v2740 = vpack.c.b16 %v2498, %v2497
        %v2741 = vpack.c.b16 %v2500, %v2499
        %v2742 = vpack.c.b16 %v2502, %v2501
        %v2743 = vpack.c.b16 %v2504, %v2503
        %v2744 = vpack.c.b16 %v2506, %v2505
        %v2745 = vpack.c.b16 %v2508, %v2507
        %v2746 = vpack.c.b16 %v2510, %v2509
        %v2747 = vpack.c.b16 %v2512, %v2511
        %v2748 = vpack.c.b16 %v2514, %v2513
        %v2749 = vpack.c.b16 %v2516, %v2515
        %v2750 = vpack.c.b16 %v2518, %v2517
        %v2751 = vpack.c.b16 %v2520, %v2519
        %v2752 = vpack.c.b16 %v2522, %v2521
        %v2753 = vpack.c.b16 %v2524, %v2523
        %v2754 = vpack.c.b16 %v2526, %v2525
        %v2755 = vpack.c.b16 %v2528, %v2527
        %v2756 = vpack.c.b16 %v2530, %v2529
        %v2757 = vpack.c.b16 %v2532, %v2531
        %v2758 = vpack.c.b16 %v2534, %v2533
        %v2759 = vpack.c.b16 %v2536, %v2535
        %v2760 = vpack.c.b16 %v2538, %v2537
        %v2761 = vpack.c.b16 %v2540, %v2539
        %v2762 = vpack.c.b16 %v2542, %v2541
        %v2763 = vpack.c.b16 %v2544, %v2543
        %v2764 = vpack.c.b16 %v2546, %v2545
        %v2765 = vpack.c.b16 %v2548, %v2547
        %v2766 = vpack.c.b16 %v2550, %v2549
        %v2767 = vpack.c.b16 %v2552, %v2551
        %v2768 = vpack.c.b16 %v2554, %v2553
        %v2769 = vpack.c.b16 %v2556, %v2555
        %v2770 = vpack.c.b16 %v2558, %v2557
        %v2771 = vpack.c.b16 %v2560, %v2559
        %v2772 = vpack.c.b16 %v2562, %v2561
        %v2773 = vpack.c.b16 %v2564, %v2563
        %v2774 = vpack.c.b16 %v2566, %v2565
        %v2775 = vpack.c.b16 %v2568, %v2567
        %v2776 = vpack.c.b16 %v2570, %v2569
        %v2777 = vpack.c.b16 %v2572, %v2571
        %v2778 = vpack.c.b16 %v2574, %v2573
        %v2779 = vpack.c.b16 %v2576, %v2575
        %v2780 = vpack.c.b16 %v2578, %v2577
        %v2781 = vpack.c.b16 %v2580, %v2579
        %v2782 = vpack.c.b16 %v2582, %v2581
        %v2783 = vpack.c.b16 %v2584, %v2583
        %v2784 = vpack.c.b16 %v2586, %v2585
        %v2785 = vpack.c.b16 %v2588, %v2587
        %v2786 = vpack.c.b16 %v2590, %v2589
        %v2787 = vpack.c.b16 %v2592, %v2591
        %v2788 = vpack.c.b16 %v2594, %v2593
        %v2789 = vpack.c.b16 %v2596, %v2595
        %v2790 = vpack.c.b16 %v2598, %v2597
        %v2791 = vpack.c.b16 %v2600, %v2599
        %v2792 = vpack.c.b16 %v2602, %v2601
        %v2793 = vpack.c.b16 %v2604, %v2603
        %v2794 = vpack.c.b16 %v2606, %v2605
        %v2795 = vpack.c.b16 %v2608, %v2607
        %v2796 = vpack.c.b16 %v2610, %v2609
        %v2797 = vpack.c.b16 %v2612, %v2611
        %v2798 = vpack.c.b16 %v2614, %v2613
        %v2799 = vpack.c.b16 %v2616, %v2615
        %v2800 = vpack.c.b16 %v2618, %v2617
        %v2801 = vpack.c.b16 %v2620, %v2619
        %v2802 = vpack.c.b16 %v2622, %v2621
        %v2803 = vpack.c.b16 %v2624, %v2623
        %v2804 = vpack.c.b16 %v2626, %v2625
        %v2805 = vpack.c.b16 %v2628, %v2627
        %v2806 = vpack.c.b16 %v2630, %v2629
        %v2807 = vpack.c.b16 %v2632, %v2631
        %v2808 = vpack.c.b16 %v2634, %v2633
        %v2809 = vpack.c.b16 %v2636, %v2635
        %v2810 = vpack.c.b16 %v2638, %v2637
        %v2811 = vpack.c.b16 %v2640, %v2639
        %v2812 = vpack.c.b16 %v2642, %v2641
        %v2813 = vpack.c.b16 %v2644, %v2643
        %v2814 = vpack.c.b16 %v2646, %v2645
        %2983 = vmatpush.bf16.msra.mxu0 %v2654
        %2984 = vmatpush.bf16.msra.mxu0 %v2653
        %2985 = vmatpush.bf16.msra.mxu0 %v2652
        %2986 = vmatpush.bf16.msra.mxu0 %v2651
        %2987 = vmatpush.bf16.msra.mxu0 %v2650
        %2988 = vmatpush.bf16.msra.mxu0 %v2649
        %2989 = vmatpush.bf16.msra.mxu0 %v2648
        %2990 = vmatpush.bf16.msra.mxu0 %v2647
        %2991 = vmatmul.bf16.gmra.mxu0 %v1933
        %v2992 = vpop.f32.mrf.mxu0
        %v2993 = vadd.f32 %v1867, %v2992
        %v2994 = vpop.f32.mrf.mxu0
        %v2995 = vadd.f32 %v1867, %v2994
        %2996 = vdwg.mxu0
        %2997 = vmatpush.bf16.msra.mxu0 %v2662
        %2998 = vmatpush.bf16.msra.mxu0 %v2661
        %2999 = vmatpush.bf16.msra.mxu0 %v2660
        %3000 = vmatpush.bf16.msra.mxu0 %v2659
        %3001 = vmatpush.bf16.msra.mxu0 %v2658
        %3002 = vmatpush.bf16.msra.mxu0 %v2657
        %3003 = vmatpush.bf16.msra.mxu0 %v2656
        %3004 = vmatpush.bf16.msra.mxu0 %v2655
        %3005 = vmatmul.bf16.gmra.mxu0 %v1934
        %v3006 = vpop.f32.mrf.mxu0
        %v3007 = vadd.f32 %v2993, %v3006
        %v3008 = vpop.f32.mrf.mxu0
        %v3009 = vadd.f32 %v2995, %v3008
        %3010 = vdwg.mxu0
        %3011 = vmatpush.bf16.msra.mxu0 %v2670
        %3012 = vmatpush.bf16.msra.mxu0 %v2669
        %3013 = vmatpush.bf16.msra.mxu0 %v2668
        %3014 = vmatpush.bf16.msra.mxu0 %v2667
        %3015 = vmatpush.bf16.msra.mxu0 %v2666
        %3016 = vmatpush.bf16.msra.mxu0 %v2665
        %3017 = vmatpush.bf16.msra.mxu0 %v2664
        %3018 = vmatpush.bf16.msra.mxu0 %v2663
        %3019 = vmatmul.bf16.gmra.mxu0 %v1935
        %v3020 = vpop.f32.mrf.mxu0
        %v3021 = vadd.f32 %v3007, %v3020
        %v3022 = vpop.f32.mrf.mxu0
        %v3023 = vadd.f32 %v3009, %v3022
        %3024 = vdwg.mxu0
        %3025 = vmatpush.bf16.msra.mxu0 %v2678
        %3026 = vmatpush.bf16.msra.mxu0 %v2677
        %3027 = vmatpush.bf16.msra.mxu0 %v2676
        %3028 = vmatpush.bf16.msra.mxu0 %v2675
        %3029 = vmatpush.bf16.msra.mxu0 %v2674
        %3030 = vmatpush.bf16.msra.mxu0 %v2673
        %3031 = vmatpush.bf16.msra.mxu0 %v2672
        %3032 = vmatpush.bf16.msra.mxu0 %v2671
        %3033 = vmatmul.bf16.gmra.mxu0 %v1936
        %v3034 = vpop.f32.mrf.mxu0
        %v3035 = vadd.f32 %v3021, %v3034
        %v3036 = vpop.f32.mrf.mxu0
        %v3037 = vadd.f32 %v3023, %v3036
        %3038 = vdwg.mxu0
        %3039 = vmatpush.bf16.msra.mxu0 %v2686
        %3040 = vmatpush.bf16.msra.mxu0 %v2685
        %3041 = vmatpush.bf16.msra.mxu0 %v2684
        %3042 = vmatpush.bf16.msra.mxu0 %v2683
        %3043 = vmatpush.bf16.msra.mxu0 %v2682
        %3044 = vmatpush.bf16.msra.mxu0 %v2681
        %3045 = vmatpush.bf16.msra.mxu0 %v2680
        %3046 = vmatpush.bf16.msra.mxu0 %v2679
        %3047 = vmatmul.bf16.gmra.mxu0 %v1937
        %v3048 = vpop.f32.mrf.mxu0
        %v3049 = vadd.f32 %v3035, %v3048
        %v3050 = vpop.f32.mrf.mxu0
        %v3051 = vadd.f32 %v3037, %v3050
        %3052 = vdwg.mxu0
        %3053 = vmatpush.bf16.msra.mxu0 %v2694
        %3054 = vmatpush.bf16.msra.mxu0 %v2693
        %3055 = vmatpush.bf16.msra.mxu0 %v2692
        %3056 = vmatpush.bf16.msra.mxu0 %v2691
        %3057 = vmatpush.bf16.msra.mxu0 %v2690
        %3058 = vmatpush.bf16.msra.mxu0 %v2689
        %3059 = vmatpush.bf16.msra.mxu0 %v2688
        %3060 = vmatpush.bf16.msra.mxu0 %v2687
        %3061 = vmatmul.bf16.gmra.mxu0 %v1938
        %v3062 = vpop.f32.mrf.mxu0
        %v3063 = vadd.f32 %v3049, %v3062
        %v3064 = vpop.f32.mrf.mxu0
        %v3065 = vadd.f32 %v3051, %v3064
        %3066 = vdwg.mxu0
        %3067 = vmatpush.bf16.msra.mxu0 %v2702
        %3068 = vmatpush.bf16.msra.mxu0 %v2701
        %3069 = vmatpush.bf16.msra.mxu0 %v2700
        %3070 = vmatpush.bf16.msra.mxu0 %v2699
        %3071 = vmatpush.bf16.msra.mxu0 %v2698
        %3072 = vmatpush.bf16.msra.mxu0 %v2697
        %3073 = vmatpush.bf16.msra.mxu0 %v2696
        %3074 = vmatpush.bf16.msra.mxu0 %v2695
        %3075 = vmatmul.bf16.gmra.mxu0 %v1939
        %v3076 = vpop.f32.mrf.mxu0
        %v3077 = vadd.f32 %v3063, %v3076
        %v3078 = vpop.f32.mrf.mxu0
        %v3079 = vadd.f32 %v3065, %v3078
        %3080 = vdwg.mxu0
        %3081 = vmatpush.bf16.msra.mxu0 %v2710
        %3082 = vmatpush.bf16.msra.mxu0 %v2709
        %3083 = vmatpush.bf16.msra.mxu0 %v2708
        %3084 = vmatpush.bf16.msra.mxu0 %v2707
        %3085 = vmatpush.bf16.msra.mxu0 %v2706
        %3086 = vmatpush.bf16.msra.mxu0 %v2705
        %3087 = vmatpush.bf16.msra.mxu0 %v2704
        %3088 = vmatpush.bf16.msra.mxu0 %v2703
        %3089 = vmatmul.bf16.gmra.mxu0 %v1940
        %v3090 = vpop.f32.mrf.mxu0
        %v3091 = vadd.f32 %v3077, %v3090
        %v3092 = vpop.f32.mrf.mxu0
        %v3093 = vadd.f32 %v3079, %v3092
        %3094 = vdwg.mxu0
        %3095 = vmatpush.bf16.msra.mxu0 %v2718
        %3096 = vmatpush.bf16.msra.mxu0 %v2717
        %3097 = vmatpush.bf16.msra.mxu0 %v2716
        %3098 = vmatpush.bf16.msra.mxu0 %v2715
        %3099 = vmatpush.bf16.msra.mxu0 %v2714
        %3100 = vmatpush.bf16.msra.mxu0 %v2713
        %3101 = vmatpush.bf16.msra.mxu0 %v2712
        %3102 = vmatpush.bf16.msra.mxu0 %v2711
        %3103 = vmatmul.bf16.gmra.mxu0 %v1941
        %v3104 = vpop.f32.mrf.mxu0
        %v3105 = vadd.f32 %v3091, %v3104
        %v3106 = vpop.f32.mrf.mxu0
        %v3107 = vadd.f32 %v3093, %v3106
        %3108 = vdwg.mxu0
        %3109 = vmatpush.bf16.msra.mxu0 %v2726
        %3110 = vmatpush.bf16.msra.mxu0 %v2725
        %3111 = vmatpush.bf16.msra.mxu0 %v2724
        %3112 = vmatpush.bf16.msra.mxu0 %v2723
        %3113 = vmatpush.bf16.msra.mxu0 %v2722
        %3114 = vmatpush.bf16.msra.mxu0 %v2721
        %3115 = vmatpush.bf16.msra.mxu0 %v2720
        %3116 = vmatpush.bf16.msra.mxu0 %v2719
        %3117 = vmatmul.bf16.gmra.mxu0 %v1942
        %v3118 = vpop.f32.mrf.mxu0
        %v3119 = vadd.f32 %v3105, %v3118
        %v3120 = vpop.f32.mrf.mxu0
        %v3121 = vadd.f32 %v3107, %v3120
        %3122 = vdwg.mxu0
        %3123 = vmatpush.bf16.msra.mxu0 %v2734
        %3124 = vmatpush.bf16.msra.mxu0 %v2733
        %3125 = vmatpush.bf16.msra.mxu0 %v2732
        %3126 = vmatpush.bf16.msra.mxu0 %v2731
        %3127 = vmatpush.bf16.msra.mxu0 %v2730
        %3128 = vmatpush.bf16.msra.mxu0 %v2729
        %3129 = vmatpush.bf16.msra.mxu0 %v2728
        %3130 = vmatpush.bf16.msra.mxu0 %v2727
        %3131 = vmatmul.bf16.gmra.mxu0 %v1943
        %v3132 = vpop.f32.mrf.mxu0
        %v3133 = vadd.f32 %v3119, %v3132
        %v3134 = vpop.f32.mrf.mxu0
        %v3135 = vadd.f32 %v3121, %v3134
        %3136 = vdwg.mxu0
        %3137 = vmatpush.bf16.msra.mxu0 %v2742
        %3138 = vmatpush.bf16.msra.mxu0 %v2741
        %3139 = vmatpush.bf16.msra.mxu0 %v2740
        %3140 = vmatpush.bf16.msra.mxu0 %v2739
        %3141 = vmatpush.bf16.msra.mxu0 %v2738
        %3142 = vmatpush.bf16.msra.mxu0 %v2737
        %3143 = vmatpush.bf16.msra.mxu0 %v2736
        %3144 = vmatpush.bf16.msra.mxu0 %v2735
        %3145 = vmatmul.bf16.gmra.mxu0 %v1944
        %v3146 = vpop.f32.mrf.mxu0
        %v3147 = vadd.f32 %v3133, %v3146
        %v3148 = vpop.f32.mrf.mxu0
        %v3149 = vadd.f32 %v3135, %v3148
        %3150 = vdwg.mxu0
        %3151 = vmatpush.bf16.msra.mxu0 %v2750
        %3152 = vmatpush.bf16.msra.mxu0 %v2749
        %3153 = vmatpush.bf16.msra.mxu0 %v2748
        %3154 = vmatpush.bf16.msra.mxu0 %v2747
        %3155 = vmatpush.bf16.msra.mxu0 %v2746
        %3156 = vmatpush.bf16.msra.mxu0 %v2745
        %3157 = vmatpush.bf16.msra.mxu0 %v2744
        %3158 = vmatpush.bf16.msra.mxu0 %v2743
        %3159 = vmatmul.bf16.gmra.mxu0 %v1945
        %v3160 = vpop.f32.mrf.mxu0
        %v3161 = vadd.f32 %v3147, %v3160
        %v3162 = vpop.f32.mrf.mxu0
        %v3163 = vadd.f32 %v3149, %v3162
        %3164 = vdwg.mxu0
        %3165 = vmatpush.bf16.msra.mxu0 %v2758
        %3166 = vmatpush.bf16.msra.mxu0 %v2757
        %3167 = vmatpush.bf16.msra.mxu0 %v2756
        %3168 = vmatpush.bf16.msra.mxu0 %v2755
        %3169 = vmatpush.bf16.msra.mxu0 %v2754
        %3170 = vmatpush.bf16.msra.mxu0 %v2753
        %3171 = vmatpush.bf16.msra.mxu0 %v2752
        %3172 = vmatpush.bf16.msra.mxu0 %v2751
        %3173 = vmatmul.bf16.gmra.mxu0 %v1946
        %v3174 = vpop.f32.mrf.mxu0
        %v3175 = vadd.f32 %v3161, %v3174
        %v3176 = vpop.f32.mrf.mxu0
        %v3177 = vadd.f32 %v3163, %v3176
        %3178 = vdwg.mxu0
        %3179 = vmatpush.bf16.msra.mxu0 %v2766
        %3180 = vmatpush.bf16.msra.mxu0 %v2765
        %3181 = vmatpush.bf16.msra.mxu0 %v2764
        %3182 = vmatpush.bf16.msra.mxu0 %v2763
        %3183 = vmatpush.bf16.msra.mxu0 %v2762
        %3184 = vmatpush.bf16.msra.mxu0 %v2761
        %3185 = vmatpush.bf16.msra.mxu0 %v2760
        %3186 = vmatpush.bf16.msra.mxu0 %v2759
        %3187 = vmatmul.bf16.gmra.mxu0 %v1947
        %v3188 = vpop.f32.mrf.mxu0
        %v3189 = vadd.f32 %v3175, %v3188
        %v3190 = vpop.f32.mrf.mxu0
        %v3191 = vadd.f32 %v3177, %v3190
        %3192 = vdwg.mxu0
        %3193 = vmatpush.bf16.msra.mxu0 %v2774
        %3194 = vmatpush.bf16.msra.mxu0 %v2773
        %3195 = vmatpush.bf16.msra.mxu0 %v2772
        %3196 = vmatpush.bf16.msra.mxu0 %v2771
        %3197 = vmatpush.bf16.msra.mxu0 %v2770
        %3198 = vmatpush.bf16.msra.mxu0 %v2769
        %3199 = vmatpush.bf16.msra.mxu0 %v2768
        %3200 = vmatpush.bf16.msra.mxu0 %v2767
        %3201 = vmatmul.bf16.gmra.mxu0 %v1948
        %v3202 = vpop.f32.mrf.mxu0
        %v3203 = vadd.f32 %v3189, %v3202
        %v3204 = vpop.f32.mrf.mxu0
        %v3205 = vadd.f32 %v3191, %v3204
        %3206 = vdwg.mxu0
        %3207 = vmatpush.bf16.msra.mxu0 %v2782
        %3208 = vmatpush.bf16.msra.mxu0 %v2781
        %3209 = vmatpush.bf16.msra.mxu0 %v2780
        %3210 = vmatpush.bf16.msra.mxu0 %v2779
        %3211 = vmatpush.bf16.msra.mxu0 %v2778
        %3212 = vmatpush.bf16.msra.mxu0 %v2777
        %3213 = vmatpush.bf16.msra.mxu0 %v2776
        %3214 = vmatpush.bf16.msra.mxu0 %v2775
        %3215 = vmatmul.bf16.gmra.mxu0 %v1949
        %v3216 = vpop.f32.mrf.mxu0
        %v3217 = vadd.f32 %v3203, %v3216
        %v3218 = vpop.f32.mrf.mxu0
        %v3219 = vadd.f32 %v3205, %v3218
        %3220 = vdwg.mxu0
        %3221 = vmatpush.bf16.msra.mxu0 %v2790
        %3222 = vmatpush.bf16.msra.mxu0 %v2789
        %3223 = vmatpush.bf16.msra.mxu0 %v2788
        %3224 = vmatpush.bf16.msra.mxu0 %v2787
        %3225 = vmatpush.bf16.msra.mxu0 %v2786
        %3226 = vmatpush.bf16.msra.mxu0 %v2785
        %3227 = vmatpush.bf16.msra.mxu0 %v2784
        %3228 = vmatpush.bf16.msra.mxu0 %v2783
        %3229 = vmatmul.bf16.gmra.mxu0 %v1950
        %v3230 = vpop.f32.mrf.mxu0
        %v3231 = vadd.f32 %v3217, %v3230
        %v3232 = vpop.f32.mrf.mxu0
        %v3233 = vadd.f32 %v3219, %v3232
        %3234 = vdwg.mxu0
        %3235 = vmatpush.bf16.msra.mxu0 %v2798
        %3236 = vmatpush.bf16.msra.mxu0 %v2797
        %3237 = vmatpush.bf16.msra.mxu0 %v2796
        %3238 = vmatpush.bf16.msra.mxu0 %v2795
        %3239 = vmatpush.bf16.msra.mxu0 %v2794
        %3240 = vmatpush.bf16.msra.mxu0 %v2793
        %3241 = vmatpush.bf16.msra.mxu0 %v2792
        %3242 = vmatpush.bf16.msra.mxu0 %v2791
        %3243 = vmatmul.bf16.gmra.mxu0 %v1951
        %v3244 = vpop.f32.mrf.mxu0
        %v3245 = vadd.f32 %v3231, %v3244
        %v3246 = vpop.f32.mrf.mxu0
        %v3247 = vadd.f32 %v3233, %v3246
        %3248 = vdwg.mxu0
        %3249 = vmatpush.bf16.msra.mxu0 %v2806
        %3250 = vmatpush.bf16.msra.mxu0 %v2805
        %3251 = vmatpush.bf16.msra.mxu0 %v2804
        %3252 = vmatpush.bf16.msra.mxu0 %v2803
        %3253 = vmatpush.bf16.msra.mxu0 %v2802
        %3254 = vmatpush.bf16.msra.mxu0 %v2801
        %3255 = vmatpush.bf16.msra.mxu0 %v2800
        %3256 = vmatpush.bf16.msra.mxu0 %v2799
        %3257 = vmatmul.bf16.gmra.mxu0 %v1952
        %v3258 = vpop.f32.mrf.mxu0
        %v3259 = vadd.f32 %v3245, %v3258
        %v3260 = vpop.f32.mrf.mxu0
        %v3261 = vadd.f32 %v3247, %v3260
        %3262 = vdwg.mxu0
        %3263 = vmatpush.bf16.msra.mxu0 %v2814
        %3264 = vmatpush.bf16.msra.mxu0 %v2813
        %3265 = vmatpush.bf16.msra.mxu0 %v2812
        %3266 = vmatpush.bf16.msra.mxu0 %v2811
        %3267 = vmatpush.bf16.msra.mxu0 %v2810
        %3268 = vmatpush.bf16.msra.mxu0 %v2809
        %3269 = vmatpush.bf16.msra.mxu0 %v2808
        %3270 = vmatpush.bf16.msra.mxu0 %v2807
        %3271 = vmatmul.bf16.gmra.mxu0 %v1953
        %v3272 = vpop.f32.mrf.mxu0
        %v3273 = vadd.f32 %v3259, %v3272
        %v3274 = vpop.f32.mrf.mxu0
        %v3275 = vadd.f32 %v3261, %v3274
        %3276 = vdwg.mxu0
        %v3277 = vmax.f32 %v3273, 0.0
        %v3278 = vmax.f32 %v3275, 0.0
        %v3279 = vadd.f32 %v3277, %v3278
        %v3280 = vrot.slane %v3279, 4
        %v3281 = vadd.f32 %v3279, %v3280
        %v3282 = vrot.slane %v3281, 2
        %v3283 = vadd.f32 %v3281, %v3282
        %v3284 = vrot.slane %v3283, 1
        %v3285 = vadd.f32 %v3283, %v3284
        %v3286 = vrcp.pop 16.0
        %v3287 = vmul.f32 16.0, %v3286
        %v3288 = vsub.f32 1.0, %v3287
        %v3289 = vmul.f32 %v3286, %v3288
        %v3290 = vadd.f32 %v3286, %v3289
        %vm3291 = vweird.f32 %v3286
        %v3292 = vsel %vm3291, %v3286, %v3290
        %v3293 = vmul.f32 %v3285, %v3292
        %v3294 = vld [vmem:[#allocation9] sm:$0xff]
        %v3295 = vld [vmem:[#allocation9 + $0x8] sm:$0xff]
        %v3296 = vld [vmem:[#allocation9 + $0x10] sm:$0xff]
        %v3297 = vld [vmem:[#allocation9 + $0x18] sm:$0xff]
        %v3298 = vld [vmem:[#allocation9 + $0x20] sm:$0xff]
        %v3299 = vld [vmem:[#allocation9 + $0x28] sm:$0xff]
        %v3300 = vld [vmem:[#allocation9 + $0x30] sm:$0xff]
        %v3301 = vld [vmem:[#allocation9 + $0x38] sm:$0xff]
        %v3302 = vld [vmem:[#allocation9 + $0x40] sm:$0xff]
        %v3303 = vld [vmem:[#allocation9 + $0x48] sm:$0xff]
        %v3304 = vld [vmem:[#allocation9 + $0x50] sm:$0xff]
        %v3305 = vld [vmem:[#allocation9 + $0x58] sm:$0xff]
        %v3306 = vld [vmem:[#allocation9 + $0x60] sm:$0xff]
        %v3307 = vld [vmem:[#allocation9 + $0x68] sm:$0xff]
        %v3308 = vld [vmem:[#allocation9 + $0x70] sm:$0xff]
        %v3309 = vld [vmem:[#allocation9 + $0x78] sm:$0xff]
        %v3310 = vld [vmem:[#allocation10] sm:$0x1]
        %3311 = vmatpush.msra.mxu0 %v3309
        %3312 = vmatpush.msra.mxu0 %v3308
        %3313 = vmatpush.msra.mxu0 %v3307
        %3314 = vmatpush.msra.mxu0 %v3306
        %3315 = vmatpush.msra.mxu0 %v3305
        %3316 = vmatpush.msra.mxu0 %v3304
        %3317 = vmatpush.msra.mxu0 %v3303
        %3318 = vmatpush.msra.mxu0 %v3302
        %3319 = vmatpush.msra.mxu0 %v3301
        %3320 = vmatpush.msra.mxu0 %v3300
        %3321 = vmatpush.msra.mxu0 %v3299
        %3322 = vmatpush.msra.mxu0 %v3298
        %3323 = vmatpush.msra.mxu0 %v3297
        %3324 = vmatpush.msra.mxu0 %v3296
        %3325 = vmatpush.msra.mxu0 %v3295
        %3326 = vmatpush.msra.mxu0 %v3294
        %3327 = vmatmul.f32.gmra.mxu0 %v3293
        %v3328 = vpop.f32.mrf.mxu0
        %v3329 = vadd.f32 %v3310, %v3328
        %3330 = vdwg.mxu0
        %v3331 = vmax.f32 %v3329, 0.0
        %v3332 = vld [vmem:[#allocation12] sm:$0xff]
        %v3333 = vld [vmem:[#allocation13] sm:$0x1]
        %vm3334 = vcmask 64512
        %v3336 = vsel %vm3334, %v3331, 0
        %3338 = vmatpush.msra.mxu0 0.0
        %3339 = vmatpush.msra.mxu0 0.0
        %3340 = vmatpush.msra.mxu0 0.0
        %3341 = vmatpush.msra.mxu0 0.0
        %3342 = vmatpush.msra.mxu0 0.0
        %3343 = vmatpush.msra.mxu0 0.0
        %3344 = vmatpush.msra.mxu0 0.0
        %3345 = vmatpush.msra.mxu0 0.0
        %3346 = vmatpush.msra.mxu0 0.0
        %3347 = vmatpush.msra.mxu0 0.0
        %3348 = vmatpush.msra.mxu0 0.0
        %3349 = vmatpush.msra.mxu0 0.0
        %3350 = vmatpush.msra.mxu0 0.0
        %3351 = vmatpush.msra.mxu0 0.0
        %3352 = vmatpush.msra.mxu0 0.0
        %3353 = vmatpush.msra.mxu0 %v3332
        %3354 = vmatmul.f32.gmra.mxu0 %v3336
        %v3355 = vpop.f32.mrf.mxu0
        %v3356 = vadd.f32 %v3333, %v3355
        %3357 = vdwg.mxu0
        %v3358 = vxor.u32 %v3356, 2147483648
        %v3359 = vmul.f32 %v3358, 1.442695
        %v3360 = vpow.pop %v3359
        %v3361 = vadd.f32 %v3360, 1.0
        %v3362 = vrcp.pop %v3361
        %v3363 = vmul.f32 %v3361, %v3362
        %v3364 = vsub.f32 1.0, %v3363
        %v3365 = vmul.f32 %v3362, %v3364
        %v3366 = vadd.f32 %v3362, %v3365
        %vm3367 = vweird.f32 %v3361
        %vm3368 = vweird.f32 %v3362
        %vm3369 = vmor %vm3367, %vm3368
        %v3370 = vsel %vm3369, %v3362, %v3366
        %v3371 = vand.u32 2147483647, %v3361
        %vm3372 = vcmp.eq.f32.partialorder %v3371, 8.507059e+37
        %v3373 = vand.u32 %v3361, 2147483648
        %v3374 = vor.u32 1.1754944e-38, %v3373
        %v3375 = vsel %vm3372, %v3374, %v3370
        %v3376 = vmul.f32 1.0, %v3375
        %v3377 = vperm.slane %v3376, 0
        %v3378 = vmul.f32 %v3277, %v3377
        %v3379 = vmul.f32 %v3278, %v3377
        %v3380 = vpack.c.bf16 %v3378, %v3378
        %v3381 = vpack.c.bf16 %v3379, %v3379
        %3382 = vst [vmem:[#allocation3 + $0x4] sm:$0xf] %v3380
        %3383 = vst [vmem:[#allocation3 + $0x8] sm:$0xf] %v3381
        %v3384 = vld [vmem:[#allocation3] sm:$0xc]
        %v3385 = vld [vmem:[#allocation3 + $0x4] sm:$0xf]
        %v3386 = vld [vmem:[#allocation3 + $0x8] sm:$0x3]
        %vm3390 = vcmask 1041408
        %vm3391 = vcmask 1045508
        %vm3392 = vmor %vm3390, %vm3391
        %v3393 = vrot.slane %v3384, 6
        %v3394 = vrot.slane %v3393, 4
        %v3395 = vrot.slane %v3385, 6
        %v3396 = vsel %vm3392, %v3394, %v3395
        %v3397 = vrot.slane %v3395, 4
        %v3398 = vrot.slane %v3386, 6
        %v3399 = vsel %vm3392, %v3397, %v3398
        %3402 = vst [vmem:[#allocation4] sm:$0xf] %v3396
        %3403 = vst [vmem:[#allocation4 + $0x54] sm:$0xf] %v3399
        %v3404 = vld [vmem:[#allocation3] sm:$0xc]
        %v3405 = vld [vmem:[#allocation3 + $0x4] sm:$0xf]
        %v3406 = vld [vmem:[#allocation3 + $0x8] sm:$0x7]
        %v3408 = vshrl.u32 %v3404, 16
        %v3410 = vrot.slane %v3408, 6
        %v3411 = vshll.u32 %v3404, 16
        %v3413 = vrot.slane %v3411, 7
        %v3414 = vor.u32 %v3410, %v3413
        %v3415 = vrot.slane %v3414, 4
        %v3417 = vshrl.u32 %v3405, 16
        %v3419 = vrot.slane %v3417, 6
        %v3420 = vshll.u32 %v3405, 16
        %v3422 = vrot.slane %v3420, 7
        %v3423 = vor.u32 %v3419, %v3422
        %v3424 = vsel %vm1161, %v3415, %v3423
        %v3425 = vrot.slane %v3423, 4
        %v3427 = vshrl.u32 %v3406, 16
        %v3429 = vrot.slane %v3427, 6
        %v3430 = vshll.u32 %v3406, 16
        %v3432 = vrot.slane %v3430, 7
        %v3433 = vor.u32 %v3429, %v3432
        %v3434 = vsel %vm1161, %v3425, %v3433
        %3437 = vst [vmem:[#allocation4 + $0x4] sm:$0xf] %v3424
        %3438 = vst [vmem:[#allocation4 + $0x58] sm:$0xf] %v3434
        %v3439 = vld [vmem:[#allocation3] sm:$0x8]
        %v3440 = vld [vmem:[#allocation3 + $0x4] sm:$0xf]
        %v3441 = vld [vmem:[#allocation3 + $0x8] sm:$0x7]
        %v3445 = vrot.slane %v3439, 7
        %v3446 = vrot.slane %v3445, 4
        %v3447 = vrot.slane %v3440, 7
        %v3448 = vsel %vm1240, %v3446, %v3447
        %v3449 = vrot.slane %v3447, 4
        %v3450 = vrot.slane %v3441, 7
        %v3451 = vsel %vm1240, %v3449, %v3450
        %3454 = vst [vmem:[#allocation4 + $0x8] sm:$0xf] %v3448
        %3455 = vst [vmem:[#allocation4 + $0x5c] sm:$0xf] %v3451
        %v3456 = vld [vmem:[#allocation3] sm:$0x8]
        %v3457 = vld [vmem:[#allocation3 + $0x4] sm:$0xf]
        %v3458 = vld [vmem:[#allocation3 + $0x8] sm:$0xf]
        %v3460 = vshrl.u32 %v3456, 16
        %v3462 = vrot.slane %v3460, 7
        %v3463 = vrot.slane %v3462, 4
        %v3465 = vshrl.u32 %v3457, 16
        %v3467 = vrot.slane %v3465, 7
        %v3468 = vshll.u32 %v3457, 16
        %v3470 = vor.u32 %v3467, %v3468
        %v3471 = vsel %vm1271, %v3463, %v3470
        %v3472 = vrot.slane %v3467, 4
        %v3474 = vshrl.u32 %v3458, 16
        %v3476 = vrot.slane %v3474, 7
        %v3477 = vshll.u32 %v3458, 16
        %v3479 = vor.u32 %v3476, %v3477
        %v3480 = vsel %vm1271, %v3472, %v3479
        %3483 = vst [vmem:[#allocation4 + $0xc] sm:$0xf] %v3471
        %3484 = vst [vmem:[#allocation4 + $0x60] sm:$0xf] %v3480
        %v3485 = vld [vmem:[#allocation3 + $0x4] sm:$0xf]
        %v3486 = vld [vmem:[#allocation3 + $0x8] sm:$0xf]
        %3487 = vst [vmem:[#allocation4 + $0x10] sm:$0xf] %v3485
        %3488 = vst [vmem:[#allocation4 + $0x64] sm:$0xf] %v3486
        %v3489 = vld [vmem:[#allocation3 + $0x4] sm:$0xf]
        %v3490 = vld [vmem:[#allocation3 + $0x8] sm:$0xf]
        %v3491 = vld [vmem:[#allocation3 + $0xc] sm:$0x1]
        %v3493 = vshrl.u32 %v3489, 16
        %v3495 = vrot.slane %v3493, 4
        %v3496 = vshll.u32 %v3489, 16
        %v3498 = vrot.slane %v3496, 5
        %v3499 = vor.u32 %v3495, %v3498
        %v3500 = vrot.slane %v3499, 4
        %v3502 = vshll.u32 %v3490, 16
        %v3504 = vrot.slane %v3502, 5
        %v3505 = vsel %vm1340, %v3500, %v3504
        %v3506 = vshrl.u32 %v3490, 16
        %v3508 = vrot.slane %v3506, 4
        %v3509 = vor.u32 %v3508, %v3504
        %v3510 = vrot.slane %v3509, 4
        %v3512 = vshll.u32 %v3491, 16
        %v3514 = vrot.slane %v3512, 5
        %v3515 = vsel %vm1340, %v3510, %v3514
        %3518 = vst [vmem:[#allocation4 + $0x14] sm:$0xf] %v3505
        %3519 = vst [vmem:[#allocation4 + $0x68] sm:$0xf] %v3515
        %v3520 = vld [vmem:[#allocation3 + $0x4] sm:$0xe]
        %v3521 = vld [vmem:[#allocation3 + $0x8] sm:$0xf]
        %v3522 = vld [vmem:[#allocation3 + $0xc] sm:$0x1]
        %v3526 = vrot.slane %v3520, 5
        %v3527 = vrot.slane %v3526, 4
        %v3528 = vrot.slane %v3521, 5
        %v3529 = vsel %vm1411, %v3527, %v3528
        %v3530 = vrot.slane %v3528, 4
        %v3531 = vrot.slane %v3522, 5
        %v3532 = vsel %vm1411, %v3530, %v3531
        %3535 = vst [vmem:[#allocation4 + $0x18] sm:$0xf] %v3529
        %3536 = vst [vmem:[#allocation4 + $0x6c] sm:$0xf] %v3532
        %v3537 = vld [vmem:[#allocation3 + $0x4] sm:$0xe]
        %v3538 = vld [vmem:[#allocation3 + $0x8] sm:$0xf]
        %v3539 = vld [vmem:[#allocation3 + $0xc] sm:$0x3]
        %v3541 = vshrl.u32 %v3537, 16
        %v3543 = vrot.slane %v3541, 5
        %v3544 = vshll.u32 %v3537, 16
        %v3546 = vrot.slane %v3544, 6
        %v3547 = vor.u32 %v3543, %v3546
        %v3548 = vrot.slane %v3547, 4
        %v3550 = vshrl.u32 %v3538, 16
        %v3552 = vrot.slane %v3550, 5
        %v3553 = vshll.u32 %v3538, 16
        %v3555 = vrot.slane %v3553, 6
        %v3556 = vor.u32 %v3552, %v3555
        %v3557 = vsel %vm1442, %v3548, %v3556
        %v3558 = vrot.slane %v3556, 4
        %v3560 = vshrl.u32 %v3539, 16
        %v3562 = vrot.slane %v3560, 5
        %v3563 = vshll.u32 %v3539, 16
        %v3565 = vrot.slane %v3563, 6
        %v3566 = vor.u32 %v3562, %v3565
        %v3567 = vsel %vm1442, %v3558, %v3566
        %3570 = vst [vmem:[#allocation4 + $0x1c] sm:$0xf] %v3557
        %3571 = vst [vmem:[#allocation4 + $0x70] sm:$0xf] %v3567
        %v3572 = vld [vmem:[#allocation3 + $0x4] sm:$0xc]
        %v3573 = vld [vmem:[#allocation3 + $0x8] sm:$0xf]
        %v3574 = vld [vmem:[#allocation3 + $0xc] sm:$0x3]
        %v3578 = vrot.slane %v3572, 6
        %v3579 = vrot.slane %v3578, 4
        %v3580 = vrot.slane %v3573, 6
        %v3581 = vsel %vm3392, %v3579, %v3580
        %v3582 = vrot.slane %v3580, 4
        %v3583 = vrot.slane %v3574, 6
        %v3584 = vsel %vm3392, %v3582, %v3583
        %3587 = vst [vmem:[#allocation4 + $0x20] sm:$0xf] %v3581
        %3588 = vst [vmem:[#allocation4 + $0x74] sm:$0xf] %v3584
        %v3589 = vld [vmem:[#allocation4] sm:$0xff]
        %v3590 = vld [vmem:[#allocation4 + $0x8] sm:$0xff]
        %v3591 = vld [vmem:[#allocation4 + $0x10] sm:$0xff]
        %v3592 = vld [vmem:[#allocation4 + $0x18] sm:$0xff]
        %v3593 = vld [vmem:[#allocation4 + $0x20] sm:$0xf]
        %v3594 = vld [vmem:[#allocation4 + $0x54] sm:$0xff]
        %v3595 = vld [vmem:[#allocation4 + $0x5c] sm:$0xff]
        %v3596 = vld [vmem:[#allocation4 + $0x64] sm:$0xff]
        %v3597 = vld [vmem:[#allocation4 + $0x6c] sm:$0xff]
        %v3598 = vld [vmem:[#allocation4 + $0x74] sm:$0xf]
        %v3599 = vld [vmem:[#allocation15] sm:$0xf]
        %v3600 = vld [vmem:[#allocation15 + $0x4] sm:$0xf]
        %v3601 = vld [vmem:[#allocation15 + $0x8] sm:$0xf]
        %v3602 = vld [vmem:[#allocation15 + $0xc] sm:$0xf]
        %v3603 = vld [vmem:[#allocation15 + $0x10] sm:$0xf]
        %v3604 = vld [vmem:[#allocation15 + $0x14] sm:$0xf]
        %v3605 = vld [vmem:[#allocation15 + $0x18] sm:$0xf]
        %v3606 = vld [vmem:[#allocation15 + $0x1c] sm:$0xf]
        %v3607 = vld [vmem:[#allocation15 + $0x20] sm:$0xf]
        %v3608 = vld [vmem:[#allocation15 + $0x24] sm:$0xf]
        %v3609 = vld [vmem:[#allocation15 + $0x28] sm:$0xf]
        %v3610 = vld [vmem:[#allocation15 + $0x2c] sm:$0xf]
        %v3611 = vld [vmem:[#allocation15 + $0x30] sm:$0xf]
        %v3612 = vld [vmem:[#allocation15 + $0x34] sm:$0xf]
        %v3613 = vld [vmem:[#allocation15 + $0x38] sm:$0xf]
        %v3614 = vld [vmem:[#allocation15 + $0x3c] sm:$0xf]
        %v3615 = vld [vmem:[#allocation15 + $0x40] sm:$0xf]
        %v3616 = vld [vmem:[#allocation15 + $0x44] sm:$0xf]
        %v3617 = vld [vmem:[#allocation15 + $0x48] sm:$0xf]
        %v3618 = vld [vmem:[#allocation15 + $0x4c] sm:$0xf]
        %v3619 = vld [vmem:[#allocation15 + $0x50] sm:$0xf]
        %v3620 = vld [vmem:[#allocation15 + $0x54] sm:$0xf]
        %v3621 = vld [vmem:[#allocation15 + $0x58] sm:$0xf]
        %v3622 = vld [vmem:[#allocation15 + $0x5c] sm:$0xf]
        %v3623 = vld [vmem:[#allocation15 + $0x60] sm:$0xf]
        %v3624 = vld [vmem:[#allocation15 + $0x64] sm:$0xf]
        %v3625 = vld [vmem:[#allocation15 + $0x68] sm:$0xf]
        %v3626 = vld [vmem:[#allocation15 + $0x6c] sm:$0xf]
        %v3627 = vld [vmem:[#allocation15 + $0x70] sm:$0xf]
        %v3628 = vld [vmem:[#allocation15 + $0x74] sm:$0xf]
        %v3629 = vld [vmem:[#allocation15 + $0x78] sm:$0xf]
        %v3630 = vld [vmem:[#allocation15 + $0x7c] sm:$0xf]
        %v3631 = vld [vmem:[#allocation15 + $0x80] sm:$0xf]
        %v3632 = vld [vmem:[#allocation15 + $0x84] sm:$0xf]
        %v3633 = vld [vmem:[#allocation15 + $0x88] sm:$0xf]
        %v3634 = vld [vmem:[#allocation15 + $0x8c] sm:$0xf]
        %v3635 = vld [vmem:[#allocation15 + $0x90] sm:$0xf]
        %v3636 = vld [vmem:[#allocation15 + $0x94] sm:$0xf]
        %v3637 = vld [vmem:[#allocation15 + $0x98] sm:$0xf]
        %v3638 = vld [vmem:[#allocation15 + $0x9c] sm:$0xf]
        %v3639 = vld [vmem:[#allocation15 + $0xa0] sm:$0xf]
        %v3640 = vld [vmem:[#allocation15 + $0xa4] sm:$0xf]
        %v3641 = vld [vmem:[#allocation15 + $0xa8] sm:$0xf]
        %v3642 = vld [vmem:[#allocation15 + $0xac] sm:$0xf]
        %v3643 = vld [vmem:[#allocation15 + $0xb0] sm:$0xf]
        %v3644 = vld [vmem:[#allocation15 + $0xb4] sm:$0xf]
        %v3645 = vld [vmem:[#allocation15 + $0xb8] sm:$0xf]
        %v3646 = vld [vmem:[#allocation15 + $0xbc] sm:$0xf]
        %v3647 = vld [vmem:[#allocation15 + $0xc0] sm:$0xf]
        %v3648 = vld [vmem:[#allocation15 + $0xc4] sm:$0xf]
        %v3649 = vld [vmem:[#allocation15 + $0xc8] sm:$0xf]
        %v3650 = vld [vmem:[#allocation15 + $0xcc] sm:$0xf]
        %v3651 = vld [vmem:[#allocation15 + $0xd0] sm:$0xf]
        %v3652 = vld [vmem:[#allocation15 + $0xd4] sm:$0xf]
        %v3653 = vld [vmem:[#allocation15 + $0xd8] sm:$0xf]
        %v3654 = vld [vmem:[#allocation15 + $0xdc] sm:$0xf]
        %v3655 = vld [vmem:[#allocation15 + $0xe0] sm:$0xf]
        %v3656 = vld [vmem:[#allocation15 + $0xe4] sm:$0xf]
        %v3657 = vld [vmem:[#allocation15 + $0xe8] sm:$0xf]
        %v3658 = vld [vmem:[#allocation15 + $0xec] sm:$0xf]
        %v3659 = vld [vmem:[#allocation15 + $0xf0] sm:$0xf]
        %v3660 = vld [vmem:[#allocation15 + $0xf4] sm:$0xf]
        %v3661 = vld [vmem:[#allocation15 + $0xf8] sm:$0xf]
        %v3662 = vld [vmem:[#allocation15 + $0xfc] sm:$0xf]
        %v3663 = vld [vmem:[#allocation15 + $0x100] sm:$0xf]
        %v3664 = vld [vmem:[#allocation15 + $0x104] sm:$0xf]
        %v3665 = vld [vmem:[#allocation15 + $0x108] sm:$0xf]
        %v3666 = vld [vmem:[#allocation15 + $0x10c] sm:$0xf]
        %v3667 = vld [vmem:[#allocation15 + $0x110] sm:$0xf]
        %v3668 = vld [vmem:[#allocation15 + $0x114] sm:$0xf]
        %v3669 = vld [vmem:[#allocation15 + $0x118] sm:$0xf]
        %v3670 = vld [vmem:[#allocation15 + $0x11c] sm:$0xf]
        %v3671 = vld [vmem:[#allocation15 + $0x120] sm:$0xf]
        %v3672 = vld [vmem:[#allocation15 + $0x124] sm:$0xf]
        %v3673 = vld [vmem:[#allocation15 + $0x128] sm:$0xf]
        %v3674 = vld [vmem:[#allocation15 + $0x12c] sm:$0xf]
        %v3675 = vld [vmem:[#allocation15 + $0x130] sm:$0xf]
        %v3676 = vld [vmem:[#allocation15 + $0x134] sm:$0xf]
        %v3677 = vld [vmem:[#allocation15 + $0x138] sm:$0xf]
        %v3678 = vld [vmem:[#allocation15 + $0x13c] sm:$0xf]
        %v3679 = vld [vmem:[#allocation15 + $0x140] sm:$0xf]
        %v3680 = vld [vmem:[#allocation15 + $0x144] sm:$0xf]
        %v3681 = vld [vmem:[#allocation15 + $0x148] sm:$0xf]
        %v3682 = vld [vmem:[#allocation15 + $0x14c] sm:$0xf]
        %v3683 = vld [vmem:[#allocation15 + $0x150] sm:$0xf]
        %v3684 = vld [vmem:[#allocation15 + $0x154] sm:$0xf]
        %v3685 = vld [vmem:[#allocation15 + $0x158] sm:$0xf]
        %v3686 = vld [vmem:[#allocation15 + $0x15c] sm:$0xf]
        %v3687 = vld [vmem:[#allocation15 + $0x160] sm:$0xf]
        %v3688 = vld [vmem:[#allocation15 + $0x164] sm:$0xf]
        %v3689 = vld [vmem:[#allocation15 + $0x168] sm:$0xf]
        %v3690 = vld [vmem:[#allocation15 + $0x16c] sm:$0xf]
        %v3691 = vld [vmem:[#allocation15 + $0x170] sm:$0xf]
        %v3692 = vld [vmem:[#allocation15 + $0x174] sm:$0xf]
        %v3693 = vld [vmem:[#allocation15 + $0x178] sm:$0xf]
        %v3694 = vld [vmem:[#allocation15 + $0x17c] sm:$0xf]
        %v3695 = vld [vmem:[#allocation15 + $0x180] sm:$0xf]
        %v3696 = vld [vmem:[#allocation15 + $0x184] sm:$0xf]
        %v3697 = vld [vmem:[#allocation15 + $0x188] sm:$0xf]
        %v3698 = vld [vmem:[#allocation15 + $0x18c] sm:$0xf]
        %v3699 = vld [vmem:[#allocation15 + $0x190] sm:$0xf]
        %v3700 = vld [vmem:[#allocation15 + $0x194] sm:$0xf]
        %v3701 = vld [vmem:[#allocation15 + $0x198] sm:$0xf]
        %v3702 = vld [vmem:[#allocation15 + $0x19c] sm:$0xf]
        %v3703 = vld [vmem:[#allocation15 + $0x1a0] sm:$0xf]
        %v3704 = vld [vmem:[#allocation15 + $0x1a4] sm:$0xf]
        %v3705 = vld [vmem:[#allocation15 + $0x1a8] sm:$0xf]
        %v3706 = vld [vmem:[#allocation15 + $0x1ac] sm:$0xf]
        %v3707 = vld [vmem:[#allocation15 + $0x1b0] sm:$0xf]
        %v3708 = vld [vmem:[#allocation15 + $0x1b4] sm:$0xf]
        %v3709 = vld [vmem:[#allocation15 + $0x1b8] sm:$0xf]
        %v3710 = vld [vmem:[#allocation15 + $0x1bc] sm:$0xf]
        %v3711 = vld [vmem:[#allocation15 + $0x1c0] sm:$0xf]
        %v3712 = vld [vmem:[#allocation15 + $0x1c4] sm:$0xf]
        %v3713 = vld [vmem:[#allocation15 + $0x1c8] sm:$0xf]
        %v3714 = vld [vmem:[#allocation15 + $0x1cc] sm:$0xf]
        %v3715 = vld [vmem:[#allocation15 + $0x1d0] sm:$0xf]
        %v3716 = vld [vmem:[#allocation15 + $0x1d4] sm:$0xf]
        %v3717 = vld [vmem:[#allocation15 + $0x1d8] sm:$0xf]
        %v3718 = vld [vmem:[#allocation15 + $0x1dc] sm:$0xf]
        %v3719 = vld [vmem:[#allocation15 + $0x1e0] sm:$0xf]
        %v3720 = vld [vmem:[#allocation15 + $0x1e4] sm:$0xf]
        %v3721 = vld [vmem:[#allocation15 + $0x1e8] sm:$0xf]
        %v3722 = vld [vmem:[#allocation15 + $0x1ec] sm:$0xf]
        %v3723 = vld [vmem:[#allocation15 + $0x1f0] sm:$0xf]
        %v3724 = vld [vmem:[#allocation15 + $0x1f4] sm:$0xf]
        %v3725 = vld [vmem:[#allocation15 + $0x1f8] sm:$0xf]
        %v3726 = vld [vmem:[#allocation15 + $0x1fc] sm:$0xf]
        %v3727 = vld [vmem:[#allocation15 + $0x200] sm:$0xf]
        %v3728 = vld [vmem:[#allocation15 + $0x204] sm:$0xf]
        %v3729 = vld [vmem:[#allocation15 + $0x208] sm:$0xf]
        %v3730 = vld [vmem:[#allocation15 + $0x20c] sm:$0xf]
        %v3731 = vld [vmem:[#allocation15 + $0x210] sm:$0xf]
        %v3732 = vld [vmem:[#allocation15 + $0x214] sm:$0xf]
        %v3733 = vld [vmem:[#allocation15 + $0x218] sm:$0xf]
        %v3734 = vld [vmem:[#allocation15 + $0x21c] sm:$0xf]
        %v3735 = vld [vmem:[#allocation15 + $0x220] sm:$0xf]
        %v3736 = vld [vmem:[#allocation15 + $0x224] sm:$0xf]
        %v3737 = vld [vmem:[#allocation15 + $0x228] sm:$0xf]
        %v3738 = vld [vmem:[#allocation15 + $0x22c] sm:$0xf]
        %v3739 = vld [vmem:[#allocation15 + $0x230] sm:$0xf]
        %v3740 = vld [vmem:[#allocation15 + $0x234] sm:$0xf]
        %v3741 = vld [vmem:[#allocation15 + $0x238] sm:$0xf]
        %v3742 = vld [vmem:[#allocation15 + $0x23c] sm:$0xf]
        %v3743 = vld [vmem:[#allocation16] sm:$0x1]
        %v3745 = vperm.slane %v3743, 0
        %v3757 = vunpack.c.l.b16 %v3589
        %v3758 = vunpack.c.h.b16 %v3589
        %v3759 = vunpack.c.l.b16 %v3590
        %v3760 = vunpack.c.h.b16 %v3590
        %v3761 = vunpack.c.l.b16 %v3591
        %v3762 = vunpack.c.h.b16 %v3591
        %v3763 = vunpack.c.l.b16 %v3592
        %v3764 = vunpack.c.h.b16 %v3592
        %v3765 = vunpack.c.l.b16 %v3593
        %v3766 = vunpack.c.l.b16 %v3594
        %v3767 = vunpack.c.h.b16 %v3594
        %v3768 = vunpack.c.l.b16 %v3595
        %v3769 = vunpack.c.h.b16 %v3595
        %v3770 = vunpack.c.l.b16 %v3596
        %v3771 = vunpack.c.h.b16 %v3596
        %v3772 = vunpack.c.l.b16 %v3597
        %v3773 = vunpack.c.h.b16 %v3597
        %v3774 = vunpack.c.l.b16 %v3598
        %v3775 = vpack.c.b16 %v3766, %v3757
        %v3776 = vpack.c.b16 %v3767, %v3758
        %v3777 = vpack.c.b16 %v3768, %v3759
        %v3778 = vpack.c.b16 %v3769, %v3760
        %v3779 = vpack.c.b16 %v3770, %v3761
        %v3780 = vpack.c.b16 %v3771, %v3762
        %v3781 = vpack.c.b16 %v3772, %v3763
        %v3782 = vpack.c.b16 %v3773, %v3764
        %v3783 = vpack.c.b16 %v3774, %v3765
        %v3937 = vunpack.c.l.b16 %v3599
        %v3938 = vunpack.c.l.b16 %v3600
        %v3939 = vunpack.c.l.b16 %v3601
        %v3940 = vunpack.c.l.b16 %v3602
        %v3941 = vunpack.c.l.b16 %v3603
        %v3942 = vunpack.c.l.b16 %v3604
        %v3943 = vunpack.c.l.b16 %v3605
        %v3944 = vunpack.c.l.b16 %v3606
        %v3945 = vunpack.c.l.b16 %v3607
        %v3946 = vunpack.c.l.b16 %v3608
        %v3947 = vunpack.c.l.b16 %v3609
        %v3948 = vunpack.c.l.b16 %v3610
        %v3949 = vunpack.c.l.b16 %v3611
        %v3950 = vunpack.c.l.b16 %v3612
        %v3951 = vunpack.c.l.b16 %v3613
        %v3952 = vunpack.c.l.b16 %v3614
        %v3953 = vunpack.c.l.b16 %v3615
        %v3954 = vunpack.c.l.b16 %v3616
        %v3955 = vunpack.c.l.b16 %v3617
        %v3956 = vunpack.c.l.b16 %v3618
        %v3957 = vunpack.c.l.b16 %v3619
        %v3958 = vunpack.c.l.b16 %v3620
        %v3959 = vunpack.c.l.b16 %v3621
        %v3960 = vunpack.c.l.b16 %v3622
        %v3961 = vunpack.c.l.b16 %v3623
        %v3962 = vunpack.c.l.b16 %v3624
        %v3963 = vunpack.c.l.b16 %v3625
        %v3964 = vunpack.c.l.b16 %v3626
        %v3965 = vunpack.c.l.b16 %v3627
        %v3966 = vunpack.c.l.b16 %v3628
        %v3967 = vunpack.c.l.b16 %v3629
        %v3968 = vunpack.c.l.b16 %v3630
        %v3969 = vunpack.c.l.b16 %v3631
        %v3970 = vunpack.c.l.b16 %v3632
        %v3971 = vunpack.c.l.b16 %v3633
        %v3972 = vunpack.c.l.b16 %v3634
        %v3973 = vunpack.c.l.b16 %v3635
        %v3974 = vunpack.c.l.b16 %v3636
        %v3975 = vunpack.c.l.b16 %v3637
        %v3976 = vunpack.c.l.b16 %v3638
        %v3977 = vunpack.c.l.b16 %v3639
        %v3978 = vunpack.c.l.b16 %v3640
        %v3979 = vunpack.c.l.b16 %v3641
        %v3980 = vunpack.c.l.b16 %v3642
        %v3981 = vunpack.c.l.b16 %v3643
        %v3982 = vunpack.c.l.b16 %v3644
        %v3983 = vunpack.c.l.b16 %v3645
        %v3984 = vunpack.c.l.b16 %v3646
        %v3985 = vunpack.c.l.b16 %v3647
        %v3986 = vunpack.c.l.b16 %v3648
        %v3987 = vunpack.c.l.b16 %v3649
        %v3988 = vunpack.c.l.b16 %v3650
        %v3989 = vunpack.c.l.b16 %v3651
        %v3990 = vunpack.c.l.b16 %v3652
        %v3991 = vunpack.c.l.b16 %v3653
        %v3992 = vunpack.c.l.b16 %v3654
        %v3993 = vunpack.c.l.b16 %v3655
        %v3994 = vunpack.c.l.b16 %v3656
        %v3995 = vunpack.c.l.b16 %v3657
        %v3996 = vunpack.c.l.b16 %v3658
        %v3997 = vunpack.c.l.b16 %v3659
        %v3998 = vunpack.c.l.b16 %v3660
        %v3999 = vunpack.c.l.b16 %v3661
        %v4000 = vunpack.c.l.b16 %v3662
        %v4001 = vunpack.c.l.b16 %v3663
        %v4002 = vunpack.c.l.b16 %v3664
        %v4003 = vunpack.c.l.b16 %v3665
        %v4004 = vunpack.c.l.b16 %v3666
        %v4005 = vunpack.c.l.b16 %v3667
        %v4006 = vunpack.c.l.b16 %v3668
        %v4007 = vunpack.c.l.b16 %v3669
        %v4008 = vunpack.c.l.b16 %v3670
        %v4009 = vunpack.c.l.b16 %v3671
        %v4010 = vunpack.c.l.b16 %v3672
        %v4011 = vunpack.c.l.b16 %v3673
        %v4012 = vunpack.c.l.b16 %v3674
        %v4013 = vunpack.c.l.b16 %v3675
        %v4014 = vunpack.c.l.b16 %v3676
        %v4015 = vunpack.c.l.b16 %v3677
        %v4016 = vunpack.c.l.b16 %v3678
        %v4017 = vunpack.c.l.b16 %v3679
        %v4018 = vunpack.c.l.b16 %v3680
        %v4019 = vunpack.c.l.b16 %v3681
        %v4020 = vunpack.c.l.b16 %v3682
        %v4021 = vunpack.c.l.b16 %v3683
        %v4022 = vunpack.c.l.b16 %v3684
        %v4023 = vunpack.c.l.b16 %v3685
        %v4024 = vunpack.c.l.b16 %v3686
        %v4025 = vunpack.c.l.b16 %v3687
        %v4026 = vunpack.c.l.b16 %v3688
        %v4027 = vunpack.c.l.b16 %v3689
        %v4028 = vunpack.c.l.b16 %v3690
        %v4029 = vunpack.c.l.b16 %v3691
        %v4030 = vunpack.c.l.b16 %v3692
        %v4031 = vunpack.c.l.b16 %v3693
        %v4032 = vunpack.c.l.b16 %v3694
        %v4033 = vunpack.c.l.b16 %v3695
        %v4034 = vunpack.c.l.b16 %v3696
        %v4035 = vunpack.c.l.b16 %v3697
        %v4036 = vunpack.c.l.b16 %v3698
        %v4037 = vunpack.c.l.b16 %v3699
        %v4038 = vunpack.c.l.b16 %v3700
        %v4039 = vunpack.c.l.b16 %v3701
        %v4040 = vunpack.c.l.b16 %v3702
        %v4041 = vunpack.c.l.b16 %v3703
        %v4042 = vunpack.c.l.b16 %v3704
        %v4043 = vunpack.c.l.b16 %v3705
        %v4044 = vunpack.c.l.b16 %v3706
        %v4045 = vunpack.c.l.b16 %v3707
        %v4046 = vunpack.c.l.b16 %v3708
        %v4047 = vunpack.c.l.b16 %v3709
        %v4048 = vunpack.c.l.b16 %v3710
        %v4049 = vunpack.c.l.b16 %v3711
        %v4050 = vunpack.c.l.b16 %v3712
        %v4051 = vunpack.c.l.b16 %v3713
        %v4052 = vunpack.c.l.b16 %v3714
        %v4053 = vunpack.c.l.b16 %v3715
        %v4054 = vunpack.c.l.b16 %v3716
        %v4055 = vunpack.c.l.b16 %v3717
        %v4056 = vunpack.c.l.b16 %v3718
        %v4057 = vunpack.c.l.b16 %v3719
        %v4058 = vunpack.c.l.b16 %v3720
        %v4059 = vunpack.c.l.b16 %v3721
        %v4060 = vunpack.c.l.b16 %v3722
        %v4061 = vunpack.c.l.b16 %v3723
        %v4062 = vunpack.c.l.b16 %v3724
        %v4063 = vunpack.c.l.b16 %v3725
        %v4064 = vunpack.c.l.b16 %v3726
        %v4065 = vunpack.c.l.b16 %v3727
        %v4066 = vunpack.c.l.b16 %v3728
        %v4067 = vunpack.c.l.b16 %v3729
        %v4068 = vunpack.c.l.b16 %v3730
        %v4069 = vunpack.c.l.b16 %v3731
        %v4070 = vunpack.c.l.b16 %v3732
        %v4071 = vunpack.c.l.b16 %v3733
        %v4072 = vunpack.c.l.b16 %v3734
        %v4073 = vunpack.c.l.b16 %v3735
        %v4074 = vunpack.c.l.b16 %v3736
        %v4075 = vunpack.c.l.b16 %v3737
        %v4076 = vunpack.c.l.b16 %v3738
        %v4077 = vunpack.c.l.b16 %v3739
        %v4078 = vunpack.c.l.b16 %v3740
        %v4079 = vunpack.c.l.b16 %v3741
        %v4080 = vunpack.c.l.b16 %v3742
        %v4081 = vpack.c.b16 %v3938, %v3937
        %v4082 = vpack.c.b16 %v3940, %v3939
        %v4083 = vpack.c.b16 %v3942, %v3941
        %v4084 = vpack.c.b16 %v3944, %v3943
        %v4085 = vpack.c.b16 %v3946, %v3945
        %v4086 = vpack.c.b16 %v3948, %v3947
        %v4087 = vpack.c.b16 %v3950, %v3949
        %v4088 = vpack.c.b16 %v3952, %v3951
        %v4089 = vpack.c.b16 %v3954, %v3953
        %v4090 = vpack.c.b16 %v3956, %v3955
        %v4091 = vpack.c.b16 %v3958, %v3957
        %v4092 = vpack.c.b16 %v3960, %v3959
        %v4093 = vpack.c.b16 %v3962, %v3961
        %v4094 = vpack.c.b16 %v3964, %v3963
        %v4095 = vpack.c.b16 %v3966, %v3965
        %v4096 = vpack.c.b16 %v3968, %v3967
        %v4097 = vpack.c.b16 %v3970, %v3969
        %v4098 = vpack.c.b16 %v3972, %v3971
        %v4099 = vpack.c.b16 %v3974, %v3973
        %v4100 = vpack.c.b16 %v3976, %v3975
        %v4101 = vpack.c.b16 %v3978, %v3977
        %v4102 = vpack.c.b16 %v3980, %v3979
        %v4103 = vpack.c.b16 %v3982, %v3981
        %v4104 = vpack.c.b16 %v3984, %v3983
        %v4105 = vpack.c.b16 %v3986, %v3985
        %v4106 = vpack.c.b16 %v3988, %v3987
        %v4107 = vpack.c.b16 %v3990, %v3989
        %v4108 = vpack.c.b16 %v3992, %v3991
        %v4109 = vpack.c.b16 %v3994, %v3993
        %v4110 = vpack.c.b16 %v3996, %v3995
        %v4111 = vpack.c.b16 %v3998, %v3997
        %v4112 = vpack.c.b16 %v4000, %v3999
        %v4113 = vpack.c.b16 %v4002, %v4001
        %v4114 = vpack.c.b16 %v4004, %v4003
        %v4115 = vpack.c.b16 %v4006, %v4005
        %v4116 = vpack.c.b16 %v4008, %v4007
        %v4117 = vpack.c.b16 %v4010, %v4009
        %v4118 = vpack.c.b16 %v4012, %v4011
        %v4119 = vpack.c.b16 %v4014, %v4013
        %v4120 = vpack.c.b16 %v4016, %v4015
        %v4121 = vpack.c.b16 %v4018, %v4017
        %v4122 = vpack.c.b16 %v4020, %v4019
        %v4123 = vpack.c.b16 %v4022, %v4021
        %v4124 = vpack.c.b16 %v4024, %v4023
        %v4125 = vpack.c.b16 %v4026, %v4025
        %v4126 = vpack.c.b16 %v4028, %v4027
        %v4127 = vpack.c.b16 %v4030, %v4029
        %v4128 = vpack.c.b16 %v4032, %v4031
        %v4129 = vpack.c.b16 %v4034, %v4033
        %v4130 = vpack.c.b16 %v4036, %v4035
        %v4131 = vpack.c.b16 %v4038, %v4037
        %v4132 = vpack.c.b16 %v4040, %v4039
        %v4133 = vpack.c.b16 %v4042, %v4041
        %v4134 = vpack.c.b16 %v4044, %v4043
        %v4135 = vpack.c.b16 %v4046, %v4045
        %v4136 = vpack.c.b16 %v4048, %v4047
        %v4137 = vpack.c.b16 %v4050, %v4049
        %v4138 = vpack.c.b16 %v4052, %v4051
        %v4139 = vpack.c.b16 %v4054, %v4053
        %v4140 = vpack.c.b16 %v4056, %v4055
        %v4141 = vpack.c.b16 %v4058, %v4057
        %v4142 = vpack.c.b16 %v4060, %v4059
        %v4143 = vpack.c.b16 %v4062, %v4061
        %v4144 = vpack.c.b16 %v4064, %v4063
        %v4145 = vpack.c.b16 %v4066, %v4065
        %v4146 = vpack.c.b16 %v4068, %v4067
        %v4147 = vpack.c.b16 %v4070, %v4069
        %v4148 = vpack.c.b16 %v4072, %v4071
        %v4149 = vpack.c.b16 %v4074, %v4073
        %v4150 = vpack.c.b16 %v4076, %v4075
        %v4151 = vpack.c.b16 %v4078, %v4077
        %v4152 = vpack.c.b16 %v4080, %v4079
        %4225 = vmatpush.bf16.msra.mxu0 %v4088
        %4226 = vmatpush.bf16.msra.mxu0 %v4087
        %4227 = vmatpush.bf16.msra.mxu0 %v4086
        %4228 = vmatpush.bf16.msra.mxu0 %v4085
        %4229 = vmatpush.bf16.msra.mxu0 %v4084
        %4230 = vmatpush.bf16.msra.mxu0 %v4083
        %4231 = vmatpush.bf16.msra.mxu0 %v4082
        %4232 = vmatpush.bf16.msra.mxu0 %v4081
        %4233 = vmatmul.bf16.gmra.mxu0 %v3775
        %v4234 = vpop.f32.mrf.mxu0
        %v4235 = vadd.f32 %v3745, %v4234
        %v4236 = vpop.f32.mrf.mxu0
        %v4237 = vadd.f32 %v3745, %v4236
        %4238 = vdwg.mxu0
        %4239 = vmatpush.bf16.msra.mxu0 %v4096
        %4240 = vmatpush.bf16.msra.mxu0 %v4095
        %4241 = vmatpush.bf16.msra.mxu0 %v4094
        %4242 = vmatpush.bf16.msra.mxu0 %v4093
        %4243 = vmatpush.bf16.msra.mxu0 %v4092
        %4244 = vmatpush.bf16.msra.mxu0 %v4091
        %4245 = vmatpush.bf16.msra.mxu0 %v4090
        %4246 = vmatpush.bf16.msra.mxu0 %v4089
        %4247 = vmatmul.bf16.gmra.mxu0 %v3776
        %v4248 = vpop.f32.mrf.mxu0
        %v4249 = vadd.f32 %v4235, %v4248
        %v4250 = vpop.f32.mrf.mxu0
        %v4251 = vadd.f32 %v4237, %v4250
        %4252 = vdwg.mxu0
        %4253 = vmatpush.bf16.msra.mxu0 %v4104
        %4254 = vmatpush.bf16.msra.mxu0 %v4103
        %4255 = vmatpush.bf16.msra.mxu0 %v4102
        %4256 = vmatpush.bf16.msra.mxu0 %v4101
        %4257 = vmatpush.bf16.msra.mxu0 %v4100
        %4258 = vmatpush.bf16.msra.mxu0 %v4099
        %4259 = vmatpush.bf16.msra.mxu0 %v4098
        %4260 = vmatpush.bf16.msra.mxu0 %v4097
        %4261 = vmatmul.bf16.gmra.mxu0 %v3777
        %v4262 = vpop.f32.mrf.mxu0
        %v4263 = vadd.f32 %v4249, %v4262
        %v4264 = vpop.f32.mrf.mxu0
        %v4265 = vadd.f32 %v4251, %v4264
        %4266 = vdwg.mxu0
        %4267 = vmatpush.bf16.msra.mxu0 %v4112
        %4268 = vmatpush.bf16.msra.mxu0 %v4111
        %4269 = vmatpush.bf16.msra.mxu0 %v4110
        %4270 = vmatpush.bf16.msra.mxu0 %v4109
        %4271 = vmatpush.bf16.msra.mxu0 %v4108
        %4272 = vmatpush.bf16.msra.mxu0 %v4107
        %4273 = vmatpush.bf16.msra.mxu0 %v4106
        %4274 = vmatpush.bf16.msra.mxu0 %v4105
        %4275 = vmatmul.bf16.gmra.mxu0 %v3778
        %v4276 = vpop.f32.mrf.mxu0
        %v4277 = vadd.f32 %v4263, %v4276
        %v4278 = vpop.f32.mrf.mxu0
        %v4279 = vadd.f32 %v4265, %v4278
        %4280 = vdwg.mxu0
        %4281 = vmatpush.bf16.msra.mxu0 %v4120
        %4282 = vmatpush.bf16.msra.mxu0 %v4119
        %4283 = vmatpush.bf16.msra.mxu0 %v4118
        %4284 = vmatpush.bf16.msra.mxu0 %v4117
        %4285 = vmatpush.bf16.msra.mxu0 %v4116
        %4286 = vmatpush.bf16.msra.mxu0 %v4115
        %4287 = vmatpush.bf16.msra.mxu0 %v4114
        %4288 = vmatpush.bf16.msra.mxu0 %v4113
        %4289 = vmatmul.bf16.gmra.mxu0 %v3779
        %v4290 = vpop.f32.mrf.mxu0
        %v4291 = vadd.f32 %v4277, %v4290
        %v4292 = vpop.f32.mrf.mxu0
        %v4293 = vadd.f32 %v4279, %v4292
        %4294 = vdwg.mxu0
        %4295 = vmatpush.bf16.msra.mxu0 %v4128
        %4296 = vmatpush.bf16.msra.mxu0 %v4127
        %4297 = vmatpush.bf16.msra.mxu0 %v4126
        %4298 = vmatpush.bf16.msra.mxu0 %v4125
        %4299 = vmatpush.bf16.msra.mxu0 %v4124
        %4300 = vmatpush.bf16.msra.mxu0 %v4123
        %4301 = vmatpush.bf16.msra.mxu0 %v4122
        %4302 = vmatpush.bf16.msra.mxu0 %v4121
        %4303 = vmatmul.bf16.gmra.mxu0 %v3780
        %v4304 = vpop.f32.mrf.mxu0
        %v4305 = vadd.f32 %v4291, %v4304
        %v4306 = vpop.f32.mrf.mxu0
        %v4307 = vadd.f32 %v4293, %v4306
        %4308 = vdwg.mxu0
        %4309 = vmatpush.bf16.msra.mxu0 %v4136
        %4310 = vmatpush.bf16.msra.mxu0 %v4135
        %4311 = vmatpush.bf16.msra.mxu0 %v4134
        %4312 = vmatpush.bf16.msra.mxu0 %v4133
        %4313 = vmatpush.bf16.msra.mxu0 %v4132
        %4314 = vmatpush.bf16.msra.mxu0 %v4131
        %4315 = vmatpush.bf16.msra.mxu0 %v4130
        %4316 = vmatpush.bf16.msra.mxu0 %v4129
        %4317 = vmatmul.bf16.gmra.mxu0 %v3781
        %v4318 = vpop.f32.mrf.mxu0
        %v4319 = vadd.f32 %v4305, %v4318
        %v4320 = vpop.f32.mrf.mxu0
        %v4321 = vadd.f32 %v4307, %v4320
        %4322 = vdwg.mxu0
        %4323 = vmatpush.bf16.msra.mxu0 %v4144
        %4324 = vmatpush.bf16.msra.mxu0 %v4143
        %4325 = vmatpush.bf16.msra.mxu0 %v4142
        %4326 = vmatpush.bf16.msra.mxu0 %v4141
        %4327 = vmatpush.bf16.msra.mxu0 %v4140
        %4328 = vmatpush.bf16.msra.mxu0 %v4139
        %4329 = vmatpush.bf16.msra.mxu0 %v4138
        %4330 = vmatpush.bf16.msra.mxu0 %v4137
        %4331 = vmatmul.bf16.gmra.mxu0 %v3782
        %v4332 = vpop.f32.mrf.mxu0
        %v4333 = vadd.f32 %v4319, %v4332
        %v4334 = vpop.f32.mrf.mxu0
        %v4335 = vadd.f32 %v4321, %v4334
        %4336 = vdwg.mxu0
        %4337 = vmatpush.bf16.msra.mxu0 %v4152
        %4338 = vmatpush.bf16.msra.mxu0 %v4151
        %4339 = vmatpush.bf16.msra.mxu0 %v4150
        %4340 = vmatpush.bf16.msra.mxu0 %v4149
        %4341 = vmatpush.bf16.msra.mxu0 %v4148
        %4342 = vmatpush.bf16.msra.mxu0 %v4147
        %4343 = vmatpush.bf16.msra.mxu0 %v4146
        %4344 = vmatpush.bf16.msra.mxu0 %v4145
        %4345 = vmatmul.bf16.gmra.mxu0 %v3783
        %v4346 = vpop.f32.mrf.mxu0
        %v4347 = vadd.f32 %v4333, %v4346
        %v4348 = vpop.f32.mrf.mxu0
        %v4349 = vadd.f32 %v4335, %v4348
        %4350 = vdwg.mxu0
        %v4351 = vmax.f32 %v4347, 0.0
        %v4352 = vmax.f32 %v4349, 0.0
        %v4353 = vadd.f32 %v4351, %v4352
        %v4354 = vrot.slane %v4353, 4
        %v4355 = vadd.f32 %v4353, %v4354
        %v4356 = vrot.slane %v4355, 2
        %v4357 = vadd.f32 %v4355, %v4356
        %v4358 = vrot.slane %v4357, 1
        %v4359 = vadd.f32 %v4357, %v4358
        %v4360 = vmul.f32 %v4359, %v3292
        %v4361 = vld [vmem:[#allocation18] sm:$0xff]
        %v4362 = vld [vmem:[#allocation18 + $0x8] sm:$0xff]
        %v4363 = vld [vmem:[#allocation18 + $0x10] sm:$0xff]
        %v4364 = vld [vmem:[#allocation18 + $0x18] sm:$0xff]
        %v4365 = vld [vmem:[#allocation18 + $0x20] sm:$0xff]
        %v4366 = vld [vmem:[#allocation18 + $0x28] sm:$0xff]
        %v4367 = vld [vmem:[#allocation18 + $0x30] sm:$0xff]
        %v4368 = vld [vmem:[#allocation18 + $0x38] sm:$0xff]
        %v4369 = vld [vmem:[#allocation18 + $0x40] sm:$0xff]
        %v4370 = vld [vmem:[#allocation18 + $0x48] sm:$0xff]
        %v4371 = vld [vmem:[#allocation18 + $0x50] sm:$0xff]
        %v4372 = vld [vmem:[#allocation18 + $0x58] sm:$0xff]
        %v4373 = vld [vmem:[#allocation18 + $0x60] sm:$0xff]
        %v4374 = vld [vmem:[#allocation18 + $0x68] sm:$0xff]
        %v4375 = vld [vmem:[#allocation18 + $0x70] sm:$0xff]
        %v4376 = vld [vmem:[#allocation18 + $0x78] sm:$0xff]
        %v4377 = vld [vmem:[#allocation19] sm:$0x1]
        %4378 = vmatpush.msra.mxu0 %v4376
        %4379 = vmatpush.msra.mxu0 %v4375
        %4380 = vmatpush.msra.mxu0 %v4374
        %4381 = vmatpush.msra.mxu0 %v4373
        %4382 = vmatpush.msra.mxu0 %v4372
        %4383 = vmatpush.msra.mxu0 %v4371
        %4384 = vmatpush.msra.mxu0 %v4370
        %4385 = vmatpush.msra.mxu0 %v4369
        %4386 = vmatpush.msra.mxu0 %v4368
        %4387 = vmatpush.msra.mxu0 %v4367
        %4388 = vmatpush.msra.mxu0 %v4366
        %4389 = vmatpush.msra.mxu0 %v4365
        %4390 = vmatpush.msra.mxu0 %v4364
        %4391 = vmatpush.msra.mxu0 %v4363
        %4392 = vmatpush.msra.mxu0 %v4362
        %4393 = vmatpush.msra.mxu0 %v4361
        %4394 = vmatmul.f32.gmra.mxu0 %v4360
        %v4395 = vpop.f32.mrf.mxu0
        %v4396 = vadd.f32 %v4377, %v4395
        %4397 = vdwg.mxu0
        %v4398 = vmax.f32 %v4396, 0.0
        %v4399 = vld [vmem:[#allocation21] sm:$0xff]
        %v4400 = vld [vmem:[#allocation22] sm:$0x1]
        %v4402 = vsel %vm3334, %v4398, 0
        %4404 = vmatpush.msra.mxu0 0.0
        %4405 = vmatpush.msra.mxu0 0.0
        %4406 = vmatpush.msra.mxu0 0.0
        %4407 = vmatpush.msra.mxu0 0.0
        %4408 = vmatpush.msra.mxu0 0.0
        %4409 = vmatpush.msra.mxu0 0.0
        %4410 = vmatpush.msra.mxu0 0.0
        %4411 = vmatpush.msra.mxu0 0.0
        %4412 = vmatpush.msra.mxu0 0.0
        %4413 = vmatpush.msra.mxu0 0.0
        %4414 = vmatpush.msra.mxu0 0.0
        %4415 = vmatpush.msra.mxu0 0.0
        %4416 = vmatpush.msra.mxu0 0.0
        %4417 = vmatpush.msra.mxu0 0.0
        %4418 = vmatpush.msra.mxu0 0.0
        %4419 = vmatpush.msra.mxu0 %v4399
        %4420 = vmatmul.f32.gmra.mxu0 %v4402
        %v4421 = vpop.f32.mrf.mxu0
        %v4422 = vadd.f32 %v4400, %v4421
        %4423 = vdwg.mxu0
        %v4424 = vxor.u32 %v4422, 2147483648
        %v4425 = vmul.f32 %v4424, 1.442695
        %v4426 = vpow.pop %v4425
        %v4427 = vadd.f32 %v4426, 1.0
        %v4428 = vrcp.pop %v4427
        %v4429 = vmul.f32 %v4427, %v4428
        %v4430 = vsub.f32 1.0, %v4429
        %v4431 = vmul.f32 %v4428, %v4430
        %v4432 = vadd.f32 %v4428, %v4431
        %vm4433 = vweird.f32 %v4427
        %vm4434 = vweird.f32 %v4428
        %vm4435 = vmor %vm4433, %vm4434
        %v4436 = vsel %vm4435, %v4428, %v4432
        %v4437 = vand.u32 2147483647, %v4427
        %vm4438 = vcmp.eq.f32.partialorder %v4437, 8.507059e+37
        %v4439 = vand.u32 %v4427, 2147483648
        %v4440 = vor.u32 1.1754944e-38, %v4439
        %v4441 = vsel %vm4438, %v4440, %v4436
        %v4442 = vmul.f32 1.0, %v4441
        %v4443 = vperm.slane %v4442, 0
        %v4444 = vmul.f32 %v4351, %v4443
        %v4445 = vmul.f32 %v4352, %v4443
        %v4446 = vpack.c.bf16 %v4444, %v4444
        %v4447 = vpack.c.bf16 %v4445, %v4445
        %4448 = vst [vmem:[#allocation3 + $0x4] sm:$0xf] %v4446
        %4449 = vst [vmem:[#allocation3 + $0x8] sm:$0xf] %v4447
        %v4450 = vld [vmem:[#allocation3] sm:$0xc]
        %v4451 = vld [vmem:[#allocation3 + $0x4] sm:$0xf]
        %v4452 = vld [vmem:[#allocation3 + $0x8] sm:$0x3]
        %v4456 = vrot.slane %v4450, 6
        %v4457 = vrot.slane %v4456, 4
        %v4458 = vrot.slane %v4451, 6
        %v4459 = vsel %vm3392, %v4457, %v4458
        %v4460 = vrot.slane %v4458, 4
        %v4461 = vrot.slane %v4452, 6
        %v4462 = vsel %vm3392, %v4460, %v4461
        %4465 = vst [vmem:[#allocation4] sm:$0xf] %v4459
        %4466 = vst [vmem:[#allocation4 + $0x54] sm:$0xf] %v4462
        %v4467 = vld [vmem:[#allocation3] sm:$0xc]
        %v4468 = vld [vmem:[#allocation3 + $0x4] sm:$0xf]
        %v4469 = vld [vmem:[#allocation3 + $0x8] sm:$0x7]
        %v4471 = vshrl.u32 %v4467, 16
        %v4473 = vrot.slane %v4471, 6
        %v4474 = vshll.u32 %v4467, 16
        %v4476 = vrot.slane %v4474, 7
        %v4477 = vor.u32 %v4473, %v4476
        %v4478 = vrot.slane %v4477, 4
        %v4480 = vshrl.u32 %v4468, 16
        %v4482 = vrot.slane %v4480, 6
        %v4483 = vshll.u32 %v4468, 16
        %v4485 = vrot.slane %v4483, 7
        %v4486 = vor.u32 %v4482, %v4485
        %v4487 = vsel %vm1161, %v4478, %v4486
        %v4488 = vrot.slane %v4486, 4
        %v4490 = vshrl.u32 %v4469, 16
        %v4492 = vrot.slane %v4490, 6
        %v4493 = vshll.u32 %v4469, 16
        %v4495 = vrot.slane %v4493, 7
        %v4496 = vor.u32 %v4492, %v4495
        %v4497 = vsel %vm1161, %v4488, %v4496
        %4500 = vst [vmem:[#allocation4 + $0x4] sm:$0xf] %v4487
        %4501 = vst [vmem:[#allocation4 + $0x58] sm:$0xf] %v4497
        %v4502 = vld [vmem:[#allocation3] sm:$0x8]
        %v4503 = vld [vmem:[#allocation3 + $0x4] sm:$0xf]
        %v4504 = vld [vmem:[#allocation3 + $0x8] sm:$0x7]
        %v4508 = vrot.slane %v4502, 7
        %v4509 = vrot.slane %v4508, 4
        %v4510 = vrot.slane %v4503, 7
        %v4511 = vsel %vm1240, %v4509, %v4510
        %v4512 = vrot.slane %v4510, 4
        %v4513 = vrot.slane %v4504, 7
        %v4514 = vsel %vm1240, %v4512, %v4513
        %4517 = vst [vmem:[#allocation4 + $0x8] sm:$0xf] %v4511
        %4518 = vst [vmem:[#allocation4 + $0x5c] sm:$0xf] %v4514
        %v4519 = vld [vmem:[#allocation3] sm:$0x8]
        %v4520 = vld [vmem:[#allocation3 + $0x4] sm:$0xf]
        %v4521 = vld [vmem:[#allocation3 + $0x8] sm:$0xf]
        %v4523 = vshrl.u32 %v4519, 16
        %v4525 = vrot.slane %v4523, 7
        %v4526 = vrot.slane %v4525, 4
        %v4528 = vshrl.u32 %v4520, 16
        %v4530 = vrot.slane %v4528, 7
        %v4531 = vshll.u32 %v4520, 16
        %v4533 = vor.u32 %v4530, %v4531
        %v4534 = vsel %vm1271, %v4526, %v4533
        %v4535 = vrot.slane %v4530, 4
        %v4537 = vshrl.u32 %v4521, 16
        %v4539 = vrot.slane %v4537, 7
        %v4540 = vshll.u32 %v4521, 16
        %v4542 = vor.u32 %v4539, %v4540
        %v4543 = vsel %vm1271, %v4535, %v4542
        %4546 = vst [vmem:[#allocation4 + $0xc] sm:$0xf] %v4534
        %4547 = vst [vmem:[#allocation4 + $0x60] sm:$0xf] %v4543
        %v4548 = vld [vmem:[#allocation3 + $0x4] sm:$0xf]
        %v4549 = vld [vmem:[#allocation3 + $0x8] sm:$0xf]
        %4550 = vst [vmem:[#allocation4 + $0x10] sm:$0xf] %v4548
        %4551 = vst [vmem:[#allocation4 + $0x64] sm:$0xf] %v4549
        %v4552 = vld [vmem:[#allocation3 + $0x4] sm:$0xf]
        %v4553 = vld [vmem:[#allocation3 + $0x8] sm:$0xf]
        %v4554 = vld [vmem:[#allocation3 + $0xc] sm:$0x1]
        %v4556 = vshrl.u32 %v4552, 16
        %v4558 = vrot.slane %v4556, 4
        %v4559 = vshll.u32 %v4552, 16
        %v4561 = vrot.slane %v4559, 5
        %v4562 = vor.u32 %v4558, %v4561
        %v4563 = vrot.slane %v4562, 4
        %v4565 = vshll.u32 %v4553, 16
        %v4567 = vrot.slane %v4565, 5
        %v4568 = vsel %vm1340, %v4563, %v4567
        %v4569 = vshrl.u32 %v4553, 16
        %v4571 = vrot.slane %v4569, 4
        %v4572 = vor.u32 %v4571, %v4567
        %v4573 = vrot.slane %v4572, 4
        %v4575 = vshll.u32 %v4554, 16
        %v4577 = vrot.slane %v4575, 5
        %v4578 = vsel %vm1340, %v4573, %v4577
        %4581 = vst [vmem:[#allocation4 + $0x14] sm:$0xf] %v4568
        %4582 = vst [vmem:[#allocation4 + $0x68] sm:$0xf] %v4578
        %v4583 = vld [vmem:[#allocation3 + $0x4] sm:$0xe]
        %v4584 = vld [vmem:[#allocation3 + $0x8] sm:$0xf]
        %v4585 = vld [vmem:[#allocation3 + $0xc] sm:$0x1]
        %v4589 = vrot.slane %v4583, 5
        %v4590 = vrot.slane %v4589, 4
        %v4591 = vrot.slane %v4584, 5
        %v4592 = vsel %vm1411, %v4590, %v4591
        %v4593 = vrot.slane %v4591, 4
        %v4594 = vrot.slane %v4585, 5
        %v4595 = vsel %vm1411, %v4593, %v4594
        %4598 = vst [vmem:[#allocation4 + $0x18] sm:$0xf] %v4592
        %4599 = vst [vmem:[#allocation4 + $0x6c] sm:$0xf] %v4595
        %v4600 = vld [vmem:[#allocation3 + $0x4] sm:$0xe]
        %v4601 = vld [vmem:[#allocation3 + $0x8] sm:$0xf]
        %v4602 = vld [vmem:[#allocation3 + $0xc] sm:$0x3]
        %v4604 = vshrl.u32 %v4600, 16
        %v4606 = vrot.slane %v4604, 5
        %v4607 = vshll.u32 %v4600, 16
        %v4609 = vrot.slane %v4607, 6
        %v4610 = vor.u32 %v4606, %v4609
        %v4611 = vrot.slane %v4610, 4
        %v4613 = vshrl.u32 %v4601, 16
        %v4615 = vrot.slane %v4613, 5
        %v4616 = vshll.u32 %v4601, 16
        %v4618 = vrot.slane %v4616, 6
        %v4619 = vor.u32 %v4615, %v4618
        %v4620 = vsel %vm1442, %v4611, %v4619
        %v4621 = vrot.slane %v4619, 4
        %v4623 = vshrl.u32 %v4602, 16
        %v4625 = vrot.slane %v4623, 5
        %v4626 = vshll.u32 %v4602, 16
        %v4628 = vrot.slane %v4626, 6
        %v4629 = vor.u32 %v4625, %v4628
        %v4630 = vsel %vm1442, %v4621, %v4629
        %4633 = vst [vmem:[#allocation4 + $0x1c] sm:$0xf] %v4620
        %4634 = vst [vmem:[#allocation4 + $0x70] sm:$0xf] %v4630
        %v4635 = vld [vmem:[#allocation3 + $0x4] sm:$0xc]
        %v4636 = vld [vmem:[#allocation3 + $0x8] sm:$0xf]
        %v4637 = vld [vmem:[#allocation3 + $0xc] sm:$0x3]
        %v4641 = vrot.slane %v4635, 6
        %v4642 = vrot.slane %v4641, 4
        %v4643 = vrot.slane %v4636, 6
        %v4644 = vsel %vm3392, %v4642, %v4643
        %v4645 = vrot.slane %v4643, 4
        %v4646 = vrot.slane %v4637, 6
        %v4647 = vsel %vm3392, %v4645, %v4646
        %4650 = vst [vmem:[#allocation4 + $0x20] sm:$0xf] %v4644
        %4651 = vst [vmem:[#allocation4 + $0x74] sm:$0xf] %v4647
        %v4652 = vld [vmem:[#allocation4] sm:$0xff]
        %v4653 = vld [vmem:[#allocation4 + $0x8] sm:$0xff]
        %v4654 = vld [vmem:[#allocation4 + $0x10] sm:$0xff]
        %v4655 = vld [vmem:[#allocation4 + $0x18] sm:$0xff]
        %v4656 = vld [vmem:[#allocation4 + $0x20] sm:$0xf]
        %v4657 = vld [vmem:[#allocation4 + $0x54] sm:$0xff]
        %v4658 = vld [vmem:[#allocation4 + $0x5c] sm:$0xff]
        %v4659 = vld [vmem:[#allocation4 + $0x64] sm:$0xff]
        %v4660 = vld [vmem:[#allocation4 + $0x6c] sm:$0xff]
        %v4661 = vld [vmem:[#allocation4 + $0x74] sm:$0xf]
        %v4662 = vld [vmem:[#allocation24] sm:$0xf]
        %v4663 = vld [vmem:[#allocation24 + $0x4] sm:$0xf]
        %v4664 = vld [vmem:[#allocation24 + $0x8] sm:$0xf]
        %v4665 = vld [vmem:[#allocation24 + $0xc] sm:$0xf]
        %v4666 = vld [vmem:[#allocation24 + $0x10] sm:$0xf]
        %v4667 = vld [vmem:[#allocation24 + $0x14] sm:$0xf]
        %v4668 = vld [vmem:[#allocation24 + $0x18] sm:$0xf]
        %v4669 = vld [vmem:[#allocation24 + $0x1c] sm:$0xf]
        %v4670 = vld [vmem:[#allocation24 + $0x20] sm:$0xf]
        %v4671 = vld [vmem:[#allocation24 + $0x24] sm:$0xf]
        %v4672 = vld [vmem:[#allocation24 + $0x28] sm:$0xf]
        %v4673 = vld [vmem:[#allocation24 + $0x2c] sm:$0xf]
        %v4674 = vld [vmem:[#allocation24 + $0x30] sm:$0xf]
        %v4675 = vld [vmem:[#allocation24 + $0x34] sm:$0xf]
        %v4676 = vld [vmem:[#allocation24 + $0x38] sm:$0xf]
        %v4677 = vld [vmem:[#allocation24 + $0x3c] sm:$0xf]
        %v4678 = vld [vmem:[#allocation24 + $0x40] sm:$0xf]
        %v4679 = vld [vmem:[#allocation24 + $0x44] sm:$0xf]
        %v4680 = vld [vmem:[#allocation24 + $0x48] sm:$0xf]
        %v4681 = vld [vmem:[#allocation24 + $0x4c] sm:$0xf]
        %v4682 = vld [vmem:[#allocation24 + $0x50] sm:$0xf]
        %v4683 = vld [vmem:[#allocation24 + $0x54] sm:$0xf]
        %v4684 = vld [vmem:[#allocation24 + $0x58] sm:$0xf]
        %v4685 = vld [vmem:[#allocation24 + $0x5c] sm:$0xf]
        %v4686 = vld [vmem:[#allocation24 + $0x60] sm:$0xf]
        %v4687 = vld [vmem:[#allocation24 + $0x64] sm:$0xf]
        %v4688 = vld [vmem:[#allocation24 + $0x68] sm:$0xf]
        %v4689 = vld [vmem:[#allocation24 + $0x6c] sm:$0xf]
        %v4690 = vld [vmem:[#allocation24 + $0x70] sm:$0xf]
        %v4691 = vld [vmem:[#allocation24 + $0x74] sm:$0xf]
        %v4692 = vld [vmem:[#allocation24 + $0x78] sm:$0xf]
        %v4693 = vld [vmem:[#allocation24 + $0x7c] sm:$0xf]
        %v4694 = vld [vmem:[#allocation24 + $0x80] sm:$0xf]
        %v4695 = vld [vmem:[#allocation24 + $0x84] sm:$0xf]
        %v4696 = vld [vmem:[#allocation24 + $0x88] sm:$0xf]
        %v4697 = vld [vmem:[#allocation24 + $0x8c] sm:$0xf]
        %v4698 = vld [vmem:[#allocation24 + $0x90] sm:$0xf]
        %v4699 = vld [vmem:[#allocation24 + $0x94] sm:$0xf]
        %v4700 = vld [vmem:[#allocation24 + $0x98] sm:$0xf]
        %v4701 = vld [vmem:[#allocation24 + $0x9c] sm:$0xf]
        %v4702 = vld [vmem:[#allocation24 + $0xa0] sm:$0xf]
        %v4703 = vld [vmem:[#allocation24 + $0xa4] sm:$0xf]
        %v4704 = vld [vmem:[#allocation24 + $0xa8] sm:$0xf]
        %v4705 = vld [vmem:[#allocation24 + $0xac] sm:$0xf]
        %v4706 = vld [vmem:[#allocation24 + $0xb0] sm:$0xf]
        %v4707 = vld [vmem:[#allocation24 + $0xb4] sm:$0xf]
        %v4708 = vld [vmem:[#allocation24 + $0xb8] sm:$0xf]
        %v4709 = vld [vmem:[#allocation24 + $0xbc] sm:$0xf]
        %v4710 = vld [vmem:[#allocation24 + $0xc0] sm:$0xf]
        %v4711 = vld [vmem:[#allocation24 + $0xc4] sm:$0xf]
        %v4712 = vld [vmem:[#allocation24 + $0xc8] sm:$0xf]
        %v4713 = vld [vmem:[#allocation24 + $0xcc] sm:$0xf]
        %v4714 = vld [vmem:[#allocation24 + $0xd0] sm:$0xf]
        %v4715 = vld [vmem:[#allocation24 + $0xd4] sm:$0xf]
        %v4716 = vld [vmem:[#allocation24 + $0xd8] sm:$0xf]
        %v4717 = vld [vmem:[#allocation24 + $0xdc] sm:$0xf]
        %v4718 = vld [vmem:[#allocation24 + $0xe0] sm:$0xf]
        %v4719 = vld [vmem:[#allocation24 + $0xe4] sm:$0xf]
        %v4720 = vld [vmem:[#allocation24 + $0xe8] sm:$0xf]
        %v4721 = vld [vmem:[#allocation24 + $0xec] sm:$0xf]
        %v4722 = vld [vmem:[#allocation24 + $0xf0] sm:$0xf]
        %v4723 = vld [vmem:[#allocation24 + $0xf4] sm:$0xf]
        %v4724 = vld [vmem:[#allocation24 + $0xf8] sm:$0xf]
        %v4725 = vld [vmem:[#allocation24 + $0xfc] sm:$0xf]
        %v4726 = vld [vmem:[#allocation24 + $0x100] sm:$0xf]
        %v4727 = vld [vmem:[#allocation24 + $0x104] sm:$0xf]
        %v4728 = vld [vmem:[#allocation24 + $0x108] sm:$0xf]
        %v4729 = vld [vmem:[#allocation24 + $0x10c] sm:$0xf]
        %v4730 = vld [vmem:[#allocation24 + $0x110] sm:$0xf]
        %v4731 = vld [vmem:[#allocation24 + $0x114] sm:$0xf]
        %v4732 = vld [vmem:[#allocation24 + $0x118] sm:$0xf]
        %v4733 = vld [vmem:[#allocation24 + $0x11c] sm:$0xf]
        %v4734 = vld [vmem:[#allocation24 + $0x120] sm:$0xf]
        %v4735 = vld [vmem:[#allocation24 + $0x124] sm:$0xf]
        %v4736 = vld [vmem:[#allocation24 + $0x128] sm:$0xf]
        %v4737 = vld [vmem:[#allocation24 + $0x12c] sm:$0xf]
        %v4738 = vld [vmem:[#allocation24 + $0x130] sm:$0xf]
        %v4739 = vld [vmem:[#allocation24 + $0x134] sm:$0xf]
        %v4740 = vld [vmem:[#allocation24 + $0x138] sm:$0xf]
        %v4741 = vld [vmem:[#allocation24 + $0x13c] sm:$0xf]
        %v4742 = vld [vmem:[#allocation24 + $0x140] sm:$0xf]
        %v4743 = vld [vmem:[#allocation24 + $0x144] sm:$0xf]
        %v4744 = vld [vmem:[#allocation24 + $0x148] sm:$0xf]
        %v4745 = vld [vmem:[#allocation24 + $0x14c] sm:$0xf]
        %v4746 = vld [vmem:[#allocation24 + $0x150] sm:$0xf]
        %v4747 = vld [vmem:[#allocation24 + $0x154] sm:$0xf]
        %v4748 = vld [vmem:[#allocation24 + $0x158] sm:$0xf]
        %v4749 = vld [vmem:[#allocation24 + $0x15c] sm:$0xf]
        %v4750 = vld [vmem:[#allocation24 + $0x160] sm:$0xf]
        %v4751 = vld [vmem:[#allocation24 + $0x164] sm:$0xf]
        %v4752 = vld [vmem:[#allocation24 + $0x168] sm:$0xf]
        %v4753 = vld [vmem:[#allocation24 + $0x16c] sm:$0xf]
        %v4754 = vld [vmem:[#allocation24 + $0x170] sm:$0xf]
        %v4755 = vld [vmem:[#allocation24 + $0x174] sm:$0xf]
        %v4756 = vld [vmem:[#allocation24 + $0x178] sm:$0xf]
        %v4757 = vld [vmem:[#allocation24 + $0x17c] sm:$0xf]
        %v4758 = vld [vmem:[#allocation24 + $0x180] sm:$0xf]
        %v4759 = vld [vmem:[#allocation24 + $0x184] sm:$0xf]
        %v4760 = vld [vmem:[#allocation24 + $0x188] sm:$0xf]
        %v4761 = vld [vmem:[#allocation24 + $0x18c] sm:$0xf]
        %v4762 = vld [vmem:[#allocation24 + $0x190] sm:$0xf]
        %v4763 = vld [vmem:[#allocation24 + $0x194] sm:$0xf]
        %v4764 = vld [vmem:[#allocation24 + $0x198] sm:$0xf]
        %v4765 = vld [vmem:[#allocation24 + $0x19c] sm:$0xf]
        %v4766 = vld [vmem:[#allocation24 + $0x1a0] sm:$0xf]
        %v4767 = vld [vmem:[#allocation24 + $0x1a4] sm:$0xf]
        %v4768 = vld [vmem:[#allocation24 + $0x1a8] sm:$0xf]
        %v4769 = vld [vmem:[#allocation24 + $0x1ac] sm:$0xf]
        %v4770 = vld [vmem:[#allocation24 + $0x1b0] sm:$0xf]
        %v4771 = vld [vmem:[#allocation24 + $0x1b4] sm:$0xf]
        %v4772 = vld [vmem:[#allocation24 + $0x1b8] sm:$0xf]
        %v4773 = vld [vmem:[#allocation24 + $0x1bc] sm:$0xf]
        %v4774 = vld [vmem:[#allocation24 + $0x1c0] sm:$0xf]
        %v4775 = vld [vmem:[#allocation24 + $0x1c4] sm:$0xf]
        %v4776 = vld [vmem:[#allocation24 + $0x1c8] sm:$0xf]
        %v4777 = vld [vmem:[#allocation24 + $0x1cc] sm:$0xf]
        %v4778 = vld [vmem:[#allocation24 + $0x1d0] sm:$0xf]
        %v4779 = vld [vmem:[#allocation24 + $0x1d4] sm:$0xf]
        %v4780 = vld [vmem:[#allocation24 + $0x1d8] sm:$0xf]
        %v4781 = vld [vmem:[#allocation24 + $0x1dc] sm:$0xf]
        %v4782 = vld [vmem:[#allocation24 + $0x1e0] sm:$0xf]
        %v4783 = vld [vmem:[#allocation24 + $0x1e4] sm:$0xf]
        %v4784 = vld [vmem:[#allocation24 + $0x1e8] sm:$0xf]
        %v4785 = vld [vmem:[#allocation24 + $0x1ec] sm:$0xf]
        %v4786 = vld [vmem:[#allocation24 + $0x1f0] sm:$0xf]
        %v4787 = vld [vmem:[#allocation24 + $0x1f4] sm:$0xf]
        %v4788 = vld [vmem:[#allocation24 + $0x1f8] sm:$0xf]
        %v4789 = vld [vmem:[#allocation24 + $0x1fc] sm:$0xf]
        %v4790 = vld [vmem:[#allocation24 + $0x200] sm:$0xf]
        %v4791 = vld [vmem:[#allocation24 + $0x204] sm:$0xf]
        %v4792 = vld [vmem:[#allocation24 + $0x208] sm:$0xf]
        %v4793 = vld [vmem:[#allocation24 + $0x20c] sm:$0xf]
        %v4794 = vld [vmem:[#allocation24 + $0x210] sm:$0xf]
        %v4795 = vld [vmem:[#allocation24 + $0x214] sm:$0xf]
        %v4796 = vld [vmem:[#allocation24 + $0x218] sm:$0xf]
        %v4797 = vld [vmem:[#allocation24 + $0x21c] sm:$0xf]
        %v4798 = vld [vmem:[#allocation24 + $0x220] sm:$0xf]
        %v4799 = vld [vmem:[#allocation24 + $0x224] sm:$0xf]
        %v4800 = vld [vmem:[#allocation24 + $0x228] sm:$0xf]
        %v4801 = vld [vmem:[#allocation24 + $0x22c] sm:$0xf]
        %v4802 = vld [vmem:[#allocation24 + $0x230] sm:$0xf]
        %v4803 = vld [vmem:[#allocation24 + $0x234] sm:$0xf]
        %v4804 = vld [vmem:[#allocation24 + $0x238] sm:$0xf]
        %v4805 = vld [vmem:[#allocation24 + $0x23c] sm:$0xf]
        %v4806 = vld [vmem:[#allocation25] sm:$0x1]
        %v4808 = vperm.slane %v4806, 0
        %v4820 = vunpack.c.l.b16 %v4652
        %v4821 = vunpack.c.h.b16 %v4652
        %v4822 = vunpack.c.l.b16 %v4653
        %v4823 = vunpack.c.h.b16 %v4653
        %v4824 = vunpack.c.l.b16 %v4654
        %v4825 = vunpack.c.h.b16 %v4654
        %v4826 = vunpack.c.l.b16 %v4655
        %v4827 = vunpack.c.h.b16 %v4655
        %v4828 = vunpack.c.l.b16 %v4656
        %v4829 = vunpack.c.l.b16 %v4657
        %v4830 = vunpack.c.h.b16 %v4657
        %v4831 = vunpack.c.l.b16 %v4658
        %v4832 = vunpack.c.h.b16 %v4658
        %v4833 = vunpack.c.l.b16 %v4659
        %v4834 = vunpack.c.h.b16 %v4659
        %v4835 = vunpack.c.l.b16 %v4660
        %v4836 = vunpack.c.h.b16 %v4660
        %v4837 = vunpack.c.l.b16 %v4661
        %v4838 = vpack.c.b16 %v4829, %v4820
        %v4839 = vpack.c.b16 %v4830, %v4821
        %v4840 = vpack.c.b16 %v4831, %v4822
        %v4841 = vpack.c.b16 %v4832, %v4823
        %v4842 = vpack.c.b16 %v4833, %v4824
        %v4843 = vpack.c.b16 %v4834, %v4825
        %v4844 = vpack.c.b16 %v4835, %v4826
        %v4845 = vpack.c.b16 %v4836, %v4827
        %v4846 = vpack.c.b16 %v4837, %v4828
        %v5000 = vunpack.c.l.b16 %v4662
        %v5001 = vunpack.c.l.b16 %v4663
        %v5002 = vunpack.c.l.b16 %v4664
        %v5003 = vunpack.c.l.b16 %v4665
        %v5004 = vunpack.c.l.b16 %v4666
        %v5005 = vunpack.c.l.b16 %v4667
        %v5006 = vunpack.c.l.b16 %v4668
        %v5007 = vunpack.c.l.b16 %v4669
        %v5008 = vunpack.c.l.b16 %v4670
        %v5009 = vunpack.c.l.b16 %v4671
        %v5010 = vunpack.c.l.b16 %v4672
        %v5011 = vunpack.c.l.b16 %v4673
        %v5012 = vunpack.c.l.b16 %v4674
        %v5013 = vunpack.c.l.b16 %v4675
        %v5014 = vunpack.c.l.b16 %v4676
        %v5015 = vunpack.c.l.b16 %v4677
        %v5016 = vunpack.c.l.b16 %v4678
        %v5017 = vunpack.c.l.b16 %v4679
        %v5018 = vunpack.c.l.b16 %v4680
        %v5019 = vunpack.c.l.b16 %v4681
        %v5020 = vunpack.c.l.b16 %v4682
        %v5021 = vunpack.c.l.b16 %v4683
        %v5022 = vunpack.c.l.b16 %v4684
        %v5023 = vunpack.c.l.b16 %v4685
        %v5024 = vunpack.c.l.b16 %v4686
        %v5025 = vunpack.c.l.b16 %v4687
        %v5026 = vunpack.c.l.b16 %v4688
        %v5027 = vunpack.c.l.b16 %v4689
        %v5028 = vunpack.c.l.b16 %v4690
        %v5029 = vunpack.c.l.b16 %v4691
        %v5030 = vunpack.c.l.b16 %v4692
        %v5031 = vunpack.c.l.b16 %v4693
        %v5032 = vunpack.c.l.b16 %v4694
        %v5033 = vunpack.c.l.b16 %v4695
        %v5034 = vunpack.c.l.b16 %v4696
        %v5035 = vunpack.c.l.b16 %v4697
        %v5036 = vunpack.c.l.b16 %v4698
        %v5037 = vunpack.c.l.b16 %v4699
        %v5038 = vunpack.c.l.b16 %v4700
        %v5039 = vunpack.c.l.b16 %v4701
        %v5040 = vunpack.c.l.b16 %v4702
        %v5041 = vunpack.c.l.b16 %v4703
        %v5042 = vunpack.c.l.b16 %v4704
        %v5043 = vunpack.c.l.b16 %v4705
        %v5044 = vunpack.c.l.b16 %v4706
        %v5045 = vunpack.c.l.b16 %v4707
        %v5046 = vunpack.c.l.b16 %v4708
        %v5047 = vunpack.c.l.b16 %v4709
        %v5048 = vunpack.c.l.b16 %v4710
        %v5049 = vunpack.c.l.b16 %v4711
        %v5050 = vunpack.c.l.b16 %v4712
        %v5051 = vunpack.c.l.b16 %v4713
        %v5052 = vunpack.c.l.b16 %v4714
        %v5053 = vunpack.c.l.b16 %v4715
        %v5054 = vunpack.c.l.b16 %v4716
        %v5055 = vunpack.c.l.b16 %v4717
        %v5056 = vunpack.c.l.b16 %v4718
        %v5057 = vunpack.c.l.b16 %v4719
        %v5058 = vunpack.c.l.b16 %v4720
        %v5059 = vunpack.c.l.b16 %v4721
        %v5060 = vunpack.c.l.b16 %v4722
        %v5061 = vunpack.c.l.b16 %v4723
        %v5062 = vunpack.c.l.b16 %v4724
        %v5063 = vunpack.c.l.b16 %v4725
        %v5064 = vunpack.c.l.b16 %v4726
        %v5065 = vunpack.c.l.b16 %v4727
        %v5066 = vunpack.c.l.b16 %v4728
        %v5067 = vunpack.c.l.b16 %v4729
        %v5068 = vunpack.c.l.b16 %v4730
        %v5069 = vunpack.c.l.b16 %v4731
        %v5070 = vunpack.c.l.b16 %v4732
        %v5071 = vunpack.c.l.b16 %v4733
        %v5072 = vunpack.c.l.b16 %v4734
        %v5073 = vunpack.c.l.b16 %v4735
        %v5074 = vunpack.c.l.b16 %v4736
        %v5075 = vunpack.c.l.b16 %v4737
        %v5076 = vunpack.c.l.b16 %v4738
        %v5077 = vunpack.c.l.b16 %v4739
        %v5078 = vunpack.c.l.b16 %v4740
        %v5079 = vunpack.c.l.b16 %v4741
        %v5080 = vunpack.c.l.b16 %v4742
        %v5081 = vunpack.c.l.b16 %v4743
        %v5082 = vunpack.c.l.b16 %v4744
        %v5083 = vunpack.c.l.b16 %v4745
        %v5084 = vunpack.c.l.b16 %v4746
        %v5085 = vunpack.c.l.b16 %v4747
        %v5086 = vunpack.c.l.b16 %v4748
        %v5087 = vunpack.c.l.b16 %v4749
        %v5088 = vunpack.c.l.b16 %v4750
        %v5089 = vunpack.c.l.b16 %v4751
        %v5090 = vunpack.c.l.b16 %v4752
        %v5091 = vunpack.c.l.b16 %v4753
        %v5092 = vunpack.c.l.b16 %v4754
        %v5093 = vunpack.c.l.b16 %v4755
        %v5094 = vunpack.c.l.b16 %v4756
        %v5095 = vunpack.c.l.b16 %v4757
        %v5096 = vunpack.c.l.b16 %v4758
        %v5097 = vunpack.c.l.b16 %v4759
        %v5098 = vunpack.c.l.b16 %v4760
        %v5099 = vunpack.c.l.b16 %v4761
        %v5100 = vunpack.c.l.b16 %v4762
        %v5101 = vunpack.c.l.b16 %v4763
        %v5102 = vunpack.c.l.b16 %v4764
        %v5103 = vunpack.c.l.b16 %v4765
        %v5104 = vunpack.c.l.b16 %v4766
        %v5105 = vunpack.c.l.b16 %v4767
        %v5106 = vunpack.c.l.b16 %v4768
        %v5107 = vunpack.c.l.b16 %v4769
        %v5108 = vunpack.c.l.b16 %v4770
        %v5109 = vunpack.c.l.b16 %v4771
        %v5110 = vunpack.c.l.b16 %v4772
        %v5111 = vunpack.c.l.b16 %v4773
        %v5112 = vunpack.c.l.b16 %v4774
        %v5113 = vunpack.c.l.b16 %v4775
        %v5114 = vunpack.c.l.b16 %v4776
        %v5115 = vunpack.c.l.b16 %v4777
        %v5116 = vunpack.c.l.b16 %v4778
        %v5117 = vunpack.c.l.b16 %v4779
        %v5118 = vunpack.c.l.b16 %v4780
        %v5119 = vunpack.c.l.b16 %v4781
        %v5120 = vunpack.c.l.b16 %v4782
        %v5121 = vunpack.c.l.b16 %v4783
        %v5122 = vunpack.c.l.b16 %v4784
        %v5123 = vunpack.c.l.b16 %v4785
        %v5124 = vunpack.c.l.b16 %v4786
        %v5125 = vunpack.c.l.b16 %v4787
        %v5126 = vunpack.c.l.b16 %v4788
        %v5127 = vunpack.c.l.b16 %v4789
        %v5128 = vunpack.c.l.b16 %v4790
        %v5129 = vunpack.c.l.b16 %v4791
        %v5130 = vunpack.c.l.b16 %v4792
        %v5131 = vunpack.c.l.b16 %v4793
        %v5132 = vunpack.c.l.b16 %v4794
        %v5133 = vunpack.c.l.b16 %v4795
        %v5134 = vunpack.c.l.b16 %v4796
        %v5135 = vunpack.c.l.b16 %v4797
        %v5136 = vunpack.c.l.b16 %v4798
        %v5137 = vunpack.c.l.b16 %v4799
        %v5138 = vunpack.c.l.b16 %v4800
        %v5139 = vunpack.c.l.b16 %v4801
        %v5140 = vunpack.c.l.b16 %v4802
        %v5141 = vunpack.c.l.b16 %v4803
        %v5142 = vunpack.c.l.b16 %v4804
        %v5143 = vunpack.c.l.b16 %v4805
        %v5144 = vpack.c.b16 %v5001, %v5000
        %v5145 = vpack.c.b16 %v5003, %v5002
        %v5146 = vpack.c.b16 %v5005, %v5004
        %v5147 = vpack.c.b16 %v5007, %v5006
        %v5148 = vpack.c.b16 %v5009, %v5008
        %v5149 = vpack.c.b16 %v5011, %v5010
        %v5150 = vpack.c.b16 %v5013, %v5012
        %v5151 = vpack.c.b16 %v5015, %v5014
        %v5152 = vpack.c.b16 %v5017, %v5016
        %v5153 = vpack.c.b16 %v5019, %v5018
        %v5154 = vpack.c.b16 %v5021, %v5020
        %v5155 = vpack.c.b16 %v5023, %v5022
        %v5156 = vpack.c.b16 %v5025, %v5024
        %v5157 = vpack.c.b16 %v5027, %v5026
        %v5158 = vpack.c.b16 %v5029, %v5028
        %v5159 = vpack.c.b16 %v5031, %v5030
        %v5160 = vpack.c.b16 %v5033, %v5032
        %v5161 = vpack.c.b16 %v5035, %v5034
        %v5162 = vpack.c.b16 %v5037, %v5036
        %v5163 = vpack.c.b16 %v5039, %v5038
        %v5164 = vpack.c.b16 %v5041, %v5040
        %v5165 = vpack.c.b16 %v5043, %v5042
        %v5166 = vpack.c.b16 %v5045, %v5044
        %v5167 = vpack.c.b16 %v5047, %v5046
        %v5168 = vpack.c.b16 %v5049, %v5048
        %v5169 = vpack.c.b16 %v5051, %v5050
        %v5170 = vpack.c.b16 %v5053, %v5052
        %v5171 = vpack.c.b16 %v5055, %v5054
        %v5172 = vpack.c.b16 %v5057, %v5056
        %v5173 = vpack.c.b16 %v5059, %v5058
        %v5174 = vpack.c.b16 %v5061, %v5060
        %v5175 = vpack.c.b16 %v5063, %v5062
        %v5176 = vpack.c.b16 %v5065, %v5064
        %v5177 = vpack.c.b16 %v5067, %v5066
        %v5178 = vpack.c.b16 %v5069, %v5068
        %v5179 = vpack.c.b16 %v5071, %v5070
        %v5180 = vpack.c.b16 %v5073, %v5072
        %v5181 = vpack.c.b16 %v5075, %v5074
        %v5182 = vpack.c.b16 %v5077, %v5076
        %v5183 = vpack.c.b16 %v5079, %v5078
        %v5184 = vpack.c.b16 %v5081, %v5080
        %v5185 = vpack.c.b16 %v5083, %v5082
        %v5186 = vpack.c.b16 %v5085, %v5084
        %v5187 = vpack.c.b16 %v5087, %v5086
        %v5188 = vpack.c.b16 %v5089, %v5088
        %v5189 = vpack.c.b16 %v5091, %v5090
        %v5190 = vpack.c.b16 %v5093, %v5092
        %v5191 = vpack.c.b16 %v5095, %v5094
        %v5192 = vpack.c.b16 %v5097, %v5096
        %v5193 = vpack.c.b16 %v5099, %v5098
        %v5194 = vpack.c.b16 %v5101, %v5100
        %v5195 = vpack.c.b16 %v5103, %v5102
        %v5196 = vpack.c.b16 %v5105, %v5104
        %v5197 = vpack.c.b16 %v5107, %v5106
        %v5198 = vpack.c.b16 %v5109, %v5108
        %v5199 = vpack.c.b16 %v5111, %v5110
        %v5200 = vpack.c.b16 %v5113, %v5112
        %v5201 = vpack.c.b16 %v5115, %v5114
        %v5202 = vpack.c.b16 %v5117, %v5116
        %v5203 = vpack.c.b16 %v5119, %v5118
        %v5204 = vpack.c.b16 %v5121, %v5120
        %v5205 = vpack.c.b16 %v5123, %v5122
        %v5206 = vpack.c.b16 %v5125, %v5124
        %v5207 = vpack.c.b16 %v5127, %v5126
        %v5208 = vpack.c.b16 %v5129, %v5128
        %v5209 = vpack.c.b16 %v5131, %v5130
        %v5210 = vpack.c.b16 %v5133, %v5132
        %v5211 = vpack.c.b16 %v5135, %v5134
        %v5212 = vpack.c.b16 %v5137, %v5136
        %v5213 = vpack.c.b16 %v5139, %v5138
        %v5214 = vpack.c.b16 %v5141, %v5140
        %v5215 = vpack.c.b16 %v5143, %v5142
        %5288 = vmatpush.bf16.msra.mxu0 %v5151
        %5289 = vmatpush.bf16.msra.mxu0 %v5150
        %5290 = vmatpush.bf16.msra.mxu0 %v5149
        %5291 = vmatpush.bf16.msra.mxu0 %v5148
        %5292 = vmatpush.bf16.msra.mxu0 %v5147
        %5293 = vmatpush.bf16.msra.mxu0 %v5146
        %5294 = vmatpush.bf16.msra.mxu0 %v5145
        %5295 = vmatpush.bf16.msra.mxu0 %v5144
        %5296 = vmatmul.bf16.gmra.mxu0 %v4838
        %v5297 = vpop.f32.mrf.mxu0
        %v5298 = vadd.f32 %v4808, %v5297
        %v5299 = vpop.f32.mrf.mxu0
        %v5300 = vadd.f32 %v4808, %v5299
        %5301 = vdwg.mxu0
        %5302 = vmatpush.bf16.msra.mxu0 %v5159
        %5303 = vmatpush.bf16.msra.mxu0 %v5158
        %5304 = vmatpush.bf16.msra.mxu0 %v5157
        %5305 = vmatpush.bf16.msra.mxu0 %v5156
        %5306 = vmatpush.bf16.msra.mxu0 %v5155
        %5307 = vmatpush.bf16.msra.mxu0 %v5154
        %5308 = vmatpush.bf16.msra.mxu0 %v5153
        %5309 = vmatpush.bf16.msra.mxu0 %v5152
        %5310 = vmatmul.bf16.gmra.mxu0 %v4839
        %v5311 = vpop.f32.mrf.mxu0
        %v5312 = vadd.f32 %v5298, %v5311
        %v5313 = vpop.f32.mrf.mxu0
        %v5314 = vadd.f32 %v5300, %v5313
        %5315 = vdwg.mxu0
        %5316 = vmatpush.bf16.msra.mxu0 %v5167
        %5317 = vmatpush.bf16.msra.mxu0 %v5166
        %5318 = vmatpush.bf16.msra.mxu0 %v5165
        %5319 = vmatpush.bf16.msra.mxu0 %v5164
        %5320 = vmatpush.bf16.msra.mxu0 %v5163
        %5321 = vmatpush.bf16.msra.mxu0 %v5162
        %5322 = vmatpush.bf16.msra.mxu0 %v5161
        %5323 = vmatpush.bf16.msra.mxu0 %v5160
        %5324 = vmatmul.bf16.gmra.mxu0 %v4840
        %v5325 = vpop.f32.mrf.mxu0
        %v5326 = vadd.f32 %v5312, %v5325
        %v5327 = vpop.f32.mrf.mxu0
        %v5328 = vadd.f32 %v5314, %v5327
        %5329 = vdwg.mxu0
        %5330 = vmatpush.bf16.msra.mxu0 %v5175
        %5331 = vmatpush.bf16.msra.mxu0 %v5174
        %5332 = vmatpush.bf16.msra.mxu0 %v5173
        %5333 = vmatpush.bf16.msra.mxu0 %v5172
        %5334 = vmatpush.bf16.msra.mxu0 %v5171
        %5335 = vmatpush.bf16.msra.mxu0 %v5170
        %5336 = vmatpush.bf16.msra.mxu0 %v5169
        %5337 = vmatpush.bf16.msra.mxu0 %v5168
        %5338 = vmatmul.bf16.gmra.mxu0 %v4841
        %v5339 = vpop.f32.mrf.mxu0
        %v5340 = vadd.f32 %v5326, %v5339
        %v5341 = vpop.f32.mrf.mxu0
        %v5342 = vadd.f32 %v5328, %v5341
        %5343 = vdwg.mxu0
        %5344 = vmatpush.bf16.msra.mxu0 %v5183
        %5345 = vmatpush.bf16.msra.mxu0 %v5182
        %5346 = vmatpush.bf16.msra.mxu0 %v5181
        %5347 = vmatpush.bf16.msra.mxu0 %v5180
        %5348 = vmatpush.bf16.msra.mxu0 %v5179
        %5349 = vmatpush.bf16.msra.mxu0 %v5178
        %5350 = vmatpush.bf16.msra.mxu0 %v5177
        %5351 = vmatpush.bf16.msra.mxu0 %v5176
        %5352 = vmatmul.bf16.gmra.mxu0 %v4842
        %v5353 = vpop.f32.mrf.mxu0
        %v5354 = vadd.f32 %v5340, %v5353
        %v5355 = vpop.f32.mrf.mxu0
        %v5356 = vadd.f32 %v5342, %v5355
        %5357 = vdwg.mxu0
        %5358 = vmatpush.bf16.msra.mxu0 %v5191
        %5359 = vmatpush.bf16.msra.mxu0 %v5190
        %5360 = vmatpush.bf16.msra.mxu0 %v5189
        %5361 = vmatpush.bf16.msra.mxu0 %v5188
        %5362 = vmatpush.bf16.msra.mxu0 %v5187
        %5363 = vmatpush.bf16.msra.mxu0 %v5186
        %5364 = vmatpush.bf16.msra.mxu0 %v5185
        %5365 = vmatpush.bf16.msra.mxu0 %v5184
        %5366 = vmatmul.bf16.gmra.mxu0 %v4843
        %v5367 = vpop.f32.mrf.mxu0
        %v5368 = vadd.f32 %v5354, %v5367
        %v5369 = vpop.f32.mrf.mxu0
        %v5370 = vadd.f32 %v5356, %v5369
        %5371 = vdwg.mxu0
        %5372 = vmatpush.bf16.msra.mxu0 %v5199
        %5373 = vmatpush.bf16.msra.mxu0 %v5198
        %5374 = vmatpush.bf16.msra.mxu0 %v5197
        %5375 = vmatpush.bf16.msra.mxu0 %v5196
        %5376 = vmatpush.bf16.msra.mxu0 %v5195
        %5377 = vmatpush.bf16.msra.mxu0 %v5194
        %5378 = vmatpush.bf16.msra.mxu0 %v5193
        %5379 = vmatpush.bf16.msra.mxu0 %v5192
        %5380 = vmatmul.bf16.gmra.mxu0 %v4844
        %v5381 = vpop.f32.mrf.mxu0
        %v5382 = vadd.f32 %v5368, %v5381
        %v5383 = vpop.f32.mrf.mxu0
        %v5384 = vadd.f32 %v5370, %v5383
        %5385 = vdwg.mxu0
        %5386 = vmatpush.bf16.msra.mxu0 %v5207
        %5387 = vmatpush.bf16.msra.mxu0 %v5206
        %5388 = vmatpush.bf16.msra.mxu0 %v5205
        %5389 = vmatpush.bf16.msra.mxu0 %v5204
        %5390 = vmatpush.bf16.msra.mxu0 %v5203
        %5391 = vmatpush.bf16.msra.mxu0 %v5202
        %5392 = vmatpush.bf16.msra.mxu0 %v5201
        %5393 = vmatpush.bf16.msra.mxu0 %v5200
        %5394 = vmatmul.bf16.gmra.mxu0 %v4845
        %v5395 = vpop.f32.mrf.mxu0
        %v5396 = vadd.f32 %v5382, %v5395
        %v5397 = vpop.f32.mrf.mxu0
        %v5398 = vadd.f32 %v5384, %v5397
        %5399 = vdwg.mxu0
        %5400 = vmatpush.bf16.msra.mxu0 %v5215
        %5401 = vmatpush.bf16.msra.mxu0 %v5214
        %5402 = vmatpush.bf16.msra.mxu0 %v5213
        %5403 = vmatpush.bf16.msra.mxu0 %v5212
        %5404 = vmatpush.bf16.msra.mxu0 %v5211
        %5405 = vmatpush.bf16.msra.mxu0 %v5210
        %5406 = vmatpush.bf16.msra.mxu0 %v5209
        %5407 = vmatpush.bf16.msra.mxu0 %v5208
        %5408 = vmatmul.bf16.gmra.mxu0 %v4846
        %v5409 = vpop.f32.mrf.mxu0
        %v5410 = vadd.f32 %v5396, %v5409
        %v5411 = vpop.f32.mrf.mxu0
        %v5412 = vadd.f32 %v5398, %v5411
        %5413 = vdwg.mxu0
        %v5414 = vmax.f32 %v5410, 0.0
        %v5415 = vmax.f32 %v5412, 0.0
        %v5416 = vadd.f32 %v5414, %v5415
        %v5417 = vrot.slane %v5416, 4
        %v5418 = vadd.f32 %v5416, %v5417
        %v5419 = vrot.slane %v5418, 2
        %v5420 = vadd.f32 %v5418, %v5419
        %v5421 = vrot.slane %v5420, 1
        %v5422 = vadd.f32 %v5420, %v5421
        %v5423 = vmul.f32 %v5422, %v3292
        %v5424 = vld [vmem:[%s15] sm:$0xff]
        %v5425 = vld [vmem:[%s15 + $0x8] sm:$0xff]
        %v5426 = vld [vmem:[%s15 + $0x10] sm:$0xff]
        %v5427 = vld [vmem:[%s15 + $0x18] sm:$0xff]
        %v5428 = vld [vmem:[%s15 + $0x20] sm:$0xff]
        %v5429 = vld [vmem:[%s15 + $0x28] sm:$0xff]
        %v5430 = vld [vmem:[%s15 + $0x30] sm:$0xff]
        %v5431 = vld [vmem:[%s15 + $0x38] sm:$0xff]
        %v5432 = vld [vmem:[%s15 + $0x40] sm:$0xff]
        %v5433 = vld [vmem:[%s15 + $0x48] sm:$0xff]
        %v5434 = vld [vmem:[%s15 + $0x50] sm:$0xff]
        %v5435 = vld [vmem:[%s15 + $0x58] sm:$0xff]
        %v5436 = vld [vmem:[%s15 + $0x60] sm:$0xff]
        %v5437 = vld [vmem:[%s15 + $0x68] sm:$0xff]
        %v5438 = vld [vmem:[%s15 + $0x70] sm:$0xff]
        %v5439 = vld [vmem:[%s15 + $0x78] sm:$0xff]
        %v5440 = vld [vmem:[#allocation27] sm:$0x1]
        %5441 = vmatpush.msra.mxu0 %v5439
        %5442 = vmatpush.msra.mxu0 %v5438
        %5443 = vmatpush.msra.mxu0 %v5437
        %5444 = vmatpush.msra.mxu0 %v5436
        %5445 = vmatpush.msra.mxu0 %v5435
        %5446 = vmatpush.msra.mxu0 %v5434
        %5447 = vmatpush.msra.mxu0 %v5433
        %5448 = vmatpush.msra.mxu0 %v5432
        %5449 = vmatpush.msra.mxu0 %v5431
        %5450 = vmatpush.msra.mxu0 %v5430
        %5451 = vmatpush.msra.mxu0 %v5429
        %5452 = vmatpush.msra.mxu0 %v5428
        %5453 = vmatpush.msra.mxu0 %v5427
        %5454 = vmatpush.msra.mxu0 %v5426
        %5455 = vmatpush.msra.mxu0 %v5425
        %5456 = vmatpush.msra.mxu0 %v5424
        %5457 = vmatmul.f32.gmra.mxu0 %v5423
        %v5458 = vpop.f32.mrf.mxu0
        %v5459 = vadd.f32 %v5440, %v5458
        %5460 = vdwg.mxu0
        %v5461 = vmax.f32 %v5459, 0.0
        %v5462 = vld [vmem:[#allocation28] sm:$0xff]
        %v5463 = vld [vmem:[#allocation30] sm:$0x1]
        %v5465 = vsel %vm3334, %v5461, 0
        %5467 = vmatpush.msra.mxu0 0.0
        %5468 = vmatpush.msra.mxu0 0.0
        %5469 = vmatpush.msra.mxu0 0.0
        %5470 = vmatpush.msra.mxu0 0.0
        %5471 = vmatpush.msra.mxu0 0.0
        %5472 = vmatpush.msra.mxu0 0.0
        %5473 = vmatpush.msra.mxu0 0.0
        %5474 = vmatpush.msra.mxu0 0.0
        %5475 = vmatpush.msra.mxu0 0.0
        %5476 = vmatpush.msra.mxu0 0.0
        %5477 = vmatpush.msra.mxu0 0.0
        %5478 = vmatpush.msra.mxu0 0.0
        %5479 = vmatpush.msra.mxu0 0.0
        %5480 = vmatpush.msra.mxu0 0.0
        %5481 = vmatpush.msra.mxu0 0.0
        %5482 = vmatpush.msra.mxu0 %v5462
        %5483 = vmatmul.f32.gmra.mxu0 %v5465
        %v5484 = vpop.f32.mrf.mxu0
        %v5485 = vadd.f32 %v5463, %v5484
        %5486 = vdwg.mxu0
        %v5487 = vxor.u32 %v5485, 2147483648
        %v5488 = vmul.f32 %v5487, 1.442695
        %v5489 = vpow.pop %v5488
        %v5490 = vadd.f32 %v5489, 1.0
        %v5491 = vrcp.pop %v5490
        %v5492 = vmul.f32 %v5490, %v5491
        %v5493 = vsub.f32 1.0, %v5492
        %v5494 = vmul.f32 %v5491, %v5493
        %v5495 = vadd.f32 %v5491, %v5494
        %vm5496 = vweird.f32 %v5490
        %vm5497 = vweird.f32 %v5491
        %vm5498 = vmor %vm5496, %vm5497
        %v5499 = vsel %vm5498, %v5491, %v5495
        %v5500 = vand.u32 2147483647, %v5490
        %vm5501 = vcmp.eq.f32.partialorder %v5500, 8.507059e+37
        %v5502 = vand.u32 %v5490, 2147483648
        %v5503 = vor.u32 1.1754944e-38, %v5502
        %v5504 = vsel %vm5501, %v5503, %v5499
        %v5505 = vmul.f32 1.0, %v5504
        %v5506 = vperm.slane %v5505, 0
        %v5507 = vmul.f32 %v5414, %v5506
        %v5508 = vmul.f32 %v5415, %v5506
        %v5509 = vpack.c.bf16 %v5507, %v5507
        %v5510 = vpack.c.bf16 %v5508, %v5508
        %5511 = vst [vmem:[#allocation3 + $0x4] sm:$0xf] %v5509
        %5512 = vst [vmem:[#allocation3 + $0x8] sm:$0xf] %v5510
        %v5513 = vld [vmem:[#allocation3] sm:$0xc]
        %v5514 = vld [vmem:[#allocation3 + $0x4] sm:$0xf]
        %v5515 = vld [vmem:[#allocation3 + $0x8] sm:$0x3]
        %v5519 = vrot.slane %v5513, 6
        %v5520 = vrot.slane %v5519, 4
        %v5521 = vrot.slane %v5514, 6
        %v5522 = vsel %vm3392, %v5520, %v5521
        %v5523 = vrot.slane %v5521, 4
        %v5524 = vrot.slane %v5515, 6
        %v5525 = vsel %vm3392, %v5523, %v5524
        %5528 = vst [vmem:[#allocation4] sm:$0xf] %v5522
        %5529 = vst [vmem:[#allocation4 + $0x54] sm:$0xf] %v5525
        %v5530 = vld [vmem:[#allocation3] sm:$0xc]
        %v5531 = vld [vmem:[#allocation3 + $0x4] sm:$0xf]
        %v5532 = vld [vmem:[#allocation3 + $0x8] sm:$0x7]
        %v5534 = vshrl.u32 %v5530, 16
        %v5536 = vrot.slane %v5534, 6
        %v5537 = vshll.u32 %v5530, 16
        %v5539 = vrot.slane %v5537, 7
        %v5540 = vor.u32 %v5536, %v5539
        %v5541 = vrot.slane %v5540, 4
        %v5543 = vshrl.u32 %v5531, 16
        %v5545 = vrot.slane %v5543, 6
        %v5546 = vshll.u32 %v5531, 16
        %v5548 = vrot.slane %v5546, 7
        %v5549 = vor.u32 %v5545, %v5548
        %v5550 = vsel %vm1161, %v5541, %v5549
        %v5551 = vrot.slane %v5549, 4
        %v5553 = vshrl.u32 %v5532, 16
        %v5555 = vrot.slane %v5553, 6
        %v5556 = vshll.u32 %v5532, 16
        %v5558 = vrot.slane %v5556, 7
        %v5559 = vor.u32 %v5555, %v5558
        %v5560 = vsel %vm1161, %v5551, %v5559
        %5563 = vst [vmem:[#allocation4 + $0x4] sm:$0xf] %v5550
        %5564 = vst [vmem:[#allocation4 + $0x58] sm:$0xf] %v5560
        %v5565 = vld [vmem:[#allocation3] sm:$0x8]
        %v5566 = vld [vmem:[#allocation3 + $0x4] sm:$0xf]
        %v5567 = vld [vmem:[#allocation3 + $0x8] sm:$0x7]
        %v5571 = vrot.slane %v5565, 7
        %v5572 = vrot.slane %v5571, 4
        %v5573 = vrot.slane %v5566, 7
        %v5574 = vsel %vm1240, %v5572, %v5573
        %v5575 = vrot.slane %v5573, 4
        %v5576 = vrot.slane %v5567, 7
        %v5577 = vsel %vm1240, %v5575, %v5576
        %5580 = vst [vmem:[#allocation4 + $0x8] sm:$0xf] %v5574
        %5581 = vst [vmem:[#allocation4 + $0x5c] sm:$0xf] %v5577
        %v5582 = vld [vmem:[#allocation3] sm:$0x8]
        %v5583 = vld [vmem:[#allocation3 + $0x4] sm:$0xf]
        %v5584 = vld [vmem:[#allocation3 + $0x8] sm:$0xf]
        %v5586 = vshrl.u32 %v5582, 16
        %v5588 = vrot.slane %v5586, 7
        %v5589 = vrot.slane %v5588, 4
        %v5591 = vshrl.u32 %v5583, 16
        %v5593 = vrot.slane %v5591, 7
        %v5594 = vshll.u32 %v5583, 16
        %v5596 = vor.u32 %v5593, %v5594
        %v5597 = vsel %vm1271, %v5589, %v5596
        %v5598 = vrot.slane %v5593, 4
        %v5600 = vshrl.u32 %v5584, 16
        %v5602 = vrot.slane %v5600, 7
        %v5603 = vshll.u32 %v5584, 16
        %v5605 = vor.u32 %v5602, %v5603
        %v5606 = vsel %vm1271, %v5598, %v5605
        %5609 = vst [vmem:[#allocation4 + $0xc] sm:$0xf] %v5597
        %5610 = vst [vmem:[#allocation4 + $0x60] sm:$0xf] %v5606
        %v5611 = vld [vmem:[#allocation3 + $0x4] sm:$0xf]
        %v5612 = vld [vmem:[#allocation3 + $0x8] sm:$0xf]
        %5613 = vst [vmem:[#allocation4 + $0x10] sm:$0xf] %v5611
        %5614 = vst [vmem:[#allocation4 + $0x64] sm:$0xf] %v5612
        %v5615 = vld [vmem:[#allocation3 + $0x4] sm:$0xf]
        %v5616 = vld [vmem:[#allocation3 + $0x8] sm:$0xf]
        %v5617 = vld [vmem:[#allocation3 + $0xc] sm:$0x1]
        %v5619 = vshrl.u32 %v5615, 16
        %v5621 = vrot.slane %v5619, 4
        %v5622 = vshll.u32 %v5615, 16
        %v5624 = vrot.slane %v5622, 5
        %v5625 = vor.u32 %v5621, %v5624
        %v5626 = vrot.slane %v5625, 4
        %v5628 = vshll.u32 %v5616, 16
        %v5630 = vrot.slane %v5628, 5
        %v5631 = vsel %vm1340, %v5626, %v5630
        %v5632 = vshrl.u32 %v5616, 16
        %v5634 = vrot.slane %v5632, 4
        %v5635 = vor.u32 %v5634, %v5630
        %v5636 = vrot.slane %v5635, 4
        %v5638 = vshll.u32 %v5617, 16
        %v5640 = vrot.slane %v5638, 5
        %v5641 = vsel %vm1340, %v5636, %v5640
        %5644 = vst [vmem:[#allocation4 + $0x14] sm:$0xf] %v5631
        %5645 = vst [vmem:[#allocation4 + $0x68] sm:$0xf] %v5641
        %v5646 = vld [vmem:[#allocation3 + $0x4] sm:$0xe]
        %v5647 = vld [vmem:[#allocation3 + $0x8] sm:$0xf]
        %v5648 = vld [vmem:[#allocation3 + $0xc] sm:$0x1]
        %v5652 = vrot.slane %v5646, 5
        %v5653 = vrot.slane %v5652, 4
        %v5654 = vrot.slane %v5647, 5
        %v5655 = vsel %vm1411, %v5653, %v5654
        %v5656 = vrot.slane %v5654, 4
        %v5657 = vrot.slane %v5648, 5
        %v5658 = vsel %vm1411, %v5656, %v5657
        %5661 = vst [vmem:[#allocation4 + $0x18] sm:$0xf] %v5655
        %5662 = vst [vmem:[#allocation4 + $0x6c] sm:$0xf] %v5658
        %v5663 = vld [vmem:[#allocation3 + $0x4] sm:$0xe]
        %v5664 = vld [vmem:[#allocation3 + $0x8] sm:$0xf]
        %v5665 = vld [vmem:[#allocation3 + $0xc] sm:$0x3]
        %v5667 = vshrl.u32 %v5663, 16
        %v5669 = vrot.slane %v5667, 5
        %v5670 = vshll.u32 %v5663, 16
        %v5672 = vrot.slane %v5670, 6
        %v5673 = vor.u32 %v5669, %v5672
        %v5674 = vrot.slane %v5673, 4
        %v5676 = vshrl.u32 %v5664, 16
        %v5678 = vrot.slane %v5676, 5
        %v5679 = vshll.u32 %v5664, 16
        %v5681 = vrot.slane %v5679, 6
        %v5682 = vor.u32 %v5678, %v5681
        %v5683 = vsel %vm1442, %v5674, %v5682
        %v5684 = vrot.slane %v5682, 4
        %v5686 = vshrl.u32 %v5665, 16
        %v5688 = vrot.slane %v5686, 5
        %v5689 = vshll.u32 %v5665, 16
        %v5691 = vrot.slane %v5689, 6
        %v5692 = vor.u32 %v5688, %v5691
        %v5693 = vsel %vm1442, %v5684, %v5692
        %5696 = vst [vmem:[#allocation4 + $0x1c] sm:$0xf] %v5683
        %5697 = vst [vmem:[#allocation4 + $0x70] sm:$0xf] %v5693
        %v5698 = vld [vmem:[#allocation3 + $0x4] sm:$0xc]
        %v5699 = vld [vmem:[#allocation3 + $0x8] sm:$0xf]
        %v5700 = vld [vmem:[#allocation3 + $0xc] sm:$0x3]
        %v5704 = vrot.slane %v5698, 6
        %v5705 = vrot.slane %v5704, 4
        %v5706 = vrot.slane %v5699, 6
        %v5707 = vsel %vm3392, %v5705, %v5706
        %v5708 = vrot.slane %v5706, 4
        %v5709 = vrot.slane %v5700, 6
        %v5710 = vsel %vm3392, %v5708, %v5709
        %5713 = vst [vmem:[#allocation4 + $0x20] sm:$0xf] %v5707
        %5714 = vst [vmem:[#allocation4 + $0x74] sm:$0xf] %v5710
        %v5715 = vld [vmem:[#allocation4] sm:$0xff]
        %v5716 = vld [vmem:[#allocation4 + $0x8] sm:$0xff]
        %v5717 = vld [vmem:[#allocation4 + $0x10] sm:$0xff]
        %v5718 = vld [vmem:[#allocation4 + $0x18] sm:$0xff]
        %v5719 = vld [vmem:[#allocation4 + $0x20] sm:$0xf]
        %v5720 = vld [vmem:[#allocation4 + $0x54] sm:$0xff]
        %v5721 = vld [vmem:[#allocation4 + $0x5c] sm:$0xff]
        %v5722 = vld [vmem:[#allocation4 + $0x64] sm:$0xff]
        %v5723 = vld [vmem:[#allocation4 + $0x6c] sm:$0xff]
        %v5724 = vld [vmem:[#allocation4 + $0x74] sm:$0xf]
        %v5725 = vld [vmem:[#allocation31] sm:$0xf]
        %v5726 = vld [vmem:[#allocation31 + $0x4] sm:$0xf]
        %v5727 = vld [vmem:[#allocation31 + $0x8] sm:$0xf]
        %v5728 = vld [vmem:[#allocation31 + $0xc] sm:$0xf]
        %v5729 = vld [vmem:[#allocation31 + $0x10] sm:$0xf]
        %v5730 = vld [vmem:[#allocation31 + $0x14] sm:$0xf]
        %v5731 = vld [vmem:[#allocation31 + $0x18] sm:$0xf]
        %v5732 = vld [vmem:[#allocation31 + $0x1c] sm:$0xf]
        %v5733 = vld [vmem:[#allocation31 + $0x20] sm:$0xf]
        %v5734 = vld [vmem:[#allocation31 + $0x24] sm:$0xf]
        %v5735 = vld [vmem:[#allocation31 + $0x28] sm:$0xf]
        %v5736 = vld [vmem:[#allocation31 + $0x2c] sm:$0xf]
        %v5737 = vld [vmem:[#allocation31 + $0x30] sm:$0xf]
        %v5738 = vld [vmem:[#allocation31 + $0x34] sm:$0xf]
        %v5739 = vld [vmem:[#allocation31 + $0x38] sm:$0xf]
        %v5740 = vld [vmem:[#allocation31 + $0x3c] sm:$0xf]
        %v5741 = vld [vmem:[#allocation31 + $0x40] sm:$0xf]
        %v5742 = vld [vmem:[#allocation31 + $0x44] sm:$0xf]
        %v5743 = vld [vmem:[#allocation31 + $0x48] sm:$0xf]
        %v5744 = vld [vmem:[#allocation31 + $0x4c] sm:$0xf]
        %v5745 = vld [vmem:[#allocation31 + $0x50] sm:$0xf]
        %v5746 = vld [vmem:[#allocation31 + $0x54] sm:$0xf]
        %v5747 = vld [vmem:[#allocation31 + $0x58] sm:$0xf]
        %v5748 = vld [vmem:[#allocation31 + $0x5c] sm:$0xf]
        %v5749 = vld [vmem:[#allocation31 + $0x60] sm:$0xf]
        %v5750 = vld [vmem:[#allocation31 + $0x64] sm:$0xf]
        %v5751 = vld [vmem:[#allocation31 + $0x68] sm:$0xf]
        %v5752 = vld [vmem:[#allocation31 + $0x6c] sm:$0xf]
        %v5753 = vld [vmem:[#allocation31 + $0x70] sm:$0xf]
        %v5754 = vld [vmem:[#allocation31 + $0x74] sm:$0xf]
        %v5755 = vld [vmem:[#allocation31 + $0x78] sm:$0xf]
        %v5756 = vld [vmem:[#allocation31 + $0x7c] sm:$0xf]
        %v5757 = vld [vmem:[#allocation31 + $0x80] sm:$0xf]
        %v5758 = vld [vmem:[#allocation31 + $0x84] sm:$0xf]
        %v5759 = vld [vmem:[#allocation31 + $0x88] sm:$0xf]
        %v5760 = vld [vmem:[#allocation31 + $0x8c] sm:$0xf]
        %v5761 = vld [vmem:[#allocation31 + $0x90] sm:$0xf]
        %v5762 = vld [vmem:[#allocation31 + $0x94] sm:$0xf]
        %v5763 = vld [vmem:[#allocation31 + $0x98] sm:$0xf]
        %v5764 = vld [vmem:[#allocation31 + $0x9c] sm:$0xf]
        %v5765 = vld [vmem:[#allocation31 + $0xa0] sm:$0xf]
        %v5766 = vld [vmem:[#allocation31 + $0xa4] sm:$0xf]
        %v5767 = vld [vmem:[#allocation31 + $0xa8] sm:$0xf]
        %v5768 = vld [vmem:[#allocation31 + $0xac] sm:$0xf]
        %v5769 = vld [vmem:[#allocation31 + $0xb0] sm:$0xf]
        %v5770 = vld [vmem:[#allocation31 + $0xb4] sm:$0xf]
        %v5771 = vld [vmem:[#allocation31 + $0xb8] sm:$0xf]
        %v5772 = vld [vmem:[#allocation31 + $0xbc] sm:$0xf]
        %v5773 = vld [vmem:[#allocation31 + $0xc0] sm:$0xf]
        %v5774 = vld [vmem:[#allocation31 + $0xc4] sm:$0xf]
        %v5775 = vld [vmem:[#allocation31 + $0xc8] sm:$0xf]
        %v5776 = vld [vmem:[#allocation31 + $0xcc] sm:$0xf]
        %v5777 = vld [vmem:[#allocation31 + $0xd0] sm:$0xf]
        %v5778 = vld [vmem:[#allocation31 + $0xd4] sm:$0xf]
        %v5779 = vld [vmem:[#allocation31 + $0xd8] sm:$0xf]
        %v5780 = vld [vmem:[#allocation31 + $0xdc] sm:$0xf]
        %v5781 = vld [vmem:[#allocation31 + $0xe0] sm:$0xf]
        %v5782 = vld [vmem:[#allocation31 + $0xe4] sm:$0xf]
        %v5783 = vld [vmem:[#allocation31 + $0xe8] sm:$0xf]
        %v5784 = vld [vmem:[#allocation31 + $0xec] sm:$0xf]
        %v5785 = vld [vmem:[#allocation31 + $0xf0] sm:$0xf]
        %v5786 = vld [vmem:[#allocation31 + $0xf4] sm:$0xf]
        %v5787 = vld [vmem:[#allocation31 + $0xf8] sm:$0xf]
        %v5788 = vld [vmem:[#allocation31 + $0xfc] sm:$0xf]
        %v5789 = vld [vmem:[#allocation31 + $0x100] sm:$0xf]
        %v5790 = vld [vmem:[#allocation31 + $0x104] sm:$0xf]
        %v5791 = vld [vmem:[#allocation31 + $0x108] sm:$0xf]
        %v5792 = vld [vmem:[#allocation31 + $0x10c] sm:$0xf]
        %v5793 = vld [vmem:[#allocation31 + $0x110] sm:$0xf]
        %v5794 = vld [vmem:[#allocation31 + $0x114] sm:$0xf]
        %v5795 = vld [vmem:[#allocation31 + $0x118] sm:$0xf]
        %v5796 = vld [vmem:[#allocation31 + $0x11c] sm:$0xf]
        %v5797 = vld [vmem:[#allocation31 + $0x120] sm:$0xf]
        %v5798 = vld [vmem:[#allocation31 + $0x124] sm:$0xf]
        %v5799 = vld [vmem:[#allocation31 + $0x128] sm:$0xf]
        %v5800 = vld [vmem:[#allocation31 + $0x12c] sm:$0xf]
        %v5801 = vld [vmem:[#allocation31 + $0x130] sm:$0xf]
        %v5802 = vld [vmem:[#allocation31 + $0x134] sm:$0xf]
        %v5803 = vld [vmem:[#allocation31 + $0x138] sm:$0xf]
        %v5804 = vld [vmem:[#allocation31 + $0x13c] sm:$0xf]
        %v5805 = vld [vmem:[#allocation31 + $0x140] sm:$0xf]
        %v5806 = vld [vmem:[#allocation31 + $0x144] sm:$0xf]
        %v5807 = vld [vmem:[#allocation31 + $0x148] sm:$0xf]
        %v5808 = vld [vmem:[#allocation31 + $0x14c] sm:$0xf]
        %v5809 = vld [vmem:[#allocation31 + $0x150] sm:$0xf]
        %v5810 = vld [vmem:[#allocation31 + $0x154] sm:$0xf]
        %v5811 = vld [vmem:[#allocation31 + $0x158] sm:$0xf]
        %v5812 = vld [vmem:[#allocation31 + $0x15c] sm:$0xf]
        %v5813 = vld [vmem:[#allocation31 + $0x160] sm:$0xf]
        %v5814 = vld [vmem:[#allocation31 + $0x164] sm:$0xf]
        %v5815 = vld [vmem:[#allocation31 + $0x168] sm:$0xf]
        %v5816 = vld [vmem:[#allocation31 + $0x16c] sm:$0xf]
        %v5817 = vld [vmem:[#allocation31 + $0x170] sm:$0xf]
        %v5818 = vld [vmem:[#allocation31 + $0x174] sm:$0xf]
        %v5819 = vld [vmem:[#allocation31 + $0x178] sm:$0xf]
        %v5820 = vld [vmem:[#allocation31 + $0x17c] sm:$0xf]
        %v5821 = vld [vmem:[#allocation31 + $0x180] sm:$0xf]
        %v5822 = vld [vmem:[#allocation31 + $0x184] sm:$0xf]
        %v5823 = vld [vmem:[#allocation31 + $0x188] sm:$0xf]
        %v5824 = vld [vmem:[#allocation31 + $0x18c] sm:$0xf]
        %v5825 = vld [vmem:[#allocation31 + $0x190] sm:$0xf]
        %v5826 = vld [vmem:[#allocation31 + $0x194] sm:$0xf]
        %v5827 = vld [vmem:[#allocation31 + $0x198] sm:$0xf]
        %v5828 = vld [vmem:[#allocation31 + $0x19c] sm:$0xf]
        %v5829 = vld [vmem:[#allocation31 + $0x1a0] sm:$0xf]
        %v5830 = vld [vmem:[#allocation31 + $0x1a4] sm:$0xf]
        %v5831 = vld [vmem:[#allocation31 + $0x1a8] sm:$0xf]
        %v5832 = vld [vmem:[#allocation31 + $0x1ac] sm:$0xf]
        %v5833 = vld [vmem:[#allocation31 + $0x1b0] sm:$0xf]
        %v5834 = vld [vmem:[#allocation31 + $0x1b4] sm:$0xf]
        %v5835 = vld [vmem:[#allocation31 + $0x1b8] sm:$0xf]
        %v5836 = vld [vmem:[#allocation31 + $0x1bc] sm:$0xf]
        %v5837 = vld [vmem:[#allocation31 + $0x1c0] sm:$0xf]
        %v5838 = vld [vmem:[#allocation31 + $0x1c4] sm:$0xf]
        %v5839 = vld [vmem:[#allocation31 + $0x1c8] sm:$0xf]
        %v5840 = vld [vmem:[#allocation31 + $0x1cc] sm:$0xf]
        %v5841 = vld [vmem:[#allocation31 + $0x1d0] sm:$0xf]
        %v5842 = vld [vmem:[#allocation31 + $0x1d4] sm:$0xf]
        %v5843 = vld [vmem:[#allocation31 + $0x1d8] sm:$0xf]
        %v5844 = vld [vmem:[#allocation31 + $0x1dc] sm:$0xf]
        %v5845 = vld [vmem:[#allocation31 + $0x1e0] sm:$0xf]
        %v5846 = vld [vmem:[#allocation31 + $0x1e4] sm:$0xf]
        %v5847 = vld [vmem:[#allocation31 + $0x1e8] sm:$0xf]
        %v5848 = vld [vmem:[#allocation31 + $0x1ec] sm:$0xf]
        %v5849 = vld [vmem:[#allocation31 + $0x1f0] sm:$0xf]
        %v5850 = vld [vmem:[#allocation31 + $0x1f4] sm:$0xf]
        %v5851 = vld [vmem:[#allocation31 + $0x1f8] sm:$0xf]
        %v5852 = vld [vmem:[#allocation31 + $0x1fc] sm:$0xf]
        %v5853 = vld [vmem:[#allocation31 + $0x200] sm:$0xf]
        %v5854 = vld [vmem:[#allocation31 + $0x204] sm:$0xf]
        %v5855 = vld [vmem:[#allocation31 + $0x208] sm:$0xf]
        %v5856 = vld [vmem:[#allocation31 + $0x20c] sm:$0xf]
        %v5857 = vld [vmem:[#allocation31 + $0x210] sm:$0xf]
        %v5858 = vld [vmem:[#allocation31 + $0x214] sm:$0xf]
        %v5859 = vld [vmem:[#allocation31 + $0x218] sm:$0xf]
        %v5860 = vld [vmem:[#allocation31 + $0x21c] sm:$0xf]
        %v5861 = vld [vmem:[#allocation31 + $0x220] sm:$0xf]
        %v5862 = vld [vmem:[#allocation31 + $0x224] sm:$0xf]
        %v5863 = vld [vmem:[#allocation31 + $0x228] sm:$0xf]
        %v5864 = vld [vmem:[#allocation31 + $0x22c] sm:$0xf]
        %v5865 = vld [vmem:[#allocation31 + $0x230] sm:$0xf]
        %v5866 = vld [vmem:[#allocation31 + $0x234] sm:$0xf]
        %v5867 = vld [vmem:[#allocation31 + $0x238] sm:$0xf]
        %v5868 = vld [vmem:[#allocation31 + $0x23c] sm:$0xf]
        %v5869 = vld [vmem:[#allocation33] sm:$0x1]
        %v5871 = vperm.slane %v5869, 0
        %v5883 = vunpack.c.l.b16 %v5715
        %v5884 = vunpack.c.h.b16 %v5715
        %v5885 = vunpack.c.l.b16 %v5716
        %v5886 = vunpack.c.h.b16 %v5716
        %v5887 = vunpack.c.l.b16 %v5717
        %v5888 = vunpack.c.h.b16 %v5717
        %v5889 = vunpack.c.l.b16 %v5718
        %v5890 = vunpack.c.h.b16 %v5718
        %v5891 = vunpack.c.l.b16 %v5719
        %v5892 = vunpack.c.l.b16 %v5720
        %v5893 = vunpack.c.h.b16 %v5720
        %v5894 = vunpack.c.l.b16 %v5721
        %v5895 = vunpack.c.h.b16 %v5721
        %v5896 = vunpack.c.l.b16 %v5722
        %v5897 = vunpack.c.h.b16 %v5722
        %v5898 = vunpack.c.l.b16 %v5723
        %v5899 = vunpack.c.h.b16 %v5723
        %v5900 = vunpack.c.l.b16 %v5724
        %v5901 = vpack.c.b16 %v5892, %v5883
        %v5902 = vpack.c.b16 %v5893, %v5884
        %v5903 = vpack.c.b16 %v5894, %v5885
        %v5904 = vpack.c.b16 %v5895, %v5886
        %v5905 = vpack.c.b16 %v5896, %v5887
        %v5906 = vpack.c.b16 %v5897, %v5888
        %v5907 = vpack.c.b16 %v5898, %v5889
        %v5908 = vpack.c.b16 %v5899, %v5890
        %v5909 = vpack.c.b16 %v5900, %v5891
        %v6063 = vunpack.c.l.b16 %v5725
        %v6064 = vunpack.c.l.b16 %v5726
        %v6065 = vunpack.c.l.b16 %v5727
        %v6066 = vunpack.c.l.b16 %v5728
        %v6067 = vunpack.c.l.b16 %v5729
        %v6068 = vunpack.c.l.b16 %v5730
        %v6069 = vunpack.c.l.b16 %v5731
        %v6070 = vunpack.c.l.b16 %v5732
        %v6071 = vunpack.c.l.b16 %v5733
        %v6072 = vunpack.c.l.b16 %v5734
        %v6073 = vunpack.c.l.b16 %v5735
        %v6074 = vunpack.c.l.b16 %v5736
        %v6075 = vunpack.c.l.b16 %v5737
        %v6076 = vunpack.c.l.b16 %v5738
        %v6077 = vunpack.c.l.b16 %v5739
        %v6078 = vunpack.c.l.b16 %v5740
        %v6079 = vunpack.c.l.b16 %v5741
        %v6080 = vunpack.c.l.b16 %v5742
        %v6081 = vunpack.c.l.b16 %v5743
        %v6082 = vunpack.c.l.b16 %v5744
        %v6083 = vunpack.c.l.b16 %v5745
        %v6084 = vunpack.c.l.b16 %v5746
        %v6085 = vunpack.c.l.b16 %v5747
        %v6086 = vunpack.c.l.b16 %v5748
        %v6087 = vunpack.c.l.b16 %v5749
        %v6088 = vunpack.c.l.b16 %v5750
        %v6089 = vunpack.c.l.b16 %v5751
        %v6090 = vunpack.c.l.b16 %v5752
        %v6091 = vunpack.c.l.b16 %v5753
        %v6092 = vunpack.c.l.b16 %v5754
        %v6093 = vunpack.c.l.b16 %v5755
        %v6094 = vunpack.c.l.b16 %v5756
        %v6095 = vunpack.c.l.b16 %v5757
        %v6096 = vunpack.c.l.b16 %v5758
        %v6097 = vunpack.c.l.b16 %v5759
        %v6098 = vunpack.c.l.b16 %v5760
        %v6099 = vunpack.c.l.b16 %v5761
        %v6100 = vunpack.c.l.b16 %v5762
        %v6101 = vunpack.c.l.b16 %v5763
        %v6102 = vunpack.c.l.b16 %v5764
        %v6103 = vunpack.c.l.b16 %v5765
        %v6104 = vunpack.c.l.b16 %v5766
        %v6105 = vunpack.c.l.b16 %v5767
        %v6106 = vunpack.c.l.b16 %v5768
        %v6107 = vunpack.c.l.b16 %v5769
        %v6108 = vunpack.c.l.b16 %v5770
        %v6109 = vunpack.c.l.b16 %v5771
        %v6110 = vunpack.c.l.b16 %v5772
        %v6111 = vunpack.c.l.b16 %v5773
        %v6112 = vunpack.c.l.b16 %v5774
        %v6113 = vunpack.c.l.b16 %v5775
        %v6114 = vunpack.c.l.b16 %v5776
        %v6115 = vunpack.c.l.b16 %v5777
        %v6116 = vunpack.c.l.b16 %v5778
        %v6117 = vunpack.c.l.b16 %v5779
        %v6118 = vunpack.c.l.b16 %v5780
        %v6119 = vunpack.c.l.b16 %v5781
        %v6120 = vunpack.c.l.b16 %v5782
        %v6121 = vunpack.c.l.b16 %v5783
        %v6122 = vunpack.c.l.b16 %v5784
        %v6123 = vunpack.c.l.b16 %v5785
        %v6124 = vunpack.c.l.b16 %v5786
        %v6125 = vunpack.c.l.b16 %v5787
        %v6126 = vunpack.c.l.b16 %v5788
        %v6127 = vunpack.c.l.b16 %v5789
        %v6128 = vunpack.c.l.b16 %v5790
        %v6129 = vunpack.c.l.b16 %v5791
        %v6130 = vunpack.c.l.b16 %v5792
        %v6131 = vunpack.c.l.b16 %v5793
        %v6132 = vunpack.c.l.b16 %v5794
        %v6133 = vunpack.c.l.b16 %v5795
        %v6134 = vunpack.c.l.b16 %v5796
        %v6135 = vunpack.c.l.b16 %v5797
        %v6136 = vunpack.c.l.b16 %v5798
        %v6137 = vunpack.c.l.b16 %v5799
        %v6138 = vunpack.c.l.b16 %v5800
        %v6139 = vunpack.c.l.b16 %v5801
        %v6140 = vunpack.c.l.b16 %v5802
        %v6141 = vunpack.c.l.b16 %v5803
        %v6142 = vunpack.c.l.b16 %v5804
        %v6143 = vunpack.c.l.b16 %v5805
        %v6144 = vunpack.c.l.b16 %v5806
        %v6145 = vunpack.c.l.b16 %v5807
        %v6146 = vunpack.c.l.b16 %v5808
        %v6147 = vunpack.c.l.b16 %v5809
        %v6148 = vunpack.c.l.b16 %v5810
        %v6149 = vunpack.c.l.b16 %v5811
        %v6150 = vunpack.c.l.b16 %v5812
        %v6151 = vunpack.c.l.b16 %v5813
        %v6152 = vunpack.c.l.b16 %v5814
        %v6153 = vunpack.c.l.b16 %v5815
        %v6154 = vunpack.c.l.b16 %v5816
        %v6155 = vunpack.c.l.b16 %v5817
        %v6156 = vunpack.c.l.b16 %v5818
        %v6157 = vunpack.c.l.b16 %v5819
        %v6158 = vunpack.c.l.b16 %v5820
        %v6159 = vunpack.c.l.b16 %v5821
        %v6160 = vunpack.c.l.b16 %v5822
        %v6161 = vunpack.c.l.b16 %v5823
        %v6162 = vunpack.c.l.b16 %v5824
        %v6163 = vunpack.c.l.b16 %v5825
        %v6164 = vunpack.c.l.b16 %v5826
        %v6165 = vunpack.c.l.b16 %v5827
        %v6166 = vunpack.c.l.b16 %v5828
        %v6167 = vunpack.c.l.b16 %v5829
        %v6168 = vunpack.c.l.b16 %v5830
        %v6169 = vunpack.c.l.b16 %v5831
        %v6170 = vunpack.c.l.b16 %v5832
        %v6171 = vunpack.c.l.b16 %v5833
        %v6172 = vunpack.c.l.b16 %v5834
        %v6173 = vunpack.c.l.b16 %v5835
        %v6174 = vunpack.c.l.b16 %v5836
        %v6175 = vunpack.c.l.b16 %v5837
        %v6176 = vunpack.c.l.b16 %v5838
        %v6177 = vunpack.c.l.b16 %v5839
        %v6178 = vunpack.c.l.b16 %v5840
        %v6179 = vunpack.c.l.b16 %v5841
        %v6180 = vunpack.c.l.b16 %v5842
        %v6181 = vunpack.c.l.b16 %v5843
        %v6182 = vunpack.c.l.b16 %v5844
        %v6183 = vunpack.c.l.b16 %v5845
        %v6184 = vunpack.c.l.b16 %v5846
        %v6185 = vunpack.c.l.b16 %v5847
        %v6186 = vunpack.c.l.b16 %v5848
        %v6187 = vunpack.c.l.b16 %v5849
        %v6188 = vunpack.c.l.b16 %v5850
        %v6189 = vunpack.c.l.b16 %v5851
        %v6190 = vunpack.c.l.b16 %v5852
        %v6191 = vunpack.c.l.b16 %v5853
        %v6192 = vunpack.c.l.b16 %v5854
        %v6193 = vunpack.c.l.b16 %v5855
        %v6194 = vunpack.c.l.b16 %v5856
        %v6195 = vunpack.c.l.b16 %v5857
        %v6196 = vunpack.c.l.b16 %v5858
        %v6197 = vunpack.c.l.b16 %v5859
        %v6198 = vunpack.c.l.b16 %v5860
        %v6199 = vunpack.c.l.b16 %v5861
        %v6200 = vunpack.c.l.b16 %v5862
        %v6201 = vunpack.c.l.b16 %v5863
        %v6202 = vunpack.c.l.b16 %v5864
        %v6203 = vunpack.c.l.b16 %v5865
        %v6204 = vunpack.c.l.b16 %v5866
        %v6205 = vunpack.c.l.b16 %v5867
        %v6206 = vunpack.c.l.b16 %v5868
        %v6207 = vpack.c.b16 %v6064, %v6063
        %v6208 = vpack.c.b16 %v6066, %v6065
        %v6209 = vpack.c.b16 %v6068, %v6067
        %v6210 = vpack.c.b16 %v6070, %v6069
        %v6211 = vpack.c.b16 %v6072, %v6071
        %v6212 = vpack.c.b16 %v6074, %v6073
        %v6213 = vpack.c.b16 %v6076, %v6075
        %v6214 = vpack.c.b16 %v6078, %v6077
        %v6215 = vpack.c.b16 %v6080, %v6079
        %v6216 = vpack.c.b16 %v6082, %v6081
        %v6217 = vpack.c.b16 %v6084, %v6083
        %v6218 = vpack.c.b16 %v6086, %v6085
        %v6219 = vpack.c.b16 %v6088, %v6087
        %v6220 = vpack.c.b16 %v6090, %v6089
        %v6221 = vpack.c.b16 %v6092, %v6091
        %v6222 = vpack.c.b16 %v6094, %v6093
        %v6223 = vpack.c.b16 %v6096, %v6095
        %v6224 = vpack.c.b16 %v6098, %v6097
        %v6225 = vpack.c.b16 %v6100, %v6099
        %v6226 = vpack.c.b16 %v6102, %v6101
        %v6227 = vpack.c.b16 %v6104, %v6103
        %v6228 = vpack.c.b16 %v6106, %v6105
        %v6229 = vpack.c.b16 %v6108, %v6107
        %v6230 = vpack.c.b16 %v6110, %v6109
        %v6231 = vpack.c.b16 %v6112, %v6111
        %v6232 = vpack.c.b16 %v6114, %v6113
        %v6233 = vpack.c.b16 %v6116, %v6115
        %v6234 = vpack.c.b16 %v6118, %v6117
        %v6235 = vpack.c.b16 %v6120, %v6119
        %v6236 = vpack.c.b16 %v6122, %v6121
        %v6237 = vpack.c.b16 %v6124, %v6123
        %v6238 = vpack.c.b16 %v6126, %v6125
        %v6239 = vpack.c.b16 %v6128, %v6127
        %v6240 = vpack.c.b16 %v6130, %v6129
        %v6241 = vpack.c.b16 %v6132, %v6131
        %v6242 = vpack.c.b16 %v6134, %v6133
        %v6243 = vpack.c.b16 %v6136, %v6135
        %v6244 = vpack.c.b16 %v6138, %v6137
        %v6245 = vpack.c.b16 %v6140, %v6139
        %v6246 = vpack.c.b16 %v6142, %v6141
        %v6247 = vpack.c.b16 %v6144, %v6143
        %v6248 = vpack.c.b16 %v6146, %v6145
        %v6249 = vpack.c.b16 %v6148, %v6147
        %v6250 = vpack.c.b16 %v6150, %v6149
        %v6251 = vpack.c.b16 %v6152, %v6151
        %v6252 = vpack.c.b16 %v6154, %v6153
        %v6253 = vpack.c.b16 %v6156, %v6155
        %v6254 = vpack.c.b16 %v6158, %v6157
        %v6255 = vpack.c.b16 %v6160, %v6159
        %v6256 = vpack.c.b16 %v6162, %v6161
        %v6257 = vpack.c.b16 %v6164, %v6163
        %v6258 = vpack.c.b16 %v6166, %v6165
        %v6259 = vpack.c.b16 %v6168, %v6167
        %v6260 = vpack.c.b16 %v6170, %v6169
        %v6261 = vpack.c.b16 %v6172, %v6171
        %v6262 = vpack.c.b16 %v6174, %v6173
        %v6263 = vpack.c.b16 %v6176, %v6175
        %v6264 = vpack.c.b16 %v6178, %v6177
        %v6265 = vpack.c.b16 %v6180, %v6179
        %v6266 = vpack.c.b16 %v6182, %v6181
        %v6267 = vpack.c.b16 %v6184, %v6183
        %v6268 = vpack.c.b16 %v6186, %v6185
        %v6269 = vpack.c.b16 %v6188, %v6187
        %v6270 = vpack.c.b16 %v6190, %v6189
        %v6271 = vpack.c.b16 %v6192, %v6191
        %v6272 = vpack.c.b16 %v6194, %v6193
        %v6273 = vpack.c.b16 %v6196, %v6195
        %v6274 = vpack.c.b16 %v6198, %v6197
        %v6275 = vpack.c.b16 %v6200, %v6199
        %v6276 = vpack.c.b16 %v6202, %v6201
        %v6277 = vpack.c.b16 %v6204, %v6203
        %v6278 = vpack.c.b16 %v6206, %v6205
        %6351 = vmatpush.bf16.msra.mxu0 %v6214
        %6352 = vmatpush.bf16.msra.mxu0 %v6213
        %6353 = vmatpush.bf16.msra.mxu0 %v6212
        %6354 = vmatpush.bf16.msra.mxu0 %v6211
        %6355 = vmatpush.bf16.msra.mxu0 %v6210
        %6356 = vmatpush.bf16.msra.mxu0 %v6209
        %6357 = vmatpush.bf16.msra.mxu0 %v6208
        %6358 = vmatpush.bf16.msra.mxu0 %v6207
        %6359 = vmatmul.bf16.gmra.mxu0 %v5901
        %v6360 = vpop.f32.mrf.mxu0
        %v6361 = vadd.f32 %v5871, %v6360
        %v6362 = vpop.f32.mrf.mxu0
        %v6363 = vadd.f32 %v5871, %v6362
        %6364 = vdwg.mxu0
        %6365 = vmatpush.bf16.msra.mxu0 %v6222
        %6366 = vmatpush.bf16.msra.mxu0 %v6221
        %6367 = vmatpush.bf16.msra.mxu0 %v6220
        %6368 = vmatpush.bf16.msra.mxu0 %v6219
        %6369 = vmatpush.bf16.msra.mxu0 %v6218
        %6370 = vmatpush.bf16.msra.mxu0 %v6217
        %6371 = vmatpush.bf16.msra.mxu0 %v6216
        %6372 = vmatpush.bf16.msra.mxu0 %v6215
        %6373 = vmatmul.bf16.gmra.mxu0 %v5902
        %v6374 = vpop.f32.mrf.mxu0
        %v6375 = vadd.f32 %v6361, %v6374
        %v6376 = vpop.f32.mrf.mxu0
        %v6377 = vadd.f32 %v6363, %v6376
        %6378 = vdwg.mxu0
        %6379 = vmatpush.bf16.msra.mxu0 %v6230
        %6380 = vmatpush.bf16.msra.mxu0 %v6229
        %6381 = vmatpush.bf16.msra.mxu0 %v6228
        %6382 = vmatpush.bf16.msra.mxu0 %v6227
        %6383 = vmatpush.bf16.msra.mxu0 %v6226
        %6384 = vmatpush.bf16.msra.mxu0 %v6225
        %6385 = vmatpush.bf16.msra.mxu0 %v6224
        %6386 = vmatpush.bf16.msra.mxu0 %v6223
        %6387 = vmatmul.bf16.gmra.mxu0 %v5903
        %v6388 = vpop.f32.mrf.mxu0
        %v6389 = vadd.f32 %v6375, %v6388
        %v6390 = vpop.f32.mrf.mxu0
        %v6391 = vadd.f32 %v6377, %v6390
        %6392 = vdwg.mxu0
        %6393 = vmatpush.bf16.msra.mxu0 %v6238
        %6394 = vmatpush.bf16.msra.mxu0 %v6237
        %6395 = vmatpush.bf16.msra.mxu0 %v6236
        %6396 = vmatpush.bf16.msra.mxu0 %v6235
        %6397 = vmatpush.bf16.msra.mxu0 %v6234
        %6398 = vmatpush.bf16.msra.mxu0 %v6233
        %6399 = vmatpush.bf16.msra.mxu0 %v6232
        %6400 = vmatpush.bf16.msra.mxu0 %v6231
        %6401 = vmatmul.bf16.gmra.mxu0 %v5904
        %v6402 = vpop.f32.mrf.mxu0
        %v6403 = vadd.f32 %v6389, %v6402
        %v6404 = vpop.f32.mrf.mxu0
        %v6405 = vadd.f32 %v6391, %v6404
        %6406 = vdwg.mxu0
        %6407 = vmatpush.bf16.msra.mxu0 %v6246
        %6408 = vmatpush.bf16.msra.mxu0 %v6245
        %6409 = vmatpush.bf16.msra.mxu0 %v6244
        %6410 = vmatpush.bf16.msra.mxu0 %v6243
        %6411 = vmatpush.bf16.msra.mxu0 %v6242
        %6412 = vmatpush.bf16.msra.mxu0 %v6241
        %6413 = vmatpush.bf16.msra.mxu0 %v6240
        %6414 = vmatpush.bf16.msra.mxu0 %v6239
        %6415 = vmatmul.bf16.gmra.mxu0 %v5905
        %v6416 = vpop.f32.mrf.mxu0
        %v6417 = vadd.f32 %v6403, %v6416
        %v6418 = vpop.f32.mrf.mxu0
        %v6419 = vadd.f32 %v6405, %v6418
        %6420 = vdwg.mxu0
        %6421 = vmatpush.bf16.msra.mxu0 %v6254
        %6422 = vmatpush.bf16.msra.mxu0 %v6253
        %6423 = vmatpush.bf16.msra.mxu0 %v6252
        %6424 = vmatpush.bf16.msra.mxu0 %v6251
        %6425 = vmatpush.bf16.msra.mxu0 %v6250
        %6426 = vmatpush.bf16.msra.mxu0 %v6249
        %6427 = vmatpush.bf16.msra.mxu0 %v6248
        %6428 = vmatpush.bf16.msra.mxu0 %v6247
        %6429 = vmatmul.bf16.gmra.mxu0 %v5906
        %v6430 = vpop.f32.mrf.mxu0
        %v6431 = vadd.f32 %v6417, %v6430
        %v6432 = vpop.f32.mrf.mxu0
        %v6433 = vadd.f32 %v6419, %v6432
        %6434 = vdwg.mxu0
        %6435 = vmatpush.bf16.msra.mxu0 %v6262
        %6436 = vmatpush.bf16.msra.mxu0 %v6261
        %6437 = vmatpush.bf16.msra.mxu0 %v6260
        %6438 = vmatpush.bf16.msra.mxu0 %v6259
        %6439 = vmatpush.bf16.msra.mxu0 %v6258
        %6440 = vmatpush.bf16.msra.mxu0 %v6257
        %6441 = vmatpush.bf16.msra.mxu0 %v6256
        %6442 = vmatpush.bf16.msra.mxu0 %v6255
        %6443 = vmatmul.bf16.gmra.mxu0 %v5907
        %v6444 = vpop.f32.mrf.mxu0
        %v6445 = vadd.f32 %v6431, %v6444
        %v6446 = vpop.f32.mrf.mxu0
        %v6447 = vadd.f32 %v6433, %v6446
        %6448 = vdwg.mxu0
        %6449 = vmatpush.bf16.msra.mxu0 %v6270
        %6450 = vmatpush.bf16.msra.mxu0 %v6269
        %6451 = vmatpush.bf16.msra.mxu0 %v6268
        %6452 = vmatpush.bf16.msra.mxu0 %v6267
        %6453 = vmatpush.bf16.msra.mxu0 %v6266
        %6454 = vmatpush.bf16.msra.mxu0 %v6265
        %6455 = vmatpush.bf16.msra.mxu0 %v6264
        %6456 = vmatpush.bf16.msra.mxu0 %v6263
        %6457 = vmatmul.bf16.gmra.mxu0 %v5908
        %v6458 = vpop.f32.mrf.mxu0
        %v6459 = vadd.f32 %v6445, %v6458
        %v6460 = vpop.f32.mrf.mxu0
        %v6461 = vadd.f32 %v6447, %v6460
        %6462 = vdwg.mxu0
        %6463 = vmatpush.bf16.msra.mxu0 %v6278
        %6464 = vmatpush.bf16.msra.mxu0 %v6277
        %6465 = vmatpush.bf16.msra.mxu0 %v6276
        %6466 = vmatpush.bf16.msra.mxu0 %v6275
        %6467 = vmatpush.bf16.msra.mxu0 %v6274
        %6468 = vmatpush.bf16.msra.mxu0 %v6273
        %6469 = vmatpush.bf16.msra.mxu0 %v6272
        %6470 = vmatpush.bf16.msra.mxu0 %v6271
        %6471 = vmatmul.bf16.gmra.mxu0 %v5909
        %v6472 = vpop.f32.mrf.mxu0
        %v6473 = vadd.f32 %v6459, %v6472
        %v6474 = vpop.f32.mrf.mxu0
        %v6475 = vadd.f32 %v6461, %v6474
        %6476 = vdwg.mxu0
        %v6477 = vmax.f32 %v6473, 0.0
        %v6478 = vmax.f32 %v6475, 0.0
        %v6479 = vadd.f32 %v6477, %v6478
        %v6480 = vrot.slane %v6479, 4
        %v6481 = vadd.f32 %v6479, %v6480
        %v6482 = vrot.slane %v6481, 2
        %v6483 = vadd.f32 %v6481, %v6482
        %v6484 = vrot.slane %v6483, 1
        %v6485 = vadd.f32 %v6483, %v6484
        %v6486 = vmul.f32 %v6485, %v3292
        %v6487 = vld [vmem:[%s21] sm:$0xff]
        %v6488 = vld [vmem:[%s21 + $0x8] sm:$0xff]
        %v6489 = vld [vmem:[%s21 + $0x10] sm:$0xff]
        %v6490 = vld [vmem:[%s21 + $0x18] sm:$0xff]
        %v6491 = vld [vmem:[%s21 + $0x20] sm:$0xff]
        %v6492 = vld [vmem:[%s21 + $0x28] sm:$0xff]
        %v6493 = vld [vmem:[%s21 + $0x30] sm:$0xff]
        %v6494 = vld [vmem:[%s21 + $0x38] sm:$0xff]
        %v6495 = vld [vmem:[%s21 + $0x40] sm:$0xff]
        %v6496 = vld [vmem:[%s21 + $0x48] sm:$0xff]
        %v6497 = vld [vmem:[%s21 + $0x50] sm:$0xff]
        %v6498 = vld [vmem:[%s21 + $0x58] sm:$0xff]
        %v6499 = vld [vmem:[%s21 + $0x60] sm:$0xff]
        %v6500 = vld [vmem:[%s21 + $0x68] sm:$0xff]
        %v6501 = vld [vmem:[%s21 + $0x70] sm:$0xff]
        %v6502 = vld [vmem:[%s21 + $0x78] sm:$0xff]
        %v6503 = vld [vmem:[%s22] sm:$0x1]
        %6504 = vmatpush.msra.mxu0 %v6502
        %6505 = vmatpush.msra.mxu0 %v6501
        %6506 = vmatpush.msra.mxu0 %v6500
        %6507 = vmatpush.msra.mxu0 %v6499
        %6508 = vmatpush.msra.mxu0 %v6498
        %6509 = vmatpush.msra.mxu0 %v6497
        %6510 = vmatpush.msra.mxu0 %v6496
        %6511 = vmatpush.msra.mxu0 %v6495
        %6512 = vmatpush.msra.mxu0 %v6494
        %6513 = vmatpush.msra.mxu0 %v6493
        %6514 = vmatpush.msra.mxu0 %v6492
        %6515 = vmatpush.msra.mxu0 %v6491
        %6516 = vmatpush.msra.mxu0 %v6490
        %6517 = vmatpush.msra.mxu0 %v6489
        %6518 = vmatpush.msra.mxu0 %v6488
        %6519 = vmatpush.msra.mxu0 %v6487
        %6520 = vmatmul.f32.gmra.mxu0 %v6486
        %v6521 = vpop.f32.mrf.mxu0
        %v6522 = vadd.f32 %v6503, %v6521
        %6523 = vdwg.mxu0
        %v6524 = vmax.f32 %v6522, 0.0
        %v6525 = vld [vmem:[#allocation34] sm:$0xff]
        %v6526 = vld [vmem:[%s24] sm:$0x1]
        %v6528 = vsel %vm3334, %v6524, 0
        %6530 = vmatpush.msra.mxu0 0.0
        %6531 = vmatpush.msra.mxu0 0.0
        %6532 = vmatpush.msra.mxu0 0.0
        %6533 = vmatpush.msra.mxu0 0.0
        %6534 = vmatpush.msra.mxu0 0.0
        %6535 = vmatpush.msra.mxu0 0.0
        %6536 = vmatpush.msra.mxu0 0.0
        %6537 = vmatpush.msra.mxu0 0.0
        %6538 = vmatpush.msra.mxu0 0.0
        %6539 = vmatpush.msra.mxu0 0.0
        %6540 = vmatpush.msra.mxu0 0.0
        %6541 = vmatpush.msra.mxu0 0.0
        %6542 = vmatpush.msra.mxu0 0.0
        %6543 = vmatpush.msra.mxu0 0.0
        %6544 = vmatpush.msra.mxu0 0.0
        %6545 = vmatpush.msra.mxu0 %v6525
        %6546 = vmatmul.f32.gmra.mxu0 %v6528
        %v6547 = vpop.f32.mrf.mxu0
        %v6548 = vadd.f32 %v6526, %v6547
        %6549 = vdwg.mxu0
        %v6550 = vxor.u32 %v6548, 2147483648
        %v6551 = vmul.f32 %v6550, 1.442695
        %v6552 = vpow.pop %v6551
        %v6553 = vadd.f32 %v6552, 1.0
        %v6554 = vrcp.pop %v6553
        %v6555 = vmul.f32 %v6553, %v6554
        %v6556 = vsub.f32 1.0, %v6555
        %v6557 = vmul.f32 %v6554, %v6556
        %v6558 = vadd.f32 %v6554, %v6557
        %vm6559 = vweird.f32 %v6553
        %vm6560 = vweird.f32 %v6554
        %vm6561 = vmor %vm6559, %vm6560
        %v6562 = vsel %vm6561, %v6554, %v6558
        %v6563 = vand.u32 2147483647, %v6553
        %vm6564 = vcmp.eq.f32.partialorder %v6563, 8.507059e+37
        %v6565 = vand.u32 %v6553, 2147483648
        %v6566 = vor.u32 1.1754944e-38, %v6565
        %v6567 = vsel %vm6564, %v6566, %v6562
        %v6568 = vmul.f32 1.0, %v6567
        %v6569 = vperm.slane %v6568, 0
        %v6570 = vmul.f32 %v6477, %v6569
        %v6571 = vmul.f32 %v6478, %v6569
        %v6572 = vpack.c.bf16 %v6571, %v6570
        %v6573 = vld [vmem:[#allocation36] sm:$0xf]
        %v6574 = vld [vmem:[#allocation36 + $0x4] sm:$0xf]
        %v6575 = vld [vmem:[#allocation36 + $0x8] sm:$0xf]
        %v6576 = vld [vmem:[#allocation36 + $0xc] sm:$0xf]
        %v6577 = vld [vmem:[#allocation36 + $0x10] sm:$0xf]
        %v6578 = vld [vmem:[#allocation36 + $0x14] sm:$0xf]
        %v6579 = vld [vmem:[#allocation36 + $0x18] sm:$0xf]
        %v6580 = vld [vmem:[#allocation36 + $0x1c] sm:$0xf]
        %v6581 = vld [vmem:[#allocation36 + $0x20] sm:$0xf]
        %v6582 = vld [vmem:[#allocation36 + $0x24] sm:$0xf]
        %v6583 = vld [vmem:[#allocation36 + $0x28] sm:$0xf]
        %v6584 = vld [vmem:[#allocation36 + $0x2c] sm:$0xf]
        %v6585 = vld [vmem:[#allocation36 + $0x30] sm:$0xf]
        %v6586 = vld [vmem:[#allocation36 + $0x34] sm:$0xf]
        %v6587 = vld [vmem:[#allocation36 + $0x38] sm:$0xf]
        %v6588 = vld [vmem:[#allocation36 + $0x3c] sm:$0xf]
        %v6589 = vld [vmem:[%s26] sm:$0x1]
        %v6591 = vperm.slane %v6589, 0
        %v6609 = vunpack.c.l.b16 %v6573
        %v6610 = vunpack.c.l.b16 %v6574
        %v6611 = vunpack.c.l.b16 %v6575
        %v6612 = vunpack.c.l.b16 %v6576
        %v6613 = vunpack.c.l.b16 %v6577
        %v6614 = vunpack.c.l.b16 %v6578
        %v6615 = vunpack.c.l.b16 %v6579
        %v6616 = vunpack.c.l.b16 %v6580
        %v6617 = vunpack.c.l.b16 %v6581
        %v6618 = vunpack.c.l.b16 %v6582
        %v6619 = vunpack.c.l.b16 %v6583
        %v6620 = vunpack.c.l.b16 %v6584
        %v6621 = vunpack.c.l.b16 %v6585
        %v6622 = vunpack.c.l.b16 %v6586
        %v6623 = vunpack.c.l.b16 %v6587
        %v6624 = vunpack.c.l.b16 %v6588
        %v6625 = vpack.c.b16 %v6610, %v6609
        %v6626 = vpack.c.b16 %v6612, %v6611
        %v6627 = vpack.c.b16 %v6614, %v6613
        %v6628 = vpack.c.b16 %v6616, %v6615
        %v6629 = vpack.c.b16 %v6618, %v6617
        %v6630 = vpack.c.b16 %v6620, %v6619
        %v6631 = vpack.c.b16 %v6622, %v6621
        %v6632 = vpack.c.b16 %v6624, %v6623
        %6641 = vmatpush.bf16.msra.mxu0 %v6632
        %6642 = vmatpush.bf16.msra.mxu0 %v6631
        %6643 = vmatpush.bf16.msra.mxu0 %v6630
        %6644 = vmatpush.bf16.msra.mxu0 %v6629
        %6645 = vmatpush.bf16.msra.mxu0 %v6628
        %6646 = vmatpush.bf16.msra.mxu0 %v6627
        %6647 = vmatpush.bf16.msra.mxu0 %v6626
        %6648 = vmatpush.bf16.msra.mxu0 %v6625
        %6649 = vmatmul.bf16.gmra.mxu0 %v6572
        %v6650 = vpop.f32.mrf.mxu0
        %v6651 = vadd.f32 %v6591, %v6650
        %v6652 = vpop.f32.mrf.mxu0
        %v6653 = vadd.f32 %v6591, %v6652
        %6654 = vdwg.mxu0
        %6655 = vmax.xlane.f32.xlu0 %v6651
        %v6656 = vpop.xlane.xlu0 %6655
        %6657 = vmax.xlane.f32.xlu0 %v6653
        %v6658 = vpop.xlane.xlu0 %6657
        %v6659 = vsub.f32 %v6651, %v6656
        %v6660 = vsub.f32 %v6653, %v6658
        %v6661 = vmul.f32 %v6659, 1.442695
        %v6662 = vpow.pop %v6661
        %v6663 = vmul.f32 %v6660, 1.442695
        %v6664 = vpow.pop %v6663
        %6665 = vadd.xlane.f32.xlu0 %v6662
        %v6666 = vpop.xlane.xlu0 %6665
        %6667 = vadd.xlane.f32.xlu0 %v6664
        %v6668 = vpop.xlane.xlu0 %6667
        %v6669 = vlog2.pop %v6666
        %v6670 = vmul.f32 %v6669, 0.6931472
        %v6671 = vlog2.pop %v6668
        %v6672 = vmul.f32 %v6671, 0.6931472
        %v6673 = vsub.f32 %v6659, %v6670
        %v6674 = vsub.f32 %v6660, %v6672
        %6675 = vst [vmem:[%s1137] sm:$0xff] %v6673
        %6676 = vst [vmem:[%s1137 + $0x8] sm:$0xff] %v6674
        %p6677 = scmp.lt.s32.totalorder %s49, 1
        %s6678 = scalar_select %p6677, %s49, 1
        %s6679 = smul.addr %s6678, 2
        %s6680 = smul.addr %s6679, 8
        %s6681 = scalar_lea.vmem %s27, %s6680
        // Predicated region
        $region213: #{_lambda_.1} parent=127 // pred_check
          %p6682 = pneg %p639
        $region214: #{_lambda_.1} parent=127 // pred_check_branch
          %6684 = sbr.rel (%p6682) target = $region216
        $region215: #{_lambda_.1} parent=127 // pred_region
          _
        $region216: #{_lambda_.1} parent=127 // pred_fallthru
          _
      $region128: #{_lambda_.1} parent=5 // pred_fallthru
        _
      %p6685 = scmp.le.s32.totalorder 2, %s44
      // Predicated region
      $region217: #{_lambda_.1} parent=5 // pred_check
        %p6686 = pneg %p6685
      $region218: #{_lambda_.1} parent=5 // pred_check_branch
        %6688 = sbr.rel (%p6686) target = $region220
      $region219: #{_lambda_.1} parent=5 // pred_region
        %s6689 = ssub.s32 %s44, 2
        // Predicated region
        $region221: #{_lambda_.1} parent=219 // pred_check
          %p6690 = pneg %p645
        $region222: #{_lambda_.1} parent=219 // pred_check_branch
          %6692 = sbr.rel (%p6690) target = $region224
        $region223: #{_lambda_.1} parent=219 // pred_region
          %p6693 = scmp.lt.s32.totalorder %s50, 1
          %s6694 = scalar_select %p6693, %s50, 1
          %s6695 = smul.addr %s6694, 2
          %s6696 = smul.addr %s6695, 8
          %s6697 = scalar_lea.vmem %s27, %s6696
        $region224: #{_lambda_.1} parent=219 // pred_fallthru
          _
      $region220: #{_lambda_.1} parent=5 // pred_fallthru
        _
    $region6: #{_lambda_.1} parent=1 // loop_footer
      %s48 = sadd.s32 1, %s44
    $region7: #{_lambda_.1} parent=1 // loop_footer_branch
      %43 = sbr.rel target = $region3
    $region8: #{_lambda_.1} parent=1 // loop_exit
      _
    %6698 = vsyncpa [#allocation6], 1
    %s6699 = scalar_lea.sflag [#allocation6], 1
    %6700 = vsyncpa %s6699, 1
    %6701 = vsyncpa [#allocation8], 1
    %6702 = vsyncpa [#allocation11], 1
    %6703 = vsyncpa [#allocation14], 1
    %6704 = vsyncpa [#allocation17], 1
    %6705 = vsyncpa [#allocation20], 1
    %6706 = vsyncpa [#allocation23], 1
    %6707 = vsyncpa [#allocation26], 1
    %6708 = vsyncpa [#allocation29], 1
    %6709 = vsyncpa [#allocation32], 1
    %6710 = vsyncpa [#allocation35], 1

</llo_original>
